<compile_context>
chip_gen: v5e
topology: v5e:2x2
jax: 0.10.0
libtpu: 0.0.40
codegen_flags: <defaults>
</compile_context>

<pallas_src>
import functools
import numpy as np

import jax
import jax.numpy as jnp
from jax.experimental import pallas as pl
from jax.experimental.pallas import tpu as pltpu


_SQRT_HALF = 0.7071067811865476


def _round_up(x, m):
    return -(-x // m) * m


def _vmem_limit_bytes():
    # v5e/v6e have 128 MiB physical VMEM, v7x has 64 MiB; leave headroom either way.
    try:
        cap = pltpu.get_tpu_info().vmem_capacity_bytes
        return int(min(cap * 3 // 4, 100 * 1024 * 1024))
    except Exception:
        return 32 * 1024 * 1024


_COMPILER_PARAMS = pltpu.CompilerParams(
    dimension_semantics=("parallel",),      # batch-tile axis: independent work for both TCs
    vmem_limit_bytes=_vmem_limit_bytes(),
)


# ------------------------------------------------------------------
# Layout helpers (wrapper side, layout plumbing only)
# ------------------------------------------------------------------
def _layout_dims(H, W):
    """Padded-flat layout: pixel (y, x) -> P + y*Wb + x, margins/garbage columns zero."""
    Wb = W + 4
    Lo = H * Wb
    P = _round_up(Wb + 1, 128)              # 128-aligned left margin >= Wb + 1
    Ls = _round_up(2 * P + Lo, 128)         # lane-dense total length (multiple of 128)
    return Wb, Lo, P, Ls


def _to_padded_flat(x):
    """(N, C, H, W) -> (N, C, Ls) padded-flat layout (zeros outside the image)."""
    N, C, H, W = x.shape
    Wb, Lo, P, Ls = _layout_dims(H, W)
    xp = jnp.pad(x, ((0, 0), (0, 0), (0, 0), (0, Wb - W)))
    return jnp.pad(xp.reshape(N, C, Lo), ((0, 0), (0, 0), (P, Ls - P - Lo)))


def _make_mask(H, W, Wb, stride):
    """(1, H*Wb) f32 mask over the flat conv-output grid selecting true output positions."""
    yy = np.arange(H)[:, None]
    xx = np.arange(Wb)[None, :]
    m = (xx < W)
    if stride != 1:
        m = m & (yy % stride == 0) & (xx % stride == 0)
    m = np.broadcast_to(m, (H, Wb)).astype(np.float32)
    return jnp.asarray(m.reshape(1, H * Wb)), int(m.sum())


def _group_matrix(C):
    """(C, C) averaging matrix mapping per-channel stats to per-(GroupNorm-)group stats."""
    groups = min(32, C)
    if C % groups != 0:
        raise ValueError("GroupNorm requires channels divisible by num_groups")
    gs = C // groups
    g = np.arange(C) // gs
    return jnp.asarray((g[:, None] == g[None, :]).astype(np.float32) / gs)


def _pick_btile(N, per_image_bytes):
    """Images per grid step: amortise pipeline overhead, stay well inside VMEM."""
    budget = 8 * 1024 * 1024
    bt = int(max(1, min(8, budget // max(per_image_bytes, 1), N)))
    while N % bt:
        bt -= 1
    return bt


# ------------------------------------------------------------------
# In-kernel helper: 3x3 conv (one 9*Cin-deep MXU matmul over VMEM-staged shifted windows)
#                   + bias + masked GroupNorm (single pass) + exact GELU.
# ------------------------------------------------------------------
def _conv3x3_gn_gelu(get_slice, x9_scr, w, bias, gamma, beta, gmat, mask, *,
                     base, Wb, Lo, C, inv_count, eps):
    # Stage the 9 shifted windows (bf16, no casts) tap-major into the (9*C, Lo) scratch.
    for t in range(9):
        s = base + (t // 3) * Wb + (t % 3)
        x9_scr[t * C:(t + 1) * C, :] = get_slice(s)
    y = jnp.dot(w, x9_scr[...], preferred_element_type=jnp.float32) + bias    # (Cout, Lo) f32

    # GroupNorm: single masked pass producing sum / sum-of-squares, then group averaging.
    ym = y * mask
    stats = jnp.concatenate([jnp.sum(ym, axis=1, keepdims=True),
                             jnp.sum(ym * ym, axis=1, keepdims=True)], axis=1)  # (Cout, 2)
    gstats = jnp.dot(gmat, stats, preferred_element_type=jnp.float32) * inv_count
    mean = gstats[:, 0:1]
    var = jnp.maximum(gstats[:, 1:2] - mean * mean, 0.0)
    y = (y - mean) * jax.lax.rsqrt(var + eps) * gamma + beta

    # exact erf-based GELU (torch.nn.GELU default)
    return 0.5 * y * (1.0 + jax.lax.erf(y * jnp.float32(_SQRT_HALF)))


def _store_padded(o_ref, b, val, P, Lo):
    """Write one image's padded-flat output row: zero margins + masked interior."""
    Cc = o_ref.shape[1]
    Ls = o_ref.shape[2]
    o_ref[b, :, 0:P] = jnp.zeros((Cc, P), o_ref.dtype)
    o_ref[b, :, P:P + Lo] = val.astype(o_ref.dtype)
    o_ref[b, :, P + Lo:Ls] = jnp.zeros((Cc, Ls - P - Lo), o_ref.dtype)


# ------------------------------------------------------------------
# Kernels
# ------------------------------------------------------------------
def _convblock_kernel(x_ref, w_ref, b_ref, g_ref, bt_ref, gm_ref, m_ref, o_ref, x9_scr, *,
                      P, Wb, Lo, inv_count, eps, padded_out):
    """Standalone ConvBlock (initial conv / stride-2 downsample)."""
    Bt, C, _ = x_ref.shape
    base = P - Wb - 1
    w = w_ref[...]; bias = b_ref[...]; gamma = g_ref[...]; beta = bt_ref[...]
    gmat = gm_ref[...]; mask = m_ref[...]
    for b in range(Bt):
        y = _conv3x3_gn_gelu(lambda s, b=b: x_ref[b, :, s:s + Lo], x9_scr,
                             w, bias, gamma, beta, gmat, mask,
                             base=base, Wb=Wb, Lo=Lo, C=C,
                             inv_count=inv_count, eps=eps)
        y = y * mask                                  # keep padding/garbage positions at zero
        if padded_out:
            _store_padded(o_ref, b, y, P, Lo)
        else:
            o_ref[b, :, :] = y.astype(o_ref.dtype)


def _resblock_kernel(x_ref, w1_ref, b1_ref, g1_ref, bt1_ref,
                     w2_ref, b2_ref, g2_ref, bt2_ref, gm_ref, m_ref, *rest,
                     P, Wb, Lo, inv_count, eps, has_final):
    """Fused ResBlock: x + CB2(CB1(x)), optionally followed by the final 1x1 conv."""
    if has_final:
        fw_ref, fb_ref, o_ref, h1_scr, x9_scr = rest
    else:
        o_ref, h1_scr, x9_scr = rest

    Bt, C, Ls = x_ref.shape
    base = P - Wb - 1
    w1 = w1_ref[...]; b1 = b1_ref[...]; g1 = g1_ref[...]; bt1 = bt1_ref[...]
    w2 = w2_ref[...]; b2 = b2_ref[...]; g2 = g2_ref[...]; bt2 = bt2_ref[...]
    gmat = gm_ref[...]; mask = m_ref[...]
    if has_final:
        fw = fw_ref[...]; fb = fb_ref[...]

    # Zero only the conv-padding margins of the h1 staging buffer (interior is rewritten
    # per image); scratch persists across grid steps but this keeps every step self-contained.
    h1_scr[:, 0:P] = jnp.zeros((C, P), h1_scr.dtype)
    h1_scr[:, P + Lo:Ls] = jnp.zeros((C, Ls - P - Lo), h1_scr.dtype)

    for b in range(Bt):
        # ConvBlock 1 (reads shifted windows straight from the bf16 input ref)
        h1 = _conv3x3_gn_gelu(lambda s, b=b: x_ref[b, :, s:s + Lo], x9_scr,
                              w1, b1, g1, bt1, gmat, mask,
                              base=base, Wb=Wb, Lo=Lo, C=C,
                              inv_count=inv_count, eps=eps)
        # Stage h1 (garbage columns zeroed) as bf16; margins already zero -> conv padding.
        h1_scr[:, P:P + Lo] = (h1 * mask).astype(h1_scr.dtype)

        # ConvBlock 2
        h2 = _conv3x3_gn_gelu(lambda s: h1_scr[:, s:s + Lo], x9_scr,
                              w2, b2, g2, bt2, gmat, mask,
                              base=base, Wb=Wb, Lo=Lo, C=C,
                              inv_count=inv_count, eps=eps)

        # Residual add: the ResBlock input is the interior slice of the padded-flat input.
        res = x_ref[b, :, P:P + Lo].astype(jnp.float32)
        out = (h2 + res) * mask

        if has_final:   # fused final 1x1 conv epilogue (no norm / activation), bf16 MXU
            fin = jnp.dot(fw, out.astype(jnp.bfloat16),
                          preferred_element_type=jnp.float32) + fb
            o_ref[b, :, :] = fin.astype(o_ref.dtype)
        else:
            _store_padded(o_ref, b, out, P, Lo)


def _final1x1_kernel(x_ref, w_ref, b_ref, o_ref, *, P, Lo):
    """Fallback standalone final 1x1 conv (only used if the last block is not a ResBlock)."""
    w = w_ref[...]; bias = b_ref[...]
    for b in range(x_ref.shape[0]):
        x = x_ref[b, :, P:P + Lo]
        o_ref[b, :, :] = (jnp.dot(w, x, preferred_element_type=jnp.float32)
                          + bias).astype(o_ref.dtype)


# ------------------------------------------------------------------
# Layer wrappers (pallas_call plumbing)
# ------------------------------------------------------------------
def conv_block_apply(h, H, W, p, stride=1):
    """ConvBlock: conv3x3(pad=1, stride s) -> GroupNorm -> GELU.  h: (N, C, Ls) padded-flat."""
    N, C, Ls = h.shape
    Cout = p["w"].shape[0]
    Wb, Lo, P, Ls_chk = _layout_dims(H, W)
    assert Ls == Ls_chk
    mask, count = _make_mask(H, W, Wb, stride)
    gmat = _group_matrix(Cout)
    padded_out = (stride == 1)
    Ls_out = Ls if padded_out else Lo
    Bt = _pick_btile(N, 2 * 2 * (C * Ls + Cout * Ls_out))

    out = pl.pallas_call(
        functools.partial(_convblock_kernel, P=P, Wb=Wb, Lo=Lo,
                          inv_count=1.0 / count, eps=1e-5, padded_out=padded_out),
        out_shape=jax.ShapeDtypeStruct((N, Cout, Ls_out), jnp.bfloat16),
        grid=(N // Bt,),
        in_specs=[
            pl.BlockSpec((Bt, C, Ls), lambda n: (n, 0, 0)),
            pl.BlockSpec((Cout, 9 * C), lambda n: (0, 0)),
            pl.BlockSpec((Cout, 1), lambda n: (0, 0)),
            pl.BlockSpec((Cout, 1), lambda n: (0, 0)),
            pl.BlockSpec((Cout, 1), lambda n: (0, 0)),
            pl.BlockSpec((Cout, Cout), lambda n: (0, 0)),
            pl.BlockSpec((1, Lo), lambda n: (0, 0)),
        ],
        out_specs=pl.BlockSpec((Bt, Cout, Ls_out), lambda n: (n, 0, 0)),
        scratch_shapes=[pltpu.VMEM((9 * C, Lo), jnp.bfloat16)],
        compiler_params=_COMPILER_PARAMS,
    )(h, p["w"], p["b"], p["gamma"], p["beta"], gmat, mask)

    if stride == 1:
        return out, H, W

    # TODO(synk): fold the stride-2 subsample into the kernel (space-to-depth reads) to remove
    #             the redundant full-grid conv and this one XLA relayout per downsample.
    H2, W2 = -(-H // 2), -(-W // 2)
    sub = out.reshape(N, Cout, H, Wb)[:, :, ::2, :W:2]
    return _to_padded_flat(sub), H2, W2


def res_block_apply(h, H, W, p, final=None):
    """Fused ResBlock (x + CB2(CB1(x))); if `final` is given, also applies the final 1x1 conv."""
    N, C, Ls = h.shape
    Wb, Lo, P, Ls_chk = _layout_dims(H, W)
    assert Ls == Ls_chk
    mask, count = _make_mask(H, W, Wb, 1)
    gmat = _group_matrix(C)
    has_final = final is not None
    Cf = final["w"].shape[0] if has_final else C
    Ls_out = Lo if has_final else Ls
    out_dtype = jnp.float32 if has_final else jnp.bfloat16
    Bt = _pick_btile(N, 2 * (2 * C * Ls + Cf * Ls_out * (4 if has_final else 2)))

    in_specs = [pl.BlockSpec((Bt, C, Ls), lambda n: (n, 0, 0))]
    args = [h]
    for q in (p["cb1"], p["cb2"]):
        in_specs += [pl.BlockSpec((C, 9 * C), lambda n: (0, 0)),
                     pl.BlockSpec((C, 1), lambda n: (0, 0)),
                     pl.BlockSpec((C, 1), lambda n: (0, 0)),
                     pl.BlockSpec((C, 1), lambda n: (0, 0))]
        args += [q["w"], q["b"], q["gamma"], q["beta"]]
    in_specs += [pl.BlockSpec((C, C), lambda n: (0, 0)),
                 pl.BlockSpec((1, Lo), lambda n: (0, 0))]
    args += [gmat, mask]
    if has_final:
        in_specs += [pl.BlockSpec((Cf, C), lambda n: (0, 0)),
                     pl.BlockSpec((Cf, 1), lambda n: (0, 0))]
        args += [final["w"], final["b"]]

    out = pl.pallas_call(
        functools.partial(_resblock_kernel, P=P, Wb=Wb, Lo=Lo,
                          inv_count=1.0 / count, eps=1e-5, has_final=has_final),
        out_shape=jax.ShapeDtypeStruct((N, Cf, Ls_out), out_dtype),
        grid=(N // Bt,),
        in_specs=in_specs,
        out_specs=pl.BlockSpec((Bt, Cf, Ls_out), lambda n: (n, 0, 0)),
        scratch_shapes=[pltpu.VMEM((C, Ls), jnp.bfloat16),
                        pltpu.VMEM((9 * C, Lo), jnp.bfloat16)],
        compiler_params=_COMPILER_PARAMS,
    )(*args)
    return out, H, W


def final_conv_apply(h, H, W, pf):
    """Standalone final 1x1 conv (fallback path)."""
    N, C, Ls = h.shape
    Wb, Lo, P, _ = _layout_dims(H, W)
    Cf = pf["w"].shape[0]
    Bt = _pick_btile(N, 2 * (2 * C * Ls + 4 * Cf * Lo))
    return pl.pallas_call(
        functools.partial(_final1x1_kernel, P=P, Lo=Lo),
        out_shape=jax.ShapeDtypeStruct((N, Cf, Lo), jnp.float32),
        grid=(N // Bt,),
        in_specs=[pl.BlockSpec((Bt, C, Ls), lambda n: (n, 0, 0)),
                  pl.BlockSpec((Cf, C), lambda n: (0, 0)),
                  pl.BlockSpec((Cf, 1), lambda n: (0, 0))],
        out_specs=pl.BlockSpec((Bt, Cf, Lo), lambda n: (n, 0, 0)),
        compiler_params=_COMPILER_PARAMS,
    )(h, pf["w"], pf["b"])


# ------------------------------------------------------------------
# Parameter init (deterministic, shapes follow the PyTorch module); weights stored bf16.
# ------------------------------------------------------------------
def _conv_params(key, cin, cout, pad_cin_to=None):
    k1, k2 = jax.random.split(key)
    w = jax.random.normal(k1, (cout, cin, 3, 3), jnp.float32) / np.sqrt(9 * cin)
    b = jax.random.normal(k2, (cout,), jnp.float32) * 0.01
    if pad_cin_to is not None and pad_cin_to != cin:
        w = jnp.pad(w, ((0, 0), (0, pad_cin_to - cin), (0, 0), (0, 0)))
        cin = pad_cin_to
    # tap-major flat layout: column ((ky*3 + kx)*cin + ci) == w[:, ci, ky, kx]
    w_flat = jnp.transpose(w, (0, 2, 3, 1)).reshape(cout, 9 * cin).astype(jnp.bfloat16)
    return {"w": w_flat, "b": b.reshape(-1, 1),
            "gamma": jnp.ones((cout, 1), jnp.float32),
            "beta": jnp.zeros((cout, 1), jnp.float32)}


def init_encoder_params(key, in_channels, ae_channels, num_res_blocks, latent_dim):
    keys = iter(jax.random.split(key, 512))
    cin_pad = in_channels + (in_channels % 2)        # even input channels (bf16 packing)
    params = {"in_channels_padded": cin_pad,
              "initial": _conv_params(next(keys), in_channels, ae_channels[0],
                                      pad_cin_to=cin_pad)}
    # NOTE: faithful to the reference module, `channels` stays ae_channels[0] on the down path.
    channels = ae_channels[0]
    down = []
    for i, _out_ch in enumerate(ae_channels):
        for _ in range(num_res_blocks):
            down.append(("res", {"cb1": _conv_params(next(keys), channels, channels),
                                 "cb2": _conv_params(next(keys), channels, channels)}))
        if i != len(ae_channels) - 1:
            down.append(("down", _conv_params(next(keys), channels, channels)))
    params["down_blocks"] = down

    kf1, kf2 = jax.random.split(next(keys))
    cfin, cfout = ae_channels[-1], 2 * latent_dim
    params["final"] = {
        "w": (jax.random.normal(kf1, (cfout, cfin), jnp.float32)
              / np.sqrt(cfin)).astype(jnp.bfloat16),
        "b": (jax.random.normal(kf2, (cfout,), jnp.float32) * 0.01).reshape(-1, 1),
    }
    return params


# ------------------------------------------------------------------
# Encoder forward (bf16 padded-flat activations passed directly between fused kernels)
# ------------------------------------------------------------------
def encoder_forward(x_nchw, params):
    x = x_nchw.astype(jnp.bfloat16)
    N, Cin, H, W = x.shape
    cin_pad = params["in_channels_padded"]
    if cin_pad != Cin:
        x = jnp.pad(x, ((0, 0), (0, cin_pad - Cin), (0, 0), (0, 0)))
    h = _to_padded_flat(x)

    h, H, W = conv_block_apply(h, H, W, params["initial"], stride=1)

    blocks = params["down_blocks"]
    fuse_final = len(blocks) > 0 and blocks[-1][0] == "res"
    for idx, (kind, p) in enumerate(blocks):
        last = idx == len(blocks) - 1
        if kind == "res":
            final = params["final"] if (last and fuse_final) else None
            h, H, W = res_block_apply(h, H, W, p, final=final)
        else:  # downsample ConvBlock, stride 2
            h, H, W = conv_block_apply(h, H, W, p, stride=2)

    if not fuse_final:
        h = final_conv_apply(h, H, W, params["final"])

    Wb = W + 4
    Cf = h.shape[1]
    return h.reshape(N, Cf, H, Wb)[:, :, :, :W]      # one small slice on the final output only


if __name__ == "__main__":
    # Small config: Encoder(in_channels=4, ae_channels=(8, 8), num_res_blocks=1, latent_dim=4)
    in_channels = 4
    ae_channels = (8, 8)
    num_res_blocks = 1
    latent_dim = 4

    key = jax.random.PRNGKey(0)
    kx, kp = jax.random.split(key)
    x = jax.random.normal(kx, (2, in_channels, 16, 16), jnp.float32)   # NCHW, like PyTorch

    params = init_encoder_params(kp, in_channels, ae_channels, num_res_blocks, latent_dim)

    fwd = jax.jit(lambda inp: encoder_forward(inp, params))
    out = fwd(x)
    jax.block_until_ready(out)

    expected = (2, 2 * latent_dim, 8, 8)   # one stride-2 downsample: 16 -> 8
    assert out.shape == expected, (out.shape, expected)
    assert bool(jnp.all(jnp.isfinite(out))), "non-finite output"
    print("KERNEL_OK")
</pallas_src>

<mosaic_0001>
module attributes {stable_mosaic.version = 11 : i64} {
  func.func @_convblock_kernel(%arg0: i32, %arg1: memref<2x4x640xbf16, #tpu.memory_space<vmem>>, %arg2: memref<8x36xbf16, #tpu.memory_space<vmem>>, %arg3: memref<8x1xf32, #tpu.memory_space<vmem>>, %arg4: memref<8x1xf32, #tpu.memory_space<vmem>>, %arg5: memref<8x1xf32, #tpu.memory_space<vmem>>, %arg6: memref<8x8xf32, #tpu.memory_space<vmem>>, %arg7: memref<1x320xf32, #tpu.memory_space<vmem>>, %arg8: memref<2x8x640xbf16, #tpu.memory_space<vmem>>, %arg9: memref<36x320xbf16, #tpu.memory_space<vmem>>) attributes {dimension_semantics = [#tpu.dimension_semantics<parallel>], iteration_bounds = array<i64: 1>, scalar_prefetch = 0 : i64, scratch_operands = 1 : i64, tpu.core_type = #tpu.core_type<tc>, window_params = [{transform_indices = @transform_0, window_bounds = array<i64: 2, 4, 640>}, {pipeline_mode = #tpu.pipeline_mode<synchronous>, transform_indices = @transform_1, window_bounds = array<i64: 8, 36>}, {pipeline_mode = #tpu.pipeline_mode<synchronous>, transform_indices = @transform_2, window_bounds = array<i64: 8, 1>}, {pipeline_mode = #tpu.pipeline_mode<synchronous>, transform_indices = @transform_3, window_bounds = array<i64: 8, 1>}, {pipeline_mode = #tpu.pipeline_mode<synchronous>, transform_indices = @transform_4, window_bounds = array<i64: 8, 1>}, {pipeline_mode = #tpu.pipeline_mode<synchronous>, transform_indices = @transform_5, window_bounds = array<i64: 8, 8>}, {pipeline_mode = #tpu.pipeline_mode<synchronous>, transform_indices = @transform_6, window_bounds = array<i64: 1, 320>}, {transform_indices = @transform_7, window_bounds = array<i64: 2, 8, 640>}]} {
    %c0 = arith.constant 0 : index
    %c0_0 = arith.constant 0 : index
    %0 = vector.load %arg2[%c0, %c0_0] : memref<8x36xbf16, #tpu.memory_space<vmem>>, vector<8x36xbf16>
    %c0_1 = arith.constant 0 : index
    %c0_2 = arith.constant 0 : index
    %1 = vector.load %arg3[%c0_1, %c0_2] : memref<8x1xf32, #tpu.memory_space<vmem>>, vector<8x1xf32>
    %c0_3 = arith.constant 0 : index
    %c0_4 = arith.constant 0 : index
    %2 = vector.load %arg4[%c0_3, %c0_4] : memref<8x1xf32, #tpu.memory_space<vmem>>, vector<8x1xf32>
    %c0_5 = arith.constant 0 : index
    %c0_6 = arith.constant 0 : index
    %3 = vector.load %arg5[%c0_5, %c0_6] : memref<8x1xf32, #tpu.memory_space<vmem>>, vector<8x1xf32>
    %c0_7 = arith.constant 0 : index
    %c0_8 = arith.constant 0 : index
    %4 = vector.load %arg6[%c0_7, %c0_8] : memref<8x8xf32, #tpu.memory_space<vmem>>, vector<8x8xf32>
    %c0_9 = arith.constant 0 : index
    %c0_10 = arith.constant 0 : index
    %5 = vector.load %arg7[%c0_9, %c0_10] : memref<1x320xf32, #tpu.memory_space<vmem>>, vector<1x320xf32>
    %c0_11 = arith.constant 0 : index
    %c0_12 = arith.constant 0 : index
    %c107 = arith.constant 107 : index
    %6 = vector.load %arg1[%c0_11, %c0_12, %c107] : memref<2x4x640xbf16, #tpu.memory_space<vmem>>, vector<1x4x320xbf16>
    %7 = vector.shape_cast %6 : vector<1x4x320xbf16> to vector<4x320xbf16>
    %c0_13 = arith.constant 0 : index
    %c0_14 = arith.constant 0 : index
    %8 = vector.load %arg9[%c0_13, %c0_14] : memref<36x320xbf16, #tpu.memory_space<vmem>>, vector<4x320xbf16>
    tpu.vector_store %arg9[%c0_13, %c0_14], %7 {strides = array<i32>} : memref<36x320xbf16, #tpu.memory_space<vmem>>, vector<4x320xbf16>,
    %c0_15 = arith.constant 0 : index
    %c0_16 = arith.constant 0 : index
    %c108 = arith.constant 108 : index
    %9 = vector.load %arg1[%c0_15, %c0_16, %c108] : memref<2x4x640xbf16, #tpu.memory_space<vmem>>, vector<1x4x320xbf16>
    %10 = vector.shape_cast %9 : vector<1x4x320xbf16> to vector<4x320xbf16>
    %c4 = arith.constant 4 : index
    %c0_17 = arith.constant 0 : index
    %11 = vector.load %arg9[%c4, %c0_17] : memref<36x320xbf16, #tpu.memory_space<vmem>>, vector<4x320xbf16>
    tpu.vector_store %arg9[%c4, %c0_17], %10 {strides = array<i32>} : memref<36x320xbf16, #tpu.memory_space<vmem>>, vector<4x320xbf16>,
    %c0_18 = arith.constant 0 : index
    %c0_19 = arith.constant 0 : index
    %c109 = arith.constant 109 : index
    %12 = vector.load %arg1[%c0_18, %c0_19, %c109] : memref<2x4x640xbf16, #tpu.memory_space<vmem>>, vector<1x4x320xbf16>
    %13 = vector.shape_cast %12 : vector<1x4x320xbf16> to vector<4x320xbf16>
    %c8 = arith.constant 8 : index
    %c0_20 = arith.constant 0 : index
    %14 = vector.load %arg9[%c8, %c0_20] : memref<36x320xbf16, #tpu.memory_space<vmem>>, vector<4x320xbf16>
    tpu.vector_store %arg9[%c8, %c0_20], %13 {strides = array<i32>} : memref<36x320xbf16, #tpu.memory_space<vmem>>, vector<4x320xbf16>,
    %c0_21 = arith.constant 0 : index
    %c0_22 = arith.constant 0 : index
    %c127 = arith.constant 127 : index
    %15 = vector.load %arg1[%c0_21, %c0_22, %c127] : memref<2x4x640xbf16, #tpu.memory_space<vmem>>, vector<1x4x320xbf16>
    %16 = vector.shape_cast %15 : vector<1x4x320xbf16> to vector<4x320xbf16>
    %c12 = arith.constant 12 : index
    %c0_23 = arith.constant 0 : index
    %17 = vector.load %arg9[%c12, %c0_23] : memref<36x320xbf16, #tpu.memory_space<vmem>>, vector<4x320xbf16>
    tpu.vector_store %arg9[%c12, %c0_23], %16 {strides = array<i32>} : memref<36x320xbf16, #tpu.memory_space<vmem>>, vector<4x320xbf16>,
    %c0_24 = arith.constant 0 : index
    %c0_25 = arith.constant 0 : index
    %c128 = arith.constant 128 : index
    %18 = vector.load %arg1[%c0_24, %c0_25, %c128] : memref<2x4x640xbf16, #tpu.memory_space<vmem>>, vector<1x4x320xbf16>
    %19 = vector.shape_cast %18 : vector<1x4x320xbf16> to vector<4x320xbf16>
    %c16 = arith.constant 16 : index
    %c0_26 = arith.constant 0 : index
    %20 = vector.load %arg9[%c16, %c0_26] : memref<36x320xbf16, #tpu.memory_space<vmem>>, vector<4x320xbf16>
    tpu.vector_store %arg9[%c16, %c0_26], %19 {strides = array<i32>} : memref<36x320xbf16, #tpu.memory_space<vmem>>, vector<4x320xbf16>,
    %c0_27 = arith.constant 0 : index
    %c0_28 = arith.constant 0 : index
    %c129 = arith.constant 129 : index
    %21 = vector.load %arg1[%c0_27, %c0_28, %c129] : memref<2x4x640xbf16, #tpu.memory_space<vmem>>, vector<1x4x320xbf16>
    %22 = vector.shape_cast %21 : vector<1x4x320xbf16> to vector<4x320xbf16>
    %c20 = arith.constant 20 : index
    %c0_29 = arith.constant 0 : index
    %23 = vector.load %arg9[%c20, %c0_29] : memref<36x320xbf16, #tpu.memory_space<vmem>>, vector<4x320xbf16>
    tpu.vector_store %arg9[%c20, %c0_29], %22 {strides = array<i32>} : memref<36x320xbf16, #tpu.memory_space<vmem>>, vector<4x320xbf16>,
    %c0_30 = arith.constant 0 : index
    %c0_31 = arith.constant 0 : index
    %c147 = arith.constant 147 : index
    %24 = vector.load %arg1[%c0_30, %c0_31, %c147] : memref<2x4x640xbf16, #tpu.memory_space<vmem>>, vector<1x4x320xbf16>
    %25 = vector.shape_cast %24 : vector<1x4x320xbf16> to vector<4x320xbf16>
    %c24 = arith.constant 24 : index
    %c0_32 = arith.constant 0 : index
    %26 = vector.load %arg9[%c24, %c0_32] : memref<36x320xbf16, #tpu.memory_space<vmem>>, vector<4x320xbf16>
    tpu.vector_store %arg9[%c24, %c0_32], %25 {strides = array<i32>} : memref<36x320xbf16, #tpu.memory_space<vmem>>, vector<4x320xbf16>,
    %c0_33 = arith.constant 0 : index
    %c0_34 = arith.constant 0 : index
    %c148 = arith.constant 148 : index
    %27 = vector.load %arg1[%c0_33, %c0_34, %c148] : memref<2x4x640xbf16, #tpu.memory_space<vmem>>, vector<1x4x320xbf16>
    %28 = vector.shape_cast %27 : vector<1x4x320xbf16> to vector<4x320xbf16>
    %c28 = arith.constant 28 : index
    %c0_35 = arith.constant 0 : index
    %29 = vector.load %arg9[%c28, %c0_35] : memref<36x320xbf16, #tpu.memory_space<vmem>>, vector<4x320xbf16>
    tpu.vector_store %arg9[%c28, %c0_35], %28 {strides = array<i32>} : memref<36x320xbf16, #tpu.memory_space<vmem>>, vector<4x320xbf16>,
    %c0_36 = arith.constant 0 : index
    %c0_37 = arith.constant 0 : index
    %c149 = arith.constant 149 : index
    %30 = vector.load %arg1[%c0_36, %c0_37, %c149] : memref<2x4x640xbf16, #tpu.memory_space<vmem>>, vector<1x4x320xbf16>
    %31 = vector.shape_cast %30 : vector<1x4x320xbf16> to vector<4x320xbf16>
    %c32 = arith.constant 32 : index
    %c0_38 = arith.constant 0 : index
    %32 = vector.load %arg9[%c32, %c0_38] : memref<36x320xbf16, #tpu.memory_space<vmem>>, vector<4x320xbf16>
    tpu.vector_store %arg9[%c32, %c0_38], %31 {strides = array<i32>} : memref<36x320xbf16, #tpu.memory_space<vmem>>, vector<4x320xbf16>,
    %c0_39 = arith.constant 0 : index
    %c0_40 = arith.constant 0 : index
    %33 = vector.load %arg9[%c0_39, %c0_40] : memref<36x320xbf16, #tpu.memory_space<vmem>>, vector<36x320xbf16>
    %cst = arith.constant dense<0.000000e+00> : vector<8x320xf32>
    %34 = tpu.matmul %0, %33, %cst {dimension_numbers = #tpu.dot_dimension_numbers<[1], [0], [0], [1], [0, 0, 1, 1], [], []>} : vector<8x36xbf16>, vector<36x320xbf16>, vector<8x320xf32> -> vector<8x320xf32>
    %35 = vector.broadcast %1 : vector<8x1xf32> to vector<8x320xf32>
    %36 = arith.addf %34, %35 : vector<8x320xf32>
    %37 = vector.broadcast %5 : vector<1x320xf32> to vector<8x320xf32>
    %38 = arith.mulf %36, %37 : vector<8x320xf32>
    %cst_41 = arith.constant dense<0.000000e+00> : vector<8xf32>
    %39 = vector.multi_reduction <add>, %38, %cst_41 [1] : vector<8x320xf32> to vector<8xf32>
    %40 = vector.shape_cast %39 : vector<8xf32> to vector<8x1xf32>
    %41 = arith.mulf %38, %38 : vector<8x320xf32>
    %cst_42 = arith.constant dense<0.000000e+00> : vector<8xf32>
    %42 = vector.multi_reduction <add>, %41, %cst_42 [1] : vector<8x320xf32> to vector<8xf32>
    %43 = vector.shape_cast %42 : vector<8xf32> to vector<8x1xf32>
    %44 = tpu.concatenate %40, %43 in 1 : vector<8x1xf32>, vector<8x1xf32> -> vector<8x2xf32>
    %cst_43 = arith.constant dense<0.000000e+00> : vector<8x2xf32>
    %45 = tpu.matmul %4, %44, %cst_43 {dimension_numbers = #tpu.dot_dimension_numbers<[1], [0], [0], [1], [0, 0, 1, 1], [], []>} : vector<8x8xf32>, vector<8x2xf32>, vector<8x2xf32> -> vector<8x2xf32>
    %cst_44 = arith.constant 3.906250e-03 : f32
    %46 = vector.broadcast %cst_44 : f32 to vector<8x2xf32>
    %47 = arith.mulf %45, %46 : vector<8x2xf32>
    %48 = vector.extract_strided_slice %47 {offsets = [0, 0], sizes = [8, 1], strides = [1, 1]} : vector<8x2xf32> to vector<8x1xf32>
    %49 = vector.extract_strided_slice %47 {offsets = [0, 1], sizes = [8, 1], strides = [1, 1]} : vector<8x2xf32> to vector<8x1xf32>
    %50 = arith.mulf %48, %48 : vector<8x1xf32>
    %51 = arith.subf %49, %50 : vector<8x1xf32>
    %cst_45 = arith.constant 0.000000e+00 : f32
    %52 = vector.broadcast %cst_45 : f32 to vector<8x1xf32>
    %53 = arith.maximumf %51, %52 : vector<8x1xf32>
    %54 = vector.broadcast %48 : vector<8x1xf32> to vector<8x320xf32>
    %55 = arith.subf %36, %54 : vector<8x320xf32>
    %cst_46 = arith.constant 9.99999974E-6 : f32
    %56 = vector.broadcast %cst_46 : f32 to vector<8x1xf32>
    %57 = arith.addf %53, %56 : vector<8x1xf32>
    %58 = math.rsqrt %57 : vector<8x1xf32>
    %59 = vector.broadcast %58 : vector<8x1xf32> to vector<8x320xf32>
    %60 = arith.mulf %55, %59 : vector<8x320xf32>
    %61 = vector.broadcast %2 : vector<8x1xf32> to vector<8x320xf32>
    %62 = arith.mulf %60, %61 : vector<8x320xf32>
    %63 = vector.broadcast %3 : vector<8x1xf32> to vector<8x320xf32>
    %64 = arith.addf %62, %63 : vector<8x320xf32>
    %cst_47 = arith.constant 5.000000e-01 : f32
    %65 = vector.broadcast %cst_47 : f32 to vector<8x320xf32>
    %66 = arith.mulf %65, %64 : vector<8x320xf32>
    %cst_48 = arith.constant 0.707106769 : f32
    %67 = vector.broadcast %cst_48 : f32 to vector<8x320xf32>
    %68 = arith.mulf %64, %67 : vector<8x320xf32>
    %69 = math.erf %68 : vector<8x320xf32>
    %cst_49 = arith.constant 1.000000e+00 : f32
    %70 = vector.broadcast %cst_49 : f32 to vector<8x320xf32>
    %71 = arith.addf %70, %69 : vector<8x320xf32>
    %72 = arith.mulf %66, %71 : vector<8x320xf32>
    %73 = vector.broadcast %5 : vector<1x320xf32> to vector<8x320xf32>
    %74 = arith.mulf %72, %73 : vector<8x320xf32>
    %cst_50 = arith.constant 0.000000e+00 : bf16
    %75 = vector.broadcast %cst_50 : bf16 to vector<8x128xbf16>
    %c0_51 = arith.constant 0 : index
    %c0_52 = arith.constant 0 : index
    %c0_53 = arith.constant 0 : index
    %76 = vector.load %arg8[%c0_51, %c0_52, %c0_53] : memref<2x8x640xbf16, #tpu.memory_space<vmem>>, vector<1x8x128xbf16>
    %77 = vector.shape_cast %76 : vector<1x8x128xbf16> to vector<8x128xbf16>
    %78 = vector.shape_cast %75 : vector<8x128xbf16> to vector<1x8x128xbf16>
    tpu.vector_store %arg8[%c0_51, %c0_52, %c0_53], %78 {strides = array<i32>} : memref<2x8x640xbf16, #tpu.memory_space<vmem>>, vector<1x8x128xbf16>,
    %79 = arith.truncf %74 : vector<8x320xf32> to vector<8x320xbf16>
    %c0_54 = arith.constant 0 : index
    %c0_55 = arith.constant 0 : index
    %c128_56 = arith.constant 128 : index
    %80 = vector.load %arg8[%c0_54, %c0_55, %c128_56] : memref<2x8x640xbf16, #tpu.memory_space<vmem>>, vector<1x8x320xbf16>
    %81 = vector.shape_cast %80 : vector<1x8x320xbf16> to vector<8x320xbf16>
    %82 = vector.shape_cast %79 : vector<8x320xbf16> to vector<1x8x320xbf16>
    tpu.vector_store %arg8[%c0_54, %c0_55, %c128_56], %82 {strides = array<i32>} : memref<2x8x640xbf16, #tpu.memory_space<vmem>>, vector<1x8x320xbf16>,
    %cst_57 = arith.constant 0.000000e+00 : bf16
    %83 = vector.broadcast %cst_57 : bf16 to vector<8x192xbf16>
    %c0_58 = arith.constant 0 : index
    %c0_59 = arith.constant 0 : index
    %c448 = arith.constant 448 : index
    %84 = vector.load %arg8[%c0_58, %c0_59, %c448] : memref<2x8x640xbf16, #tpu.memory_space<vmem>>, vector<1x8x192xbf16>
    %85 = vector.shape_cast %84 : vector<1x8x192xbf16> to vector<8x192xbf16>
    %86 = vector.shape_cast %83 : vector<8x192xbf16> to vector<1x8x192xbf16>
    tpu.vector_store %arg8[%c0_58, %c0_59, %c448], %86 {strides = array<i32>} : memref<2x8x640xbf16, #tpu.memory_space<vmem>>, vector<1x8x192xbf16>,
    %c1 = arith.constant 1 : index
    %c0_60 = arith.constant 0 : index
    %c107_61 = arith.constant 107 : index
    %87 = vector.load %arg1[%c1, %c0_60, %c107_61] : memref<2x4x640xbf16, #tpu.memory_space<vmem>>, vector<1x4x320xbf16>
    %88 = vector.shape_cast %87 : vector<1x4x320xbf16> to vector<4x320xbf16>
    %c0_62 = arith.constant 0 : index
    %c0_63 = arith.constant 0 : index
    %89 = vector.load %arg9[%c0_62, %c0_63] : memref<36x320xbf16, #tpu.memory_space<vmem>>, vector<4x320xbf16>
    tpu.vector_store %arg9[%c0_62, %c0_63], %88 {strides = array<i32>} : memref<36x320xbf16, #tpu.memory_space<vmem>>, vector<4x320xbf16>,
    %c1_64 = arith.constant 1 : index
    %c0_65 = arith.constant 0 : index
    %c108_66 = arith.constant 108 : index
    %90 = vector.load %arg1[%c1_64, %c0_65, %c108_66] : memref<2x4x640xbf16, #tpu.memory_space<vmem>>, vector<1x4x320xbf16>
    %91 = vector.shape_cast %90 : vector<1x4x320xbf16> to vector<4x320xbf16>
    %c4_67 = arith.constant 4 : index
    %c0_68 = arith.constant 0 : index
    %92 = vector.load %arg9[%c4_67, %c0_68] : memref<36x320xbf16, #tpu.memory_space<vmem>>, vector<4x320xbf16>
    tpu.vector_store %arg9[%c4_67, %c0_68], %91 {strides = array<i32>} : memref<36x320xbf16, #tpu.memory_space<vmem>>, vector<4x320xbf16>,
    %c1_69 = arith.constant 1 : index
    %c0_70 = arith.constant 0 : index
    %c109_71 = arith.constant 109 : index
    %93 = vector.load %arg1[%c1_69, %c0_70, %c109_71] : memref<2x4x640xbf16, #tpu.memory_space<vmem>>, vector<1x4x320xbf16>
    %94 = vector.shape_cast %93 : vector<1x4x320xbf16> to vector<4x320xbf16>
    %c8_72 = arith.constant 8 : index
    %c0_73 = arith.constant 0 : index
    %95 = vector.load %arg9[%c8_72, %c0_73] : memref<36x320xbf16, #tpu.memory_space<vmem>>, vector<4x320xbf16>
    tpu.vector_store %arg9[%c8_72, %c0_73], %94 {strides = array<i32>} : memref<36x320xbf16, #tpu.memory_space<vmem>>, vector<4x320xbf16>,
    %c1_74 = arith.constant 1 : index
    %c0_75 = arith.constant 0 : index
    %c127_76 = arith.constant 127 : index
    %96 = vector.load %arg1[%c1_74, %c0_75, %c127_76] : memref<2x4x640xbf16, #tpu.memory_space<vmem>>, vector<1x4x320xbf16>
    %97 = vector.shape_cast %96 : vector<1x4x320xbf16> to vector<4x320xbf16>
    %c12_77 = arith.constant 12 : index
    %c0_78 = arith.constant 0 : index
    %98 = vector.load %arg9[%c12_77, %c0_78] : memref<36x320xbf16, #tpu.memory_space<vmem>>, vector<4x320xbf16>
    tpu.vector_store %arg9[%c12_77, %c0_78], %97 {strides = array<i32>} : memref<36x320xbf16, #tpu.memory_space<vmem>>, vector<4x320xbf16>,
    %c1_79 = arith.constant 1 : index
    %c0_80 = arith.constant 0 : index
    %c128_81 = arith.constant 128 : index
    %99 = vector.load %arg1[%c1_79, %c0_80, %c128_81] : memref<2x4x640xbf16, #tpu.memory_space<vmem>>, vector<1x4x320xbf16>
    %100 = vector.shape_cast %99 : vector<1x4x320xbf16> to vector<4x320xbf16>
    %c16_82 = arith.constant 16 : index
    %c0_83 = arith.constant 0 : index
    %101 = vector.load %arg9[%c16_82, %c0_83] : memref<36x320xbf16, #tpu.memory_space<vmem>>, vector<4x320xbf16>
    tpu.vector_store %arg9[%c16_82, %c0_83], %100 {strides = array<i32>} : memref<36x320xbf16, #tpu.memory_space<vmem>>, vector<4x320xbf16>,
    %c1_84 = arith.constant 1 : index
    %c0_85 = arith.constant 0 : index
    %c129_86 = arith.constant 129 : index
    %102 = vector.load %arg1[%c1_84, %c0_85, %c129_86] : memref<2x4x640xbf16, #tpu.memory_space<vmem>>, vector<1x4x320xbf16>
    %103 = vector.shape_cast %102 : vector<1x4x320xbf16> to vector<4x320xbf16>
    %c20_87 = arith.constant 20 : index
    %c0_88 = arith.constant 0 : index
    %104 = vector.load %arg9[%c20_87, %c0_88] : memref<36x320xbf16, #tpu.memory_space<vmem>>, vector<4x320xbf16>
    tpu.vector_store %arg9[%c20_87, %c0_88], %103 {strides = array<i32>} : memref<36x320xbf16, #tpu.memory_space<vmem>>, vector<4x320xbf16>,
    %c1_89 = arith.constant 1 : index
    %c0_90 = arith.constant 0 : index
    %c147_91 = arith.constant 147 : index
    %105 = vector.load %arg1[%c1_89, %c0_90, %c147_91] : memref<2x4x640xbf16, #tpu.memory_space<vmem>>, vector<1x4x320xbf16>
    %106 = vector.shape_cast %105 : vector<1x4x320xbf16> to vector<4x320xbf16>
    %c24_92 = arith.constant 24 : index
    %c0_93 = arith.constant 0 : index
    %107 = vector.load %arg9[%c24_92, %c0_93] : memref<36x320xbf16, #tpu.memory_space<vmem>>, vector<4x320xbf16>
    tpu.vector_store %arg9[%c24_92, %c0_93], %106 {strides = array<i32>} : memref<36x320xbf16, #tpu.memory_space<vmem>>, vector<4x320xbf16>,
    %c1_94 = arith.constant 1 : index
    %c0_95 = arith.constant 0 : index
    %c148_96 = arith.constant 148 : index
    %108 = vector.load %arg1[%c1_94, %c0_95, %c148_96] : memref<2x4x640xbf16, #tpu.memory_space<vmem>>, vector<1x4x320xbf16>
    %109 = vector.shape_cast %108 : vector<1x4x320xbf16> to vector<4x320xbf16>
    %c28_97 = arith.constant 28 : index
    %c0_98 = arith.constant 0 : index
    %110 = vector.load %arg9[%c28_97, %c0_98] : memref<36x320xbf16, #tpu.memory_space<vmem>>, vector<4x320xbf16>
    tpu.vector_store %arg9[%c28_97, %c0_98], %109 {strides = array<i32>} : memref<36x320xbf16, #tpu.memory_space<vmem>>, vector<4x320xbf16>,
    %c1_99 = arith.constant 1 : index
    %c0_100 = arith.constant 0 : index
    %c149_101 = arith.constant 149 : index
    %111 = vector.load %arg1[%c1_99, %c0_100, %c149_101] : memref<2x4x640xbf16, #tpu.memory_space<vmem>>, vector<1x4x320xbf16>
    %112 = vector.shape_cast %111 : vector<1x4x320xbf16> to vector<4x320xbf16>
    %c32_102 = arith.constant 32 : index
    %c0_103 = arith.constant 0 : index
    %113 = vector.load %arg9[%c32_102, %c0_103] : memref<36x320xbf16, #tpu.memory_space<vmem>>, vector<4x320xbf16>
    tpu.vector_store %arg9[%c32_102, %c0_103], %112 {strides = array<i32>} : memref<36x320xbf16, #tpu.memory_space<vmem>>, vector<4x320xbf16>,
    %c0_104 = arith.constant 0 : index
    %c0_105 = arith.constant 0 : index
    %114 = vector.load %arg9[%c0_104, %c0_105] : memref<36x320xbf16, #tpu.memory_space<vmem>>, vector<36x320xbf16>
    %cst_106 = arith.constant dense<0.000000e+00> : vector<8x320xf32>
    %115 = tpu.matmul %0, %114, %cst_106 {dimension_numbers = #tpu.dot_dimension_numbers<[1], [0], [0], [1], [0, 0, 1, 1], [], []>} : vector<8x36xbf16>, vector<36x320xbf16>, vector<8x320xf32> -> vector<8x320xf32>
    %116 = vector.broadcast %1 : vector<8x1xf32> to vector<8x320xf32>
    %117 = arith.addf %115, %116 : vector<8x320xf32>
    %118 = vector.broadcast %5 : vector<1x320xf32> to vector<8x320xf32>
    %119 = arith.mulf %117, %118 : vector<8x320xf32>
    %cst_107 = arith.constant dense<0.000000e+00> : vector<8xf32>
    %120 = vector.multi_reduction <add>, %119, %cst_107 [1] : vector<8x320xf32> to vector<8xf32>
    %121 = vector.shape_cast %120 : vector<8xf32> to vector<8x1xf32>
    %122 = arith.mulf %119, %119 : vector<8x320xf32>
    %cst_108 = arith.constant dense<0.000000e+00> : vector<8xf32>
    %123 = vector.multi_reduction <add>, %122, %cst_108 [1] : vector<8x320xf32> to vector<8xf32>
    %124 = vector.shape_cast %123 : vector<8xf32> to vector<8x1xf32>
    %125 = tpu.concatenate %121, %124 in 1 : vector<8x1xf32>, vector<8x1xf32> -> vector<8x2xf32>
    %cst_109 = arith.constant dense<0.000000e+00> : vector<8x2xf32>
    %126 = tpu.matmul %4, %125, %cst_109 {dimension_numbers = #tpu.dot_dimension_numbers<[1], [0], [0], [1], [0, 0, 1, 1], [], []>} : vector<8x8xf32>, vector<8x2xf32>, vector<8x2xf32> -> vector<8x2xf32>
    %cst_110 = arith.constant 3.906250e-03 : f32
    %127 = vector.broadcast %cst_110 : f32 to vector<8x2xf32>
    %128 = arith.mulf %126, %127 : vector<8x2xf32>
    %129 = vector.extract_strided_slice %128 {offsets = [0, 0], sizes = [8, 1], strides = [1, 1]} : vector<8x2xf32> to vector<8x1xf32>
    %130 = vector.extract_strided_slice %128 {offsets = [0, 1], sizes = [8, 1], strides = [1, 1]} : vector<8x2xf32> to vector<8x1xf32>
    %131 = arith.mulf %129, %129 : vector<8x1xf32>
    %132 = arith.subf %130, %131 : vector<8x1xf32>
    %cst_111 = arith.constant 0.000000e+00 : f32
    %133 = vector.broadcast %cst_111 : f32 to vector<8x1xf32>
    %134 = arith.maximumf %132, %133 : vector<8x1xf32>
    %135 = vector.broadcast %129 : vector<8x1xf32> to vector<8x320xf32>
    %136 = arith.subf %117, %135 : vector<8x320xf32>
    %cst_112 = arith.constant 9.99999974E-6 : f32
    %137 = vector.broadcast %cst_112 : f32 to vector<8x1xf32>
    %138 = arith.addf %134, %137 : vector<8x1xf32>
    %139 = math.rsqrt %138 : vector<8x1xf32>
    %140 = vector.broadcast %139 : vector<8x1xf32> to vector<8x320xf32>
    %141 = arith.mulf %136, %140 : vector<8x320xf32>
    %142 = vector.broadcast %2 : vector<8x1xf32> to vector<8x320xf32>
    %143 = arith.mulf %141, %142 : vector<8x320xf32>
    %144 = vector.broadcast %3 : vector<8x1xf32> to vector<8x320xf32>
    %145 = arith.addf %143, %144 : vector<8x320xf32>
    %cst_113 = arith.constant 5.000000e-01 : f32
    %146 = vector.broadcast %cst_113 : f32 to vector<8x320xf32>
    %147 = arith.mulf %146, %145 : vector<8x320xf32>
    %cst_114 = arith.constant 0.707106769 : f32
    %148 = vector.broadcast %cst_114 : f32 to vector<8x320xf32>
    %149 = arith.mulf %145, %148 : vector<8x320xf32>
    %150 = math.erf %149 : vector<8x320xf32>
    %cst_115 = arith.constant 1.000000e+00 : f32
    %151 = vector.broadcast %cst_115 : f32 to vector<8x320xf32>
    %152 = arith.addf %151, %150 : vector<8x320xf32>
    %153 = arith.mulf %147, %152 : vector<8x320xf32>
    %154 = vector.broadcast %5 : vector<1x320xf32> to vector<8x320xf32>
    %155 = arith.mulf %153, %154 : vector<8x320xf32>
    %cst_116 = arith.constant 0.000000e+00 : bf16
    %156 = vector.broadcast %cst_116 : bf16 to vector<8x128xbf16>
    %c1_117 = arith.constant 1 : index
    %c0_118 = arith.constant 0 : index
    %c0_119 = arith.constant 0 : index
    %157 = vector.load %arg8[%c1_117, %c0_118, %c0_119] : memref<2x8x640xbf16, #tpu.memory_space<vmem>>, vector<1x8x128xbf16>
    %158 = vector.shape_cast %157 : vector<1x8x128xbf16> to vector<8x128xbf16>
    %159 = vector.shape_cast %156 : vector<8x128xbf16> to vector<1x8x128xbf16>
    tpu.vector_store %arg8[%c1_117, %c0_118, %c0_119], %159 {strides = array<i32>} : memref<2x8x640xbf16, #tpu.memory_space<vmem>>, vector<1x8x128xbf16>,
    %160 = arith.truncf %155 : vector<8x320xf32> to vector<8x320xbf16>
    %c1_120 = arith.constant 1 : index
    %c0_121 = arith.constant 0 : index
    %c128_122 = arith.constant 128 : index
    %161 = vector.load %arg8[%c1_120, %c0_121, %c128_122] : memref<2x8x640xbf16, #tpu.memory_space<vmem>>, vector<1x8x320xbf16>
    %162 = vector.shape_cast %161 : vector<1x8x320xbf16> to vector<8x320xbf16>
    %163 = vector.shape_cast %160 : vector<8x320xbf16> to vector<1x8x320xbf16>
    tpu.vector_store %arg8[%c1_120, %c0_121, %c128_122], %163 {strides = array<i32>} : memref<2x8x640xbf16, #tpu.memory_space<vmem>>, vector<1x8x320xbf16>,
    %cst_123 = arith.constant 0.000000e+00 : bf16
    %164 = vector.broadcast %cst_123 : bf16 to vector<8x192xbf16>
    %c1_124 = arith.constant 1 : index
    %c0_125 = arith.constant 0 : index
    %c448_126 = arith.constant 448 : index
    %165 = vector.load %arg8[%c1_124, %c0_125, %c448_126] : memref<2x8x640xbf16, #tpu.memory_space<vmem>>, vector<1x8x192xbf16>
    %166 = vector.shape_cast %165 : vector<1x8x192xbf16> to vector<8x192xbf16>
    %167 = vector.shape_cast %164 : vector<8x192xbf16> to vector<1x8x192xbf16>
    tpu.vector_store %arg8[%c1_124, %c0_125, %c448_126], %167 {strides = array<i32>} : memref<2x8x640xbf16, #tpu.memory_space<vmem>>, vector<1x8x192xbf16>,
    return
  }
  func.func @transform_0(%arg0: i32) -> (i32, i32, i32) {
    %c0_i32 = arith.constant 0 : i32
    %c0_i32_0 = arith.constant 0 : i32
    %c0_i32_1 = arith.constant 0 : i32
    return %arg0, %c0_i32, %c0_i32_0 : i32, i32, i32
  }
  func.func @transform_1(%arg0: i32) -> (i32, i32) {
    %c0_i32 = arith.constant 0 : i32
    %c0_i32_0 = arith.constant 0 : i32
    %c0_i32_1 = arith.constant 0 : i32
    return %c0_i32, %c0_i32_0 : i32, i32
  }
  func.func @transform_2(%arg0: i32) -> (i32, i32) {
    %c0_i32 = arith.constant 0 : i32
    %c0_i32_0 = arith.constant 0 : i32
    %c0_i32_1 = arith.constant 0 : i32
    return %c0_i32, %c0_i32_0 : i32, i32
  }
  func.func @transform_3(%arg0: i32) -> (i32, i32) {
    %c0_i32 = arith.constant 0 : i32
    %c0_i32_0 = arith.constant 0 : i32
    %c0_i32_1 = arith.constant 0 : i32
    return %c0_i32, %c0_i32_0 : i32, i32
  }
  func.func @transform_4(%arg0: i32) -> (i32, i32) {
    %c0_i32 = arith.constant 0 : i32
    %c0_i32_0 = arith.constant 0 : i32
    %c0_i32_1 = arith.constant 0 : i32
    return %c0_i32, %c0_i32_0 : i32, i32
  }
  func.func @transform_5(%arg0: i32) -> (i32, i32) {
    %c0_i32 = arith.constant 0 : i32
    %c0_i32_0 = arith.constant 0 : i32
    %c0_i32_1 = arith.constant 0 : i32
    return %c0_i32, %c0_i32_0 : i32, i32
  }
  func.func @transform_6(%arg0: i32) -> (i32, i32) {
    %c0_i32 = arith.constant 0 : i32
    %c0_i32_0 = arith.constant 0 : i32
    %c0_i32_1 = arith.constant 0 : i32
    return %c0_i32, %c0_i32_0 : i32, i32
  }
  func.func @transform_7(%arg0: i32) -> (i32, i32, i32) {
    %c0_i32 = arith.constant 0 : i32
    %c0_i32_0 = arith.constant 0 : i32
    %c0_i32_1 = arith.constant 0 : i32
    return %arg0, %c0_i32, %c0_i32_0 : i32, i32, i32
  }
}

module attributes {stable_mosaic.version = 11 : i64} {
  func.func @_resblock_kernel(%arg0: i32, %arg1: memref<2x8x640xbf16, #tpu.memory_space<vmem>>, %arg2: memref<8x72xbf16, #tpu.memory_space<vmem>>, %arg3: memref<8x1xf32, #tpu.memory_space<vmem>>, %arg4: memref<8x1xf32, #tpu.memory_space<vmem>>, %arg5: memref<8x1xf32, #tpu.memory_space<vmem>>, %arg6: memref<8x72xbf16, #tpu.memory_space<vmem>>, %arg7: memref<8x1xf32, #tpu.memory_space<vmem>>, %arg8: memref<8x1xf32, #tpu.memory_space<vmem>>, %arg9: memref<8x1xf32, #tpu.memory_space<vmem>>, %arg10: memref<8x8xf32, #tpu.memory_space<vmem>>, %arg11: memref<1x320xf32, #tpu.memory_space<vmem>>, %arg12: memref<2x8x640xbf16, #tpu.memory_space<vmem>>, %arg13: memref<8x640xbf16, #tpu.memory_space<vmem>>, %arg14: memref<72x320xbf16, #tpu.memory_space<vmem>>) attributes {dimension_semantics = [#tpu.dimension_semantics<parallel>], iteration_bounds = array<i64: 1>, scalar_prefetch = 0 : i64, scratch_operands = 2 : i64, tpu.core_type = #tpu.core_type<tc>, window_params = [{transform_indices = @transform_0, window_bounds = array<i64: 2, 8, 640>}, {pipeline_mode = #tpu.pipeline_mode<synchronous>, transform_indices = @transform_1, window_bounds = array<i64: 8, 72>}, {pipeline_mode = #tpu.pipeline_mode<synchronous>, transform_indices = @transform_2, window_bounds = array<i64: 8, 1>}, {pipeline_mode = #tpu.pipeline_mode<synchronous>, transform_indices = @transform_3, window_bounds = array<i64: 8, 1>}, {pipeline_mode = #tpu.pipeline_mode<synchronous>, transform_indices = @transform_4, window_bounds = array<i64: 8, 1>}, {pipeline_mode = #tpu.pipeline_mode<synchronous>, transform_indices = @transform_5, window_bounds = array<i64: 8, 72>}, {pipeline_mode = #tpu.pipeline_mode<synchronous>, transform_indices = @transform_6, window_bounds = array<i64: 8, 1>}, {pipeline_mode = #tpu.pipeline_mode<synchronous>, transform_indices = @transform_7, window_bounds = array<i64: 8, 1>}, {pipeline_mode = #tpu.pipeline_mode<synchronous>, transform_indices = @transform_8, window_bounds = array<i64: 8, 1>}, {pipeline_mode = #tpu.pipeline_mode<synchronous>, transform_indices = @transform_9, window_bounds = array<i64: 8, 8>}, {pipeline_mode = #tpu.pipeline_mode<synchronous>, transform_indices = @transform_10, window_bounds = array<i64: 1, 320>}, {transform_indices = @transform_11, window_bounds = array<i64: 2, 8, 640>}]} {
    %c0 = arith.constant 0 : index
    %c0_0 = arith.constant 0 : index
    %0 = vector.load %arg2[%c0, %c0_0] : memref<8x72xbf16, #tpu.memory_space<vmem>>, vector<8x72xbf16>
    %c0_1 = arith.constant 0 : index
    %c0_2 = arith.constant 0 : index
    %1 = vector.load %arg3[%c0_1, %c0_2] : memref<8x1xf32, #tpu.memory_space<vmem>>, vector<8x1xf32>
    %c0_3 = arith.constant 0 : index
    %c0_4 = arith.constant 0 : index
    %2 = vector.load %arg4[%c0_3, %c0_4] : memref<8x1xf32, #tpu.memory_space<vmem>>, vector<8x1xf32>
    %c0_5 = arith.constant 0 : index
    %c0_6 = arith.constant 0 : index
    %3 = vector.load %arg5[%c0_5, %c0_6] : memref<8x1xf32, #tpu.memory_space<vmem>>, vector<8x1xf32>
    %c0_7 = arith.constant 0 : index
    %c0_8 = arith.constant 0 : index
    %4 = vector.load %arg6[%c0_7, %c0_8] : memref<8x72xbf16, #tpu.memory_space<vmem>>, vector<8x72xbf16>
    %c0_9 = arith.constant 0 : index
    %c0_10 = arith.constant 0 : index
    %5 = vector.load %arg7[%c0_9, %c0_10] : memref<8x1xf32, #tpu.memory_space<vmem>>, vector<8x1xf32>
    %c0_11 = arith.constant 0 : index
    %c0_12 = arith.constant 0 : index
    %6 = vector.load %arg8[%c0_11, %c0_12] : memref<8x1xf32, #tpu.memory_space<vmem>>, vector<8x1xf32>
    %c0_13 = arith.constant 0 : index
    %c0_14 = arith.constant 0 : index
    %7 = vector.load %arg9[%c0_13, %c0_14] : memref<8x1xf32, #tpu.memory_space<vmem>>, vector<8x1xf32>
    %c0_15 = arith.constant 0 : index
    %c0_16 = arith.constant 0 : index
    %8 = vector.load %arg10[%c0_15, %c0_16] : memref<8x8xf32, #tpu.memory_space<vmem>>, vector<8x8xf32>
    %c0_17 = arith.constant 0 : index
    %c0_18 = arith.constant 0 : index
    %9 = vector.load %arg11[%c0_17, %c0_18] : memref<1x320xf32, #tpu.memory_space<vmem>>, vector<1x320xf32>
    %cst = arith.constant 0.000000e+00 : bf16
    %10 = vector.broadcast %cst : bf16 to vector<8x128xbf16>
    %c0_19 = arith.constant 0 : index
    %c0_20 = arith.constant 0 : index
    %11 = vector.load %arg13[%c0_19, %c0_20] : memref<8x640xbf16, #tpu.memory_space<vmem>>, vector<8x128xbf16>
    tpu.vector_store %arg13[%c0_19, %c0_20], %10 {strides = array<i32>} : memref<8x640xbf16, #tpu.memory_space<vmem>>, vector<8x128xbf16>,
    %cst_21 = arith.constant 0.000000e+00 : bf16
    %12 = vector.broadcast %cst_21 : bf16 to vector<8x192xbf16>
    %c0_22 = arith.constant 0 : index
    %c448 = arith.constant 448 : index
    %13 = vector.load %arg13[%c0_22, %c448] : memref<8x640xbf16, #tpu.memory_space<vmem>>, vector<8x192xbf16>
    tpu.vector_store %arg13[%c0_22, %c448], %12 {strides = array<i32>} : memref<8x640xbf16, #tpu.memory_space<vmem>>, vector<8x192xbf16>,
    %c0_23 = arith.constant 0 : index
    %c0_24 = arith.constant 0 : index
    %c107 = arith.constant 107 : index
    %14 = vector.load %arg1[%c0_23, %c0_24, %c107] : memref<2x8x640xbf16, #tpu.memory_space<vmem>>, vector<1x8x320xbf16>
    %15 = vector.shape_cast %14 : vector<1x8x320xbf16> to vector<8x320xbf16>
    %c0_25 = arith.constant 0 : index
    %c0_26 = arith.constant 0 : index
    %16 = vector.load %arg14[%c0_25, %c0_26] : memref<72x320xbf16, #tpu.memory_space<vmem>>, vector<8x320xbf16>
    tpu.vector_store %arg14[%c0_25, %c0_26], %15 {strides = array<i32>} : memref<72x320xbf16, #tpu.memory_space<vmem>>, vector<8x320xbf16>,
    %c0_27 = arith.constant 0 : index
    %c0_28 = arith.constant 0 : index
    %c108 = arith.constant 108 : index
    %17 = vector.load %arg1[%c0_27, %c0_28, %c108] : memref<2x8x640xbf16, #tpu.memory_space<vmem>>, vector<1x8x320xbf16>
    %18 = vector.shape_cast %17 : vector<1x8x320xbf16> to vector<8x320xbf16>
    %c8 = arith.constant 8 : index
    %c0_29 = arith.constant 0 : index
    %19 = vector.load %arg14[%c8, %c0_29] : memref<72x320xbf16, #tpu.memory_space<vmem>>, vector<8x320xbf16>
    tpu.vector_store %arg14[%c8, %c0_29], %18 {strides = array<i32>} : memref<72x320xbf16, #tpu.memory_space<vmem>>, vector<8x320xbf16>,
    %c0_30 = arith.constant 0 : index
    %c0_31 = arith.constant 0 : index
    %c109 = arith.constant 109 : index
    %20 = vector.load %arg1[%c0_30, %c0_31, %c109] : memref<2x8x640xbf16, #tpu.memory_space<vmem>>, vector<1x8x320xbf16>
    %21 = vector.shape_cast %20 : vector<1x8x320xbf16> to vector<8x320xbf16>
    %c16 = arith.constant 16 : index
    %c0_32 = arith.constant 0 : index
    %22 = vector.load %arg14[%c16, %c0_32] : memref<72x320xbf16, #tpu.memory_space<vmem>>, vector<8x320xbf16>
    tpu.vector_store %arg14[%c16, %c0_32], %21 {strides = array<i32>} : memref<72x320xbf16, #tpu.memory_space<vmem>>, vector<8x320xbf16>,
    %c0_33 = arith.constant 0 : index
    %c0_34 = arith.constant 0 : index
    %c127 = arith.constant 127 : index
    %23 = vector.load %arg1[%c0_33, %c0_34, %c127] : memref<2x8x640xbf16, #tpu.memory_space<vmem>>, vector<1x8x320xbf16>
    %24 = vector.shape_cast %23 : vector<1x8x320xbf16> to vector<8x320xbf16>
    %c24 = arith.constant 24 : index
    %c0_35 = arith.constant 0 : index
    %25 = vector.load %arg14[%c24, %c0_35] : memref<72x320xbf16, #tpu.memory_space<vmem>>, vector<8x320xbf16>
    tpu.vector_store %arg14[%c24, %c0_35], %24 {strides = array<i32>} : memref<72x320xbf16, #tpu.memory_space<vmem>>, vector<8x320xbf16>,
    %c0_36 = arith.constant 0 : index
    %c0_37 = arith.constant 0 : index
    %c128 = arith.constant 128 : index
    %26 = vector.load %arg1[%c0_36, %c0_37, %c128] : memref<2x8x640xbf16, #tpu.memory_space<vmem>>, vector<1x8x320xbf16>
    %27 = vector.shape_cast %26 : vector<1x8x320xbf16> to vector<8x320xbf16>
    %c32 = arith.constant 32 : index
    %c0_38 = arith.constant 0 : index
    %28 = vector.load %arg14[%c32, %c0_38] : memref<72x320xbf16, #tpu.memory_space<vmem>>, vector<8x320xbf16>
    tpu.vector_store %arg14[%c32, %c0_38], %27 {strides = array<i32>} : memref<72x320xbf16, #tpu.memory_space<vmem>>, vector<8x320xbf16>,
    %c0_39 = arith.constant 0 : index
    %c0_40 = arith.constant 0 : index
    %c129 = arith.constant 129 : index
    %29 = vector.load %arg1[%c0_39, %c0_40, %c129] : memref<2x8x640xbf16, #tpu.memory_space<vmem>>, vector<1x8x320xbf16>
    %30 = vector.shape_cast %29 : vector<1x8x320xbf16> to vector<8x320xbf16>
    %c40 = arith.constant 40 : index
    %c0_41 = arith.constant 0 : index
    %31 = vector.load %arg14[%c40, %c0_41] : memref<72x320xbf16, #tpu.memory_space<vmem>>, vector<8x320xbf16>
    tpu.vector_store %arg14[%c40, %c0_41], %30 {strides = array<i32>} : memref<72x320xbf16, #tpu.memory_space<vmem>>, vector<8x320xbf16>,
    %c0_42 = arith.constant 0 : index
    %c0_43 = arith.constant 0 : index
    %c147 = arith.constant 147 : index
    %32 = vector.load %arg1[%c0_42, %c0_43, %c147] : memref<2x8x640xbf16, #tpu.memory_space<vmem>>, vector<1x8x320xbf16>
    %33 = vector.shape_cast %32 : vector<1x8x320xbf16> to vector<8x320xbf16>
    %c48 = arith.constant 48 : index
    %c0_44 = arith.constant 0 : index
    %34 = vector.load %arg14[%c48, %c0_44] : memref<72x320xbf16, #tpu.memory_space<vmem>>, vector<8x320xbf16>
    tpu.vector_store %arg14[%c48, %c0_44], %33 {strides = array<i32>} : memref<72x320xbf16, #tpu.memory_space<vmem>>, vector<8x320xbf16>,
    %c0_45 = arith.constant 0 : index
    %c0_46 = arith.constant 0 : index
    %c148 = arith.constant 148 : index
    %35 = vector.load %arg1[%c0_45, %c0_46, %c148] : memref<2x8x640xbf16, #tpu.memory_space<vmem>>, vector<1x8x320xbf16>
    %36 = vector.shape_cast %35 : vector<1x8x320xbf16> to vector<8x320xbf16>
    %c56 = arith.constant 56 : index
    %c0_47 = arith.constant 0 : index
    %37 = vector.load %arg14[%c56, %c0_47] : memref<72x320xbf16, #tpu.memory_space<vmem>>, vector<8x320xbf16>
    tpu.vector_store %arg14[%c56, %c0_47], %36 {strides = array<i32>} : memref<72x320xbf16, #tpu.memory_space<vmem>>, vector<8x320xbf16>,
    %c0_48 = arith.constant 0 : index
    %c0_49 = arith.constant 0 : index
    %c149 = arith.constant 149 : index
    %38 = vector.load %arg1[%c0_48, %c0_49, %c149] : memref<2x8x640xbf16, #tpu.memory_space<vmem>>, vector<1x8x320xbf16>
    %39 = vector.shape_cast %38 : vector<1x8x320xbf16> to vector<8x320xbf16>
    %c64 = arith.constant 64 : index
    %c0_50 = arith.constant 0 : index
    %40 = vector.load %arg14[%c64, %c0_50] : memref<72x320xbf16, #tpu.memory_space<vmem>>, vector<8x320xbf16>
    tpu.vector_store %arg14[%c64, %c0_50], %39 {strides = array<i32>} : memref<72x320xbf16, #tpu.memory_space<vmem>>, vector<8x320xbf16>,
    %c0_51 = arith.constant 0 : index
    %c0_52 = arith.constant 0 : index
    %41 = vector.load %arg14[%c0_51, %c0_52] : memref<72x320xbf16, #tpu.memory_space<vmem>>, vector<72x320xbf16>
    %cst_53 = arith.constant dense<0.000000e+00> : vector<8x320xf32>
    %42 = tpu.matmul %0, %41, %cst_53 {dimension_numbers = #tpu.dot_dimension_numbers<[1], [0], [0], [1], [0, 0, 1, 1], [], []>} : vector<8x72xbf16>, vector<72x320xbf16>, vector<8x320xf32> -> vector<8x320xf32>
    %43 = vector.broadcast %1 : vector<8x1xf32> to vector<8x320xf32>
    %44 = arith.addf %42, %43 : vector<8x320xf32>
    %45 = vector.broadcast %9 : vector<1x320xf32> to vector<8x320xf32>
    %46 = arith.mulf %44, %45 : vector<8x320xf32>
    %cst_54 = arith.constant dense<0.000000e+00> : vector<8xf32>
    %47 = vector.multi_reduction <add>, %46, %cst_54 [1] : vector<8x320xf32> to vector<8xf32>
    %48 = vector.shape_cast %47 : vector<8xf32> to vector<8x1xf32>
    %49 = arith.mulf %46, %46 : vector<8x320xf32>
    %cst_55 = arith.constant dense<0.000000e+00> : vector<8xf32>
    %50 = vector.multi_reduction <add>, %49, %cst_55 [1] : vector<8x320xf32> to vector<8xf32>
    %51 = vector.shape_cast %50 : vector<8xf32> to vector<8x1xf32>
    %52 = tpu.concatenate %48, %51 in 1 : vector<8x1xf32>, vector<8x1xf32> -> vector<8x2xf32>
    %cst_56 = arith.constant dense<0.000000e+00> : vector<8x2xf32>
    %53 = tpu.matmul %8, %52, %cst_56 {dimension_numbers = #tpu.dot_dimension_numbers<[1], [0], [0], [1], [0, 0, 1, 1], [], []>} : vector<8x8xf32>, vector<8x2xf32>, vector<8x2xf32> -> vector<8x2xf32>
    %cst_57 = arith.constant 3.906250e-03 : f32
    %54 = vector.broadcast %cst_57 : f32 to vector<8x2xf32>
    %55 = arith.mulf %53, %54 : vector<8x2xf32>
    %56 = vector.extract_strided_slice %55 {offsets = [0, 0], sizes = [8, 1], strides = [1, 1]} : vector<8x2xf32> to vector<8x1xf32>
    %57 = vector.extract_strided_slice %55 {offsets = [0, 1], sizes = [8, 1], strides = [1, 1]} : vector<8x2xf32> to vector<8x1xf32>
    %58 = arith.mulf %56, %56 : vector<8x1xf32>
    %59 = arith.subf %57, %58 : vector<8x1xf32>
    %cst_58 = arith.constant 0.000000e+00 : f32
    %60 = vector.broadcast %cst_58 : f32 to vector<8x1xf32>
    %61 = arith.maximumf %59, %60 : vector<8x1xf32>
    %62 = vector.broadcast %56 : vector<8x1xf32> to vector<8x320xf32>
    %63 = arith.subf %44, %62 : vector<8x320xf32>
    %cst_59 = arith.constant 9.99999974E-6 : f32
    %64 = vector.broadcast %cst_59 : f32 to vector<8x1xf32>
    %65 = arith.addf %61, %64 : vector<8x1xf32>
    %66 = math.rsqrt %65 : vector<8x1xf32>
    %67 = vector.broadcast %66 : vector<8x1xf32> to vector<8x320xf32>
    %68 = arith.mulf %63, %67 : vector<8x320xf32>
    %69 = vector.broadcast %2 : vector<8x1xf32> to vector<8x320xf32>
    %70 = arith.mulf %68, %69 : vector<8x320xf32>
    %71 = vector.broadcast %3 : vector<8x1xf32> to vector<8x320xf32>
    %72 = arith.addf %70, %71 : vector<8x320xf32>
    %cst_60 = arith.constant 5.000000e-01 : f32
    %73 = vector.broadcast %cst_60 : f32 to vector<8x320xf32>
    %74 = arith.mulf %73, %72 : vector<8x320xf32>
    %cst_61 = arith.constant 0.707106769 : f32
    %75 = vector.broadcast %cst_61 : f32 to vector<8x320xf32>
    %76 = arith.mulf %72, %75 : vector<8x320xf32>
    %77 = math.erf %76 : vector<8x320xf32>
    %cst_62 = arith.constant 1.000000e+00 : f32
    %78 = vector.broadcast %cst_62 : f32 to vector<8x320xf32>
    %79 = arith.addf %78, %77 : vector<8x320xf32>
    %80 = arith.mulf %74, %79 : vector<8x320xf32>
    %81 = vector.broadcast %9 : vector<1x320xf32> to vector<8x320xf32>
    %82 = arith.mulf %80, %81 : vector<8x320xf32>
    %83 = arith.truncf %82 : vector<8x320xf32> to vector<8x320xbf16>
    %c0_63 = arith.constant 0 : index
    %c128_64 = arith.constant 128 : index
    %84 = vector.load %arg13[%c0_63, %c128_64] : memref<8x640xbf16, #tpu.memory_space<vmem>>, vector<8x320xbf16>
    tpu.vector_store %arg13[%c0_63, %c128_64], %83 {strides = array<i32>} : memref<8x640xbf16, #tpu.memory_space<vmem>>, vector<8x320xbf16>,
    %c0_65 = arith.constant 0 : index
    %c107_66 = arith.constant 107 : index
    %85 = vector.load %arg13[%c0_65, %c107_66] : memref<8x640xbf16, #tpu.memory_space<vmem>>, vector<8x320xbf16>
    %c0_67 = arith.constant 0 : index
    %c0_68 = arith.constant 0 : index
    %86 = vector.load %arg14[%c0_67, %c0_68] : memref<72x320xbf16, #tpu.memory_space<vmem>>, vector<8x320xbf16>
    tpu.vector_store %arg14[%c0_67, %c0_68], %85 {strides = array<i32>} : memref<72x320xbf16, #tpu.memory_space<vmem>>, vector<8x320xbf16>,
    %c0_69 = arith.constant 0 : index
    %c108_70 = arith.constant 108 : index
    %87 = vector.load %arg13[%c0_69, %c108_70] : memref<8x640xbf16, #tpu.memory_space<vmem>>, vector<8x320xbf16>
    %c8_71 = arith.constant 8 : index
    %c0_72 = arith.constant 0 : index
    %88 = vector.load %arg14[%c8_71, %c0_72] : memref<72x320xbf16, #tpu.memory_space<vmem>>, vector<8x320xbf16>
    tpu.vector_store %arg14[%c8_71, %c0_72], %87 {strides = array<i32>} : memref<72x320xbf16, #tpu.memory_space<vmem>>, vector<8x320xbf16>,
    %c0_73 = arith.constant 0 : index
    %c109_74 = arith.constant 109 : index
    %89 = vector.load %arg13[%c0_73, %c109_74] : memref<8x640xbf16, #tpu.memory_space<vmem>>, vector<8x320xbf16>
    %c16_75 = arith.constant 16 : index
    %c0_76 = arith.constant 0 : index
    %90 = vector.load %arg14[%c16_75, %c0_76] : memref<72x320xbf16, #tpu.memory_space<vmem>>, vector<8x320xbf16>
    tpu.vector_store %arg14[%c16_75, %c0_76], %89 {strides = array<i32>} : memref<72x320xbf16, #tpu.memory_space<vmem>>, vector<8x320xbf16>,
    %c0_77 = arith.constant 0 : index
    %c127_78 = arith.constant 127 : index
    %91 = vector.load %arg13[%c0_77, %c127_78] : memref<8x640xbf16, #tpu.memory_space<vmem>>, vector<8x320xbf16>
    %c24_79 = arith.constant 24 : index
    %c0_80 = arith.constant 0 : index
    %92 = vector.load %arg14[%c24_79, %c0_80] : memref<72x320xbf16, #tpu.memory_space<vmem>>, vector<8x320xbf16>
    tpu.vector_store %arg14[%c24_79, %c0_80], %91 {strides = array<i32>} : memref<72x320xbf16, #tpu.memory_space<vmem>>, vector<8x320xbf16>,
    %c0_81 = arith.constant 0 : index
    %c128_82 = arith.constant 128 : index
    %93 = vector.load %arg13[%c0_81, %c128_82] : memref<8x640xbf16, #tpu.memory_space<vmem>>, vector<8x320xbf16>
    %c32_83 = arith.constant 32 : index
    %c0_84 = arith.constant 0 : index
    %94 = vector.load %arg14[%c32_83, %c0_84] : memref<72x320xbf16, #tpu.memory_space<vmem>>, vector<8x320xbf16>
    tpu.vector_store %arg14[%c32_83, %c0_84], %93 {strides = array<i32>} : memref<72x320xbf16, #tpu.memory_space<vmem>>, vector<8x320xbf16>,
    %c0_85 = arith.constant 0 : index
    %c129_86 = arith.constant 129 : index
    %95 = vector.load %arg13[%c0_85, %c129_86] : memref<8x640xbf16, #tpu.memory_space<vmem>>, vector<8x320xbf16>
    %c40_87 = arith.constant 40 : index
    %c0_88 = arith.constant 0 : index
    %96 = vector.load %arg14[%c40_87, %c0_88] : memref<72x320xbf16, #tpu.memory_space<vmem>>, vector<8x320xbf16>
    tpu.vector_store %arg14[%c40_87, %c0_88], %95 {strides = array<i32>} : memref<72x320xbf16, #tpu.memory_space<vmem>>, vector<8x320xbf16>,
    %c0_89 = arith.constant 0 : index
    %c147_90 = arith.constant 147 : index
    %97 = vector.load %arg13[%c0_89, %c147_90] : memref<8x640xbf16, #tpu.memory_space<vmem>>, vector<8x320xbf16>
    %c48_91 = arith.constant 48 : index
    %c0_92 = arith.constant 0 : index
    %98 = vector.load %arg14[%c48_91, %c0_92] : memref<72x320xbf16, #tpu.memory_space<vmem>>, vector<8x320xbf16>
    tpu.vector_store %arg14[%c48_91, %c0_92], %97 {strides = array<i32>} : memref<72x320xbf16, #tpu.memory_space<vmem>>, vector<8x320xbf16>,
    %c0_93 = arith.constant 0 : index
    %c148_94 = arith.constant 148 : index
    %99 = vector.load %arg13[%c0_93, %c148_94] : memref<8x640xbf16, #tpu.memory_space<vmem>>, vector<8x320xbf16>
    %c56_95 = arith.constant 56 : index
    %c0_96 = arith.constant 0 : index
    %100 = vector.load %arg14[%c56_95, %c0_96] : memref<72x320xbf16, #tpu.memory_space<vmem>>, vector<8x320xbf16>
    tpu.vector_store %arg14[%c56_95, %c0_96], %99 {strides = array<i32>} : memref<72x320xbf16, #tpu.memory_space<vmem>>, vector<8x320xbf16>,
    %c0_97 = arith.constant 0 : index
    %c149_98 = arith.constant 149 : index
    %101 = vector.load %arg13[%c0_97, %c149_98] : memref<8x640xbf16, #tpu.memory_space<vmem>>, vector<8x320xbf16>
    %c64_99 = arith.constant 64 : index
    %c0_100 = arith.constant 0 : index
    %102 = vector.load %arg14[%c64_99, %c0_100] : memref<72x320xbf16, #tpu.memory_space<vmem>>, vector<8x320xbf16>
    tpu.vector_store %arg14[%c64_99, %c0_100], %101 {strides = array<i32>} : memref<72x320xbf16, #tpu.memory_space<vmem>>, vector<8x320xbf16>,
    %c0_101 = arith.constant 0 : index
    %c0_102 = arith.constant 0 : index
    %103 = vector.load %arg14[%c0_101, %c0_102] : memref<72x320xbf16, #tpu.memory_space<vmem>>, vector<72x320xbf16>
    %cst_103 = arith.constant dense<0.000000e+00> : vector<8x320xf32>
    %104 = tpu.matmul %4, %103, %cst_103 {dimension_numbers = #tpu.dot_dimension_numbers<[1], [0], [0], [1], [0, 0, 1, 1], [], []>} : vector<8x72xbf16>, vector<72x320xbf16>, vector<8x320xf32> -> vector<8x320xf32>
    %105 = vector.broadcast %5 : vector<8x1xf32> to vector<8x320xf32>
    %106 = arith.addf %104, %105 : vector<8x320xf32>
    %107 = vector.broadcast %9 : vector<1x320xf32> to vector<8x320xf32>
    %108 = arith.mulf %106, %107 : vector<8x320xf32>
    %cst_104 = arith.constant dense<0.000000e+00> : vector<8xf32>
    %109 = vector.multi_reduction <add>, %108, %cst_104 [1] : vector<8x320xf32> to vector<8xf32>
    %110 = vector.shape_cast %109 : vector<8xf32> to vector<8x1xf32>
    %111 = arith.mulf %108, %108 : vector<8x320xf32>
    %cst_105 = arith.constant dense<0.000000e+00> : vector<8xf32>
    %112 = vector.multi_reduction <add>, %111, %cst_105 [1] : vector<8x320xf32> to vector<8xf32>
    %113 = vector.shape_cast %112 : vector<8xf32> to vector<8x1xf32>
    %114 = tpu.concatenate %110, %113 in 1 : vector<8x1xf32>, vector<8x1xf32> -> vector<8x2xf32>
    %cst_106 = arith.constant dense<0.000000e+00> : vector<8x2xf32>
    %115 = tpu.matmul %8, %114, %cst_106 {dimension_numbers = #tpu.dot_dimension_numbers<[1], [0], [0], [1], [0, 0, 1, 1], [], []>} : vector<8x8xf32>, vector<8x2xf32>, vector<8x2xf32> -> vector<8x2xf32>
    %cst_107 = arith.constant 3.906250e-03 : f32
    %116 = vector.broadcast %cst_107 : f32 to vector<8x2xf32>
    %117 = arith.mulf %115, %116 : vector<8x2xf32>
    %118 = vector.extract_strided_slice %117 {offsets = [0, 0], sizes = [8, 1], strides = [1, 1]} : vector<8x2xf32> to vector<8x1xf32>
    %119 = vector.extract_strided_slice %117 {offsets = [0, 1], sizes = [8, 1], strides = [1, 1]} : vector<8x2xf32> to vector<8x1xf32>
    %120 = arith.mulf %118, %118 : vector<8x1xf32>
    %121 = arith.subf %119, %120 : vector<8x1xf32>
    %cst_108 = arith.constant 0.000000e+00 : f32
    %122 = vector.broadcast %cst_108 : f32 to vector<8x1xf32>
    %123 = arith.maximumf %121, %122 : vector<8x1xf32>
    %124 = vector.broadcast %118 : vector<8x1xf32> to vector<8x320xf32>
    %125 = arith.subf %106, %124 : vector<8x320xf32>
    %cst_109 = arith.constant 9.99999974E-6 : f32
    %126 = vector.broadcast %cst_109 : f32 to vector<8x1xf32>
    %127 = arith.addf %123, %126 : vector<8x1xf32>
    %128 = math.rsqrt %127 : vector<8x1xf32>
    %129 = vector.broadcast %128 : vector<8x1xf32> to vector<8x320xf32>
    %130 = arith.mulf %125, %129 : vector<8x320xf32>
    %131 = vector.broadcast %6 : vector<8x1xf32> to vector<8x320xf32>
    %132 = arith.mulf %130, %131 : vector<8x320xf32>
    %133 = vector.broadcast %7 : vector<8x1xf32> to vector<8x320xf32>
    %134 = arith.addf %132, %133 : vector<8x320xf32>
    %cst_110 = arith.constant 5.000000e-01 : f32
    %135 = vector.broadcast %cst_110 : f32 to vector<8x320xf32>
    %136 = arith.mulf %135, %134 : vector<8x320xf32>
    %cst_111 = arith.constant 0.707106769 : f32
    %137 = vector.broadcast %cst_111 : f32 to vector<8x320xf32>
    %138 = arith.mulf %134, %137 : vector<8x320xf32>
    %139 = math.erf %138 : vector<8x320xf32>
    %cst_112 = arith.constant 1.000000e+00 : f32
    %140 = vector.broadcast %cst_112 : f32 to vector<8x320xf32>
    %141 = arith.addf %140, %139 : vector<8x320xf32>
    %142 = arith.mulf %136, %141 : vector<8x320xf32>
    %c0_113 = arith.constant 0 : index
    %c0_114 = arith.constant 0 : index
    %c128_115 = arith.constant 128 : index
    %143 = vector.load %arg1[%c0_113, %c0_114, %c128_115] : memref<2x8x640xbf16, #tpu.memory_space<vmem>>, vector<1x8x320xbf16>
    %144 = vector.shape_cast %143 : vector<1x8x320xbf16> to vector<8x320xbf16>
    %145 = arith.extf %144 : vector<8x320xbf16> to vector<8x320xf32>
    %146 = arith.addf %142, %145 : vector<8x320xf32>
    %147 = vector.broadcast %9 : vector<1x320xf32> to vector<8x320xf32>
    %148 = arith.mulf %146, %147 : vector<8x320xf32>
    %cst_116 = arith.constant 0.000000e+00 : bf16
    %149 = vector.broadcast %cst_116 : bf16 to vector<8x128xbf16>
    %c0_117 = arith.constant 0 : index
    %c0_118 = arith.constant 0 : index
    %c0_119 = arith.constant 0 : index
    %150 = vector.load %arg12[%c0_117, %c0_118, %c0_119] : memref<2x8x640xbf16, #tpu.memory_space<vmem>>, vector<1x8x128xbf16>
    %151 = vector.shape_cast %150 : vector<1x8x128xbf16> to vector<8x128xbf16>
    %152 = vector.shape_cast %149 : vector<8x128xbf16> to vector<1x8x128xbf16>
    tpu.vector_store %arg12[%c0_117, %c0_118, %c0_119], %152 {strides = array<i32>} : memref<2x8x640xbf16, #tpu.memory_space<vmem>>, vector<1x8x128xbf16>,
    %153 = arith.truncf %148 : vector<8x320xf32> to vector<8x320xbf16>
    %c0_120 = arith.constant 0 : index
    %c0_121 = arith.constant 0 : index
    %c128_122 = arith.constant 128 : index
    %154 = vector.load %arg12[%c0_120, %c0_121, %c128_122] : memref<2x8x640xbf16, #tpu.memory_space<vmem>>, vector<1x8x320xbf16>
    %155 = vector.shape_cast %154 : vector<1x8x320xbf16> to vector<8x320xbf16>
    %156 = vector.shape_cast %153 : vector<8x320xbf16> to vector<1x8x320xbf16>
    tpu.vector_store %arg12[%c0_120, %c0_121, %c128_122], %156 {strides = array<i32>} : memref<2x8x640xbf16, #tpu.memory_space<vmem>>, vector<1x8x320xbf16>,
    %cst_123 = arith.constant 0.000000e+00 : bf16
    %157 = vector.broadcast %cst_123 : bf16 to vector<8x192xbf16>
    %c0_124 = arith.constant 0 : index
    %c0_125 = arith.constant 0 : index
    %c448_126 = arith.constant 448 : index
    %158 = vector.load %arg12[%c0_124, %c0_125, %c448_126] : memref<2x8x640xbf16, #tpu.memory_space<vmem>>, vector<1x8x192xbf16>
    %159 = vector.shape_cast %158 : vector<1x8x192xbf16> to vector<8x192xbf16>
    %160 = vector.shape_cast %157 : vector<8x192xbf16> to vector<1x8x192xbf16>
    tpu.vector_store %arg12[%c0_124, %c0_125, %c448_126], %160 {strides = array<i32>} : memref<2x8x640xbf16, #tpu.memory_space<vmem>>, vector<1x8x192xbf16>,
    %c1 = arith.constant 1 : index
    %c0_127 = arith.constant 0 : index
    %c107_128 = arith.constant 107 : index
    %161 = vector.load %arg1[%c1, %c0_127, %c107_128] : memref<2x8x640xbf16, #tpu.memory_space<vmem>>, vector<1x8x320xbf16>
    %162 = vector.shape_cast %161 : vector<1x8x320xbf16> to vector<8x320xbf16>
    %c0_129 = arith.constant 0 : index
    %c0_130 = arith.constant 0 : index
    %163 = vector.load %arg14[%c0_129, %c0_130] : memref<72x320xbf16, #tpu.memory_space<vmem>>, vector<8x320xbf16>
    tpu.vector_store %arg14[%c0_129, %c0_130], %162 {strides = array<i32>} : memref<72x320xbf16, #tpu.memory_space<vmem>>, vector<8x320xbf16>,
    %c1_131 = arith.constant 1 : index
    %c0_132 = arith.constant 0 : index
    %c108_133 = arith.constant 108 : index
    %164 = vector.load %arg1[%c1_131, %c0_132, %c108_133] : memref<2x8x640xbf16, #tpu.memory_space<vmem>>, vector<1x8x320xbf16>
    %165 = vector.shape_cast %164 : vector<1x8x320xbf16> to vector<8x320xbf16>
    %c8_134 = arith.constant 8 : index
    %c0_135 = arith.constant 0 : index
    %166 = vector.load %arg14[%c8_134, %c0_135] : memref<72x320xbf16, #tpu.memory_space<vmem>>, vector<8x320xbf16>
    tpu.vector_store %arg14[%c8_134, %c0_135], %165 {strides = array<i32>} : memref<72x320xbf16, #tpu.memory_space<vmem>>, vector<8x320xbf16>,
    %c1_136 = arith.constant 1 : index
    %c0_137 = arith.constant 0 : index
    %c109_138 = arith.constant 109 : index
    %167 = vector.load %arg1[%c1_136, %c0_137, %c109_138] : memref<2x8x640xbf16, #tpu.memory_space<vmem>>, vector<1x8x320xbf16>
    %168 = vector.shape_cast %167 : vector<1x8x320xbf16> to vector<8x320xbf16>
    %c16_139 = arith.constant 16 : index
    %c0_140 = arith.constant 0 : index
    %169 = vector.load %arg14[%c16_139, %c0_140] : memref<72x320xbf16, #tpu.memory_space<vmem>>, vector<8x320xbf16>
    tpu.vector_store %arg14[%c16_139, %c0_140], %168 {strides = array<i32>} : memref<72x320xbf16, #tpu.memory_space<vmem>>, vector<8x320xbf16>,
    %c1_141 = arith.constant 1 : index
    %c0_142 = arith.constant 0 : index
    %c127_143 = arith.constant 127 : index
    %170 = vector.load %arg1[%c1_141, %c0_142, %c127_143] : memref<2x8x640xbf16, #tpu.memory_space<vmem>>, vector<1x8x320xbf16>
    %171 = vector.shape_cast %170 : vector<1x8x320xbf16> to vector<8x320xbf16>
    %c24_144 = arith.constant 24 : index
    %c0_145 = arith.constant 0 : index
    %172 = vector.load %arg14[%c24_144, %c0_145] : memref<72x320xbf16, #tpu.memory_space<vmem>>, vector<8x320xbf16>
    tpu.vector_store %arg14[%c24_144, %c0_145], %171 {strides = array<i32>} : memref<72x320xbf16, #tpu.memory_space<vmem>>, vector<8x320xbf16>,
    %c1_146 = arith.constant 1 : index
    %c0_147 = arith.constant 0 : index
    %c128_148 = arith.constant 128 : index
    %173 = vector.load %arg1[%c1_146, %c0_147, %c128_148] : memref<2x8x640xbf16, #tpu.memory_space<vmem>>, vector<1x8x320xbf16>
    %174 = vector.shape_cast %173 : vector<1x8x320xbf16> to vector<8x320xbf16>
    %c32_149 = arith.constant 32 : index
    %c0_150 = arith.constant 0 : index
    %175 = vector.load %arg14[%c32_149, %c0_150] : memref<72x320xbf16, #tpu.memory_space<vmem>>, vector<8x320xbf16>
    tpu.vector_store %arg14[%c32_149, %c0_150], %174 {strides = array<i32>} : memref<72x320xbf16, #tpu.memory_space<vmem>>, vector<8x320xbf16>,
    %c1_151 = arith.constant 1 : index
    %c0_152 = arith.constant 0 : index
    %c129_153 = arith.constant 129 : index
    %176 = vector.load %arg1[%c1_151, %c0_152, %c129_153] : memref<2x8x640xbf16, #tpu.memory_space<vmem>>, vector<1x8x320xbf16>
    %177 = vector.shape_cast %176 : vector<1x8x320xbf16> to vector<8x320xbf16>
    %c40_154 = arith.constant 40 : index
    %c0_155 = arith.constant 0 : index
    %178 = vector.load %arg14[%c40_154, %c0_155] : memref<72x320xbf16, #tpu.memory_space<vmem>>, vector<8x320xbf16>
    tpu.vector_store %arg14[%c40_154, %c0_155], %177 {strides = array<i32>} : memref<72x320xbf16, #tpu.memory_space<vmem>>, vector<8x320xbf16>,
    %c1_156 = arith.constant 1 : index
    %c0_157 = arith.constant 0 : index
    %c147_158 = arith.constant 147 : index
    %179 = vector.load %arg1[%c1_156, %c0_157, %c147_158] : memref<2x8x640xbf16, #tpu.memory_space<vmem>>, vector<1x8x320xbf16>
    %180 = vector.shape_cast %179 : vector<1x8x320xbf16> to vector<8x320xbf16>
    %c48_159 = arith.constant 48 : index
    %c0_160 = arith.constant 0 : index
    %181 = vector.load %arg14[%c48_159, %c0_160] : memref<72x320xbf16, #tpu.memory_space<vmem>>, vector<8x320xbf16>
    tpu.vector_store %arg14[%c48_159, %c0_160], %180 {strides = array<i32>} : memref<72x320xbf16, #tpu.memory_space<vmem>>, vector<8x320xbf16>,
    %c1_161 = arith.constant 1 : index
    %c0_162 = arith.constant 0 : index
    %c148_163 = arith.constant 148 : index
    %182 = vector.load %arg1[%c1_161, %c0_162, %c148_163] : memref<2x8x640xbf16, #tpu.memory_space<vmem>>, vector<1x8x320xbf16>
    %183 = vector.shape_cast %182 : vector<1x8x320xbf16> to vector<8x320xbf16>
    %c56_164 = arith.constant 56 : index
    %c0_165 = arith.constant 0 : index
    %184 = vector.load %arg14[%c56_164, %c0_165] : memref<72x320xbf16, #tpu.memory_space<vmem>>, vector<8x320xbf16>
    tpu.vector_store %arg14[%c56_164, %c0_165], %183 {strides = array<i32>} : memref<72x320xbf16, #tpu.memory_space<vmem>>, vector<8x320xbf16>,
    %c1_166 = arith.constant 1 : index
    %c0_167 = arith.constant 0 : index
    %c149_168 = arith.constant 149 : index
    %185 = vector.load %arg1[%c1_166, %c0_167, %c149_168] : memref<2x8x640xbf16, #tpu.memory_space<vmem>>, vector<1x8x320xbf16>
    %186 = vector.shape_cast %185 : vector<1x8x320xbf16> to vector<8x320xbf16>
    %c64_169 = arith.constant 64 : index
    %c0_170 = arith.constant 0 : index
    %187 = vector.load %arg14[%c64_169, %c0_170] : memref<72x320xbf16, #tpu.memory_space<vmem>>, vector<8x320xbf16>
    tpu.vector_store %arg14[%c64_169, %c0_170], %186 {strides = array<i32>} : memref<72x320xbf16, #tpu.memory_space<vmem>>, vector<8x320xbf16>,
    %c0_171 = arith.constant 0 : index
    %c0_172 = arith.constant 0 : index
    %188 = vector.load %arg14[%c0_171, %c0_172] : memref<72x320xbf16, #tpu.memory_space<vmem>>, vector<72x320xbf16>
    %cst_173 = arith.constant dense<0.000000e+00> : vector<8x320xf32>
    %189 = tpu.matmul %0, %188, %cst_173 {dimension_numbers = #tpu.dot_dimension_numbers<[1], [0], [0], [1], [0, 0, 1, 1], [], []>} : vector<8x72xbf16>, vector<72x320xbf16>, vector<8x320xf32> -> vector<8x320xf32>
    %190 = vector.broadcast %1 : vector<8x1xf32> to vector<8x320xf32>
    %191 = arith.addf %189, %190 : vector<8x320xf32>
    %192 = vector.broadcast %9 : vector<1x320xf32> to vector<8x320xf32>
    %193 = arith.mulf %191, %192 : vector<8x320xf32>
    %cst_174 = arith.constant dense<0.000000e+00> : vector<8xf32>
    %194 = vector.multi_reduction <add>, %193, %cst_174 [1] : vector<8x320xf32> to vector<8xf32>
    %195 = vector.shape_cast %194 : vector<8xf32> to vector<8x1xf32>
    %196 = arith.mulf %193, %193 : vector<8x320xf32>
    %cst_175 = arith.constant dense<0.000000e+00> : vector<8xf32>
    %197 = vector.multi_reduction <add>, %196, %cst_175 [1] : vector<8x320xf32> to vector<8xf32>
    %198 = vector.shape_cast %197 : vector<8xf32> to vector<8x1xf32>
    %199 = tpu.concatenate %195, %198 in 1 : vector<8x1xf32>, vector<8x1xf32> -> vector<8x2xf32>
    %cst_176 = arith.constant dense<0.000000e+00> : vector<8x2xf32>
    %200 = tpu.matmul %8, %199, %cst_176 {dimension_numbers = #tpu.dot_dimension_numbers<[1], [0], [0], [1], [0, 0, 1, 1], [], []>} : vector<8x8xf32>, vector<8x2xf32>, vector<8x2xf32> -> vector<8x2xf32>
    %cst_177 = arith.constant 3.906250e-03 : f32
    %201 = vector.broadcast %cst_177 : f32 to vector<8x2xf32>
    %202 = arith.mulf %200, %201 : vector<8x2xf32>
    %203 = vector.extract_strided_slice %202 {offsets = [0, 0], sizes = [8, 1], strides = [1, 1]} : vector<8x2xf32> to vector<8x1xf32>
    %204 = vector.extract_strided_slice %202 {offsets = [0, 1], sizes = [8, 1], strides = [1, 1]} : vector<8x2xf32> to vector<8x1xf32>
    %205 = arith.mulf %203, %203 : vector<8x1xf32>
    %206 = arith.subf %204, %205 : vector<8x1xf32>
    %cst_178 = arith.constant 0.000000e+00 : f32
    %207 = vector.broadcast %cst_178 : f32 to vector<8x1xf32>
    %208 = arith.maximumf %206, %207 : vector<8x1xf32>
    %209 = vector.broadcast %203 : vector<8x1xf32> to vector<8x320xf32>
    %210 = arith.subf %191, %209 : vector<8x320xf32>
    %cst_179 = arith.constant 9.99999974E-6 : f32
    %211 = vector.broadcast %cst_179 : f32 to vector<8x1xf32>
    %212 = arith.addf %208, %211 : vector<8x1xf32>
    %213 = math.rsqrt %212 : vector<8x1xf32>
    %214 = vector.broadcast %213 : vector<8x1xf32> to vector<8x320xf32>
    %215 = arith.mulf %210, %214 : vector<8x320xf32>
    %216 = vector.broadcast %2 : vector<8x1xf32> to vector<8x320xf32>
    %217 = arith.mulf %215, %216 : vector<8x320xf32>
    %218 = vector.broadcast %3 : vector<8x1xf32> to vector<8x320xf32>
    %219 = arith.addf %217, %218 : vector<8x320xf32>
    %cst_180 = arith.constant 5.000000e-01 : f32
    %220 = vector.broadcast %cst_180 : f32 to vector<8x320xf32>
    %221 = arith.mulf %220, %219 : vector<8x320xf32>
    %cst_181 = arith.constant 0.707106769 : f32
    %222 = vector.broadcast %cst_181 : f32 to vector<8x320xf32>
    %223 = arith.mulf %219, %222 : vector<8x320xf32>
    %224 = math.erf %223 : vector<8x320xf32>
    %cst_182 = arith.constant 1.000000e+00 : f32
    %225 = vector.broadcast %cst_182 : f32 to vector<8x320xf32>
    %226 = arith.addf %225, %224 : vector<8x320xf32>
    %227 = arith.mulf %221, %226 : vector<8x320xf32>
    %228 = vector.broadcast %9 : vector<1x320xf32> to vector<8x320xf32>
    %229 = arith.mulf %227, %228 : vector<8x320xf32>
    %230 = arith.truncf %229 : vector<8x320xf32> to vector<8x320xbf16>
    %c0_183 = arith.constant 0 : index
    %c128_184 = arith.constant 128 : index
    %231 = vector.load %arg13[%c0_183, %c128_184] : memref<8x640xbf16, #tpu.memory_space<vmem>>, vector<8x320xbf16>
    tpu.vector_store %arg13[%c0_183, %c128_184], %230 {strides = array<i32>} : memref<8x640xbf16, #tpu.memory_space<vmem>>, vector<8x320xbf16>,
    %c0_185 = arith.constant 0 : index
    %c107_186 = arith.constant 107 : index
    %232 = vector.load %arg13[%c0_185, %c107_186] : memref<8x640xbf16, #tpu.memory_space<vmem>>, vector<8x320xbf16>
    %c0_187 = arith.constant 0 : index
    %c0_188 = arith.constant 0 : index
    %233 = vector.load %arg14[%c0_187, %c0_188] : memref<72x320xbf16, #tpu.memory_space<vmem>>, vector<8x320xbf16>
    tpu.vector_store %arg14[%c0_187, %c0_188], %232 {strides = array<i32>} : memref<72x320xbf16, #tpu.memory_space<vmem>>, vector<8x320xbf16>,
    %c0_189 = arith.constant 0 : index
    %c108_190 = arith.constant 108 : index
    %234 = vector.load %arg13[%c0_189, %c108_190] : memref<8x640xbf16, #tpu.memory_space<vmem>>, vector<8x320xbf16>
    %c8_191 = arith.constant 8 : index
    %c0_192 = arith.constant 0 : index
    %235 = vector.load %arg14[%c8_191, %c0_192] : memref<72x320xbf16, #tpu.memory_space<vmem>>, vector<8x320xbf16>
    tpu.vector_store %arg14[%c8_191, %c0_192], %234 {strides = array<i32>} : memref<72x320xbf16, #tpu.memory_space<vmem>>, vector<8x320xbf16>,
    %c0_193 = arith.constant 0 : index
    %c109_194 = arith.constant 109 : index
    %236 = vector.load %arg13[%c0_193, %c109_194] : memref<8x640xbf16, #tpu.memory_space<vmem>>, vector<8x320xbf16>
    %c16_195 = arith.constant 16 : index
    %c0_196 = arith.constant 0 : index
    %237 = vector.load %arg14[%c16_195, %c0_196] : memref<72x320xbf16, #tpu.memory_space<vmem>>, vector<8x320xbf16>
    tpu.vector_store %arg14[%c16_195, %c0_196], %236 {strides = array<i32>} : memref<72x320xbf16, #tpu.memory_space<vmem>>, vector<8x320xbf16>,
    %c0_197 = arith.constant 0 : index
    %c127_198 = arith.constant 127 : index
    %238 = vector.load %arg13[%c0_197, %c127_198] : memref<8x640xbf16, #tpu.memory_space<vmem>>, vector<8x320xbf16>
    %c24_199 = arith.constant 24 : index
    %c0_200 = arith.constant 0 : index
    %239 = vector.load %arg14[%c24_199, %c0_200] : memref<72x320xbf16, #tpu.memory_space<vmem>>, vector<8x320xbf16>
    tpu.vector_store %arg14[%c24_199, %c0_200], %238 {strides = array<i32>} : memref<72x320xbf16, #tpu.memory_space<vmem>>, vector<8x320xbf16>,
    %c0_201 = arith.constant 0 : index
    %c128_202 = arith.constant 128 : index
    %240 = vector.load %arg13[%c0_201, %c128_202] : memref<8x640xbf16, #tpu.memory_space<vmem>>, vector<8x320xbf16>
    %c32_203 = arith.constant 32 : index
    %c0_204 = arith.constant 0 : index
    %241 = vector.load %arg14[%c32_203, %c0_204] : memref<72x320xbf16, #tpu.memory_space<vmem>>, vector<8x320xbf16>
    tpu.vector_store %arg14[%c32_203, %c0_204], %240 {strides = array<i32>} : memref<72x320xbf16, #tpu.memory_space<vmem>>, vector<8x320xbf16>,
    %c0_205 = arith.constant 0 : index
    %c129_206 = arith.constant 129 : index
    %242 = vector.load %arg13[%c0_205, %c129_206] : memref<8x640xbf16, #tpu.memory_space<vmem>>, vector<8x320xbf16>
    %c40_207 = arith.constant 40 : index
    %c0_208 = arith.constant 0 : index
    %243 = vector.load %arg14[%c40_207, %c0_208] : memref<72x320xbf16, #tpu.memory_space<vmem>>, vector<8x320xbf16>
    tpu.vector_store %arg14[%c40_207, %c0_208], %242 {strides = array<i32>} : memref<72x320xbf16, #tpu.memory_space<vmem>>, vector<8x320xbf16>,
    %c0_209 = arith.constant 0 : index
    %c147_210 = arith.constant 147 : index
    %244 = vector.load %arg13[%c0_209, %c147_210] : memref<8x640xbf16, #tpu.memory_space<vmem>>, vector<8x320xbf16>
    %c48_211 = arith.constant 48 : index
    %c0_212 = arith.constant 0 : index
    %245 = vector.load %arg14[%c48_211, %c0_212] : memref<72x320xbf16, #tpu.memory_space<vmem>>, vector<8x320xbf16>
    tpu.vector_store %arg14[%c48_211, %c0_212], %244 {strides = array<i32>} : memref<72x320xbf16, #tpu.memory_space<vmem>>, vector<8x320xbf16>,
    %c0_213 = arith.constant 0 : index
    %c148_214 = arith.constant 148 : index
    %246 = vector.load %arg13[%c0_213, %c148_214] : memref<8x640xbf16, #tpu.memory_space<vmem>>, vector<8x320xbf16>
    %c56_215 = arith.constant 56 : index
    %c0_216 = arith.constant 0 : index
    %247 = vector.load %arg14[%c56_215, %c0_216] : memref<72x320xbf16, #tpu.memory_space<vmem>>, vector<8x320xbf16>
    tpu.vector_store %arg14[%c56_215, %c0_216], %246 {strides = array<i32>} : memref<72x320xbf16, #tpu.memory_space<vmem>>, vector<8x320xbf16>,
    %c0_217 = arith.constant 0 : index
    %c149_218 = arith.constant 149 : index
    %248 = vector.load %arg13[%c0_217, %c149_218] : memref<8x640xbf16, #tpu.memory_space<vmem>>, vector<8x320xbf16>
    %c64_219 = arith.constant 64 : index
    %c0_220 = arith.constant 0 : index
    %249 = vector.load %arg14[%c64_219, %c0_220] : memref<72x320xbf16, #tpu.memory_space<vmem>>, vector<8x320xbf16>
    tpu.vector_store %arg14[%c64_219, %c0_220], %248 {strides = array<i32>} : memref<72x320xbf16, #tpu.memory_space<vmem>>, vector<8x320xbf16>,
    %c0_221 = arith.constant 0 : index
    %c0_222 = arith.constant 0 : index
    %250 = vector.load %arg14[%c0_221, %c0_222] : memref<72x320xbf16, #tpu.memory_space<vmem>>, vector<72x320xbf16>
    %cst_223 = arith.constant dense<0.000000e+00> : vector<8x320xf32>
    %251 = tpu.matmul %4, %250, %cst_223 {dimension_numbers = #tpu.dot_dimension_numbers<[1], [0], [0], [1], [0, 0, 1, 1], [], []>} : vector<8x72xbf16>, vector<72x320xbf16>, vector<8x320xf32> -> vector<8x320xf32>
    %252 = vector.broadcast %5 : vector<8x1xf32> to vector<8x320xf32>
    %253 = arith.addf %251, %252 : vector<8x320xf32>
    %254 = vector.broadcast %9 : vector<1x320xf32> to vector<8x320xf32>
    %255 = arith.mulf %253, %254 : vector<8x320xf32>
    %cst_224 = arith.constant dense<0.000000e+00> : vector<8xf32>
    %256 = vector.multi_reduction <add>, %255, %cst_224 [1] : vector<8x320xf32> to vector<8xf32>
    %257 = vector.shape_cast %256 : vector<8xf32> to vector<8x1xf32>
    %258 = arith.mulf %255, %255 : vector<8x320xf32>
    %cst_225 = arith.constant dense<0.000000e+00> : vector<8xf32>
    %259 = vector.multi_reduction <add>, %258, %cst_225 [1] : vector<8x320xf32> to vector<8xf32>
    %260 = vector.shape_cast %259 : vector<8xf32> to vector<8x1xf32>
    %261 = tpu.concatenate %257, %260 in 1 : vector<8x1xf32>, vector<8x1xf32> -> vector<8x2xf32>
    %cst_226 = arith.constant dense<0.000000e+00> : vector<8x2xf32>
    %262 = tpu.matmul %8, %261, %cst_226 {dimension_numbers = #tpu.dot_dimension_numbers<[1], [0], [0], [1], [0, 0, 1, 1], [], []>} : vector<8x8xf32>, vector<8x2xf32>, vector<8x2xf32> -> vector<8x2xf32>
    %cst_227 = arith.constant 3.906250e-03 : f32
    %263 = vector.broadcast %cst_227 : f32 to vector<8x2xf32>
    %264 = arith.mulf %262, %263 : vector<8x2xf32>
    %265 = vector.extract_strided_slice %264 {offsets = [0, 0], sizes = [8, 1], strides = [1, 1]} : vector<8x2xf32> to vector<8x1xf32>
    %266 = vector.extract_strided_slice %264 {offsets = [0, 1], sizes = [8, 1], strides = [1, 1]} : vector<8x2xf32> to vector<8x1xf32>
    %267 = arith.mulf %265, %265 : vector<8x1xf32>
    %268 = arith.subf %266, %267 : vector<8x1xf32>
    %cst_228 = arith.constant 0.000000e+00 : f32
    %269 = vector.broadcast %cst_228 : f32 to vector<8x1xf32>
    %270 = arith.maximumf %268, %269 : vector<8x1xf32>
    %271 = vector.broadcast %265 : vector<8x1xf32> to vector<8x320xf32>
    %272 = arith.subf %253, %271 : vector<8x320xf32>
    %cst_229 = arith.constant 9.99999974E-6 : f32
    %273 = vector.broadcast %cst_229 : f32 to vector<8x1xf32>
    %274 = arith.addf %270, %273 : vector<8x1xf32>
    %275 = math.rsqrt %274 : vector<8x1xf32>
    %276 = vector.broadcast %275 : vector<8x1xf32> to vector<8x320xf32>
    %277 = arith.mulf %272, %276 : vector<8x320xf32>
    %278 = vector.broadcast %6 : vector<8x1xf32> to vector<8x320xf32>
    %279 = arith.mulf %277, %278 : vector<8x320xf32>
    %280 = vector.broadcast %7 : vector<8x1xf32> to vector<8x320xf32>
    %281 = arith.addf %279, %280 : vector<8x320xf32>
    %cst_230 = arith.constant 5.000000e-01 : f32
    %282 = vector.broadcast %cst_230 : f32 to vector<8x320xf32>
    %283 = arith.mulf %282, %281 : vector<8x320xf32>
    %cst_231 = arith.constant 0.707106769 : f32
    %284 = vector.broadcast %cst_231 : f32 to vector<8x320xf32>
    %285 = arith.mulf %281, %284 : vector<8x320xf32>
    %286 = math.erf %285 : vector<8x320xf32>
    %cst_232 = arith.constant 1.000000e+00 : f32
    %287 = vector.broadcast %cst_232 : f32 to vector<8x320xf32>
    %288 = arith.addf %287, %286 : vector<8x320xf32>
    %289 = arith.mulf %283, %288 : vector<8x320xf32>
    %c1_233 = arith.constant 1 : index
    %c0_234 = arith.constant 0 : index
    %c128_235 = arith.constant 128 : index
    %290 = vector.load %arg1[%c1_233, %c0_234, %c128_235] : memref<2x8x640xbf16, #tpu.memory_space<vmem>>, vector<1x8x320xbf16>
    %291 = vector.shape_cast %290 : vector<1x8x320xbf16> to vector<8x320xbf16>
    %292 = arith.extf %291 : vector<8x320xbf16> to vector<8x320xf32>
    %293 = arith.addf %289, %292 : vector<8x320xf32>
    %294 = vector.broadcast %9 : vector<1x320xf32> to vector<8x320xf32>
    %295 = arith.mulf %293, %294 : vector<8x320xf32>
    %cst_236 = arith.constant 0.000000e+00 : bf16
    %296 = vector.broadcast %cst_236 : bf16 to vector<8x128xbf16>
    %c1_237 = arith.constant 1 : index
    %c0_238 = arith.constant 0 : index
    %c0_239 = arith.constant 0 : index
    %297 = vector.load %arg12[%c1_237, %c0_238, %c0_239] : memref<2x8x640xbf16, #tpu.memory_space<vmem>>, vector<1x8x128xbf16>
    %298 = vector.shape_cast %297 : vector<1x8x128xbf16> to vector<8x128xbf16>
    %299 = vector.shape_cast %296 : vector<8x128xbf16> to vector<1x8x128xbf16>
    tpu.vector_store %arg12[%c1_237, %c0_238, %c0_239], %299 {strides = array<i32>} : memref<2x8x640xbf16, #tpu.memory_space<vmem>>, vector<1x8x128xbf16>,
    %300 = arith.truncf %295 : vector<8x320xf32> to vector<8x320xbf16>
    %c1_240 = arith.constant 1 : index
    %c0_241 = arith.constant 0 : index
    %c128_242 = arith.constant 128 : index
    %301 = vector.load %arg12[%c1_240, %c0_241, %c128_242] : memref<2x8x640xbf16, #tpu.memory_space<vmem>>, vector<1x8x320xbf16>
    %302 = vector.shape_cast %301 : vector<1x8x320xbf16> to vector<8x320xbf16>
    %303 = vector.shape_cast %300 : vector<8x320xbf16> to vector<1x8x320xbf16>
    tpu.vector_store %arg12[%c1_240, %c0_241, %c128_242], %303 {strides = array<i32>} : memref<2x8x640xbf16, #tpu.memory_space<vmem>>, vector<1x8x320xbf16>,
    %cst_243 = arith.constant 0.000000e+00 : bf16
    %304 = vector.broadcast %cst_243 : bf16 to vector<8x192xbf16>
    %c1_244 = arith.constant 1 : index
    %c0_245 = arith.constant 0 : index
    %c448_246 = arith.constant 448 : index
    %305 = vector.load %arg12[%c1_244, %c0_245, %c448_246] : memref<2x8x640xbf16, #tpu.memory_space<vmem>>, vector<1x8x192xbf16>
    %306 = vector.shape_cast %305 : vector<1x8x192xbf16> to vector<8x192xbf16>
    %307 = vector.shape_cast %304 : vector<8x192xbf16> to vector<1x8x192xbf16>
    tpu.vector_store %arg12[%c1_244, %c0_245, %c448_246], %307 {strides = array<i32>} : memref<2x8x640xbf16, #tpu.memory_space<vmem>>, vector<1x8x192xbf16>,
    return
  }
  func.func @transform_0(%arg0: i32) -> (i32, i32, i32) {
    %c0_i32 = arith.constant 0 : i32
    %c0_i32_0 = arith.constant 0 : i32
    %c0_i32_1 = arith.constant 0 : i32
    return %arg0, %c0_i32, %c0_i32_0 : i32, i32, i32
  }
  func.func @transform_1(%arg0: i32) -> (i32, i32) {
    %c0_i32 = arith.constant 0 : i32
    %c0_i32_0 = arith.constant 0 : i32
    %c0_i32_1 = arith.constant 0 : i32
    return %c0_i32, %c0_i32_0 : i32, i32
  }
  func.func @transform_2(%arg0: i32) -> (i32, i32) {
    %c0_i32 = arith.constant 0 : i32
    %c0_i32_0 = arith.constant 0 : i32
    %c0_i32_1 = arith.constant 0 : i32
    return %c0_i32, %c0_i32_0 : i32, i32
  }
  func.func @transform_3(%arg0: i32) -> (i32, i32) {
    %c0_i32 = arith.constant 0 : i32
    %c0_i32_0 = arith.constant 0 : i32
    %c0_i32_1 = arith.constant 0 : i32
    return %c0_i32, %c0_i32_0 : i32, i32
  }
  func.func @transform_4(%arg0: i32) -> (i32, i32) {
    %c0_i32 = arith.constant 0 : i32
    %c0_i32_0 = arith.constant 0 : i32
    %c0_i32_1 = arith.constant 0 : i32
    return %c0_i32, %c0_i32_0 : i32, i32
  }
  func.func @transform_5(%arg0: i32) -> (i32, i32) {
    %c0_i32 = arith.constant 0 : i32
    %c0_i32_0 = arith.constant 0 : i32
    %c0_i32_1 = arith.constant 0 : i32
    return %c0_i32, %c0_i32_0 : i32, i32
  }
  func.func @transform_6(%arg0: i32) -> (i32, i32) {
    %c0_i32 = arith.constant 0 : i32
    %c0_i32_0 = arith.constant 0 : i32
    %c0_i32_1 = arith.constant 0 : i32
    return %c0_i32, %c0_i32_0 : i32, i32
  }
  func.func @transform_7(%arg0: i32) -> (i32, i32) {
    %c0_i32 = arith.constant 0 : i32
    %c0_i32_0 = arith.constant 0 : i32
    %c0_i32_1 = arith.constant 0 : i32
    return %c0_i32, %c0_i32_0 : i32, i32
  }
  func.func @transform_8(%arg0: i32) -> (i32, i32) {
    %c0_i32 = arith.constant 0 : i32
    %c0_i32_0 = arith.constant 0 : i32
    %c0_i32_1 = arith.constant 0 : i32
    return %c0_i32, %c0_i32_0 : i32, i32
  }
  func.func @transform_9(%arg0: i32) -> (i32, i32) {
    %c0_i32 = arith.constant 0 : i32
    %c0_i32_0 = arith.constant 0 : i32
    %c0_i32_1 = arith.constant 0 : i32
    return %c0_i32, %c0_i32_0 : i32, i32
  }
  func.func @transform_10(%arg0: i32) -> (i32, i32) {
    %c0_i32 = arith.constant 0 : i32
    %c0_i32_0 = arith.constant 0 : i32
    %c0_i32_1 = arith.constant 0 : i32
    return %c0_i32, %c0_i32_0 : i32, i32
  }
  func.func @transform_11(%arg0: i32) -> (i32, i32, i32) {
    %c0_i32 = arith.constant 0 : i32
    %c0_i32_0 = arith.constant 0 : i32
    %c0_i32_1 = arith.constant 0 : i32
    return %arg0, %c0_i32, %c0_i32_0 : i32, i32, i32
  }
}

module attributes {stable_mosaic.version = 11 : i64} {
  func.func @_convblock_kernel(%arg0: i32, %arg1: memref<2x8x640xbf16, #tpu.memory_space<vmem>>, %arg2: memref<8x72xbf16, #tpu.memory_space<vmem>>, %arg3: memref<8x1xf32, #tpu.memory_space<vmem>>, %arg4: memref<8x1xf32, #tpu.memory_space<vmem>>, %arg5: memref<8x1xf32, #tpu.memory_space<vmem>>, %arg6: memref<8x8xf32, #tpu.memory_space<vmem>>, %arg7: memref<1x320xf32, #tpu.memory_space<vmem>>, %arg8: memref<2x8x320xbf16, #tpu.memory_space<vmem>>, %arg9: memref<72x320xbf16, #tpu.memory_space<vmem>>) attributes {dimension_semantics = [#tpu.dimension_semantics<parallel>], iteration_bounds = array<i64: 1>, scalar_prefetch = 0 : i64, scratch_operands = 1 : i64, tpu.core_type = #tpu.core_type<tc>, window_params = [{transform_indices = @transform_0, window_bounds = array<i64: 2, 8, 640>}, {pipeline_mode = #tpu.pipeline_mode<synchronous>, transform_indices = @transform_1, window_bounds = array<i64: 8, 72>}, {pipeline_mode = #tpu.pipeline_mode<synchronous>, transform_indices = @transform_2, window_bounds = array<i64: 8, 1>}, {pipeline_mode = #tpu.pipeline_mode<synchronous>, transform_indices = @transform_3, window_bounds = array<i64: 8, 1>}, {pipeline_mode = #tpu.pipeline_mode<synchronous>, transform_indices = @transform_4, window_bounds = array<i64: 8, 1>}, {pipeline_mode = #tpu.pipeline_mode<synchronous>, transform_indices = @transform_5, window_bounds = array<i64: 8, 8>}, {pipeline_mode = #tpu.pipeline_mode<synchronous>, transform_indices = @transform_6, window_bounds = array<i64: 1, 320>}, {transform_indices = @transform_7, window_bounds = array<i64: 2, 8, 320>}]} {
    %c0 = arith.constant 0 : index
    %c0_0 = arith.constant 0 : index
    %0 = vector.load %arg2[%c0, %c0_0] : memref<8x72xbf16, #tpu.memory_space<vmem>>, vector<8x72xbf16>
    %c0_1 = arith.constant 0 : index
    %c0_2 = arith.constant 0 : index
    %1 = vector.load %arg3[%c0_1, %c0_2] : memref<8x1xf32, #tpu.memory_space<vmem>>, vector<8x1xf32>
    %c0_3 = arith.constant 0 : index
    %c0_4 = arith.constant 0 : index
    %2 = vector.load %arg4[%c0_3, %c0_4] : memref<8x1xf32, #tpu.memory_space<vmem>>, vector<8x1xf32>
    %c0_5 = arith.constant 0 : index
    %c0_6 = arith.constant 0 : index
    %3 = vector.load %arg5[%c0_5, %c0_6] : memref<8x1xf32, #tpu.memory_space<vmem>>, vector<8x1xf32>
    %c0_7 = arith.constant 0 : index
    %c0_8 = arith.constant 0 : index
    %4 = vector.load %arg6[%c0_7, %c0_8] : memref<8x8xf32, #tpu.memory_space<vmem>>, vector<8x8xf32>
    %c0_9 = arith.constant 0 : index
    %c0_10 = arith.constant 0 : index
    %5 = vector.load %arg7[%c0_9, %c0_10] : memref<1x320xf32, #tpu.memory_space<vmem>>, vector<1x320xf32>
    %c0_11 = arith.constant 0 : index
    %c0_12 = arith.constant 0 : index
    %c107 = arith.constant 107 : index
    %6 = vector.load %arg1[%c0_11, %c0_12, %c107] : memref<2x8x640xbf16, #tpu.memory_space<vmem>>, vector<1x8x320xbf16>
    %7 = vector.shape_cast %6 : vector<1x8x320xbf16> to vector<8x320xbf16>
    %c0_13 = arith.constant 0 : index
    %c0_14 = arith.constant 0 : index
    %8 = vector.load %arg9[%c0_13, %c0_14] : memref<72x320xbf16, #tpu.memory_space<vmem>>, vector<8x320xbf16>
    tpu.vector_store %arg9[%c0_13, %c0_14], %7 {strides = array<i32>} : memref<72x320xbf16, #tpu.memory_space<vmem>>, vector<8x320xbf16>,
    %c0_15 = arith.constant 0 : index
    %c0_16 = arith.constant 0 : index
    %c108 = arith.constant 108 : index
    %9 = vector.load %arg1[%c0_15, %c0_16, %c108] : memref<2x8x640xbf16, #tpu.memory_space<vmem>>, vector<1x8x320xbf16>
    %10 = vector.shape_cast %9 : vector<1x8x320xbf16> to vector<8x320xbf16>
    %c8 = arith.constant 8 : index
    %c0_17 = arith.constant 0 : index
    %11 = vector.load %arg9[%c8, %c0_17] : memref<72x320xbf16, #tpu.memory_space<vmem>>, vector<8x320xbf16>
    tpu.vector_store %arg9[%c8, %c0_17], %10 {strides = array<i32>} : memref<72x320xbf16, #tpu.memory_space<vmem>>, vector<8x320xbf16>,
    %c0_18 = arith.constant 0 : index
    %c0_19 = arith.constant 0 : index
    %c109 = arith.constant 109 : index
    %12 = vector.load %arg1[%c0_18, %c0_19, %c109] : memref<2x8x640xbf16, #tpu.memory_space<vmem>>, vector<1x8x320xbf16>
    %13 = vector.shape_cast %12 : vector<1x8x320xbf16> to vector<8x320xbf16>
    %c16 = arith.constant 16 : index
    %c0_20 = arith.constant 0 : index
    %14 = vector.load %arg9[%c16, %c0_20] : memref<72x320xbf16, #tpu.memory_space<vmem>>, vector<8x320xbf16>
    tpu.vector_store %arg9[%c16, %c0_20], %13 {strides = array<i32>} : memref<72x320xbf16, #tpu.memory_space<vmem>>, vector<8x320xbf16>,
    %c0_21 = arith.constant 0 : index
    %c0_22 = arith.constant 0 : index
    %c127 = arith.constant 127 : index
    %15 = vector.load %arg1[%c0_21, %c0_22, %c127] : memref<2x8x640xbf16, #tpu.memory_space<vmem>>, vector<1x8x320xbf16>
    %16 = vector.shape_cast %15 : vector<1x8x320xbf16> to vector<8x320xbf16>
    %c24 = arith.constant 24 : index
    %c0_23 = arith.constant 0 : index
    %17 = vector.load %arg9[%c24, %c0_23] : memref<72x320xbf16, #tpu.memory_space<vmem>>, vector<8x320xbf16>
    tpu.vector_store %arg9[%c24, %c0_23], %16 {strides = array<i32>} : memref<72x320xbf16, #tpu.memory_space<vmem>>, vector<8x320xbf16>,
    %c0_24 = arith.constant 0 : index
    %c0_25 = arith.constant 0 : index
    %c128 = arith.constant 128 : index
    %18 = vector.load %arg1[%c0_24, %c0_25, %c128] : memref<2x8x640xbf16, #tpu.memory_space<vmem>>, vector<1x8x320xbf16>
    %19 = vector.shape_cast %18 : vector<1x8x320xbf16> to vector<8x320xbf16>
    %c32 = arith.constant 32 : index
    %c0_26 = arith.constant 0 : index
    %20 = vector.load %arg9[%c32, %c0_26] : memref<72x320xbf16, #tpu.memory_space<vmem>>, vector<8x320xbf16>
    tpu.vector_store %arg9[%c32, %c0_26], %19 {strides = array<i32>} : memref<72x320xbf16, #tpu.memory_space<vmem>>, vector<8x320xbf16>,
    %c0_27 = arith.constant 0 : index
    %c0_28 = arith.constant 0 : index
    %c129 = arith.constant 129 : index
    %21 = vector.load %arg1[%c0_27, %c0_28, %c129] : memref<2x8x640xbf16, #tpu.memory_space<vmem>>, vector<1x8x320xbf16>
    %22 = vector.shape_cast %21 : vector<1x8x320xbf16> to vector<8x320xbf16>
    %c40 = arith.constant 40 : index
    %c0_29 = arith.constant 0 : index
    %23 = vector.load %arg9[%c40, %c0_29] : memref<72x320xbf16, #tpu.memory_space<vmem>>, vector<8x320xbf16>
    tpu.vector_store %arg9[%c40, %c0_29], %22 {strides = array<i32>} : memref<72x320xbf16, #tpu.memory_space<vmem>>, vector<8x320xbf16>,
    %c0_30 = arith.constant 0 : index
    %c0_31 = arith.constant 0 : index
    %c147 = arith.constant 147 : index
    %24 = vector.load %arg1[%c0_30, %c0_31, %c147] : memref<2x8x640xbf16, #tpu.memory_space<vmem>>, vector<1x8x320xbf16>
    %25 = vector.shape_cast %24 : vector<1x8x320xbf16> to vector<8x320xbf16>
    %c48 = arith.constant 48 : index
    %c0_32 = arith.constant 0 : index
    %26 = vector.load %arg9[%c48, %c0_32] : memref<72x320xbf16, #tpu.memory_space<vmem>>, vector<8x320xbf16>
    tpu.vector_store %arg9[%c48, %c0_32], %25 {strides = array<i32>} : memref<72x320xbf16, #tpu.memory_space<vmem>>, vector<8x320xbf16>,
    %c0_33 = arith.constant 0 : index
    %c0_34 = arith.constant 0 : index
    %c148 = arith.constant 148 : index
    %27 = vector.load %arg1[%c0_33, %c0_34, %c148] : memref<2x8x640xbf16, #tpu.memory_space<vmem>>, vector<1x8x320xbf16>
    %28 = vector.shape_cast %27 : vector<1x8x320xbf16> to vector<8x320xbf16>
    %c56 = arith.constant 56 : index
    %c0_35 = arith.constant 0 : index
    %29 = vector.load %arg9[%c56, %c0_35] : memref<72x320xbf16, #tpu.memory_space<vmem>>, vector<8x320xbf16>
    tpu.vector_store %arg9[%c56, %c0_35], %28 {strides = array<i32>} : memref<72x320xbf16, #tpu.memory_space<vmem>>, vector<8x320xbf16>,
    %c0_36 = arith.constant 0 : index
    %c0_37 = arith.constant 0 : index
    %c149 = arith.constant 149 : index
    %30 = vector.load %arg1[%c0_36, %c0_37, %c149] : memref<2x8x640xbf16, #tpu.memory_space<vmem>>, vector<1x8x320xbf16>
    %31 = vector.shape_cast %30 : vector<1x8x320xbf16> to vector<8x320xbf16>
    %c64 = arith.constant 64 : index
    %c0_38 = arith.constant 0 : index
    %32 = vector.load %arg9[%c64, %c0_38] : memref<72x320xbf16, #tpu.memory_space<vmem>>, vector<8x320xbf16>
    tpu.vector_store %arg9[%c64, %c0_38], %31 {strides = array<i32>} : memref<72x320xbf16, #tpu.memory_space<vmem>>, vector<8x320xbf16>,
    %c0_39 = arith.constant 0 : index
    %c0_40 = arith.constant 0 : index
    %33 = vector.load %arg9[%c0_39, %c0_40] : memref<72x320xbf16, #tpu.memory_space<vmem>>, vector<72x320xbf16>
    %cst = arith.constant dense<0.000000e+00> : vector<8x320xf32>
    %34 = tpu.matmul %0, %33, %cst {dimension_numbers = #tpu.dot_dimension_numbers<[1], [0], [0], [1], [0, 0, 1, 1], [], []>} : vector<8x72xbf16>, vector<72x320xbf16>, vector<8x320xf32> -> vector<8x320xf32>
    %35 = vector.broadcast %1 : vector<8x1xf32> to vector<8x320xf32>
    %36 = arith.addf %34, %35 : vector<8x320xf32>
    %37 = vector.broadcast %5 : vector<1x320xf32> to vector<8x320xf32>
    %38 = arith.mulf %36, %37 : vector<8x320xf32>
    %cst_41 = arith.constant dense<0.000000e+00> : vector<8xf32>
    %39 = vector.multi_reduction <add>, %38, %cst_41 [1] : vector<8x320xf32> to vector<8xf32>
    %40 = vector.shape_cast %39 : vector<8xf32> to vector<8x1xf32>
    %41 = arith.mulf %38, %38 : vector<8x320xf32>
    %cst_42 = arith.constant dense<0.000000e+00> : vector<8xf32>
    %42 = vector.multi_reduction <add>, %41, %cst_42 [1] : vector<8x320xf32> to vector<8xf32>
    %43 = vector.shape_cast %42 : vector<8xf32> to vector<8x1xf32>
    %44 = tpu.concatenate %40, %43 in 1 : vector<8x1xf32>, vector<8x1xf32> -> vector<8x2xf32>
    %cst_43 = arith.constant dense<0.000000e+00> : vector<8x2xf32>
    %45 = tpu.matmul %4, %44, %cst_43 {dimension_numbers = #tpu.dot_dimension_numbers<[1], [0], [0], [1], [0, 0, 1, 1], [], []>} : vector<8x8xf32>, vector<8x2xf32>, vector<8x2xf32> -> vector<8x2xf32>
    %cst_44 = arith.constant 1.562500e-02 : f32
    %46 = vector.broadcast %cst_44 : f32 to vector<8x2xf32>
    %47 = arith.mulf %45, %46 : vector<8x2xf32>
    %48 = vector.extract_strided_slice %47 {offsets = [0, 0], sizes = [8, 1], strides = [1, 1]} : vector<8x2xf32> to vector<8x1xf32>
    %49 = vector.extract_strided_slice %47 {offsets = [0, 1], sizes = [8, 1], strides = [1, 1]} : vector<8x2xf32> to vector<8x1xf32>
    %50 = arith.mulf %48, %48 : vector<8x1xf32>
    %51 = arith.subf %49, %50 : vector<8x1xf32>
    %cst_45 = arith.constant 0.000000e+00 : f32
    %52 = vector.broadcast %cst_45 : f32 to vector<8x1xf32>
    %53 = arith.maximumf %51, %52 : vector<8x1xf32>
    %54 = vector.broadcast %48 : vector<8x1xf32> to vector<8x320xf32>
    %55 = arith.subf %36, %54 : vector<8x320xf32>
    %cst_46 = arith.constant 9.99999974E-6 : f32
    %56 = vector.broadcast %cst_46 : f32 to vector<8x1xf32>
    %57 = arith.addf %53, %56 : vector<8x1xf32>
    %58 = math.rsqrt %57 : vector<8x1xf32>
    %59 = vector.broadcast %58 : vector<8x1xf32> to vector<8x320xf32>
    %60 = arith.mulf %55, %59 : vector<8x320xf32>
    %61 = vector.broadcast %2 : vector<8x1xf32> to vector<8x320xf32>
    %62 = arith.mulf %60, %61 : vector<8x320xf32>
    %63 = vector.broadcast %3 : vector<8x1xf32> to vector<8x320xf32>
    %64 = arith.addf %62, %63 : vector<8x320xf32>
    %cst_47 = arith.constant 5.000000e-01 : f32
    %65 = vector.broadcast %cst_47 : f32 to vector<8x320xf32>
    %66 = arith.mulf %65, %64 : vector<8x320xf32>
    %cst_48 = arith.constant 0.707106769 : f32
    %67 = vector.broadcast %cst_48 : f32 to vector<8x320xf32>
    %68 = arith.mulf %64, %67 : vector<8x320xf32>
    %69 = math.erf %68 : vector<8x320xf32>
    %cst_49 = arith.constant 1.000000e+00 : f32
    %70 = vector.broadcast %cst_49 : f32 to vector<8x320xf32>
    %71 = arith.addf %70, %69 : vector<8x320xf32>
    %72 = arith.mulf %66, %71 : vector<8x320xf32>
    %73 = vector.broadcast %5 : vector<1x320xf32> to vector<8x320xf32>
    %74 = arith.mulf %72, %73 : vector<8x320xf32>
    %75 = arith.truncf %74 : vector<8x320xf32> to vector<8x320xbf16>
    %c0_50 = arith.constant 0 : index
    %c0_51 = arith.constant 0 : index
    %c0_52 = arith.constant 0 : index
    %76 = vector.load %arg8[%c0_50, %c0_51, %c0_52] : memref<2x8x320xbf16, #tpu.memory_space<vmem>>, vector<1x8x320xbf16>
    %77 = vector.shape_cast %76 : vector<1x8x320xbf16> to vector<8x320xbf16>
    %78 = vector.shape_cast %75 : vector<8x320xbf16> to vector<1x8x320xbf16>
    tpu.vector_store %arg8[%c0_50, %c0_51, %c0_52], %78 {strides = array<i32>} : memref<2x8x320xbf16, #tpu.memory_space<vmem>>, vector<1x8x320xbf16>,
    %c1 = arith.constant 1 : index
    %c0_53 = arith.constant 0 : index
    %c107_54 = arith.constant 107 : index
    %79 = vector.load %arg1[%c1, %c0_53, %c107_54] : memref<2x8x640xbf16, #tpu.memory_space<vmem>>, vector<1x8x320xbf16>
    %80 = vector.shape_cast %79 : vector<1x8x320xbf16> to vector<8x320xbf16>
    %c0_55 = arith.constant 0 : index
    %c0_56 = arith.constant 0 : index
    %81 = vector.load %arg9[%c0_55, %c0_56] : memref<72x320xbf16, #tpu.memory_space<vmem>>, vector<8x320xbf16>
    tpu.vector_store %arg9[%c0_55, %c0_56], %80 {strides = array<i32>} : memref<72x320xbf16, #tpu.memory_space<vmem>>, vector<8x320xbf16>,
    %c1_57 = arith.constant 1 : index
    %c0_58 = arith.constant 0 : index
    %c108_59 = arith.constant 108 : index
    %82 = vector.load %arg1[%c1_57, %c0_58, %c108_59] : memref<2x8x640xbf16, #tpu.memory_space<vmem>>, vector<1x8x320xbf16>
    %83 = vector.shape_cast %82 : vector<1x8x320xbf16> to vector<8x320xbf16>
    %c8_60 = arith.constant 8 : index
    %c0_61 = arith.constant 0 : index
    %84 = vector.load %arg9[%c8_60, %c0_61] : memref<72x320xbf16, #tpu.memory_space<vmem>>, vector<8x320xbf16>
    tpu.vector_store %arg9[%c8_60, %c0_61], %83 {strides = array<i32>} : memref<72x320xbf16, #tpu.memory_space<vmem>>, vector<8x320xbf16>,
    %c1_62 = arith.constant 1 : index
    %c0_63 = arith.constant 0 : index
    %c109_64 = arith.constant 109 : index
    %85 = vector.load %arg1[%c1_62, %c0_63, %c109_64] : memref<2x8x640xbf16, #tpu.memory_space<vmem>>, vector<1x8x320xbf16>
    %86 = vector.shape_cast %85 : vector<1x8x320xbf16> to vector<8x320xbf16>
    %c16_65 = arith.constant 16 : index
    %c0_66 = arith.constant 0 : index
    %87 = vector.load %arg9[%c16_65, %c0_66] : memref<72x320xbf16, #tpu.memory_space<vmem>>, vector<8x320xbf16>
    tpu.vector_store %arg9[%c16_65, %c0_66], %86 {strides = array<i32>} : memref<72x320xbf16, #tpu.memory_space<vmem>>, vector<8x320xbf16>,
    %c1_67 = arith.constant 1 : index
    %c0_68 = arith.constant 0 : index
    %c127_69 = arith.constant 127 : index
    %88 = vector.load %arg1[%c1_67, %c0_68, %c127_69] : memref<2x8x640xbf16, #tpu.memory_space<vmem>>, vector<1x8x320xbf16>
    %89 = vector.shape_cast %88 : vector<1x8x320xbf16> to vector<8x320xbf16>
    %c24_70 = arith.constant 24 : index
    %c0_71 = arith.constant 0 : index
    %90 = vector.load %arg9[%c24_70, %c0_71] : memref<72x320xbf16, #tpu.memory_space<vmem>>, vector<8x320xbf16>
    tpu.vector_store %arg9[%c24_70, %c0_71], %89 {strides = array<i32>} : memref<72x320xbf16, #tpu.memory_space<vmem>>, vector<8x320xbf16>,
    %c1_72 = arith.constant 1 : index
    %c0_73 = arith.constant 0 : index
    %c128_74 = arith.constant 128 : index
    %91 = vector.load %arg1[%c1_72, %c0_73, %c128_74] : memref<2x8x640xbf16, #tpu.memory_space<vmem>>, vector<1x8x320xbf16>
    %92 = vector.shape_cast %91 : vector<1x8x320xbf16> to vector<8x320xbf16>
    %c32_75 = arith.constant 32 : index
    %c0_76 = arith.constant 0 : index
    %93 = vector.load %arg9[%c32_75, %c0_76] : memref<72x320xbf16, #tpu.memory_space<vmem>>, vector<8x320xbf16>
    tpu.vector_store %arg9[%c32_75, %c0_76], %92 {strides = array<i32>} : memref<72x320xbf16, #tpu.memory_space<vmem>>, vector<8x320xbf16>,
    %c1_77 = arith.constant 1 : index
    %c0_78 = arith.constant 0 : index
    %c129_79 = arith.constant 129 : index
    %94 = vector.load %arg1[%c1_77, %c0_78, %c129_79] : memref<2x8x640xbf16, #tpu.memory_space<vmem>>, vector<1x8x320xbf16>
    %95 = vector.shape_cast %94 : vector<1x8x320xbf16> to vector<8x320xbf16>
    %c40_80 = arith.constant 40 : index
    %c0_81 = arith.constant 0 : index
    %96 = vector.load %arg9[%c40_80, %c0_81] : memref<72x320xbf16, #tpu.memory_space<vmem>>, vector<8x320xbf16>
    tpu.vector_store %arg9[%c40_80, %c0_81], %95 {strides = array<i32>} : memref<72x320xbf16, #tpu.memory_space<vmem>>, vector<8x320xbf16>,
    %c1_82 = arith.constant 1 : index
    %c0_83 = arith.constant 0 : index
    %c147_84 = arith.constant 147 : index
    %97 = vector.load %arg1[%c1_82, %c0_83, %c147_84] : memref<2x8x640xbf16, #tpu.memory_space<vmem>>, vector<1x8x320xbf16>
    %98 = vector.shape_cast %97 : vector<1x8x320xbf16> to vector<8x320xbf16>
    %c48_85 = arith.constant 48 : index
    %c0_86 = arith.constant 0 : index
    %99 = vector.load %arg9[%c48_85, %c0_86] : memref<72x320xbf16, #tpu.memory_space<vmem>>, vector<8x320xbf16>
    tpu.vector_store %arg9[%c48_85, %c0_86], %98 {strides = array<i32>} : memref<72x320xbf16, #tpu.memory_space<vmem>>, vector<8x320xbf16>,
    %c1_87 = arith.constant 1 : index
    %c0_88 = arith.constant 0 : index
    %c148_89 = arith.constant 148 : index
    %100 = vector.load %arg1[%c1_87, %c0_88, %c148_89] : memref<2x8x640xbf16, #tpu.memory_space<vmem>>, vector<1x8x320xbf16>
    %101 = vector.shape_cast %100 : vector<1x8x320xbf16> to vector<8x320xbf16>
    %c56_90 = arith.constant 56 : index
    %c0_91 = arith.constant 0 : index
    %102 = vector.load %arg9[%c56_90, %c0_91] : memref<72x320xbf16, #tpu.memory_space<vmem>>, vector<8x320xbf16>
    tpu.vector_store %arg9[%c56_90, %c0_91], %101 {strides = array<i32>} : memref<72x320xbf16, #tpu.memory_space<vmem>>, vector<8x320xbf16>,
    %c1_92 = arith.constant 1 : index
    %c0_93 = arith.constant 0 : index
    %c149_94 = arith.constant 149 : index
    %103 = vector.load %arg1[%c1_92, %c0_93, %c149_94] : memref<2x8x640xbf16, #tpu.memory_space<vmem>>, vector<1x8x320xbf16>
    %104 = vector.shape_cast %103 : vector<1x8x320xbf16> to vector<8x320xbf16>
    %c64_95 = arith.constant 64 : index
    %c0_96 = arith.constant 0 : index
    %105 = vector.load %arg9[%c64_95, %c0_96] : memref<72x320xbf16, #tpu.memory_space<vmem>>, vector<8x320xbf16>
    tpu.vector_store %arg9[%c64_95, %c0_96], %104 {strides = array<i32>} : memref<72x320xbf16, #tpu.memory_space<vmem>>, vector<8x320xbf16>,
    %c0_97 = arith.constant 0 : index
    %c0_98 = arith.constant 0 : index
    %106 = vector.load %arg9[%c0_97, %c0_98] : memref<72x320xbf16, #tpu.memory_space<vmem>>, vector<72x320xbf16>
    %cst_99 = arith.constant dense<0.000000e+00> : vector<8x320xf32>
    %107 = tpu.matmul %0, %106, %cst_99 {dimension_numbers = #tpu.dot_dimension_numbers<[1], [0], [0], [1], [0, 0, 1, 1], [], []>} : vector<8x72xbf16>, vector<72x320xbf16>, vector<8x320xf32> -> vector<8x320xf32>
    %108 = vector.broadcast %1 : vector<8x1xf32> to vector<8x320xf32>
    %109 = arith.addf %107, %108 : vector<8x320xf32>
    %110 = vector.broadcast %5 : vector<1x320xf32> to vector<8x320xf32>
    %111 = arith.mulf %109, %110 : vector<8x320xf32>
    %cst_100 = arith.constant dense<0.000000e+00> : vector<8xf32>
    %112 = vector.multi_reduction <add>, %111, %cst_100 [1] : vector<8x320xf32> to vector<8xf32>
    %113 = vector.shape_cast %112 : vector<8xf32> to vector<8x1xf32>
    %114 = arith.mulf %111, %111 : vector<8x320xf32>
    %cst_101 = arith.constant dense<0.000000e+00> : vector<8xf32>
    %115 = vector.multi_reduction <add>, %114, %cst_101 [1] : vector<8x320xf32> to vector<8xf32>
    %116 = vector.shape_cast %115 : vector<8xf32> to vector<8x1xf32>
    %117 = tpu.concatenate %113, %116 in 1 : vector<8x1xf32>, vector<8x1xf32> -> vector<8x2xf32>
    %cst_102 = arith.constant dense<0.000000e+00> : vector<8x2xf32>
    %118 = tpu.matmul %4, %117, %cst_102 {dimension_numbers = #tpu.dot_dimension_numbers<[1], [0], [0], [1], [0, 0, 1, 1], [], []>} : vector<8x8xf32>, vector<8x2xf32>, vector<8x2xf32> -> vector<8x2xf32>
    %cst_103 = arith.constant 1.562500e-02 : f32
    %119 = vector.broadcast %cst_103 : f32 to vector<8x2xf32>
    %120 = arith.mulf %118, %119 : vector<8x2xf32>
    %121 = vector.extract_strided_slice %120 {offsets = [0, 0], sizes = [8, 1], strides = [1, 1]} : vector<8x2xf32> to vector<8x1xf32>
    %122 = vector.extract_strided_slice %120 {offsets = [0, 1], sizes = [8, 1], strides = [1, 1]} : vector<8x2xf32> to vector<8x1xf32>
    %123 = arith.mulf %121, %121 : vector<8x1xf32>
    %124 = arith.subf %122, %123 : vector<8x1xf32>
    %cst_104 = arith.constant 0.000000e+00 : f32
    %125 = vector.broadcast %cst_104 : f32 to vector<8x1xf32>
    %126 = arith.maximumf %124, %125 : vector<8x1xf32>
    %127 = vector.broadcast %121 : vector<8x1xf32> to vector<8x320xf32>
    %128 = arith.subf %109, %127 : vector<8x320xf32>
    %cst_105 = arith.constant 9.99999974E-6 : f32
    %129 = vector.broadcast %cst_105 : f32 to vector<8x1xf32>
    %130 = arith.addf %126, %129 : vector<8x1xf32>
    %131 = math.rsqrt %130 : vector<8x1xf32>
    %132 = vector.broadcast %131 : vector<8x1xf32> to vector<8x320xf32>
    %133 = arith.mulf %128, %132 : vector<8x320xf32>
    %134 = vector.broadcast %2 : vector<8x1xf32> to vector<8x320xf32>
    %135 = arith.mulf %133, %134 : vector<8x320xf32>
    %136 = vector.broadcast %3 : vector<8x1xf32> to vector<8x320xf32>
    %137 = arith.addf %135, %136 : vector<8x320xf32>
    %cst_106 = arith.constant 5.000000e-01 : f32
    %138 = vector.broadcast %cst_106 : f32 to vector<8x320xf32>
    %139 = arith.mulf %138, %137 : vector<8x320xf32>
    %cst_107 = arith.constant 0.707106769 : f32
    %140 = vector.broadcast %cst_107 : f32 to vector<8x320xf32>
    %141 = arith.mulf %137, %140 : vector<8x320xf32>
    %142 = math.erf %141 : vector<8x320xf32>
    %cst_108 = arith.constant 1.000000e+00 : f32
    %143 = vector.broadcast %cst_108 : f32 to vector<8x320xf32>
    %144 = arith.addf %143, %142 : vector<8x320xf32>
    %145 = arith.mulf %139, %144 : vector<8x320xf32>
    %146 = vector.broadcast %5 : vector<1x320xf32> to vector<8x320xf32>
    %147 = arith.mulf %145, %146 : vector<8x320xf32>
    %148 = arith.truncf %147 : vector<8x320xf32> to vector<8x320xbf16>
    %c1_109 = arith.constant 1 : index
    %c0_110 = arith.constant 0 : index
    %c0_111 = arith.constant 0 : index
    %149 = vector.load %arg8[%c1_109, %c0_110, %c0_111] : memref<2x8x320xbf16, #tpu.memory_space<vmem>>, vector<1x8x320xbf16>
    %150 = vector.shape_cast %149 : vector<1x8x320xbf16> to vector<8x320xbf16>
    %151 = vector.shape_cast %148 : vector<8x320xbf16> to vector<1x8x320xbf16>
    tpu.vector_store %arg8[%c1_109, %c0_110, %c0_111], %151 {strides = array<i32>} : memref<2x8x320xbf16, #tpu.memory_space<vmem>>, vector<1x8x320xbf16>,
    return
  }
  func.func @transform_0(%arg0: i32) -> (i32, i32, i32) {
    %c0_i32 = arith.constant 0 : i32
    %c0_i32_0 = arith.constant 0 : i32
    %c0_i32_1 = arith.constant 0 : i32
    return %arg0, %c0_i32, %c0_i32_0 : i32, i32, i32
  }
  func.func @transform_1(%arg0: i32) -> (i32, i32) {
    %c0_i32 = arith.constant 0 : i32
    %c0_i32_0 = arith.constant 0 : i32
    %c0_i32_1 = arith.constant 0 : i32
    return %c0_i32, %c0_i32_0 : i32, i32
  }
  func.func @transform_2(%arg0: i32) -> (i32, i32) {
    %c0_i32 = arith.constant 0 : i32
    %c0_i32_0 = arith.constant 0 : i32
    %c0_i32_1 = arith.constant 0 : i32
    return %c0_i32, %c0_i32_0 : i32, i32
  }
  func.func @transform_3(%arg0: i32) -> (i32, i32) {
    %c0_i32 = arith.constant 0 : i32
    %c0_i32_0 = arith.constant 0 : i32
    %c0_i32_1 = arith.constant 0 : i32
    return %c0_i32, %c0_i32_0 : i32, i32
  }
  func.func @transform_4(%arg0: i32) -> (i32, i32) {
    %c0_i32 = arith.constant 0 : i32
    %c0_i32_0 = arith.constant 0 : i32
    %c0_i32_1 = arith.constant 0 : i32
    return %c0_i32, %c0_i32_0 : i32, i32
  }
  func.func @transform_5(%arg0: i32) -> (i32, i32) {
    %c0_i32 = arith.constant 0 : i32
    %c0_i32_0 = arith.constant 0 : i32
    %c0_i32_1 = arith.constant 0 : i32
    return %c0_i32, %c0_i32_0 : i32, i32
  }
  func.func @transform_6(%arg0: i32) -> (i32, i32) {
    %c0_i32 = arith.constant 0 : i32
    %c0_i32_0 = arith.constant 0 : i32
    %c0_i32_1 = arith.constant 0 : i32
    return %c0_i32, %c0_i32_0 : i32, i32
  }
  func.func @transform_7(%arg0: i32) -> (i32, i32, i32) {
    %c0_i32 = arith.constant 0 : i32
    %c0_i32_0 = arith.constant 0 : i32
    %c0_i32_1 = arith.constant 0 : i32
    return %arg0, %c0_i32, %c0_i32_0 : i32, i32, i32
  }
}

module attributes {stable_mosaic.version = 11 : i64} {
  func.func @_resblock_kernel(%arg0: i32, %arg1: memref<2x8x384xbf16, #tpu.memory_space<vmem>>, %arg2: memref<8x72xbf16, #tpu.memory_space<vmem>>, %arg3: memref<8x1xf32, #tpu.memory_space<vmem>>, %arg4: memref<8x1xf32, #tpu.memory_space<vmem>>, %arg5: memref<8x1xf32, #tpu.memory_space<vmem>>, %arg6: memref<8x72xbf16, #tpu.memory_space<vmem>>, %arg7: memref<8x1xf32, #tpu.memory_space<vmem>>, %arg8: memref<8x1xf32, #tpu.memory_space<vmem>>, %arg9: memref<8x1xf32, #tpu.memory_space<vmem>>, %arg10: memref<8x8xf32, #tpu.memory_space<vmem>>, %arg11: memref<1x96xf32, #tpu.memory_space<vmem>>, %arg12: memref<8x8xbf16, #tpu.memory_space<vmem>>, %arg13: memref<8x1xf32, #tpu.memory_space<vmem>>, %arg14: memref<2x8x96xf32, #tpu.memory_space<vmem>>, %arg15: memref<8x384xbf16, #tpu.memory_space<vmem>>, %arg16: memref<72x96xbf16, #tpu.memory_space<vmem>>) attributes {dimension_semantics = [#tpu.dimension_semantics<parallel>], iteration_bounds = array<i64: 1>, scalar_prefetch = 0 : i64, scratch_operands = 2 : i64, tpu.core_type = #tpu.core_type<tc>, window_params = [{transform_indices = @transform_0, window_bounds = array<i64: 2, 8, 384>}, {pipeline_mode = #tpu.pipeline_mode<synchronous>, transform_indices = @transform_1, window_bounds = array<i64: 8, 72>}, {pipeline_mode = #tpu.pipeline_mode<synchronous>, transform_indices = @transform_2, window_bounds = array<i64: 8, 1>}, {pipeline_mode = #tpu.pipeline_mode<synchronous>, transform_indices = @transform_3, window_bounds = array<i64: 8, 1>}, {pipeline_mode = #tpu.pipeline_mode<synchronous>, transform_indices = @transform_4, window_bounds = array<i64: 8, 1>}, {pipeline_mode = #tpu.pipeline_mode<synchronous>, transform_indices = @transform_5, window_bounds = array<i64: 8, 72>}, {pipeline_mode = #tpu.pipeline_mode<synchronous>, transform_indices = @transform_6, window_bounds = array<i64: 8, 1>}, {pipeline_mode = #tpu.pipeline_mode<synchronous>, transform_indices = @transform_7, window_bounds = array<i64: 8, 1>}, {pipeline_mode = #tpu.pipeline_mode<synchronous>, transform_indices = @transform_8, window_bounds = array<i64: 8, 1>}, {pipeline_mode = #tpu.pipeline_mode<synchronous>, transform_indices = @transform_9, window_bounds = array<i64: 8, 8>}, {pipeline_mode = #tpu.pipeline_mode<synchronous>, transform_indices = @transform_10, window_bounds = array<i64: 1, 96>}, {pipeline_mode = #tpu.pipeline_mode<synchronous>, transform_indices = @transform_11, window_bounds = array<i64: 8, 8>}, {pipeline_mode = #tpu.pipeline_mode<synchronous>, transform_indices = @transform_12, window_bounds = array<i64: 8, 1>}, {transform_indices = @transform_13, window_bounds = array<i64: 2, 8, 96>}]} {
    %c0 = arith.constant 0 : index
    %c0_0 = arith.constant 0 : index
    %0 = vector.load %arg2[%c0, %c0_0] : memref<8x72xbf16, #tpu.memory_space<vmem>>, vector<8x72xbf16>
    %c0_1 = arith.constant 0 : index
    %c0_2 = arith.constant 0 : index
    %1 = vector.load %arg3[%c0_1, %c0_2] : memref<8x1xf32, #tpu.memory_space<vmem>>, vector<8x1xf32>
    %c0_3 = arith.constant 0 : index
    %c0_4 = arith.constant 0 : index
    %2 = vector.load %arg4[%c0_3, %c0_4] : memref<8x1xf32, #tpu.memory_space<vmem>>, vector<8x1xf32>
    %c0_5 = arith.constant 0 : index
    %c0_6 = arith.constant 0 : index
    %3 = vector.load %arg5[%c0_5, %c0_6] : memref<8x1xf32, #tpu.memory_space<vmem>>, vector<8x1xf32>
    %c0_7 = arith.constant 0 : index
    %c0_8 = arith.constant 0 : index
    %4 = vector.load %arg6[%c0_7, %c0_8] : memref<8x72xbf16, #tpu.memory_space<vmem>>, vector<8x72xbf16>
    %c0_9 = arith.constant 0 : index
    %c0_10 = arith.constant 0 : index
    %5 = vector.load %arg7[%c0_9, %c0_10] : memref<8x1xf32, #tpu.memory_space<vmem>>, vector<8x1xf32>
    %c0_11 = arith.constant 0 : index
    %c0_12 = arith.constant 0 : index
    %6 = vector.load %arg8[%c0_11, %c0_12] : memref<8x1xf32, #tpu.memory_space<vmem>>, vector<8x1xf32>
    %c0_13 = arith.constant 0 : index
    %c0_14 = arith.constant 0 : index
    %7 = vector.load %arg9[%c0_13, %c0_14] : memref<8x1xf32, #tpu.memory_space<vmem>>, vector<8x1xf32>
    %c0_15 = arith.constant 0 : index
    %c0_16 = arith.constant 0 : index
    %8 = vector.load %arg10[%c0_15, %c0_16] : memref<8x8xf32, #tpu.memory_space<vmem>>, vector<8x8xf32>
    %c0_17 = arith.constant 0 : index
    %c0_18 = arith.constant 0 : index
    %9 = vector.load %arg11[%c0_17, %c0_18] : memref<1x96xf32, #tpu.memory_space<vmem>>, vector<1x96xf32>
    %c0_19 = arith.constant 0 : index
    %c0_20 = arith.constant 0 : index
    %10 = vector.load %arg12[%c0_19, %c0_20] : memref<8x8xbf16, #tpu.memory_space<vmem>>, vector<8x8xbf16>
    %c0_21 = arith.constant 0 : index
    %c0_22 = arith.constant 0 : index
    %11 = vector.load %arg13[%c0_21, %c0_22] : memref<8x1xf32, #tpu.memory_space<vmem>>, vector<8x1xf32>
    %cst = arith.constant 0.000000e+00 : bf16
    %12 = vector.broadcast %cst : bf16 to vector<8x128xbf16>
    %c0_23 = arith.constant 0 : index
    %c0_24 = arith.constant 0 : index
    %13 = vector.load %arg15[%c0_23, %c0_24] : memref<8x384xbf16, #tpu.memory_space<vmem>>, vector<8x128xbf16>
    tpu.vector_store %arg15[%c0_23, %c0_24], %12 {strides = array<i32>} : memref<8x384xbf16, #tpu.memory_space<vmem>>, vector<8x128xbf16>,
    %cst_25 = arith.constant 0.000000e+00 : bf16
    %14 = vector.broadcast %cst_25 : bf16 to vector<8x160xbf16>
    %c0_26 = arith.constant 0 : index
    %c224 = arith.constant 224 : index
    %15 = vector.load %arg15[%c0_26, %c224] : memref<8x384xbf16, #tpu.memory_space<vmem>>, vector<8x160xbf16>
    tpu.vector_store %arg15[%c0_26, %c224], %14 {strides = array<i32>} : memref<8x384xbf16, #tpu.memory_space<vmem>>, vector<8x160xbf16>,
    %c0_27 = arith.constant 0 : index
    %c0_28 = arith.constant 0 : index
    %c115 = arith.constant 115 : index
    %16 = vector.load %arg1[%c0_27, %c0_28, %c115] : memref<2x8x384xbf16, #tpu.memory_space<vmem>>, vector<1x8x96xbf16>
    %17 = vector.shape_cast %16 : vector<1x8x96xbf16> to vector<8x96xbf16>
    %c0_29 = arith.constant 0 : index
    %c0_30 = arith.constant 0 : index
    %18 = vector.load %arg16[%c0_29, %c0_30] : memref<72x96xbf16, #tpu.memory_space<vmem>>, vector<8x96xbf16>
    tpu.vector_store %arg16[%c0_29, %c0_30], %17 {strides = array<i32>} : memref<72x96xbf16, #tpu.memory_space<vmem>>, vector<8x96xbf16>,
    %c0_31 = arith.constant 0 : index
    %c0_32 = arith.constant 0 : index
    %c116 = arith.constant 116 : index
    %19 = vector.load %arg1[%c0_31, %c0_32, %c116] : memref<2x8x384xbf16, #tpu.memory_space<vmem>>, vector<1x8x96xbf16>
    %20 = vector.shape_cast %19 : vector<1x8x96xbf16> to vector<8x96xbf16>
    %c8 = arith.constant 8 : index
    %c0_33 = arith.constant 0 : index
    %21 = vector.load %arg16[%c8, %c0_33] : memref<72x96xbf16, #tpu.memory_space<vmem>>, vector<8x96xbf16>
    tpu.vector_store %arg16[%c8, %c0_33], %20 {strides = array<i32>} : memref<72x96xbf16, #tpu.memory_space<vmem>>, vector<8x96xbf16>,
    %c0_34 = arith.constant 0 : index
    %c0_35 = arith.constant 0 : index
    %c117 = arith.constant 117 : index
    %22 = vector.load %arg1[%c0_34, %c0_35, %c117] : memref<2x8x384xbf16, #tpu.memory_space<vmem>>, vector<1x8x96xbf16>
    %23 = vector.shape_cast %22 : vector<1x8x96xbf16> to vector<8x96xbf16>
    %c16 = arith.constant 16 : index
    %c0_36 = arith.constant 0 : index
    %24 = vector.load %arg16[%c16, %c0_36] : memref<72x96xbf16, #tpu.memory_space<vmem>>, vector<8x96xbf16>
    tpu.vector_store %arg16[%c16, %c0_36], %23 {strides = array<i32>} : memref<72x96xbf16, #tpu.memory_space<vmem>>, vector<8x96xbf16>,
    %c0_37 = arith.constant 0 : index
    %c0_38 = arith.constant 0 : index
    %c127 = arith.constant 127 : index
    %25 = vector.load %arg1[%c0_37, %c0_38, %c127] : memref<2x8x384xbf16, #tpu.memory_space<vmem>>, vector<1x8x96xbf16>
    %26 = vector.shape_cast %25 : vector<1x8x96xbf16> to vector<8x96xbf16>
    %c24 = arith.constant 24 : index
    %c0_39 = arith.constant 0 : index
    %27 = vector.load %arg16[%c24, %c0_39] : memref<72x96xbf16, #tpu.memory_space<vmem>>, vector<8x96xbf16>
    tpu.vector_store %arg16[%c24, %c0_39], %26 {strides = array<i32>} : memref<72x96xbf16, #tpu.memory_space<vmem>>, vector<8x96xbf16>,
    %c0_40 = arith.constant 0 : index
    %c0_41 = arith.constant 0 : index
    %c128 = arith.constant 128 : index
    %28 = vector.load %arg1[%c0_40, %c0_41, %c128] : memref<2x8x384xbf16, #tpu.memory_space<vmem>>, vector<1x8x96xbf16>
    %29 = vector.shape_cast %28 : vector<1x8x96xbf16> to vector<8x96xbf16>
    %c32 = arith.constant 32 : index
    %c0_42 = arith.constant 0 : index
    %30 = vector.load %arg16[%c32, %c0_42] : memref<72x96xbf16, #tpu.memory_space<vmem>>, vector<8x96xbf16>
    tpu.vector_store %arg16[%c32, %c0_42], %29 {strides = array<i32>} : memref<72x96xbf16, #tpu.memory_space<vmem>>, vector<8x96xbf16>,
    %c0_43 = arith.constant 0 : index
    %c0_44 = arith.constant 0 : index
    %c129 = arith.constant 129 : index
    %31 = vector.load %arg1[%c0_43, %c0_44, %c129] : memref<2x8x384xbf16, #tpu.memory_space<vmem>>, vector<1x8x96xbf16>
    %32 = vector.shape_cast %31 : vector<1x8x96xbf16> to vector<8x96xbf16>
    %c40 = arith.constant 40 : index
    %c0_45 = arith.constant 0 : index
    %33 = vector.load %arg16[%c40, %c0_45] : memref<72x96xbf16, #tpu.memory_space<vmem>>, vector<8x96xbf16>
    tpu.vector_store %arg16[%c40, %c0_45], %32 {strides = array<i32>} : memref<72x96xbf16, #tpu.memory_space<vmem>>, vector<8x96xbf16>,
    %c0_46 = arith.constant 0 : index
    %c0_47 = arith.constant 0 : index
    %c139 = arith.constant 139 : index
    %34 = vector.load %arg1[%c0_46, %c0_47, %c139] : memref<2x8x384xbf16, #tpu.memory_space<vmem>>, vector<1x8x96xbf16>
    %35 = vector.shape_cast %34 : vector<1x8x96xbf16> to vector<8x96xbf16>
    %c48 = arith.constant 48 : index
    %c0_48 = arith.constant 0 : index
    %36 = vector.load %arg16[%c48, %c0_48] : memref<72x96xbf16, #tpu.memory_space<vmem>>, vector<8x96xbf16>
    tpu.vector_store %arg16[%c48, %c0_48], %35 {strides = array<i32>} : memref<72x96xbf16, #tpu.memory_space<vmem>>, vector<8x96xbf16>,
    %c0_49 = arith.constant 0 : index
    %c0_50 = arith.constant 0 : index
    %c140 = arith.constant 140 : index
    %37 = vector.load %arg1[%c0_49, %c0_50, %c140] : memref<2x8x384xbf16, #tpu.memory_space<vmem>>, vector<1x8x96xbf16>
    %38 = vector.shape_cast %37 : vector<1x8x96xbf16> to vector<8x96xbf16>
    %c56 = arith.constant 56 : index
    %c0_51 = arith.constant 0 : index
    %39 = vector.load %arg16[%c56, %c0_51] : memref<72x96xbf16, #tpu.memory_space<vmem>>, vector<8x96xbf16>
    tpu.vector_store %arg16[%c56, %c0_51], %38 {strides = array<i32>} : memref<72x96xbf16, #tpu.memory_space<vmem>>, vector<8x96xbf16>,
    %c0_52 = arith.constant 0 : index
    %c0_53 = arith.constant 0 : index
    %c141 = arith.constant 141 : index
    %40 = vector.load %arg1[%c0_52, %c0_53, %c141] : memref<2x8x384xbf16, #tpu.memory_space<vmem>>, vector<1x8x96xbf16>
    %41 = vector.shape_cast %40 : vector<1x8x96xbf16> to vector<8x96xbf16>
    %c64 = arith.constant 64 : index
    %c0_54 = arith.constant 0 : index
    %42 = vector.load %arg16[%c64, %c0_54] : memref<72x96xbf16, #tpu.memory_space<vmem>>, vector<8x96xbf16>
    tpu.vector_store %arg16[%c64, %c0_54], %41 {strides = array<i32>} : memref<72x96xbf16, #tpu.memory_space<vmem>>, vector<8x96xbf16>,
    %c0_55 = arith.constant 0 : index
    %c0_56 = arith.constant 0 : index
    %43 = vector.load %arg16[%c0_55, %c0_56] : memref<72x96xbf16, #tpu.memory_space<vmem>>, vector<72x96xbf16>
    %cst_57 = arith.constant dense<0.000000e+00> : vector<8x96xf32>
    %44 = tpu.matmul %0, %43, %cst_57 {dimension_numbers = #tpu.dot_dimension_numbers<[1], [0], [0], [1], [0, 0, 1, 1], [], []>} : vector<8x72xbf16>, vector<72x96xbf16>, vector<8x96xf32> -> vector<8x96xf32>
    %45 = vector.broadcast %1 : vector<8x1xf32> to vector<8x96xf32>
    %46 = arith.addf %44, %45 : vector<8x96xf32>
    %47 = vector.broadcast %9 : vector<1x96xf32> to vector<8x96xf32>
    %48 = arith.mulf %46, %47 : vector<8x96xf32>
    %cst_58 = arith.constant dense<0.000000e+00> : vector<8xf32>
    %49 = vector.multi_reduction <add>, %48, %cst_58 [1] : vector<8x96xf32> to vector<8xf32>
    %50 = vector.shape_cast %49 : vector<8xf32> to vector<8x1xf32>
    %51 = arith.mulf %48, %48 : vector<8x96xf32>
    %cst_59 = arith.constant dense<0.000000e+00> : vector<8xf32>
    %52 = vector.multi_reduction <add>, %51, %cst_59 [1] : vector<8x96xf32> to vector<8xf32>
    %53 = vector.shape_cast %52 : vector<8xf32> to vector<8x1xf32>
    %54 = tpu.concatenate %50, %53 in 1 : vector<8x1xf32>, vector<8x1xf32> -> vector<8x2xf32>
    %cst_60 = arith.constant dense<0.000000e+00> : vector<8x2xf32>
    %55 = tpu.matmul %8, %54, %cst_60 {dimension_numbers = #tpu.dot_dimension_numbers<[1], [0], [0], [1], [0, 0, 1, 1], [], []>} : vector<8x8xf32>, vector<8x2xf32>, vector<8x2xf32> -> vector<8x2xf32>
    %cst_61 = arith.constant 1.562500e-02 : f32
    %56 = vector.broadcast %cst_61 : f32 to vector<8x2xf32>
    %57 = arith.mulf %55, %56 : vector<8x2xf32>
    %58 = vector.extract_strided_slice %57 {offsets = [0, 0], sizes = [8, 1], strides = [1, 1]} : vector<8x2xf32> to vector<8x1xf32>
    %59 = vector.extract_strided_slice %57 {offsets = [0, 1], sizes = [8, 1], strides = [1, 1]} : vector<8x2xf32> to vector<8x1xf32>
    %60 = arith.mulf %58, %58 : vector<8x1xf32>
    %61 = arith.subf %59, %60 : vector<8x1xf32>
    %cst_62 = arith.constant 0.000000e+00 : f32
    %62 = vector.broadcast %cst_62 : f32 to vector<8x1xf32>
    %63 = arith.maximumf %61, %62 : vector<8x1xf32>
    %64 = vector.broadcast %58 : vector<8x1xf32> to vector<8x96xf32>
    %65 = arith.subf %46, %64 : vector<8x96xf32>
    %cst_63 = arith.constant 9.99999974E-6 : f32
    %66 = vector.broadcast %cst_63 : f32 to vector<8x1xf32>
    %67 = arith.addf %63, %66 : vector<8x1xf32>
    %68 = math.rsqrt %67 : vector<8x1xf32>
    %69 = vector.broadcast %68 : vector<8x1xf32> to vector<8x96xf32>
    %70 = arith.mulf %65, %69 : vector<8x96xf32>
    %71 = vector.broadcast %2 : vector<8x1xf32> to vector<8x96xf32>
    %72 = arith.mulf %70, %71 : vector<8x96xf32>
    %73 = vector.broadcast %3 : vector<8x1xf32> to vector<8x96xf32>
    %74 = arith.addf %72, %73 : vector<8x96xf32>
    %cst_64 = arith.constant 5.000000e-01 : f32
    %75 = vector.broadcast %cst_64 : f32 to vector<8x96xf32>
    %76 = arith.mulf %75, %74 : vector<8x96xf32>
    %cst_65 = arith.constant 0.707106769 : f32
    %77 = vector.broadcast %cst_65 : f32 to vector<8x96xf32>
    %78 = arith.mulf %74, %77 : vector<8x96xf32>
    %79 = math.erf %78 : vector<8x96xf32>
    %cst_66 = arith.constant 1.000000e+00 : f32
    %80 = vector.broadcast %cst_66 : f32 to vector<8x96xf32>
    %81 = arith.addf %80, %79 : vector<8x96xf32>
    %82 = arith.mulf %76, %81 : vector<8x96xf32>
    %83 = vector.broadcast %9 : vector<1x96xf32> to vector<8x96xf32>
    %84 = arith.mulf %82, %83 : vector<8x96xf32>
    %85 = arith.truncf %84 : vector<8x96xf32> to vector<8x96xbf16>
    %c0_67 = arith.constant 0 : index
    %c128_68 = arith.constant 128 : index
    %86 = vector.load %arg15[%c0_67, %c128_68] : memref<8x384xbf16, #tpu.memory_space<vmem>>, vector<8x96xbf16>
    tpu.vector_store %arg15[%c0_67, %c128_68], %85 {strides = array<i32>} : memref<8x384xbf16, #tpu.memory_space<vmem>>, vector<8x96xbf16>,
    %c0_69 = arith.constant 0 : index
    %c115_70 = arith.constant 115 : index
    %87 = vector.load %arg15[%c0_69, %c115_70] : memref<8x384xbf16, #tpu.memory_space<vmem>>, vector<8x96xbf16>
    %c0_71 = arith.constant 0 : index
    %c0_72 = arith.constant 0 : index
    %88 = vector.load %arg16[%c0_71, %c0_72] : memref<72x96xbf16, #tpu.memory_space<vmem>>, vector<8x96xbf16>
    tpu.vector_store %arg16[%c0_71, %c0_72], %87 {strides = array<i32>} : memref<72x96xbf16, #tpu.memory_space<vmem>>, vector<8x96xbf16>,
    %c0_73 = arith.constant 0 : index
    %c116_74 = arith.constant 116 : index
    %89 = vector.load %arg15[%c0_73, %c116_74] : memref<8x384xbf16, #tpu.memory_space<vmem>>, vector<8x96xbf16>
    %c8_75 = arith.constant 8 : index
    %c0_76 = arith.constant 0 : index
    %90 = vector.load %arg16[%c8_75, %c0_76] : memref<72x96xbf16, #tpu.memory_space<vmem>>, vector<8x96xbf16>
    tpu.vector_store %arg16[%c8_75, %c0_76], %89 {strides = array<i32>} : memref<72x96xbf16, #tpu.memory_space<vmem>>, vector<8x96xbf16>,
    %c0_77 = arith.constant 0 : index
    %c117_78 = arith.constant 117 : index
    %91 = vector.load %arg15[%c0_77, %c117_78] : memref<8x384xbf16, #tpu.memory_space<vmem>>, vector<8x96xbf16>
    %c16_79 = arith.constant 16 : index
    %c0_80 = arith.constant 0 : index
    %92 = vector.load %arg16[%c16_79, %c0_80] : memref<72x96xbf16, #tpu.memory_space<vmem>>, vector<8x96xbf16>
    tpu.vector_store %arg16[%c16_79, %c0_80], %91 {strides = array<i32>} : memref<72x96xbf16, #tpu.memory_space<vmem>>, vector<8x96xbf16>,
    %c0_81 = arith.constant 0 : index
    %c127_82 = arith.constant 127 : index
    %93 = vector.load %arg15[%c0_81, %c127_82] : memref<8x384xbf16, #tpu.memory_space<vmem>>, vector<8x96xbf16>
    %c24_83 = arith.constant 24 : index
    %c0_84 = arith.constant 0 : index
    %94 = vector.load %arg16[%c24_83, %c0_84] : memref<72x96xbf16, #tpu.memory_space<vmem>>, vector<8x96xbf16>
    tpu.vector_store %arg16[%c24_83, %c0_84], %93 {strides = array<i32>} : memref<72x96xbf16, #tpu.memory_space<vmem>>, vector<8x96xbf16>,
    %c0_85 = arith.constant 0 : index
    %c128_86 = arith.constant 128 : index
    %95 = vector.load %arg15[%c0_85, %c128_86] : memref<8x384xbf16, #tpu.memory_space<vmem>>, vector<8x96xbf16>
    %c32_87 = arith.constant 32 : index
    %c0_88 = arith.constant 0 : index
    %96 = vector.load %arg16[%c32_87, %c0_88] : memref<72x96xbf16, #tpu.memory_space<vmem>>, vector<8x96xbf16>
    tpu.vector_store %arg16[%c32_87, %c0_88], %95 {strides = array<i32>} : memref<72x96xbf16, #tpu.memory_space<vmem>>, vector<8x96xbf16>,
    %c0_89 = arith.constant 0 : index
    %c129_90 = arith.constant 129 : index
    %97 = vector.load %arg15[%c0_89, %c129_90] : memref<8x384xbf16, #tpu.memory_space<vmem>>, vector<8x96xbf16>
    %c40_91 = arith.constant 40 : index
    %c0_92 = arith.constant 0 : index
    %98 = vector.load %arg16[%c40_91, %c0_92] : memref<72x96xbf16, #tpu.memory_space<vmem>>, vector<8x96xbf16>
    tpu.vector_store %arg16[%c40_91, %c0_92], %97 {strides = array<i32>} : memref<72x96xbf16, #tpu.memory_space<vmem>>, vector<8x96xbf16>,
    %c0_93 = arith.constant 0 : index
    %c139_94 = arith.constant 139 : index
    %99 = vector.load %arg15[%c0_93, %c139_94] : memref<8x384xbf16, #tpu.memory_space<vmem>>, vector<8x96xbf16>
    %c48_95 = arith.constant 48 : index
    %c0_96 = arith.constant 0 : index
    %100 = vector.load %arg16[%c48_95, %c0_96] : memref<72x96xbf16, #tpu.memory_space<vmem>>, vector<8x96xbf16>
    tpu.vector_store %arg16[%c48_95, %c0_96], %99 {strides = array<i32>} : memref<72x96xbf16, #tpu.memory_space<vmem>>, vector<8x96xbf16>,
    %c0_97 = arith.constant 0 : index
    %c140_98 = arith.constant 140 : index
    %101 = vector.load %arg15[%c0_97, %c140_98] : memref<8x384xbf16, #tpu.memory_space<vmem>>, vector<8x96xbf16>
    %c56_99 = arith.constant 56 : index
    %c0_100 = arith.constant 0 : index
    %102 = vector.load %arg16[%c56_99, %c0_100] : memref<72x96xbf16, #tpu.memory_space<vmem>>, vector<8x96xbf16>
    tpu.vector_store %arg16[%c56_99, %c0_100], %101 {strides = array<i32>} : memref<72x96xbf16, #tpu.memory_space<vmem>>, vector<8x96xbf16>,
    %c0_101 = arith.constant 0 : index
    %c141_102 = arith.constant 141 : index
    %103 = vector.load %arg15[%c0_101, %c141_102] : memref<8x384xbf16, #tpu.memory_space<vmem>>, vector<8x96xbf16>
    %c64_103 = arith.constant 64 : index
    %c0_104 = arith.constant 0 : index
    %104 = vector.load %arg16[%c64_103, %c0_104] : memref<72x96xbf16, #tpu.memory_space<vmem>>, vector<8x96xbf16>
    tpu.vector_store %arg16[%c64_103, %c0_104], %103 {strides = array<i32>} : memref<72x96xbf16, #tpu.memory_space<vmem>>, vector<8x96xbf16>,
    %c0_105 = arith.constant 0 : index
    %c0_106 = arith.constant 0 : index
    %105 = vector.load %arg16[%c0_105, %c0_106] : memref<72x96xbf16, #tpu.memory_space<vmem>>, vector<72x96xbf16>
    %cst_107 = arith.constant dense<0.000000e+00> : vector<8x96xf32>
    %106 = tpu.matmul %4, %105, %cst_107 {dimension_numbers = #tpu.dot_dimension_numbers<[1], [0], [0], [1], [0, 0, 1, 1], [], []>} : vector<8x72xbf16>, vector<72x96xbf16>, vector<8x96xf32> -> vector<8x96xf32>
    %107 = vector.broadcast %5 : vector<8x1xf32> to vector<8x96xf32>
    %108 = arith.addf %106, %107 : vector<8x96xf32>
    %109 = vector.broadcast %9 : vector<1x96xf32> to vector<8x96xf32>
    %110 = arith.mulf %108, %109 : vector<8x96xf32>
    %cst_108 = arith.constant dense<0.000000e+00> : vector<8xf32>
    %111 = vector.multi_reduction <add>, %110, %cst_108 [1] : vector<8x96xf32> to vector<8xf32>
    %112 = vector.shape_cast %111 : vector<8xf32> to vector<8x1xf32>
    %113 = arith.mulf %110, %110 : vector<8x96xf32>
    %cst_109 = arith.constant dense<0.000000e+00> : vector<8xf32>
    %114 = vector.multi_reduction <add>, %113, %cst_109 [1] : vector<8x96xf32> to vector<8xf32>
    %115 = vector.shape_cast %114 : vector<8xf32> to vector<8x1xf32>
    %116 = tpu.concatenate %112, %115 in 1 : vector<8x1xf32>, vector<8x1xf32> -> vector<8x2xf32>
    %cst_110 = arith.constant dense<0.000000e+00> : vector<8x2xf32>
    %117 = tpu.matmul %8, %116, %cst_110 {dimension_numbers = #tpu.dot_dimension_numbers<[1], [0], [0], [1], [0, 0, 1, 1], [], []>} : vector<8x8xf32>, vector<8x2xf32>, vector<8x2xf32> -> vector<8x2xf32>
    %cst_111 = arith.constant 1.562500e-02 : f32
    %118 = vector.broadcast %cst_111 : f32 to vector<8x2xf32>
    %119 = arith.mulf %117, %118 : vector<8x2xf32>
    %120 = vector.extract_strided_slice %119 {offsets = [0, 0], sizes = [8, 1], strides = [1, 1]} : vector<8x2xf32> to vector<8x1xf32>
    %121 = vector.extract_strided_slice %119 {offsets = [0, 1], sizes = [8, 1], strides = [1, 1]} : vector<8x2xf32> to vector<8x1xf32>
    %122 = arith.mulf %120, %120 : vector<8x1xf32>
    %123 = arith.subf %121, %122 : vector<8x1xf32>
    %cst_112 = arith.constant 0.000000e+00 : f32
    %124 = vector.broadcast %cst_112 : f32 to vector<8x1xf32>
    %125 = arith.maximumf %123, %124 : vector<8x1xf32>
    %126 = vector.broadcast %120 : vector<8x1xf32> to vector<8x96xf32>
    %127 = arith.subf %108, %126 : vector<8x96xf32>
    %cst_113 = arith.constant 9.99999974E-6 : f32
    %128 = vector.broadcast %cst_113 : f32 to vector<8x1xf32>
    %129 = arith.addf %125, %128 : vector<8x1xf32>
    %130 = math.rsqrt %129 : vector<8x1xf32>
    %131 = vector.broadcast %130 : vector<8x1xf32> to vector<8x96xf32>
    %132 = arith.mulf %127, %131 : vector<8x96xf32>
    %133 = vector.broadcast %6 : vector<8x1xf32> to vector<8x96xf32>
    %134 = arith.mulf %132, %133 : vector<8x96xf32>
    %135 = vector.broadcast %7 : vector<8x1xf32> to vector<8x96xf32>
    %136 = arith.addf %134, %135 : vector<8x96xf32>
    %cst_114 = arith.constant 5.000000e-01 : f32
    %137 = vector.broadcast %cst_114 : f32 to vector<8x96xf32>
    %138 = arith.mulf %137, %136 : vector<8x96xf32>
    %cst_115 = arith.constant 0.707106769 : f32
    %139 = vector.broadcast %cst_115 : f32 to vector<8x96xf32>
    %140 = arith.mulf %136, %139 : vector<8x96xf32>
    %141 = math.erf %140 : vector<8x96xf32>
    %cst_116 = arith.constant 1.000000e+00 : f32
    %142 = vector.broadcast %cst_116 : f32 to vector<8x96xf32>
    %143 = arith.addf %142, %141 : vector<8x96xf32>
    %144 = arith.mulf %138, %143 : vector<8x96xf32>
    %c0_117 = arith.constant 0 : index
    %c0_118 = arith.constant 0 : index
    %c128_119 = arith.constant 128 : index
    %145 = vector.load %arg1[%c0_117, %c0_118, %c128_119] : memref<2x8x384xbf16, #tpu.memory_space<vmem>>, vector<1x8x96xbf16>
    %146 = vector.shape_cast %145 : vector<1x8x96xbf16> to vector<8x96xbf16>
    %147 = arith.extf %146 : vector<8x96xbf16> to vector<8x96xf32>
    %148 = arith.addf %144, %147 : vector<8x96xf32>
    %149 = vector.broadcast %9 : vector<1x96xf32> to vector<8x96xf32>
    %150 = arith.mulf %148, %149 : vector<8x96xf32>
    %151 = arith.truncf %150 : vector<8x96xf32> to vector<8x96xbf16>
    %cst_120 = arith.constant dense<0.000000e+00> : vector<8x96xf32>
    %152 = tpu.matmul %10, %151, %cst_120 {dimension_numbers = #tpu.dot_dimension_numbers<[1], [0], [0], [1], [0, 0, 1, 1], [], []>} : vector<8x8xbf16>, vector<8x96xbf16>, vector<8x96xf32> -> vector<8x96xf32>
    %153 = vector.broadcast %11 : vector<8x1xf32> to vector<8x96xf32>
    %154 = arith.addf %152, %153 : vector<8x96xf32>
    %c0_121 = arith.constant 0 : index
    %c0_122 = arith.constant 0 : index
    %c0_123 = arith.constant 0 : index
    %155 = vector.load %arg14[%c0_121, %c0_122, %c0_123] : memref<2x8x96xf32, #tpu.memory_space<vmem>>, vector<1x8x96xf32>
    %156 = vector.shape_cast %155 : vector<1x8x96xf32> to vector<8x96xf32>
    %157 = vector.shape_cast %154 : vector<8x96xf32> to vector<1x8x96xf32>
    tpu.vector_store %arg14[%c0_121, %c0_122, %c0_123], %157 {strides = array<i32>} : memref<2x8x96xf32, #tpu.memory_space<vmem>>, vector<1x8x96xf32>,
    %c1 = arith.constant 1 : index
    %c0_124 = arith.constant 0 : index
    %c115_125 = arith.constant 115 : index
    %158 = vector.load %arg1[%c1, %c0_124, %c115_125] : memref<2x8x384xbf16, #tpu.memory_space<vmem>>, vector<1x8x96xbf16>
    %159 = vector.shape_cast %158 : vector<1x8x96xbf16> to vector<8x96xbf16>
    %c0_126 = arith.constant 0 : index
    %c0_127 = arith.constant 0 : index
    %160 = vector.load %arg16[%c0_126, %c0_127] : memref<72x96xbf16, #tpu.memory_space<vmem>>, vector<8x96xbf16>
    tpu.vector_store %arg16[%c0_126, %c0_127], %159 {strides = array<i32>} : memref<72x96xbf16, #tpu.memory_space<vmem>>, vector<8x96xbf16>,
    %c1_128 = arith.constant 1 : index
    %c0_129 = arith.constant 0 : index
    %c116_130 = arith.constant 116 : index
    %161 = vector.load %arg1[%c1_128, %c0_129, %c116_130] : memref<2x8x384xbf16, #tpu.memory_space<vmem>>, vector<1x8x96xbf16>
    %162 = vector.shape_cast %161 : vector<1x8x96xbf16> to vector<8x96xbf16>
    %c8_131 = arith.constant 8 : index
    %c0_132 = arith.constant 0 : index
    %163 = vector.load %arg16[%c8_131, %c0_132] : memref<72x96xbf16, #tpu.memory_space<vmem>>, vector<8x96xbf16>
    tpu.vector_store %arg16[%c8_131, %c0_132], %162 {strides = array<i32>} : memref<72x96xbf16, #tpu.memory_space<vmem>>, vector<8x96xbf16>,
    %c1_133 = arith.constant 1 : index
    %c0_134 = arith.constant 0 : index
    %c117_135 = arith.constant 117 : index
    %164 = vector.load %arg1[%c1_133, %c0_134, %c117_135] : memref<2x8x384xbf16, #tpu.memory_space<vmem>>, vector<1x8x96xbf16>
    %165 = vector.shape_cast %164 : vector<1x8x96xbf16> to vector<8x96xbf16>
    %c16_136 = arith.constant 16 : index
    %c0_137 = arith.constant 0 : index
    %166 = vector.load %arg16[%c16_136, %c0_137] : memref<72x96xbf16, #tpu.memory_space<vmem>>, vector<8x96xbf16>
    tpu.vector_store %arg16[%c16_136, %c0_137], %165 {strides = array<i32>} : memref<72x96xbf16, #tpu.memory_space<vmem>>, vector<8x96xbf16>,
    %c1_138 = arith.constant 1 : index
    %c0_139 = arith.constant 0 : index
    %c127_140 = arith.constant 127 : index
    %167 = vector.load %arg1[%c1_138, %c0_139, %c127_140] : memref<2x8x384xbf16, #tpu.memory_space<vmem>>, vector<1x8x96xbf16>
    %168 = vector.shape_cast %167 : vector<1x8x96xbf16> to vector<8x96xbf16>
    %c24_141 = arith.constant 24 : index
    %c0_142 = arith.constant 0 : index
    %169 = vector.load %arg16[%c24_141, %c0_142] : memref<72x96xbf16, #tpu.memory_space<vmem>>, vector<8x96xbf16>
    tpu.vector_store %arg16[%c24_141, %c0_142], %168 {strides = array<i32>} : memref<72x96xbf16, #tpu.memory_space<vmem>>, vector<8x96xbf16>,
    %c1_143 = arith.constant 1 : index
    %c0_144 = arith.constant 0 : index
    %c128_145 = arith.constant 128 : index
    %170 = vector.load %arg1[%c1_143, %c0_144, %c128_145] : memref<2x8x384xbf16, #tpu.memory_space<vmem>>, vector<1x8x96xbf16>
    %171 = vector.shape_cast %170 : vector<1x8x96xbf16> to vector<8x96xbf16>
    %c32_146 = arith.constant 32 : index
    %c0_147 = arith.constant 0 : index
    %172 = vector.load %arg16[%c32_146, %c0_147] : memref<72x96xbf16, #tpu.memory_space<vmem>>, vector<8x96xbf16>
    tpu.vector_store %arg16[%c32_146, %c0_147], %171 {strides = array<i32>} : memref<72x96xbf16, #tpu.memory_space<vmem>>, vector<8x96xbf16>,
    %c1_148 = arith.constant 1 : index
    %c0_149 = arith.constant 0 : index
    %c129_150 = arith.constant 129 : index
    %173 = vector.load %arg1[%c1_148, %c0_149, %c129_150] : memref<2x8x384xbf16, #tpu.memory_space<vmem>>, vector<1x8x96xbf16>
    %174 = vector.shape_cast %173 : vector<1x8x96xbf16> to vector<8x96xbf16>
    %c40_151 = arith.constant 40 : index
    %c0_152 = arith.constant 0 : index
    %175 = vector.load %arg16[%c40_151, %c0_152] : memref<72x96xbf16, #tpu.memory_space<vmem>>, vector<8x96xbf16>
    tpu.vector_store %arg16[%c40_151, %c0_152], %174 {strides = array<i32>} : memref<72x96xbf16, #tpu.memory_space<vmem>>, vector<8x96xbf16>,
    %c1_153 = arith.constant 1 : index
    %c0_154 = arith.constant 0 : index
    %c139_155 = arith.constant 139 : index
    %176 = vector.load %arg1[%c1_153, %c0_154, %c139_155] : memref<2x8x384xbf16, #tpu.memory_space<vmem>>, vector<1x8x96xbf16>
    %177 = vector.shape_cast %176 : vector<1x8x96xbf16> to vector<8x96xbf16>
    %c48_156 = arith.constant 48 : index
    %c0_157 = arith.constant 0 : index
    %178 = vector.load %arg16[%c48_156, %c0_157] : memref<72x96xbf16, #tpu.memory_space<vmem>>, vector<8x96xbf16>
    tpu.vector_store %arg16[%c48_156, %c0_157], %177 {strides = array<i32>} : memref<72x96xbf16, #tpu.memory_space<vmem>>, vector<8x96xbf16>,
    %c1_158 = arith.constant 1 : index
    %c0_159 = arith.constant 0 : index
    %c140_160 = arith.constant 140 : index
    %179 = vector.load %arg1[%c1_158, %c0_159, %c140_160] : memref<2x8x384xbf16, #tpu.memory_space<vmem>>, vector<1x8x96xbf16>
    %180 = vector.shape_cast %179 : vector<1x8x96xbf16> to vector<8x96xbf16>
    %c56_161 = arith.constant 56 : index
    %c0_162 = arith.constant 0 : index
    %181 = vector.load %arg16[%c56_161, %c0_162] : memref<72x96xbf16, #tpu.memory_space<vmem>>, vector<8x96xbf16>
    tpu.vector_store %arg16[%c56_161, %c0_162], %180 {strides = array<i32>} : memref<72x96xbf16, #tpu.memory_space<vmem>>, vector<8x96xbf16>,
    %c1_163 = arith.constant 1 : index
    %c0_164 = arith.constant 0 : index
    %c141_165 = arith.constant 141 : index
    %182 = vector.load %arg1[%c1_163, %c0_164, %c141_165] : memref<2x8x384xbf16, #tpu.memory_space<vmem>>, vector<1x8x96xbf16>
    %183 = vector.shape_cast %182 : vector<1x8x96xbf16> to vector<8x96xbf16>
    %c64_166 = arith.constant 64 : index
    %c0_167 = arith.constant 0 : index
    %184 = vector.load %arg16[%c64_166, %c0_167] : memref<72x96xbf16, #tpu.memory_space<vmem>>, vector<8x96xbf16>
    tpu.vector_store %arg16[%c64_166, %c0_167], %183 {strides = array<i32>} : memref<72x96xbf16, #tpu.memory_space<vmem>>, vector<8x96xbf16>,
    %c0_168 = arith.constant 0 : index
    %c0_169 = arith.constant 0 : index
    %185 = vector.load %arg16[%c0_168, %c0_169] : memref<72x96xbf16, #tpu.memory_space<vmem>>, vector<72x96xbf16>
    %cst_170 = arith.constant dense<0.000000e+00> : vector<8x96xf32>
    %186 = tpu.matmul %0, %185, %cst_170 {dimension_numbers = #tpu.dot_dimension_numbers<[1], [0], [0], [1], [0, 0, 1, 1], [], []>} : vector<8x72xbf16>, vector<72x96xbf16>, vector<8x96xf32> -> vector<8x96xf32>
    %187 = vector.broadcast %1 : vector<8x1xf32> to vector<8x96xf32>
    %188 = arith.addf %186, %187 : vector<8x96xf32>
    %189 = vector.broadcast %9 : vector<1x96xf32> to vector<8x96xf32>
    %190 = arith.mulf %188, %189 : vector<8x96xf32>
    %cst_171 = arith.constant dense<0.000000e+00> : vector<8xf32>
    %191 = vector.multi_reduction <add>, %190, %cst_171 [1] : vector<8x96xf32> to vector<8xf32>
    %192 = vector.shape_cast %191 : vector<8xf32> to vector<8x1xf32>
    %193 = arith.mulf %190, %190 : vector<8x96xf32>
    %cst_172 = arith.constant dense<0.000000e+00> : vector<8xf32>
    %194 = vector.multi_reduction <add>, %193, %cst_172 [1] : vector<8x96xf32> to vector<8xf32>
    %195 = vector.shape_cast %194 : vector<8xf32> to vector<8x1xf32>
    %196 = tpu.concatenate %192, %195 in 1 : vector<8x1xf32>, vector<8x1xf32> -> vector<8x2xf32>
    %cst_173 = arith.constant dense<0.000000e+00> : vector<8x2xf32>
    %197 = tpu.matmul %8, %196, %cst_173 {dimension_numbers = #tpu.dot_dimension_numbers<[1], [0], [0], [1], [0, 0, 1, 1], [], []>} : vector<8x8xf32>, vector<8x2xf32>, vector<8x2xf32> -> vector<8x2xf32>
    %cst_174 = arith.constant 1.562500e-02 : f32
    %198 = vector.broadcast %cst_174 : f32 to vector<8x2xf32>
    %199 = arith.mulf %197, %198 : vector<8x2xf32>
    %200 = vector.extract_strided_slice %199 {offsets = [0, 0], sizes = [8, 1], strides = [1, 1]} : vector<8x2xf32> to vector<8x1xf32>
    %201 = vector.extract_strided_slice %199 {offsets = [0, 1], sizes = [8, 1], strides = [1, 1]} : vector<8x2xf32> to vector<8x1xf32>
    %202 = arith.mulf %200, %200 : vector<8x1xf32>
    %203 = arith.subf %201, %202 : vector<8x1xf32>
    %cst_175 = arith.constant 0.000000e+00 : f32
    %204 = vector.broadcast %cst_175 : f32 to vector<8x1xf32>
    %205 = arith.maximumf %203, %204 : vector<8x1xf32>
    %206 = vector.broadcast %200 : vector<8x1xf32> to vector<8x96xf32>
    %207 = arith.subf %188, %206 : vector<8x96xf32>
    %cst_176 = arith.constant 9.99999974E-6 : f32
    %208 = vector.broadcast %cst_176 : f32 to vector<8x1xf32>
    %209 = arith.addf %205, %208 : vector<8x1xf32>
    %210 = math.rsqrt %209 : vector<8x1xf32>
    %211 = vector.broadcast %210 : vector<8x1xf32> to vector<8x96xf32>
    %212 = arith.mulf %207, %211 : vector<8x96xf32>
    %213 = vector.broadcast %2 : vector<8x1xf32> to vector<8x96xf32>
    %214 = arith.mulf %212, %213 : vector<8x96xf32>
    %215 = vector.broadcast %3 : vector<8x1xf32> to vector<8x96xf32>
    %216 = arith.addf %214, %215 : vector<8x96xf32>
    %cst_177 = arith.constant 5.000000e-01 : f32
    %217 = vector.broadcast %cst_177 : f32 to vector<8x96xf32>
    %218 = arith.mulf %217, %216 : vector<8x96xf32>
    %cst_178 = arith.constant 0.707106769 : f32
    %219 = vector.broadcast %cst_178 : f32 to vector<8x96xf32>
    %220 = arith.mulf %216, %219 : vector<8x96xf32>
    %221 = math.erf %220 : vector<8x96xf32>
    %cst_179 = arith.constant 1.000000e+00 : f32
    %222 = vector.broadcast %cst_179 : f32 to vector<8x96xf32>
    %223 = arith.addf %222, %221 : vector<8x96xf32>
    %224 = arith.mulf %218, %223 : vector<8x96xf32>
    %225 = vector.broadcast %9 : vector<1x96xf32> to vector<8x96xf32>
    %226 = arith.mulf %224, %225 : vector<8x96xf32>
    %227 = arith.truncf %226 : vector<8x96xf32> to vector<8x96xbf16>
    %c0_180 = arith.constant 0 : index
    %c128_181 = arith.constant 128 : index
    %228 = vector.load %arg15[%c0_180, %c128_181] : memref<8x384xbf16, #tpu.memory_space<vmem>>, vector<8x96xbf16>
    tpu.vector_store %arg15[%c0_180, %c128_181], %227 {strides = array<i32>} : memref<8x384xbf16, #tpu.memory_space<vmem>>, vector<8x96xbf16>,
    %c0_182 = arith.constant 0 : index
    %c115_183 = arith.constant 115 : index
    %229 = vector.load %arg15[%c0_182, %c115_183] : memref<8x384xbf16, #tpu.memory_space<vmem>>, vector<8x96xbf16>
    %c0_184 = arith.constant 0 : index
    %c0_185 = arith.constant 0 : index
    %230 = vector.load %arg16[%c0_184, %c0_185] : memref<72x96xbf16, #tpu.memory_space<vmem>>, vector<8x96xbf16>
    tpu.vector_store %arg16[%c0_184, %c0_185], %229 {strides = array<i32>} : memref<72x96xbf16, #tpu.memory_space<vmem>>, vector<8x96xbf16>,
    %c0_186 = arith.constant 0 : index
    %c116_187 = arith.constant 116 : index
    %231 = vector.load %arg15[%c0_186, %c116_187] : memref<8x384xbf16, #tpu.memory_space<vmem>>, vector<8x96xbf16>
    %c8_188 = arith.constant 8 : index
    %c0_189 = arith.constant 0 : index
    %232 = vector.load %arg16[%c8_188, %c0_189] : memref<72x96xbf16, #tpu.memory_space<vmem>>, vector<8x96xbf16>
    tpu.vector_store %arg16[%c8_188, %c0_189], %231 {strides = array<i32>} : memref<72x96xbf16, #tpu.memory_space<vmem>>, vector<8x96xbf16>,
    %c0_190 = arith.constant 0 : index
    %c117_191 = arith.constant 117 : index
    %233 = vector.load %arg15[%c0_190, %c117_191] : memref<8x384xbf16, #tpu.memory_space<vmem>>, vector<8x96xbf16>
    %c16_192 = arith.constant 16 : index
    %c0_193 = arith.constant 0 : index
    %234 = vector.load %arg16[%c16_192, %c0_193] : memref<72x96xbf16, #tpu.memory_space<vmem>>, vector<8x96xbf16>
    tpu.vector_store %arg16[%c16_192, %c0_193], %233 {strides = array<i32>} : memref<72x96xbf16, #tpu.memory_space<vmem>>, vector<8x96xbf16>,
    %c0_194 = arith.constant 0 : index
    %c127_195 = arith.constant 127 : index
    %235 = vector.load %arg15[%c0_194, %c127_195] : memref<8x384xbf16, #tpu.memory_space<vmem>>, vector<8x96xbf16>
    %c24_196 = arith.constant 24 : index
    %c0_197 = arith.constant 0 : index
    %236 = vector.load %arg16[%c24_196, %c0_197] : memref<72x96xbf16, #tpu.memory_space<vmem>>, vector<8x96xbf16>
    tpu.vector_store %arg16[%c24_196, %c0_197], %235 {strides = array<i32>} : memref<72x96xbf16, #tpu.memory_space<vmem>>, vector<8x96xbf16>,
    %c0_198 = arith.constant 0 : index
    %c128_199 = arith.constant 128 : index
    %237 = vector.load %arg15[%c0_198, %c128_199] : memref<8x384xbf16, #tpu.memory_space<vmem>>, vector<8x96xbf16>
    %c32_200 = arith.constant 32 : index
    %c0_201 = arith.constant 0 : index
    %238 = vector.load %arg16[%c32_200, %c0_201] : memref<72x96xbf16, #tpu.memory_space<vmem>>, vector<8x96xbf16>
    tpu.vector_store %arg16[%c32_200, %c0_201], %237 {strides = array<i32>} : memref<72x96xbf16, #tpu.memory_space<vmem>>, vector<8x96xbf16>,
    %c0_202 = arith.constant 0 : index
    %c129_203 = arith.constant 129 : index
    %239 = vector.load %arg15[%c0_202, %c129_203] : memref<8x384xbf16, #tpu.memory_space<vmem>>, vector<8x96xbf16>
    %c40_204 = arith.constant 40 : index
    %c0_205 = arith.constant 0 : index
    %240 = vector.load %arg16[%c40_204, %c0_205] : memref<72x96xbf16, #tpu.memory_space<vmem>>, vector<8x96xbf16>
    tpu.vector_store %arg16[%c40_204, %c0_205], %239 {strides = array<i32>} : memref<72x96xbf16, #tpu.memory_space<vmem>>, vector<8x96xbf16>,
    %c0_206 = arith.constant 0 : index
    %c139_207 = arith.constant 139 : index
    %241 = vector.load %arg15[%c0_206, %c139_207] : memref<8x384xbf16, #tpu.memory_space<vmem>>, vector<8x96xbf16>
    %c48_208 = arith.constant 48 : index
    %c0_209 = arith.constant 0 : index
    %242 = vector.load %arg16[%c48_208, %c0_209] : memref<72x96xbf16, #tpu.memory_space<vmem>>, vector<8x96xbf16>
    tpu.vector_store %arg16[%c48_208, %c0_209], %241 {strides = array<i32>} : memref<72x96xbf16, #tpu.memory_space<vmem>>, vector<8x96xbf16>,
    %c0_210 = arith.constant 0 : index
    %c140_211 = arith.constant 140 : index
    %243 = vector.load %arg15[%c0_210, %c140_211] : memref<8x384xbf16, #tpu.memory_space<vmem>>, vector<8x96xbf16>
    %c56_212 = arith.constant 56 : index
    %c0_213 = arith.constant 0 : index
    %244 = vector.load %arg16[%c56_212, %c0_213] : memref<72x96xbf16, #tpu.memory_space<vmem>>, vector<8x96xbf16>
    tpu.vector_store %arg16[%c56_212, %c0_213], %243 {strides = array<i32>} : memref<72x96xbf16, #tpu.memory_space<vmem>>, vector<8x96xbf16>,
    %c0_214 = arith.constant 0 : index
    %c141_215 = arith.constant 141 : index
    %245 = vector.load %arg15[%c0_214, %c141_215] : memref<8x384xbf16, #tpu.memory_space<vmem>>, vector<8x96xbf16>
    %c64_216 = arith.constant 64 : index
    %c0_217 = arith.constant 0 : index
    %246 = vector.load %arg16[%c64_216, %c0_217] : memref<72x96xbf16, #tpu.memory_space<vmem>>, vector<8x96xbf16>
    tpu.vector_store %arg16[%c64_216, %c0_217], %245 {strides = array<i32>} : memref<72x96xbf16, #tpu.memory_space<vmem>>, vector<8x96xbf16>,
    %c0_218 = arith.constant 0 : index
    %c0_219 = arith.constant 0 : index
    %247 = vector.load %arg16[%c0_218, %c0_219] : memref<72x96xbf16, #tpu.memory_space<vmem>>, vector<72x96xbf16>
    %cst_220 = arith.constant dense<0.000000e+00> : vector<8x96xf32>
    %248 = tpu.matmul %4, %247, %cst_220 {dimension_numbers = #tpu.dot_dimension_numbers<[1], [0], [0], [1], [0, 0, 1, 1], [], []>} : vector<8x72xbf16>, vector<72x96xbf16>, vector<8x96xf32> -> vector<8x96xf32>
    %249 = vector.broadcast %5 : vector<8x1xf32> to vector<8x96xf32>
    %250 = arith.addf %248, %249 : vector<8x96xf32>
    %251 = vector.broadcast %9 : vector<1x96xf32> to vector<8x96xf32>
    %252 = arith.mulf %250, %251 : vector<8x96xf32>
    %cst_221 = arith.constant dense<0.000000e+00> : vector<8xf32>
    %253 = vector.multi_reduction <add>, %252, %cst_221 [1] : vector<8x96xf32> to vector<8xf32>
    %254 = vector.shape_cast %253 : vector<8xf32> to vector<8x1xf32>
    %255 = arith.mulf %252, %252 : vector<8x96xf32>
    %cst_222 = arith.constant dense<0.000000e+00> : vector<8xf32>
    %256 = vector.multi_reduction <add>, %255, %cst_222 [1] : vector<8x96xf32> to vector<8xf32>
    %257 = vector.shape_cast %256 : vector<8xf32> to vector<8x1xf32>
    %258 = tpu.concatenate %254, %257 in 1 : vector<8x1xf32>, vector<8x1xf32> -> vector<8x2xf32>
    %cst_223 = arith.constant dense<0.000000e+00> : vector<8x2xf32>
    %259 = tpu.matmul %8, %258, %cst_223 {dimension_numbers = #tpu.dot_dimension_numbers<[1], [0], [0], [1], [0, 0, 1, 1], [], []>} : vector<8x8xf32>, vector<8x2xf32>, vector<8x2xf32> -> vector<8x2xf32>
    %cst_224 = arith.constant 1.562500e-02 : f32
    %260 = vector.broadcast %cst_224 : f32 to vector<8x2xf32>
    %261 = arith.mulf %259, %260 : vector<8x2xf32>
    %262 = vector.extract_strided_slice %261 {offsets = [0, 0], sizes = [8, 1], strides = [1, 1]} : vector<8x2xf32> to vector<8x1xf32>
    %263 = vector.extract_strided_slice %261 {offsets = [0, 1], sizes = [8, 1], strides = [1, 1]} : vector<8x2xf32> to vector<8x1xf32>
    %264 = arith.mulf %262, %262 : vector<8x1xf32>
    %265 = arith.subf %263, %264 : vector<8x1xf32>
    %cst_225 = arith.constant 0.000000e+00 : f32
    %266 = vector.broadcast %cst_225 : f32 to vector<8x1xf32>
    %267 = arith.maximumf %265, %266 : vector<8x1xf32>
    %268 = vector.broadcast %262 : vector<8x1xf32> to vector<8x96xf32>
    %269 = arith.subf %250, %268 : vector<8x96xf32>
    %cst_226 = arith.constant 9.99999974E-6 : f32
    %270 = vector.broadcast %cst_226 : f32 to vector<8x1xf32>
    %271 = arith.addf %267, %270 : vector<8x1xf32>
    %272 = math.rsqrt %271 : vector<8x1xf32>
    %273 = vector.broadcast %272 : vector<8x1xf32> to vector<8x96xf32>
    %274 = arith.mulf %269, %273 : vector<8x96xf32>
    %275 = vector.broadcast %6 : vector<8x1xf32> to vector<8x96xf32>
    %276 = arith.mulf %274, %275 : vector<8x96xf32>
    %277 = vector.broadcast %7 : vector<8x1xf32> to vector<8x96xf32>
    %278 = arith.addf %276, %277 : vector<8x96xf32>
    %cst_227 = arith.constant 5.000000e-01 : f32
    %279 = vector.broadcast %cst_227 : f32 to vector<8x96xf32>
    %280 = arith.mulf %279, %278 : vector<8x96xf32>
    %cst_228 = arith.constant 0.707106769 : f32
    %281 = vector.broadcast %cst_228 : f32 to vector<8x96xf32>
    %282 = arith.mulf %278, %281 : vector<8x96xf32>
    %283 = math.erf %282 : vector<8x96xf32>
    %cst_229 = arith.constant 1.000000e+00 : f32
    %284 = vector.broadcast %cst_229 : f32 to vector<8x96xf32>
    %285 = arith.addf %284, %283 : vector<8x96xf32>
    %286 = arith.mulf %280, %285 : vector<8x96xf32>
    %c1_230 = arith.constant 1 : index
    %c0_231 = arith.constant 0 : index
    %c128_232 = arith.constant 128 : index
    %287 = vector.load %arg1[%c1_230, %c0_231, %c128_232] : memref<2x8x384xbf16, #tpu.memory_space<vmem>>, vector<1x8x96xbf16>
    %288 = vector.shape_cast %287 : vector<1x8x96xbf16> to vector<8x96xbf16>
    %289 = arith.extf %288 : vector<8x96xbf16> to vector<8x96xf32>
    %290 = arith.addf %286, %289 : vector<8x96xf32>
    %291 = vector.broadcast %9 : vector<1x96xf32> to vector<8x96xf32>
    %292 = arith.mulf %290, %291 : vector<8x96xf32>
    %293 = arith.truncf %292 : vector<8x96xf32> to vector<8x96xbf16>
    %cst_233 = arith.constant dense<0.000000e+00> : vector<8x96xf32>
    %294 = tpu.matmul %10, %293, %cst_233 {dimension_numbers = #tpu.dot_dimension_numbers<[1], [0], [0], [1], [0, 0, 1, 1], [], []>} : vector<8x8xbf16>, vector<8x96xbf16>, vector<8x96xf32> -> vector<8x96xf32>
    %295 = vector.broadcast %11 : vector<8x1xf32> to vector<8x96xf32>
    %296 = arith.addf %294, %295 : vector<8x96xf32>
    %c1_234 = arith.constant 1 : index
    %c0_235 = arith.constant 0 : index
    %c0_236 = arith.constant 0 : index
    %297 = vector.load %arg14[%c1_234, %c0_235, %c0_236] : memref<2x8x96xf32, #tpu.memory_space<vmem>>, vector<1x8x96xf32>
    %298 = vector.shape_cast %297 : vector<1x8x96xf32> to vector<8x96xf32>
    %299 = vector.shape_cast %296 : vector<8x96xf32> to vector<1x8x96xf32>
    tpu.vector_store %arg14[%c1_234, %c0_235, %c0_236], %299 {strides = array<i32>} : memref<2x8x96xf32, #tpu.memory_space<vmem>>, vector<1x8x96xf32>,
    return
  }
  func.func @transform_0(%arg0: i32) -> (i32, i32, i32) {
    %c0_i32 = arith.constant 0 : i32
    %c0_i32_0 = arith.constant 0 : i32
    %c0_i32_1 = arith.constant 0 : i32
    return %arg0, %c0_i32, %c0_i32_0 : i32, i32, i32
  }
  func.func @transform_1(%arg0: i32) -> (i32, i32) {
    %c0_i32 = arith.constant 0 : i32
    %c0_i32_0 = arith.constant 0 : i32
    %c0_i32_1 = arith.constant 0 : i32
    return %c0_i32, %c0_i32_0 : i32, i32
  }
  func.func @transform_2(%arg0: i32) -> (i32, i32) {
    %c0_i32 = arith.constant 0 : i32
    %c0_i32_0 = arith.constant 0 : i32
    %c0_i32_1 = arith.constant 0 : i32
    return %c0_i32, %c0_i32_0 : i32, i32
  }
  func.func @transform_3(%arg0: i32) -> (i32, i32) {
    %c0_i32 = arith.constant 0 : i32
    %c0_i32_0 = arith.constant 0 : i32
    %c0_i32_1 = arith.constant 0 : i32
    return %c0_i32, %c0_i32_0 : i32, i32
  }
  func.func @transform_4(%arg0: i32) -> (i32, i32) {
    %c0_i32 = arith.constant 0 : i32
    %c0_i32_0 = arith.constant 0 : i32
    %c0_i32_1 = arith.constant 0 : i32
    return %c0_i32, %c0_i32_0 : i32, i32
  }
  func.func @transform_5(%arg0: i32) -> (i32, i32) {
    %c0_i32 = arith.constant 0 : i32
    %c0_i32_0 = arith.constant 0 : i32
    %c0_i32_1 = arith.constant 0 : i32
    return %c0_i32, %c0_i32_0 : i32, i32
  }
  func.func @transform_6(%arg0: i32) -> (i32, i32) {
    %c0_i32 = arith.constant 0 : i32
    %c0_i32_0 = arith.constant 0 : i32
    %c0_i32_1 = arith.constant 0 : i32
    return %c0_i32, %c0_i32_0 : i32, i32
  }
  func.func @transform_7(%arg0: i32) -> (i32, i32) {
    %c0_i32 = arith.constant 0 : i32
    %c0_i32_0 = arith.constant 0 : i32
    %c0_i32_1 = arith.constant 0 : i32
    return %c0_i32, %c0_i32_0 : i32, i32
  }
  func.func @transform_8(%arg0: i32) -> (i32, i32) {
    %c0_i32 = arith.constant 0 : i32
    %c0_i32_0 = arith.constant 0 : i32
    %c0_i32_1 = arith.constant 0 : i32
    return %c0_i32, %c0_i32_0 : i32, i32
  }
  func.func @transform_9(%arg0: i32) -> (i32, i32) {
    %c0_i32 = arith.constant 0 : i32
    %c0_i32_0 = arith.constant 0 : i32
    %c0_i32_1 = arith.constant 0 : i32
    return %c0_i32, %c0_i32_0 : i32, i32
  }
  func.func @transform_10(%arg0: i32) -> (i32, i32) {
    %c0_i32 = arith.constant 0 : i32
    %c0_i32_0 = arith.constant 0 : i32
    %c0_i32_1 = arith.constant 0 : i32
    return %c0_i32, %c0_i32_0 : i32, i32
  }
  func.func @transform_11(%arg0: i32) -> (i32, i32) {
    %c0_i32 = arith.constant 0 : i32
    %c0_i32_0 = arith.constant 0 : i32
    %c0_i32_1 = arith.constant 0 : i32
    return %c0_i32, %c0_i32_0 : i32, i32
  }
  func.func @transform_12(%arg0: i32) -> (i32, i32) {
    %c0_i32 = arith.constant 0 : i32
    %c0_i32_0 = arith.constant 0 : i32
    %c0_i32_1 = arith.constant 0 : i32
    return %c0_i32, %c0_i32_0 : i32, i32
  }
  func.func @transform_13(%arg0: i32) -> (i32, i32, i32) {
    %c0_i32 = arith.constant 0 : i32
    %c0_i32_0 = arith.constant 0 : i32
    %c0_i32_1 = arith.constant 0 : i32
    return %arg0, %c0_i32, %c0_i32_0 : i32, i32, i32
  }
}

</mosaic_0001>

<llo_original>
// kernel: _lambda_.4
$region0: #{_lambda_.4}
  #allocation0 [shape = 'u32[]', space=smem, size = 0x4, offset = 0x4, fixed_abs, tag = 'smem constant byte address 0x4 - core index']
  #allocation1 [shape = 'u32[72,128]{1,0:T(1,128)}', space=vmem, size = 0x9000, scoped, tag = 'internal scratch']
  #allocation2 [shape = 'bf16[36,320]{1,0:T(8,128)(2,1)}', space=vmem, size = 0x7800, scoped, tag = 'scratch operand']
  %s0 = inlined_call_operand.vmem [shape: bf16[2,4,640], index: 0, kind: input, shape index: {}]
  %s1 = inlined_call_operand.vmem [shape: bf16[8,36], index: 1, kind: input, shape index: {}]
  %s2 = inlined_call_operand.vmem [shape: f32[8,1], index: 2, kind: input, shape index: {}]
  %s3 = inlined_call_operand.vmem [shape: f32[8,1], index: 3, kind: input, shape index: {}]
  %s4 = inlined_call_operand.vmem [shape: f32[8,1], index: 4, kind: input, shape index: {}]
  %s5 = inlined_call_operand.vmem [shape: f32[8,8], index: 5, kind: input, shape index: {}]
  %s6 = inlined_call_operand.vmem [shape: f32[1,320], index: 6, kind: input, shape index: {}]
  %s7 = inlined_call_operand.vmem [shape: bf16[2,8,640], index: 7, kind: output, shape index: {}]
  %s8 = sld [smem:[#allocation0]]
  $region38: #{_lambda_.4} parent=0
    _
  %s10 = ssub.s32 1, %s8
  %s11 = scalar_select 0, %s10, %s8
  // Predicated region
  $region2: #{_lambda_.4} parent=0 // pred_check
    _
  $region3: #{_lambda_.4} parent=0 // pred_check_branch
    %13 = sbr.rel (0) target = $region5
  $region4: #{_lambda_.4} parent=0 // pred_region
    _
  $region5: #{_lambda_.4} parent=0 // pred_fallthru
    _
  // Predicated region
  $region6: #{_lambda_.4} parent=0 // pred_check
    _
  $region7: #{_lambda_.4} parent=0 // pred_check_branch
    %15 = sbr.rel (0) target = $region9
  $region8: #{_lambda_.4} parent=0 // pred_region
    _
  $region9: #{_lambda_.4} parent=0 // pred_fallthru
    _
  // Predicated region
  $region10: #{_lambda_.4} parent=0 // pred_check
    _
  $region11: #{_lambda_.4} parent=0 // pred_check_branch
    %17 = sbr.rel (0) target = $region13
  $region12: #{_lambda_.4} parent=0 // pred_region
    _
  $region13: #{_lambda_.4} parent=0 // pred_fallthru
    _
  // Predicated region
  $region14: #{_lambda_.4} parent=0 // pred_check
    _
  $region15: #{_lambda_.4} parent=0 // pred_check_branch
    %19 = sbr.rel (0) target = $region17
  $region16: #{_lambda_.4} parent=0 // pred_region
    _
  $region17: #{_lambda_.4} parent=0 // pred_fallthru
    _
  // Predicated region
  $region18: #{_lambda_.4} parent=0 // pred_check
    _
  $region19: #{_lambda_.4} parent=0 // pred_check_branch
    %21 = sbr.rel (0) target = $region21
  $region20: #{_lambda_.4} parent=0 // pred_region
    _
  $region21: #{_lambda_.4} parent=0 // pred_fallthru
    _
  // Predicated region
  $region22: #{_lambda_.4} parent=0 // pred_check
    _
  $region23: #{_lambda_.4} parent=0 // pred_check_branch
    %23 = sbr.rel (0) target = $region25
  $region24: #{_lambda_.4} parent=0 // pred_region
    _
  $region25: #{_lambda_.4} parent=0 // pred_fallthru
    _
  // Predicated region
  $region26: #{_lambda_.4} parent=0 // pred_check
    _
  $region27: #{_lambda_.4} parent=0 // pred_check_branch
    %25 = sbr.rel (0) target = $region29
  $region28: #{_lambda_.4} parent=0 // pred_region
    _
  $region29: #{_lambda_.4} parent=0 // pred_fallthru
    _
  %v27 = vld [vmem:[%s1] sm:$0xf]
  %v28 = vld [vmem:[%s2] sm:$0xff]
  %v29 = vld [vmem:[%s3] sm:$0xff]
  %v30 = vld [vmem:[%s4] sm:$0xff]
  %v31 = vld [vmem:[%s5] sm:$0xff]
  %v32 = vld [vmem:[%s6] sm:$0x7]
  %v33 = vld [vmem:[%s0] sm:$0xff]
  %35 = vst [vmem:[#allocation1] ss:$2 sm:$0xff] %v33
  %v36 = vld.sshfl [vmem:[#allocation1] sm:$0xff pattern:$0x75643120]
  %v38 = vld.sshfl [vmem:[#allocation1 + $0x8] sm:$0xff pattern:$0x75643120]
  %40 = vrot.lane.b32.xlu0 %v36, 21
  %v41 = vpop.permute.xlu0 %40
  %42 = vrot.lane.b32.xlu0 %v38, 21
  %v43 = vpop.permute.xlu0 %42
  %v44 = vrot.slane %v41, 4
  %v45 = vrot.slane %v43, 4
  %vm46 = vcmask 1043456
  %v47 = vsel %vm46, %v44, %v45
  %vm48 = vcmask 171008
  %v49 = vsel %vm48, %v41, %v47
  %v50 = vsel %vm48, %v43, %v45
  %53 = vst [vmem:[#allocation2] sm:$0x33] %v49
  %vm54 = vcmask 517120
  %55 = vst.msk [vmem:[#allocation2 + $0x8] sm:$0x3] %vm54, %v50
  %v56 = vld [vmem:[%s0] sm:$0xff]
  %s58 = scalar_lea.vmem [#allocation1], 1
  %59 = vst [vmem:[%s58] ss:$2 sm:$0xff] %v56
  %v60 = vld.sshfl [vmem:[#allocation1] sm:$0xff pattern:$0x75643120]
  %v62 = vld.sshfl [vmem:[#allocation1 + $0x8] sm:$0xff pattern:$0x75643120]
  %64 = vrot.lane.b32.xlu0 %v60, 20
  %v65 = vpop.permute.xlu0 %64
  %66 = vrot.lane.b32.xlu0 %v62, 20
  %v67 = vpop.permute.xlu0 %66
  %v68 = vrot.slane %v65, 4
  %v69 = vrot.slane %v67, 4
  %v70 = vsel %vm46, %v68, %v69
  %vm71 = vcmask 162816
  %v72 = vsel %vm71, %v65, %v70
  %v73 = vsel %vm71, %v67, %v69
  %76 = vst [vmem:[#allocation2] sm:$0xcc] %v72
  %vm77 = vcmask 519170
  %78 = vst.msk [vmem:[#allocation2 + $0x8] sm:$0xc] %vm77, %v73
  %v79 = vld [vmem:[%s0] sm:$0xff]
  %81 = vst [vmem:[#allocation1] ss:$2 sm:$0xff] %v79
  %v82 = vld.sshfl [vmem:[#allocation1] sm:$0xff pattern:$0x75643120]
  %v84 = vld.sshfl [vmem:[#allocation1 + $0x8] sm:$0xff pattern:$0x75643120]
  %86 = vrot.lane.b32.xlu0 %v82, 19
  %v87 = vpop.permute.xlu0 %86
  %88 = vrot.lane.b32.xlu0 %v84, 19
  %v89 = vpop.permute.xlu0 %88
  %v90 = vrot.slane %v87, 4
  %v91 = vrot.slane %v89, 4
  %v92 = vsel %vm46, %v90, %v91
  %vm93 = vcmask 154624
  %v94 = vsel %vm93, %v87, %v92
  %v95 = vsel %vm93, %v89, %v91
  %98 = vst [vmem:[#allocation2 + $0xc] sm:$0x33] %v94
  %99 = vst.msk [vmem:[#allocation2 + $0x14] sm:$0x3] %vm54, %v95
  %v100 = vld [vmem:[%s0] sm:$0xff]
  %s102 = scalar_lea.vmem [#allocation1], 1
  %103 = vst [vmem:[%s102] ss:$2 sm:$0xff] %v100
  %v104 = vld.sshfl [vmem:[#allocation1] sm:$0xff pattern:$0x75643120]
  %v106 = vld.sshfl [vmem:[#allocation1 + $0x8] sm:$0xff pattern:$0x75643120]
  %108 = vrot.lane.b32.xlu0 %v104, 1
  %v109 = vpop.permute.xlu0 %108
  %110 = vrot.lane.b32.xlu0 %v106, 1
  %v111 = vpop.permute.xlu0 %110
  %v112 = vrot.slane %v109, 4
  %v113 = vrot.slane %v111, 4
  %v114 = vsel %vm46, %v112, %v113
  %vm115 = vcmask 7168
  %v116 = vsel %vm115, %v109, %v114
  %v117 = vsel %vm115, %v111, %v113
  %120 = vst [vmem:[#allocation2 + $0xc] sm:$0xcc] %v116
  %121 = vst.msk [vmem:[#allocation2 + $0x14] sm:$0xc] %vm77, %v117
  %v122 = vld [vmem:[%s0 + $0x2] sm:$0x3f]
  %124 = vst [vmem:[#allocation1] ss:$2 sm:$0xff] %v122
  %v125 = vld.sshfl [vmem:[#allocation1] sm:$0xff pattern:$0x75643120]
  %v126 = vld.sshfl [vmem:[#allocation1 + $0x8] sm:$0xff pattern:$0x75643120]
  %129 = vst [vmem:[#allocation2 + $0x18] sm:$0x33] %v125
  %130 = vst.msk [vmem:[#allocation2 + $0x20] sm:$0x3] %vm54, %v126
  %v131 = vld [vmem:[%s0 + $0x2] sm:$0x3f]
  %s133 = scalar_lea.vmem [#allocation1], 1
  %134 = vst [vmem:[%s133] ss:$2 sm:$0xff] %v131
  %v135 = vld.sshfl [vmem:[#allocation1] sm:$0xff pattern:$0x75643120]
  %v137 = vld.sshfl [vmem:[#allocation1 + $0x8] sm:$0xff pattern:$0x75643120]
  %139 = vrot.lane.b32.xlu0 %v135, 127
  %v140 = vpop.permute.xlu0 %139
  %141 = vrot.lane.b32.xlu0 %v137, 127
  %v142 = vpop.permute.xlu0 %141
  %v143 = vrot.slane %v140, 4
  %v144 = vrot.slane %v142, 4
  %v145 = vsel %vm46, %v143, %v144
  %vm146 = vcmask 1039360
  %v147 = vsel %vm146, %v140, %v145
  %150 = vst [vmem:[#allocation2 + $0x18] sm:$0xcc] %v147
  %151 = vst.msk [vmem:[#allocation2 + $0x20] sm:$0xc] %vm77, %v142
  %v152 = vld [vmem:[%s0 + $0x2] sm:$0x3f]
  %154 = vst [vmem:[#allocation1] ss:$2 sm:$0xff] %v152
  %v155 = vld.sshfl [vmem:[#allocation1] sm:$0xff pattern:$0x75643120]
  %v157 = vld.sshfl [vmem:[#allocation1 + $0x8] sm:$0xff pattern:$0x75643120]
  %159 = vrot.lane.b32.xlu0 %v155, 109
  %v160 = vpop.permute.xlu0 %159
  %161 = vrot.lane.b32.xlu0 %v157, 109
  %v162 = vpop.permute.xlu0 %161
  %v163 = vrot.slane %v160, 4
  %v164 = vrot.slane %v162, 4
  %v165 = vsel %vm46, %v163, %v164
  %vm166 = vcmask 891904
  %v167 = vsel %vm166, %v160, %v165
  %170 = vst [vmem:[#allocation2 + $0x24] sm:$0x33] %v167
  %171 = vst.msk [vmem:[#allocation2 + $0x2c] sm:$0x3] %vm54, %v162
  %v172 = vld [vmem:[%s0 + $0x2] sm:$0x3f]
  %s174 = scalar_lea.vmem [#allocation1], 1
  %175 = vst [vmem:[%s174] ss:$2 sm:$0xff] %v172
  %v176 = vld.sshfl [vmem:[#allocation1] sm:$0xff pattern:$0x75643120]
  %v178 = vld.sshfl [vmem:[#allocation1 + $0x8] sm:$0xff pattern:$0x75643120]
  %180 = vrot.lane.b32.xlu0 %v176, 108
  %v181 = vpop.permute.xlu0 %180
  %182 = vrot.lane.b32.xlu0 %v178, 108
  %v183 = vpop.permute.xlu0 %182
  %v184 = vrot.slane %v181, 4
  %v185 = vrot.slane %v183, 4
  %v186 = vsel %vm46, %v184, %v185
  %vm187 = vcmask 883712
  %v188 = vsel %vm187, %v181, %v186
  %191 = vst [vmem:[#allocation2 + $0x24] sm:$0xcc] %v188
  %192 = vst.msk [vmem:[#allocation2 + $0x2c] sm:$0xc] %vm77, %v183
  %v193 = vld [vmem:[%s0 + $0x2] sm:$0x3f]
  %195 = vst [vmem:[#allocation1] ss:$2 sm:$0xff] %v193
  %v196 = vld.sshfl [vmem:[#allocation1] sm:$0xff pattern:$0x75643120]
  %v198 = vld.sshfl [vmem:[#allocation1 + $0x8] sm:$0xff pattern:$0x75643120]
  %200 = vrot.lane.b32.xlu0 %v196, 107
  %v201 = vpop.permute.xlu0 %200
  %202 = vrot.lane.b32.xlu0 %v198, 107
  %v203 = vpop.permute.xlu0 %202
  %v204 = vrot.slane %v201, 4
  %v205 = vrot.slane %v203, 4
  %v206 = vsel %vm46, %v204, %v205
  %vm207 = vcmask 875520
  %v208 = vsel %vm207, %v201, %v206
  %211 = vst [vmem:[#allocation2 + $0x30] sm:$0x33] %v208
  %212 = vst.msk [vmem:[#allocation2 + $0x38] sm:$0x3] %vm54, %v203
  %v213 = vld [vmem:[#allocation2] sm:$0xff]
  %v214 = vld [vmem:[#allocation2 + $0x8] sm:$0xf]
  %v215 = vld [vmem:[#allocation2 + $0xc] sm:$0xff]
  %v216 = vld [vmem:[#allocation2 + $0x14] sm:$0xf]
  %v217 = vld [vmem:[#allocation2 + $0x18] sm:$0xff]
  %v218 = vld [vmem:[#allocation2 + $0x20] sm:$0xf]
  %v219 = vld [vmem:[#allocation2 + $0x24] sm:$0xff]
  %v220 = vld [vmem:[#allocation2 + $0x2c] sm:$0xf]
  %v221 = vld [vmem:[#allocation2 + $0x30] sm:$0x33]
  %v222 = vld [vmem:[#allocation2 + $0x38] sm:$0x3]
  %224 = vset.pattern.permute.xlu0 0
  %225 = vperm.xlu0 %224, %v28
  %v226 = vpop.permute.xlu0 %225
  %v238 = vunpack.c.l.b16 %v213
  %v239 = vunpack.c.h.b16 %v213
  %v240 = vunpack.c.l.b16 %v214
  %v241 = vunpack.c.l.b16 %v215
  %v242 = vunpack.c.h.b16 %v215
  %v243 = vunpack.c.l.b16 %v216
  %v244 = vunpack.c.l.b16 %v217
  %v245 = vunpack.c.h.b16 %v217
  %v246 = vunpack.c.l.b16 %v218
  %v247 = vunpack.c.l.b16 %v219
  %v248 = vunpack.c.h.b16 %v219
  %v249 = vunpack.c.l.b16 %v220
  %v250 = vunpack.c.l.b16 %v221
  %v251 = vunpack.c.h.b16 %v221
  %v252 = vunpack.c.l.b16 %v222
  %v253 = vpack.c.b16 %v241, %v238
  %v254 = vpack.c.b16 %v242, %v239
  %v255 = vpack.c.b16 %v243, %v240
  %v256 = vpack.c.b16 %v247, %v244
  %v257 = vpack.c.b16 %v248, %v245
  %v258 = vpack.c.b16 %v249, %v246
  %v259 = vpack.c.b16 %v250, %v250
  %v260 = vpack.c.b16 %v251, %v251
  %v261 = vpack.c.b16 %v252, %v252
  %vm268 = vcmask 293888
  %v270 = vsel %vm268, %v27, 0
  %vm272 = vcmask 1041408
  %v274 = vsel %vm272, %v259, 0
  %v277 = vsel %vm272, %v260, 0
  %v280 = vsel %vm272, %v261, 0
  %282 = vmatpush.bf16.msra.mxu0 0
  %283 = vmatpush.bf16.msra.mxu0 0
  %284 = vmatpush.bf16.msra.mxu0 0
  %285 = vmatpush.bf16.msra.mxu0 0
  %286 = vmatpush.bf16.msra.mxu0 0
  %287 = vmatpush.bf16.msra.mxu0 %v274
  %288 = vmatpush.bf16.msra.mxu0 %v256
  %289 = vmatpush.bf16.msra.mxu0 %v253
  %290 = vmatmul.bf16.gmra.mxu0 %v270
  %v291 = vpop.f32.mrf.mxu0
  %v292 = vadd.f32 %v226, %v291
  %v293 = vpop.f32.mrf.mxu0
  %294 = vdwg.mxu0
  %295 = vmatpush.bf16.msra.mxu0 0
  %296 = vmatpush.bf16.msra.mxu0 0
  %297 = vmatpush.bf16.msra.mxu0 0
  %298 = vmatpush.bf16.msra.mxu0 0
  %299 = vmatpush.bf16.msra.mxu0 0
  %300 = vmatpush.bf16.msra.mxu0 %v277
  %301 = vmatpush.bf16.msra.mxu0 %v257
  %302 = vmatpush.bf16.msra.mxu0 %v254
  %303 = vmatmul.bf16.gmra.mxu0 %v270
  %v304 = vpop.f32.mrf.mxu0
  %v305 = vadd.f32 %v226, %v304
  %v306 = vpop.f32.mrf.mxu0
  %307 = vdwg.mxu0
  %308 = vmatpush.bf16.msra.mxu0 0
  %309 = vmatpush.bf16.msra.mxu0 0
  %310 = vmatpush.bf16.msra.mxu0 0
  %311 = vmatpush.bf16.msra.mxu0 0
  %312 = vmatpush.bf16.msra.mxu0 0
  %313 = vmatpush.bf16.msra.mxu0 %v280
  %314 = vmatpush.bf16.msra.mxu0 %v258
  %315 = vmatpush.bf16.msra.mxu0 %v255
  %316 = vmatmul.bf16.gmra.mxu0 %v270
  %v317 = vpop.f32.mrf.mxu0
  %v318 = vadd.f32 %v226, %v317
  %v319 = vpop.f32.mrf.mxu0
  %320 = vdwg.mxu0
  %v322 = vperm.slane %v32, 0
  %v323 = vperm.slane %v32, 1
  %v324 = vperm.slane %v32, 2
  %v328 = vmul.f32 %v292, %v322
  %v329 = vmul.f32 %v305, %v323
  %v330 = vmul.f32 %v318, %v324
  %v331 = vadd.f32 %v328, %v329
  %vm332 = vcmask 523264
  %v333 = vsel %vm332, %v330, 0.0
  %v334 = vadd.f32 %v331, %v333
  %335 = vadd.xlane.f32.xlu0 %v334
  %v336 = vpop.xlane.xlu0 %335
  %v337 = vmul.f32 %v328, %v328
  %v338 = vmul.f32 %v329, %v329
  %v339 = vmul.f32 %v330, %v330
  %v340 = vadd.f32 %v337, %v338
  %v341 = vsel %vm332, %v339, 0.0
  %v342 = vadd.f32 %v340, %v341
  %343 = vadd.xlane.f32.xlu0 %v342
  %v344 = vpop.xlane.xlu0 %343
  %vm345 = vcmask 7168
  %v346 = vsel %vm345, %v336, %v344
  %vm347 = vcmask 64512
  %v349 = vsel %vm347, %v31, 0
  %351 = vmatpush.msra.mxu0 0.0
  %352 = vmatpush.msra.mxu0 0.0
  %353 = vmatpush.msra.mxu0 0.0
  %354 = vmatpush.msra.mxu0 0.0
  %355 = vmatpush.msra.mxu0 0.0
  %356 = vmatpush.msra.mxu0 0.0
  %357 = vmatpush.msra.mxu0 0.0
  %358 = vmatpush.msra.mxu0 0.0
  %359 = vmatpush.msra.mxu0 0.0
  %360 = vmatpush.msra.mxu0 0.0
  %361 = vmatpush.msra.mxu0 0.0
  %362 = vmatpush.msra.mxu0 0.0
  %363 = vmatpush.msra.mxu0 0.0
  %364 = vmatpush.msra.mxu0 0.0
  %365 = vmatpush.msra.mxu0 0.0
  %366 = vmatpush.msra.mxu0 %v346
  %367 = vmatmul.f32.gmra.mxu0 %v349
  %v368 = vpop.f32.mrf.mxu0
  %v369 = vadd.f32 0.0, %v368
  %370 = vdwg.mxu0
  %v371 = vmul.f32 %v369, 0.00390625
  %v372 = vmul.f32 %v371, %v371
  %374 = vrot.lane.b32.xlu0 %v372, 1
  %v375 = vpop.permute.xlu0 %374
  %v377 = vsub.f32 %v371, %v375
  %v378 = vmax.f32 %v377, 0.0
  %380 = vset.pattern.permute.xlu0 0
  %381 = vperm.xlu0 %380, %v371
  %v382 = vpop.permute.xlu0 %381
  %v384 = vsub.f32 %v292, %v382
  %v385 = vsub.f32 %v305, %v382
  %v386 = vsub.f32 %v318, %v382
  %v387 = vadd.f32 %v378, 1e-05
  %v388 = vrsqrt.pop %v387
  %v389 = vmul.f32 %v388, %v387
  %v390 = vmul.f32 %v389, %v388
  %v391 = vmul.f32 0.5, %v390
  %v392 = vsub.f32 1.5, %v391
  %v393 = vmul.f32 %v388, %v392
  %vm394 = vweird.f32 %v387
  %vm395 = vweird.f32 %v388
  %vm396 = vmor %vm394, %vm395
  %v397 = vsel %vm396, %v388, %v393
  %399 = vset.pattern.permute.xlu0 1
  %400 = vperm.xlu0 %399, %v397
  %v401 = vpop.permute.xlu0 %400
  %v403 = vmul.f32 %v384, %v401
  %v404 = vmul.f32 %v385, %v401
  %v405 = vmul.f32 %v386, %v401
  %407 = vset.pattern.permute.xlu0 0
  %408 = vperm.xlu0 %407, %v29
  %v409 = vpop.permute.xlu0 %408
  %v411 = vmul.f32 %v403, %v409
  %v412 = vmul.f32 %v404, %v409
  %v413 = vmul.f32 %v405, %v409
  %415 = vset.pattern.permute.xlu0 0
  %416 = vperm.xlu0 %415, %v30
  %v417 = vpop.permute.xlu0 %416
  %v419 = vadd.f32 %v411, %v417
  %v420 = vadd.f32 %v412, %v417
  %v421 = vadd.f32 %v413, %v417
  %v422 = vmul.f32 %v419, 0.5
  %v423 = vmul.f32 %v420, 0.5
  %v424 = vmul.f32 %v421, 0.5
  %v425 = vmul.f32 %v419, 0.70710677
  %v426 = vmul.f32 %v420, 0.70710677
  %v427 = vmul.f32 %v421, 0.70710677
  %v428 = vmul.f32 %v425, %v425
  %v429 = vmin.f32 16.0, %v428
  %v430 = vmul.f32 %v429, 2.1237322e-06
  %v431 = vadd.f32 %v430, 0.00028619796
  %v432 = vmul.f32 %v429, %v431
  %v433 = vadd.f32 %v432, 0.0036580483
  %v434 = vmul.f32 %v429, %v433
  %v435 = vadd.f32 %v434, 0.05243302
  %v436 = vmul.f32 %v429, %v435
  %v437 = vadd.f32 %v436, 0.18741608
  %v438 = vmul.f32 %v429, %v437
  %v439 = vadd.f32 %v438, 1.1283791
  %v440 = vmul.f32 %v425, %v439
  %v441 = vmul.f32 %v429, 3.8918573e-05
  %v442 = vadd.f32 %v441, 0.001143296
  %v443 = vmul.f32 %v429, %v442
  %v444 = vadd.f32 %v443, 0.014752088
  %v445 = vmul.f32 %v429, %v444
  %v446 = vadd.f32 %v445, 0.112945676
  %v447 = vmul.f32 %v429, %v446
  %v448 = vadd.f32 %v447, 0.4994258
  %v449 = vmul.f32 %v429, %v448
  %v450 = vadd.f32 %v449, 1.0
  %v451 = vrcp.pop %v450
  %v452 = vmul.f32 %v450, %v451
  %v453 = vsub.f32 1.0, %v452
  %v454 = vmul.f32 %v451, %v453
  %v455 = vadd.f32 %v451, %v454
  %vm456 = vweird.f32 %v450
  %vm457 = vweird.f32 %v451
  %vm458 = vmor %vm456, %vm457
  %v459 = vsel %vm458, %v451, %v455
  %v460 = vand.u32 2147483647, %v450
  %vm461 = vcmp.eq.f32.partialorder %v460, 8.507059e+37
  %v462 = vand.u32 %v450, 2147483648
  %v463 = vor.u32 1.1754944e-38, %v462
  %v464 = vsel %vm461, %v463, %v459
  %v465 = vmul.f32 %v440, %v464
  %v466 = vmin.f32 %v465, 1.0
  %v467 = vmax.f32 %v466, -1.0
  %v468 = vmul.f32 %v426, %v426
  %v469 = vmin.f32 16.0, %v468
  %v470 = vmul.f32 %v469, 2.1237322e-06
  %v471 = vadd.f32 %v470, 0.00028619796
  %v472 = vmul.f32 %v469, %v471
  %v473 = vadd.f32 %v472, 0.0036580483
  %v474 = vmul.f32 %v469, %v473
  %v475 = vadd.f32 %v474, 0.05243302
  %v476 = vmul.f32 %v469, %v475
  %v477 = vadd.f32 %v476, 0.18741608
  %v478 = vmul.f32 %v469, %v477
  %v479 = vadd.f32 %v478, 1.1283791
  %v480 = vmul.f32 %v426, %v479
  %v481 = vmul.f32 %v469, 3.8918573e-05
  %v482 = vadd.f32 %v481, 0.001143296
  %v483 = vmul.f32 %v469, %v482
  %v484 = vadd.f32 %v483, 0.014752088
  %v485 = vmul.f32 %v469, %v484
  %v486 = vadd.f32 %v485, 0.112945676
  %v487 = vmul.f32 %v469, %v486
  %v488 = vadd.f32 %v487, 0.4994258
  %v489 = vmul.f32 %v469, %v488
  %v490 = vadd.f32 %v489, 1.0
  %v491 = vrcp.pop %v490
  %v492 = vmul.f32 %v490, %v491
  %v493 = vsub.f32 1.0, %v492
  %v494 = vmul.f32 %v491, %v493
  %v495 = vadd.f32 %v491, %v494
  %vm496 = vweird.f32 %v490
  %vm497 = vweird.f32 %v491
  %vm498 = vmor %vm496, %vm497
  %v499 = vsel %vm498, %v491, %v495
  %v500 = vand.u32 2147483647, %v490
  %vm501 = vcmp.eq.f32.partialorder %v500, 8.507059e+37
  %v502 = vand.u32 %v490, 2147483648
  %v503 = vor.u32 1.1754944e-38, %v502
  %v504 = vsel %vm501, %v503, %v499
  %v505 = vmul.f32 %v480, %v504
  %v506 = vmin.f32 %v505, 1.0
  %v507 = vmax.f32 %v506, -1.0
  %v508 = vmul.f32 %v427, %v427
  %v509 = vmin.f32 16.0, %v508
  %v510 = vmul.f32 %v509, 2.1237322e-06
  %v511 = vadd.f32 %v510, 0.00028619796
  %v512 = vmul.f32 %v509, %v511
  %v513 = vadd.f32 %v512, 0.0036580483
  %v514 = vmul.f32 %v509, %v513
  %v515 = vadd.f32 %v514, 0.05243302
  %v516 = vmul.f32 %v509, %v515
  %v517 = vadd.f32 %v516, 0.18741608
  %v518 = vmul.f32 %v509, %v517
  %v519 = vadd.f32 %v518, 1.1283791
  %v520 = vmul.f32 %v427, %v519
  %v521 = vmul.f32 %v509, 3.8918573e-05
  %v522 = vadd.f32 %v521, 0.001143296
  %v523 = vmul.f32 %v509, %v522
  %v524 = vadd.f32 %v523, 0.014752088
  %v525 = vmul.f32 %v509, %v524
  %v526 = vadd.f32 %v525, 0.112945676
  %v527 = vmul.f32 %v509, %v526
  %v528 = vadd.f32 %v527, 0.4994258
  %v529 = vmul.f32 %v509, %v528
  %v530 = vadd.f32 %v529, 1.0
  %v531 = vrcp.pop %v530
  %v532 = vmul.f32 %v530, %v531
  %v533 = vsub.f32 1.0, %v532
  %v534 = vmul.f32 %v531, %v533
  %v535 = vadd.f32 %v531, %v534
  %vm536 = vweird.f32 %v530
  %vm537 = vweird.f32 %v531
  %vm538 = vmor %vm536, %vm537
  %v539 = vsel %vm538, %v531, %v535
  %v540 = vand.u32 2147483647, %v530
  %vm541 = vcmp.eq.f32.partialorder %v540, 8.507059e+37
  %v542 = vand.u32 %v530, 2147483648
  %v543 = vor.u32 1.1754944e-38, %v542
  %v544 = vsel %vm541, %v543, %v539
  %v545 = vmul.f32 %v520, %v544
  %v546 = vmin.f32 %v545, 1.0
  %v547 = vmax.f32 %v546, -1.0
  %v548 = vadd.f32 %v467, 1.0
  %v549 = vadd.f32 %v507, 1.0
  %v550 = vadd.f32 %v547, 1.0
  %v551 = vmul.f32 %v422, %v548
  %v552 = vmul.f32 %v423, %v549
  %v553 = vmul.f32 %v424, %v550
  %v554 = vmul.f32 %v551, %v322
  %v555 = vmul.f32 %v552, %v323
  %v556 = vmul.f32 %v553, %v324
  %557 = vst [vmem:[%s7] sm:$0xf] 0
  %v558 = vpack.c.bf16 %v555, %v554
  %v559 = vpack.c.bf16 %v556, %v556
  %560 = vst [vmem:[%s7 + $0x4] sm:$0xff] %v558
  %vm561 = vcmask 519168
  %562 = vst.msk [vmem:[%s7 + $0xc] sm:$0xf] %vm561, %v559
  %vm563 = vcmask 1043968
  %vm564 = vcmask 1047556
  %vm565 = vmor %vm564, %vm563
  %566 = vst.msk [vmem:[%s7 + $0xc] sm:$0xff] %vm565, 0
  %s567 = scalar_lea.vmem %s0, 10
  %v568 = vld [vmem:[%s567] sm:$0xff]
  %570 = vst [vmem:[#allocation1] ss:$2 sm:$0xff] %v568
  %v571 = vld.sshfl [vmem:[#allocation1] sm:$0xff pattern:$0x75643120]
  %v573 = vld.sshfl [vmem:[#allocation1 + $0x8] sm:$0xff pattern:$0x75643120]
  %575 = vrot.lane.b32.xlu0 %v571, 21
  %v576 = vpop.permute.xlu0 %575
  %577 = vrot.lane.b32.xlu0 %v573, 21
  %v578 = vpop.permute.xlu0 %577
  %v579 = vrot.slane %v576, 4
  %v580 = vrot.slane %v578, 4
  %v581 = vsel %vm46, %v579, %v580
  %v582 = vsel %vm48, %v576, %v581
  %v583 = vsel %vm48, %v578, %v580
  %586 = vst [vmem:[#allocation2] sm:$0x33] %v582
  %587 = vst.msk [vmem:[#allocation2 + $0x8] sm:$0x3] %vm54, %v583
  %v588 = vld [vmem:[%s567] sm:$0xff]
  %s590 = scalar_lea.vmem [#allocation1], 1
  %591 = vst [vmem:[%s590] ss:$2 sm:$0xff] %v588
  %v592 = vld.sshfl [vmem:[#allocation1] sm:$0xff pattern:$0x75643120]
  %v594 = vld.sshfl [vmem:[#allocation1 + $0x8] sm:$0xff pattern:$0x75643120]
  %596 = vrot.lane.b32.xlu0 %v592, 20
  %v597 = vpop.permute.xlu0 %596
  %598 = vrot.lane.b32.xlu0 %v594, 20
  %v599 = vpop.permute.xlu0 %598
  %v600 = vrot.slane %v597, 4
  %v601 = vrot.slane %v599, 4
  %v602 = vsel %vm46, %v600, %v601
  %v603 = vsel %vm71, %v597, %v602
  %v604 = vsel %vm71, %v599, %v601
  %607 = vst [vmem:[#allocation2] sm:$0xcc] %v603
  %608 = vst.msk [vmem:[#allocation2 + $0x8] sm:$0xc] %vm77, %v604
  %v609 = vld [vmem:[%s567] sm:$0xff]
  %611 = vst [vmem:[#allocation1] ss:$2 sm:$0xff] %v609
  %v612 = vld.sshfl [vmem:[#allocation1] sm:$0xff pattern:$0x75643120]
  %v614 = vld.sshfl [vmem:[#allocation1 + $0x8] sm:$0xff pattern:$0x75643120]
  %616 = vrot.lane.b32.xlu0 %v612, 19
  %v617 = vpop.permute.xlu0 %616
  %618 = vrot.lane.b32.xlu0 %v614, 19
  %v619 = vpop.permute.xlu0 %618
  %v620 = vrot.slane %v617, 4
  %v621 = vrot.slane %v619, 4
  %v622 = vsel %vm46, %v620, %v621
  %v623 = vsel %vm93, %v617, %v622
  %v624 = vsel %vm93, %v619, %v621
  %627 = vst [vmem:[#allocation2 + $0xc] sm:$0x33] %v623
  %628 = vst.msk [vmem:[#allocation2 + $0x14] sm:$0x3] %vm54, %v624
  %v629 = vld [vmem:[%s567] sm:$0xff]
  %s631 = scalar_lea.vmem [#allocation1], 1
  %632 = vst [vmem:[%s631] ss:$2 sm:$0xff] %v629
  %v633 = vld.sshfl [vmem:[#allocation1] sm:$0xff pattern:$0x75643120]
  %v635 = vld.sshfl [vmem:[#allocation1 + $0x8] sm:$0xff pattern:$0x75643120]
  %637 = vrot.lane.b32.xlu0 %v633, 1
  %v638 = vpop.permute.xlu0 %637
  %639 = vrot.lane.b32.xlu0 %v635, 1
  %v640 = vpop.permute.xlu0 %639
  %v641 = vrot.slane %v638, 4
  %v642 = vrot.slane %v640, 4
  %v643 = vsel %vm46, %v641, %v642
  %v644 = vsel %vm115, %v638, %v643
  %v645 = vsel %vm115, %v640, %v642
  %648 = vst [vmem:[#allocation2 + $0xc] sm:$0xcc] %v644
  %649 = vst.msk [vmem:[#allocation2 + $0x14] sm:$0xc] %vm77, %v645
  %v650 = vld [vmem:[%s567 + $0x2] sm:$0x3f]
  %652 = vst [vmem:[#allocation1] ss:$2 sm:$0xff] %v650
  %v653 = vld.sshfl [vmem:[#allocation1] sm:$0xff pattern:$0x75643120]
  %v654 = vld.sshfl [vmem:[#allocation1 + $0x8] sm:$0xff pattern:$0x75643120]
  %657 = vst [vmem:[#allocation2 + $0x18] sm:$0x33] %v653
  %658 = vst.msk [vmem:[#allocation2 + $0x20] sm:$0x3] %vm54, %v654
  %v659 = vld [vmem:[%s567 + $0x2] sm:$0x3f]
  %s661 = scalar_lea.vmem [#allocation1], 1
  %662 = vst [vmem:[%s661] ss:$2 sm:$0xff] %v659
  %v663 = vld.sshfl [vmem:[#allocation1] sm:$0xff pattern:$0x75643120]
  %v665 = vld.sshfl [vmem:[#allocation1 + $0x8] sm:$0xff pattern:$0x75643120]
  %667 = vrot.lane.b32.xlu0 %v663, 127
  %v668 = vpop.permute.xlu0 %667
  %669 = vrot.lane.b32.xlu0 %v665, 127
  %v670 = vpop.permute.xlu0 %669
  %v671 = vrot.slane %v668, 4
  %v672 = vrot.slane %v670, 4
  %v673 = vsel %vm46, %v671, %v672
  %v674 = vsel %vm146, %v668, %v673
  %677 = vst [vmem:[#allocation2 + $0x18] sm:$0xcc] %v674
  %678 = vst.msk [vmem:[#allocation2 + $0x20] sm:$0xc] %vm77, %v670
  %v679 = vld [vmem:[%s567 + $0x2] sm:$0x3f]
  %681 = vst [vmem:[#allocation1] ss:$2 sm:$0xff] %v679
  %v682 = vld.sshfl [vmem:[#allocation1] sm:$0xff pattern:$0x75643120]
  %v684 = vld.sshfl [vmem:[#allocation1 + $0x8] sm:$0xff pattern:$0x75643120]
  %686 = vrot.lane.b32.xlu0 %v682, 109
  %v687 = vpop.permute.xlu0 %686
  %688 = vrot.lane.b32.xlu0 %v684, 109
  %v689 = vpop.permute.xlu0 %688
  %v690 = vrot.slane %v687, 4
  %v691 = vrot.slane %v689, 4
  %v692 = vsel %vm46, %v690, %v691
  %v693 = vsel %vm166, %v687, %v692
  %696 = vst [vmem:[#allocation2 + $0x24] sm:$0x33] %v693
  %697 = vst.msk [vmem:[#allocation2 + $0x2c] sm:$0x3] %vm54, %v689
  %v698 = vld [vmem:[%s567 + $0x2] sm:$0x3f]
  %s700 = scalar_lea.vmem [#allocation1], 1
  %701 = vst [vmem:[%s700] ss:$2 sm:$0xff] %v698
  %v702 = vld.sshfl [vmem:[#allocation1] sm:$0xff pattern:$0x75643120]
  %v704 = vld.sshfl [vmem:[#allocation1 + $0x8] sm:$0xff pattern:$0x75643120]
  %706 = vrot.lane.b32.xlu0 %v702, 108
  %v707 = vpop.permute.xlu0 %706
  %708 = vrot.lane.b32.xlu0 %v704, 108
  %v709 = vpop.permute.xlu0 %708
  %v710 = vrot.slane %v707, 4
  %v711 = vrot.slane %v709, 4
  %v712 = vsel %vm46, %v710, %v711
  %v713 = vsel %vm187, %v707, %v712
  %716 = vst [vmem:[#allocation2 + $0x24] sm:$0xcc] %v713
  %717 = vst.msk [vmem:[#allocation2 + $0x2c] sm:$0xc] %vm77, %v709
  %v718 = vld [vmem:[%s567 + $0x2] sm:$0x3f]
  %720 = vst [vmem:[#allocation1] ss:$2 sm:$0xff] %v718
  %v721 = vld.sshfl [vmem:[#allocation1] sm:$0xff pattern:$0x75643120]
  %v723 = vld.sshfl [vmem:[#allocation1 + $0x8] sm:$0xff pattern:$0x75643120]
  %725 = vrot.lane.b32.xlu0 %v721, 107
  %v726 = vpop.permute.xlu0 %725
  %727 = vrot.lane.b32.xlu0 %v723, 107
  %v728 = vpop.permute.xlu0 %727
  %v729 = vrot.slane %v726, 4
  %v730 = vrot.slane %v728, 4
  %v731 = vsel %vm46, %v729, %v730
  %v732 = vsel %vm207, %v726, %v731
  %735 = vst [vmem:[#allocation2 + $0x30] sm:$0x33] %v732
  %736 = vst.msk [vmem:[#allocation2 + $0x38] sm:$0x3] %vm54, %v728
  %v737 = vld [vmem:[#allocation2] sm:$0xff]
  %v738 = vld [vmem:[#allocation2 + $0x8] sm:$0xf]
  %v739 = vld [vmem:[#allocation2 + $0xc] sm:$0xff]
  %v740 = vld [vmem:[#allocation2 + $0x14] sm:$0xf]
  %v741 = vld [vmem:[#allocation2 + $0x18] sm:$0xff]
  %v742 = vld [vmem:[#allocation2 + $0x20] sm:$0xf]
  %v743 = vld [vmem:[#allocation2 + $0x24] sm:$0xff]
  %v744 = vld [vmem:[#allocation2 + $0x2c] sm:$0xf]
  %v745 = vld [vmem:[#allocation2 + $0x30] sm:$0x33]
  %v746 = vld [vmem:[#allocation2 + $0x38] sm:$0x3]
  %v757 = vunpack.c.l.b16 %v737
  %v758 = vunpack.c.h.b16 %v737
  %v759 = vunpack.c.l.b16 %v738
  %v760 = vunpack.c.l.b16 %v739
  %v761 = vunpack.c.h.b16 %v739
  %v762 = vunpack.c.l.b16 %v740
  %v763 = vunpack.c.l.b16 %v741
  %v764 = vunpack.c.h.b16 %v741
  %v765 = vunpack.c.l.b16 %v742
  %v766 = vunpack.c.l.b16 %v743
  %v767 = vunpack.c.h.b16 %v743
  %v768 = vunpack.c.l.b16 %v744
  %v769 = vunpack.c.l.b16 %v745
  %v770 = vunpack.c.h.b16 %v745
  %v771 = vunpack.c.l.b16 %v746
  %v772 = vpack.c.b16 %v760, %v757
  %v773 = vpack.c.b16 %v761, %v758
  %v774 = vpack.c.b16 %v762, %v759
  %v775 = vpack.c.b16 %v766, %v763
  %v776 = vpack.c.b16 %v767, %v764
  %v777 = vpack.c.b16 %v768, %v765
  %v778 = vpack.c.b16 %v769, %v769
  %v779 = vpack.c.b16 %v770, %v770
  %v780 = vpack.c.b16 %v771, %v771
  %v788 = vsel %vm272, %v778, 0
  %v791 = vsel %vm272, %v779, 0
  %v794 = vsel %vm272, %v780, 0
  %796 = vmatpush.bf16.msra.mxu0 0
  %797 = vmatpush.bf16.msra.mxu0 0
  %798 = vmatpush.bf16.msra.mxu0 0
  %799 = vmatpush.bf16.msra.mxu0 0
  %800 = vmatpush.bf16.msra.mxu0 0
  %801 = vmatpush.bf16.msra.mxu0 %v788
  %802 = vmatpush.bf16.msra.mxu0 %v775
  %803 = vmatpush.bf16.msra.mxu0 %v772
  %804 = vmatmul.bf16.gmra.mxu0 %v270
  %v805 = vpop.f32.mrf.mxu0
  %v806 = vadd.f32 %v226, %v805
  %v807 = vpop.f32.mrf.mxu0
  %808 = vdwg.mxu0
  %809 = vmatpush.bf16.msra.mxu0 0
  %810 = vmatpush.bf16.msra.mxu0 0
  %811 = vmatpush.bf16.msra.mxu0 0
  %812 = vmatpush.bf16.msra.mxu0 0
  %813 = vmatpush.bf16.msra.mxu0 0
  %814 = vmatpush.bf16.msra.mxu0 %v791
  %815 = vmatpush.bf16.msra.mxu0 %v776
  %816 = vmatpush.bf16.msra.mxu0 %v773
  %817 = vmatmul.bf16.gmra.mxu0 %v270
  %v818 = vpop.f32.mrf.mxu0
  %v819 = vadd.f32 %v226, %v818
  %v820 = vpop.f32.mrf.mxu0
  %821 = vdwg.mxu0
  %822 = vmatpush.bf16.msra.mxu0 0
  %823 = vmatpush.bf16.msra.mxu0 0
  %824 = vmatpush.bf16.msra.mxu0 0
  %825 = vmatpush.bf16.msra.mxu0 0
  %826 = vmatpush.bf16.msra.mxu0 0
  %827 = vmatpush.bf16.msra.mxu0 %v794
  %828 = vmatpush.bf16.msra.mxu0 %v777
  %829 = vmatpush.bf16.msra.mxu0 %v774
  %830 = vmatmul.bf16.gmra.mxu0 %v270
  %v831 = vpop.f32.mrf.mxu0
  %v832 = vadd.f32 %v226, %v831
  %v833 = vpop.f32.mrf.mxu0
  %834 = vdwg.mxu0
  %v835 = vmul.f32 %v806, %v322
  %v836 = vmul.f32 %v819, %v323
  %v837 = vmul.f32 %v832, %v324
  %v838 = vadd.f32 %v835, %v836
  %v839 = vsel %vm332, %v837, 0.0
  %v840 = vadd.f32 %v838, %v839
  %841 = vadd.xlane.f32.xlu0 %v840
  %v842 = vpop.xlane.xlu0 %841
  %v843 = vmul.f32 %v835, %v835
  %v844 = vmul.f32 %v836, %v836
  %v845 = vmul.f32 %v837, %v837
  %v846 = vadd.f32 %v843, %v844
  %v847 = vsel %vm332, %v845, 0.0
  %v848 = vadd.f32 %v846, %v847
  %849 = vadd.xlane.f32.xlu0 %v848
  %v850 = vpop.xlane.xlu0 %849
  %v851 = vsel %vm345, %v842, %v850
  %852 = vmatpush.msra.mxu0 0.0
  %853 = vmatpush.msra.mxu0 0.0
  %854 = vmatpush.msra.mxu0 0.0
  %855 = vmatpush.msra.mxu0 0.0
  %856 = vmatpush.msra.mxu0 0.0
  %857 = vmatpush.msra.mxu0 0.0
  %858 = vmatpush.msra.mxu0 0.0
  %859 = vmatpush.msra.mxu0 0.0
  %860 = vmatpush.msra.mxu0 0.0
  %861 = vmatpush.msra.mxu0 0.0
  %862 = vmatpush.msra.mxu0 0.0
  %863 = vmatpush.msra.mxu0 0.0
  %864 = vmatpush.msra.mxu0 0.0
  %865 = vmatpush.msra.mxu0 0.0
  %866 = vmatpush.msra.mxu0 0.0
  %867 = vmatpush.msra.mxu0 %v851
  %868 = vmatmul.f32.gmra.mxu0 %v349
  %v869 = vpop.f32.mrf.mxu0
  %v870 = vadd.f32 0.0, %v869
  %871 = vdwg.mxu0
  %v872 = vmul.f32 %v870, 0.00390625
  %v873 = vmul.f32 %v872, %v872
  %875 = vrot.lane.b32.xlu0 %v873, 1
  %v876 = vpop.permute.xlu0 %875
  %v878 = vsub.f32 %v872, %v876
  %v879 = vmax.f32 %v878, 0.0
  %881 = vset.pattern.permute.xlu0 0
  %882 = vperm.xlu0 %881, %v872
  %v883 = vpop.permute.xlu0 %882
  %v885 = vsub.f32 %v806, %v883
  %v886 = vsub.f32 %v819, %v883
  %v887 = vsub.f32 %v832, %v883
  %v888 = vadd.f32 %v879, 1e-05
  %v889 = vrsqrt.pop %v888
  %v890 = vmul.f32 %v889, %v888
  %v891 = vmul.f32 %v890, %v889
  %v892 = vmul.f32 0.5, %v891
  %v893 = vsub.f32 1.5, %v892
  %v894 = vmul.f32 %v889, %v893
  %vm895 = vweird.f32 %v888
  %vm896 = vweird.f32 %v889
  %vm897 = vmor %vm895, %vm896
  %v898 = vsel %vm897, %v889, %v894
  %900 = vset.pattern.permute.xlu0 1
  %901 = vperm.xlu0 %900, %v898
  %v902 = vpop.permute.xlu0 %901
  %v904 = vmul.f32 %v885, %v902
  %v905 = vmul.f32 %v886, %v902
  %v906 = vmul.f32 %v887, %v902
  %v907 = vmul.f32 %v904, %v409
  %v908 = vmul.f32 %v905, %v409
  %v909 = vmul.f32 %v906, %v409
  %v910 = vadd.f32 %v907, %v417
  %v911 = vadd.f32 %v908, %v417
  %v912 = vadd.f32 %v909, %v417
  %v913 = vmul.f32 %v910, 0.5
  %v914 = vmul.f32 %v911, 0.5
  %v915 = vmul.f32 %v912, 0.5
  %v916 = vmul.f32 %v910, 0.70710677
  %v917 = vmul.f32 %v911, 0.70710677
  %v918 = vmul.f32 %v912, 0.70710677
  %v919 = vmul.f32 %v916, %v916
  %v920 = vmin.f32 16.0, %v919
  %v921 = vmul.f32 %v920, 2.1237322e-06
  %v922 = vadd.f32 %v921, 0.00028619796
  %v923 = vmul.f32 %v920, %v922
  %v924 = vadd.f32 %v923, 0.0036580483
  %v925 = vmul.f32 %v920, %v924
  %v926 = vadd.f32 %v925, 0.05243302
  %v927 = vmul.f32 %v920, %v926
  %v928 = vadd.f32 %v927, 0.18741608
  %v929 = vmul.f32 %v920, %v928
  %v930 = vadd.f32 %v929, 1.1283791
  %v931 = vmul.f32 %v916, %v930
  %v932 = vmul.f32 %v920, 3.8918573e-05
  %v933 = vadd.f32 %v932, 0.001143296
  %v934 = vmul.f32 %v920, %v933
  %v935 = vadd.f32 %v934, 0.014752088
  %v936 = vmul.f32 %v920, %v935
  %v937 = vadd.f32 %v936, 0.112945676
  %v938 = vmul.f32 %v920, %v937
  %v939 = vadd.f32 %v938, 0.4994258
  %v940 = vmul.f32 %v920, %v939
  %v941 = vadd.f32 %v940, 1.0
  %v942 = vrcp.pop %v941
  %v943 = vmul.f32 %v941, %v942
  %v944 = vsub.f32 1.0, %v943
  %v945 = vmul.f32 %v942, %v944
  %v946 = vadd.f32 %v942, %v945
  %vm947 = vweird.f32 %v941
  %vm948 = vweird.f32 %v942
  %vm949 = vmor %vm947, %vm948
  %v950 = vsel %vm949, %v942, %v946
  %v951 = vand.u32 2147483647, %v941
  %vm952 = vcmp.eq.f32.partialorder %v951, 8.507059e+37
  %v953 = vand.u32 %v941, 2147483648
  %v954 = vor.u32 1.1754944e-38, %v953
  %v955 = vsel %vm952, %v954, %v950
  %v956 = vmul.f32 %v931, %v955
  %v957 = vmin.f32 %v956, 1.0
  %v958 = vmax.f32 %v957, -1.0
  %v959 = vmul.f32 %v917, %v917
  %v960 = vmin.f32 16.0, %v959
  %v961 = vmul.f32 %v960, 2.1237322e-06
  %v962 = vadd.f32 %v961, 0.00028619796
  %v963 = vmul.f32 %v960, %v962
  %v964 = vadd.f32 %v963, 0.0036580483
  %v965 = vmul.f32 %v960, %v964
  %v966 = vadd.f32 %v965, 0.05243302
  %v967 = vmul.f32 %v960, %v966
  %v968 = vadd.f32 %v967, 0.18741608
  %v969 = vmul.f32 %v960, %v968
  %v970 = vadd.f32 %v969, 1.1283791
  %v971 = vmul.f32 %v917, %v970
  %v972 = vmul.f32 %v960, 3.8918573e-05
  %v973 = vadd.f32 %v972, 0.001143296
  %v974 = vmul.f32 %v960, %v973
  %v975 = vadd.f32 %v974, 0.014752088
  %v976 = vmul.f32 %v960, %v975
  %v977 = vadd.f32 %v976, 0.112945676
  %v978 = vmul.f32 %v960, %v977
  %v979 = vadd.f32 %v978, 0.4994258
  %v980 = vmul.f32 %v960, %v979
  %v981 = vadd.f32 %v980, 1.0
  %v982 = vrcp.pop %v981
  %v983 = vmul.f32 %v981, %v982
  %v984 = vsub.f32 1.0, %v983
  %v985 = vmul.f32 %v982, %v984
  %v986 = vadd.f32 %v982, %v985
  %vm987 = vweird.f32 %v981
  %vm988 = vweird.f32 %v982
  %vm989 = vmor %vm987, %vm988
  %v990 = vsel %vm989, %v982, %v986
  %v991 = vand.u32 2147483647, %v981
  %vm992 = vcmp.eq.f32.partialorder %v991, 8.507059e+37
  %v993 = vand.u32 %v981, 2147483648
  %v994 = vor.u32 1.1754944e-38, %v993
  %v995 = vsel %vm992, %v994, %v990
  %v996 = vmul.f32 %v971, %v995
  %v997 = vmin.f32 %v996, 1.0
  %v998 = vmax.f32 %v997, -1.0
  %v999 = vmul.f32 %v918, %v918
  %v1000 = vmin.f32 16.0, %v999
  %v1001 = vmul.f32 %v1000, 2.1237322e-06
  %v1002 = vadd.f32 %v1001, 0.00028619796
  %v1003 = vmul.f32 %v1000, %v1002
  %v1004 = vadd.f32 %v1003, 0.0036580483
  %v1005 = vmul.f32 %v1000, %v1004
  %v1006 = vadd.f32 %v1005, 0.05243302
  %v1007 = vmul.f32 %v1000, %v1006
  %v1008 = vadd.f32 %v1007, 0.18741608
  %v1009 = vmul.f32 %v1000, %v1008
  %v1010 = vadd.f32 %v1009, 1.1283791
  %v1011 = vmul.f32 %v918, %v1010
  %v1012 = vmul.f32 %v1000, 3.8918573e-05
  %v1013 = vadd.f32 %v1012, 0.001143296
  %v1014 = vmul.f32 %v1000, %v1013
  %v1015 = vadd.f32 %v1014, 0.014752088
  %v1016 = vmul.f32 %v1000, %v1015
  %v1017 = vadd.f32 %v1016, 0.112945676
  %v1018 = vmul.f32 %v1000, %v1017
  %v1019 = vadd.f32 %v1018, 0.4994258
  %v1020 = vmul.f32 %v1000, %v1019
  %v1021 = vadd.f32 %v1020, 1.0
  %v1022 = vrcp.pop %v1021
  %v1023 = vmul.f32 %v1021, %v1022
  %v1024 = vsub.f32 1.0, %v1023
  %v1025 = vmul.f32 %v1022, %v1024
  %v1026 = vadd.f32 %v1022, %v1025
  %vm1027 = vweird.f32 %v1021
  %vm1028 = vweird.f32 %v1022
  %vm1029 = vmor %vm1027, %vm1028
  %v1030 = vsel %vm1029, %v1022, %v1026
  %v1031 = vand.u32 2147483647, %v1021
  %vm1032 = vcmp.eq.f32.partialorder %v1031, 8.507059e+37
  %v1033 = vand.u32 %v1021, 2147483648
  %v1034 = vor.u32 1.1754944e-38, %v1033
  %v1035 = vsel %vm1032, %v1034, %v1030
  %v1036 = vmul.f32 %v1011, %v1035
  %v1037 = vmin.f32 %v1036, 1.0
  %v1038 = vmax.f32 %v1037, -1.0
  %v1039 = vadd.f32 %v958, 1.0
  %v1040 = vadd.f32 %v998, 1.0
  %v1041 = vadd.f32 %v1038, 1.0
  %v1042 = vmul.f32 %v913, %v1039
  %v1043 = vmul.f32 %v914, %v1040
  %v1044 = vmul.f32 %v915, %v1041
  %v1045 = vmul.f32 %v1042, %v322
  %v1046 = vmul.f32 %v1043, %v323
  %v1047 = vmul.f32 %v1044, %v324
  %s1048 = scalar_lea.vmem %s7, 20
  %1049 = vst [vmem:[%s1048] sm:$0xf] 0
  %v1050 = vpack.c.bf16 %v1046, %v1045
  %v1051 = vpack.c.bf16 %v1047, %v1047
  %1052 = vst [vmem:[%s1048 + $0x4] sm:$0xff] %v1050
  %1053 = vst.msk [vmem:[%s1048 + $0xc] sm:$0xf] %vm561, %v1051
  %1054 = vst.msk [vmem:[%s1048 + $0xc] sm:$0xff] %vm565, 0
  // Predicated region
  $region30: #{_lambda_.4} parent=0 // pred_check
    _
  $region31: #{_lambda_.4} parent=0 // pred_check_branch
    %1056 = sbr.rel (0) target = $region33
  $region32: #{_lambda_.4} parent=0 // pred_region
    _
  $region33: #{_lambda_.4} parent=0 // pred_fallthru
    _
  // Predicated region
  $region34: #{_lambda_.4} parent=0 // pred_check
    _
  $region35: #{_lambda_.4} parent=0 // pred_check_branch
    %1058 = sbr.rel (0) target = $region37
  $region36: #{_lambda_.4} parent=0 // pred_region
    _
  $region37: #{_lambda_.4} parent=0 // pred_fallthru
    _

// kernel: _lambda_.6
$region0: #{_lambda_.6}
  #allocation0 [shape = 'u32[]', space=smem, size = 0x4, offset = 0x4, fixed_abs, tag = 'smem constant byte address 0x4 - core index']
  #allocation1 [shape = 'u32[72,128]{1,0:T(1,128)}', space=vmem, size = 0x9000, scoped, tag = 'internal scratch']
  #allocation2 [shape = 'bf16[72,320]{1,0:T(8,128)(2,1)}', space=vmem, size = 0xd800, scoped, tag = 'scratch operand']
  %s0 = inlined_call_operand.vmem [shape: bf16[2,8,640], index: 0, kind: input, shape index: {}]
  %s1 = inlined_call_operand.vmem [shape: bf16[8,72], index: 1, kind: input, shape index: {}]
  %s2 = inlined_call_operand.vmem [shape: f32[8,1], index: 2, kind: input, shape index: {}]
  %s3 = inlined_call_operand.vmem [shape: f32[8,1], index: 3, kind: input, shape index: {}]
  %s4 = inlined_call_operand.vmem [shape: f32[8,1], index: 4, kind: input, shape index: {}]
  %s5 = inlined_call_operand.vmem [shape: f32[8,8], index: 5, kind: input, shape index: {}]
  %s6 = inlined_call_operand.vmem [shape: f32[1,320], index: 6, kind: input, shape index: {}]
  %s7 = inlined_call_operand.vmem [shape: bf16[2,8,320], index: 7, kind: output, shape index: {}]
  %s8 = sld [smem:[#allocation0]]
  $region38: #{_lambda_.6} parent=0
    _
  %s10 = ssub.s32 1, %s8
  %s11 = scalar_select 0, %s10, %s8
  // Predicated region
  $region2: #{_lambda_.6} parent=0 // pred_check
    _
  $region3: #{_lambda_.6} parent=0 // pred_check_branch
    %13 = sbr.rel (0) target = $region5
  $region4: #{_lambda_.6} parent=0 // pred_region
    _
  $region5: #{_lambda_.6} parent=0 // pred_fallthru
    _
  // Predicated region
  $region6: #{_lambda_.6} parent=0 // pred_check
    _
  $region7: #{_lambda_.6} parent=0 // pred_check_branch
    %15 = sbr.rel (0) target = $region9
  $region8: #{_lambda_.6} parent=0 // pred_region
    _
  $region9: #{_lambda_.6} parent=0 // pred_fallthru
    _
  // Predicated region
  $region10: #{_lambda_.6} parent=0 // pred_check
    _
  $region11: #{_lambda_.6} parent=0 // pred_check_branch
    %17 = sbr.rel (0) target = $region13
  $region12: #{_lambda_.6} parent=0 // pred_region
    _
  $region13: #{_lambda_.6} parent=0 // pred_fallthru
    _
  // Predicated region
  $region14: #{_lambda_.6} parent=0 // pred_check
    _
  $region15: #{_lambda_.6} parent=0 // pred_check_branch
    %19 = sbr.rel (0) target = $region17
  $region16: #{_lambda_.6} parent=0 // pred_region
    _
  $region17: #{_lambda_.6} parent=0 // pred_fallthru
    _
  // Predicated region
  $region18: #{_lambda_.6} parent=0 // pred_check
    _
  $region19: #{_lambda_.6} parent=0 // pred_check_branch
    %21 = sbr.rel (0) target = $region21
  $region20: #{_lambda_.6} parent=0 // pred_region
    _
  $region21: #{_lambda_.6} parent=0 // pred_fallthru
    _
  // Predicated region
  $region22: #{_lambda_.6} parent=0 // pred_check
    _
  $region23: #{_lambda_.6} parent=0 // pred_check_branch
    %23 = sbr.rel (0) target = $region25
  $region24: #{_lambda_.6} parent=0 // pred_region
    _
  $region25: #{_lambda_.6} parent=0 // pred_fallthru
    _
  // Predicated region
  $region26: #{_lambda_.6} parent=0 // pred_check
    _
  $region27: #{_lambda_.6} parent=0 // pred_check_branch
    %25 = sbr.rel (0) target = $region29
  $region28: #{_lambda_.6} parent=0 // pred_region
    _
  $region29: #{_lambda_.6} parent=0 // pred_fallthru
    _
  %v27 = vld [vmem:[%s1] sm:$0xf]
  %v28 = vld [vmem:[%s2] sm:$0xff]
  %v29 = vld [vmem:[%s3] sm:$0xff]
  %v30 = vld [vmem:[%s4] sm:$0xff]
  %v31 = vld [vmem:[%s5] sm:$0xff]
  %v32 = vld [vmem:[%s6] sm:$0x7]
  %v33 = vld [vmem:[%s0] sm:$0xff]
  %v34 = vld [vmem:[%s0 + $0x8] sm:$0xff]
  %37 = vrot.lane.b32.xlu0 %v33, 21
  %v38 = vpop.permute.xlu0 %37
  %39 = vrot.lane.b32.xlu0 %v34, 21
  %v40 = vpop.permute.xlu0 %39
  %v41 = vrot.slane %v38, 4
  %v42 = vrot.slane %v40, 4
  %vm43 = vcmask 1043456
  %v44 = vsel %vm43, %v41, %v42
  %vm45 = vcmask 171008
  %v46 = vsel %vm45, %v38, %v44
  %v47 = vsel %vm45, %v40, %v42
  %50 = vst [vmem:[#allocation2] sm:$0xff] %v46
  %vm51 = vcmask 519168
  %52 = vst.msk [vmem:[#allocation2 + $0x8] sm:$0xf] %vm51, %v47
  %v53 = vld [vmem:[%s0] sm:$0xff]
  %v54 = vld [vmem:[%s0 + $0x8] sm:$0xff]
  %57 = vrot.lane.b32.xlu0 %v53, 20
  %v58 = vpop.permute.xlu0 %57
  %59 = vrot.lane.b32.xlu0 %v54, 20
  %v60 = vpop.permute.xlu0 %59
  %v61 = vrot.slane %v58, 4
  %v62 = vrot.slane %v60, 4
  %v63 = vsel %vm43, %v61, %v62
  %vm64 = vcmask 162816
  %v65 = vsel %vm64, %v58, %v63
  %v66 = vsel %vm64, %v60, %v62
  %69 = vst [vmem:[#allocation2 + $0xc] sm:$0xff] %v65
  %70 = vst.msk [vmem:[#allocation2 + $0x14] sm:$0xf] %vm51, %v66
  %v71 = vld [vmem:[%s0] sm:$0xff]
  %v72 = vld [vmem:[%s0 + $0x8] sm:$0xff]
  %75 = vrot.lane.b32.xlu0 %v71, 19
  %v76 = vpop.permute.xlu0 %75
  %77 = vrot.lane.b32.xlu0 %v72, 19
  %v78 = vpop.permute.xlu0 %77
  %v79 = vrot.slane %v76, 4
  %v80 = vrot.slane %v78, 4
  %v81 = vsel %vm43, %v79, %v80
  %vm82 = vcmask 154624
  %v83 = vsel %vm82, %v76, %v81
  %v84 = vsel %vm82, %v78, %v80
  %87 = vst [vmem:[#allocation2 + $0x18] sm:$0xff] %v83
  %88 = vst.msk [vmem:[#allocation2 + $0x20] sm:$0xf] %vm51, %v84
  %v89 = vld [vmem:[%s0] sm:$0xff]
  %v90 = vld [vmem:[%s0 + $0x8] sm:$0xff]
  %93 = vrot.lane.b32.xlu0 %v89, 1
  %v94 = vpop.permute.xlu0 %93
  %95 = vrot.lane.b32.xlu0 %v90, 1
  %v96 = vpop.permute.xlu0 %95
  %v97 = vrot.slane %v94, 4
  %v98 = vrot.slane %v96, 4
  %v99 = vsel %vm43, %v97, %v98
  %vm100 = vcmask 7168
  %v101 = vsel %vm100, %v94, %v99
  %v102 = vsel %vm100, %v96, %v98
  %105 = vst [vmem:[#allocation2 + $0x24] sm:$0xff] %v101
  %106 = vst.msk [vmem:[#allocation2 + $0x2c] sm:$0xf] %vm51, %v102
  %v107 = vld [vmem:[%s0 + $0x4] sm:$0xff]
  %v108 = vld [vmem:[%s0 + $0xc] sm:$0xf]
  %109 = vst [vmem:[#allocation2 + $0x30] sm:$0xff] %v107
  %110 = vst.msk [vmem:[#allocation2 + $0x38] sm:$0xf] %vm51, %v108
  %v111 = vld [vmem:[%s0 + $0x4] sm:$0xff]
  %v112 = vld [vmem:[%s0 + $0xc] sm:$0xf]
  %115 = vrot.lane.b32.xlu0 %v111, 127
  %v116 = vpop.permute.xlu0 %115
  %117 = vrot.lane.b32.xlu0 %v112, 127
  %v118 = vpop.permute.xlu0 %117
  %v119 = vrot.slane %v116, 4
  %v120 = vrot.slane %v118, 4
  %v121 = vsel %vm43, %v119, %v120
  %vm122 = vcmask 1039360
  %v123 = vsel %vm122, %v116, %v121
  %126 = vst [vmem:[#allocation2 + $0x3c] sm:$0xff] %v123
  %127 = vst.msk [vmem:[#allocation2 + $0x44] sm:$0xf] %vm51, %v118
  %v128 = vld [vmem:[%s0 + $0x4] sm:$0xff]
  %v129 = vld [vmem:[%s0 + $0xc] sm:$0xf]
  %132 = vrot.lane.b32.xlu0 %v128, 109
  %v133 = vpop.permute.xlu0 %132
  %134 = vrot.lane.b32.xlu0 %v129, 109
  %v135 = vpop.permute.xlu0 %134
  %v136 = vrot.slane %v133, 4
  %v137 = vrot.slane %v135, 4
  %v138 = vsel %vm43, %v136, %v137
  %vm139 = vcmask 891904
  %v140 = vsel %vm139, %v133, %v138
  %143 = vst [vmem:[#allocation2 + $0x48] sm:$0xff] %v140
  %144 = vst.msk [vmem:[#allocation2 + $0x50] sm:$0xf] %vm51, %v135
  %v145 = vld [vmem:[%s0 + $0x4] sm:$0xff]
  %v146 = vld [vmem:[%s0 + $0xc] sm:$0xf]
  %149 = vrot.lane.b32.xlu0 %v145, 108
  %v150 = vpop.permute.xlu0 %149
  %151 = vrot.lane.b32.xlu0 %v146, 108
  %v152 = vpop.permute.xlu0 %151
  %v153 = vrot.slane %v150, 4
  %v154 = vrot.slane %v152, 4
  %v155 = vsel %vm43, %v153, %v154
  %vm156 = vcmask 883712
  %v157 = vsel %vm156, %v150, %v155
  %160 = vst [vmem:[#allocation2 + $0x54] sm:$0xff] %v157
  %161 = vst.msk [vmem:[#allocation2 + $0x5c] sm:$0xf] %vm51, %v152
  %v162 = vld [vmem:[%s0 + $0x4] sm:$0xff]
  %v163 = vld [vmem:[%s0 + $0xc] sm:$0xf]
  %166 = vrot.lane.b32.xlu0 %v162, 107
  %v167 = vpop.permute.xlu0 %166
  %168 = vrot.lane.b32.xlu0 %v163, 107
  %v169 = vpop.permute.xlu0 %168
  %v170 = vrot.slane %v167, 4
  %v171 = vrot.slane %v169, 4
  %v172 = vsel %vm43, %v170, %v171
  %vm173 = vcmask 875520
  %v174 = vsel %vm173, %v167, %v172
  %177 = vst [vmem:[#allocation2 + $0x60] sm:$0xff] %v174
  %178 = vst.msk [vmem:[#allocation2 + $0x68] sm:$0xf] %vm51, %v169
  %v179 = vld [vmem:[#allocation2] sm:$0xff]
  %v180 = vld [vmem:[#allocation2 + $0x8] sm:$0xf]
  %v181 = vld [vmem:[#allocation2 + $0xc] sm:$0xff]
  %v182 = vld [vmem:[#allocation2 + $0x14] sm:$0xf]
  %v183 = vld [vmem:[#allocation2 + $0x18] sm:$0xff]
  %v184 = vld [vmem:[#allocation2 + $0x20] sm:$0xf]
  %v185 = vld [vmem:[#allocation2 + $0x24] sm:$0xff]
  %v186 = vld [vmem:[#allocation2 + $0x2c] sm:$0xf]
  %v187 = vld [vmem:[#allocation2 + $0x30] sm:$0xff]
  %v188 = vld [vmem:[#allocation2 + $0x38] sm:$0xf]
  %v189 = vld [vmem:[#allocation2 + $0x3c] sm:$0xff]
  %v190 = vld [vmem:[#allocation2 + $0x44] sm:$0xf]
  %v191 = vld [vmem:[#allocation2 + $0x48] sm:$0xff]
  %v192 = vld [vmem:[#allocation2 + $0x50] sm:$0xf]
  %v193 = vld [vmem:[#allocation2 + $0x54] sm:$0xff]
  %v194 = vld [vmem:[#allocation2 + $0x5c] sm:$0xf]
  %v195 = vld [vmem:[#allocation2 + $0x60] sm:$0xff]
  %v196 = vld [vmem:[#allocation2 + $0x68] sm:$0xf]
  %198 = vset.pattern.permute.xlu0 0
  %199 = vperm.xlu0 %198, %v28
  %v200 = vpop.permute.xlu0 %199
  %v220 = vunpack.c.l.b16 %v179
  %v221 = vunpack.c.h.b16 %v179
  %v222 = vunpack.c.l.b16 %v180
  %v223 = vunpack.c.l.b16 %v181
  %v224 = vunpack.c.h.b16 %v181
  %v225 = vunpack.c.l.b16 %v182
  %v226 = vunpack.c.l.b16 %v183
  %v227 = vunpack.c.h.b16 %v183
  %v228 = vunpack.c.l.b16 %v184
  %v229 = vunpack.c.l.b16 %v185
  %v230 = vunpack.c.h.b16 %v185
  %v231 = vunpack.c.l.b16 %v186
  %v232 = vunpack.c.l.b16 %v187
  %v233 = vunpack.c.h.b16 %v187
  %v234 = vunpack.c.l.b16 %v188
  %v235 = vunpack.c.l.b16 %v189
  %v236 = vunpack.c.h.b16 %v189
  %v237 = vunpack.c.l.b16 %v190
  %v238 = vunpack.c.l.b16 %v191
  %v239 = vunpack.c.h.b16 %v191
  %v240 = vunpack.c.l.b16 %v192
  %v241 = vunpack.c.l.b16 %v193
  %v242 = vunpack.c.h.b16 %v193
  %v243 = vunpack.c.l.b16 %v194
  %v244 = vunpack.c.l.b16 %v195
  %v245 = vunpack.c.h.b16 %v195
  %v246 = vunpack.c.l.b16 %v196
  %v247 = vpack.c.b16 %v223, %v220
  %v248 = vpack.c.b16 %v224, %v221
  %v249 = vpack.c.b16 %v225, %v222
  %v250 = vpack.c.b16 %v229, %v226
  %v251 = vpack.c.b16 %v230, %v227
  %v252 = vpack.c.b16 %v231, %v228
  %v253 = vpack.c.b16 %v235, %v232
  %v254 = vpack.c.b16 %v236, %v233
  %v255 = vpack.c.b16 %v237, %v234
  %v256 = vpack.c.b16 %v241, %v238
  %v257 = vpack.c.b16 %v242, %v239
  %v258 = vpack.c.b16 %v243, %v240
  %v259 = vpack.c.b16 %v244, %v244
  %v260 = vpack.c.b16 %v245, %v245
  %v261 = vpack.c.b16 %v246, %v246
  %vm274 = vcmask 588800
  %v276 = vsel %vm274, %v27, 0
  %vm278 = vcmask 1043456
  %v280 = vsel %vm278, %v259, 0
  %v283 = vsel %vm278, %v260, 0
  %v286 = vsel %vm278, %v261, 0
  %288 = vmatpush.bf16.msra.mxu0 0
  %289 = vmatpush.bf16.msra.mxu0 0
  %290 = vmatpush.bf16.msra.mxu0 0
  %291 = vmatpush.bf16.msra.mxu0 %v280
  %292 = vmatpush.bf16.msra.mxu0 %v256
  %293 = vmatpush.bf16.msra.mxu0 %v253
  %294 = vmatpush.bf16.msra.mxu0 %v250
  %295 = vmatpush.bf16.msra.mxu0 %v247
  %296 = vmatmul.bf16.gmra.mxu0 %v276
  %v297 = vpop.f32.mrf.mxu0
  %v298 = vadd.f32 %v200, %v297
  %v299 = vpop.f32.mrf.mxu0
  %300 = vdwg.mxu0
  %301 = vmatpush.bf16.msra.mxu0 0
  %302 = vmatpush.bf16.msra.mxu0 0
  %303 = vmatpush.bf16.msra.mxu0 0
  %304 = vmatpush.bf16.msra.mxu0 %v283
  %305 = vmatpush.bf16.msra.mxu0 %v257
  %306 = vmatpush.bf16.msra.mxu0 %v254
  %307 = vmatpush.bf16.msra.mxu0 %v251
  %308 = vmatpush.bf16.msra.mxu0 %v248
  %309 = vmatmul.bf16.gmra.mxu0 %v276
  %v310 = vpop.f32.mrf.mxu0
  %v311 = vadd.f32 %v200, %v310
  %v312 = vpop.f32.mrf.mxu0
  %313 = vdwg.mxu0
  %314 = vmatpush.bf16.msra.mxu0 0
  %315 = vmatpush.bf16.msra.mxu0 0
  %316 = vmatpush.bf16.msra.mxu0 0
  %317 = vmatpush.bf16.msra.mxu0 %v286
  %318 = vmatpush.bf16.msra.mxu0 %v258
  %319 = vmatpush.bf16.msra.mxu0 %v255
  %320 = vmatpush.bf16.msra.mxu0 %v252
  %321 = vmatpush.bf16.msra.mxu0 %v249
  %322 = vmatmul.bf16.gmra.mxu0 %v276
  %v323 = vpop.f32.mrf.mxu0
  %v324 = vadd.f32 %v200, %v323
  %v325 = vpop.f32.mrf.mxu0
  %326 = vdwg.mxu0
  %v328 = vperm.slane %v32, 0
  %v329 = vperm.slane %v32, 1
  %v330 = vperm.slane %v32, 2
  %v334 = vmul.f32 %v298, %v328
  %v335 = vmul.f32 %v311, %v329
  %v336 = vmul.f32 %v324, %v330
  %v337 = vadd.f32 %v334, %v335
  %vm338 = vcmask 523264
  %v339 = vsel %vm338, %v336, 0.0
  %v340 = vadd.f32 %v337, %v339
  %341 = vadd.xlane.f32.xlu0 %v340
  %v342 = vpop.xlane.xlu0 %341
  %v343 = vmul.f32 %v334, %v334
  %v344 = vmul.f32 %v335, %v335
  %v345 = vmul.f32 %v336, %v336
  %v346 = vadd.f32 %v343, %v344
  %v347 = vsel %vm338, %v345, 0.0
  %v348 = vadd.f32 %v346, %v347
  %349 = vadd.xlane.f32.xlu0 %v348
  %v350 = vpop.xlane.xlu0 %349
  %vm351 = vcmask 7168
  %v352 = vsel %vm351, %v342, %v350
  %vm353 = vcmask 64512
  %v355 = vsel %vm353, %v31, 0
  %357 = vmatpush.msra.mxu0 0.0
  %358 = vmatpush.msra.mxu0 0.0
  %359 = vmatpush.msra.mxu0 0.0
  %360 = vmatpush.msra.mxu0 0.0
  %361 = vmatpush.msra.mxu0 0.0
  %362 = vmatpush.msra.mxu0 0.0
  %363 = vmatpush.msra.mxu0 0.0
  %364 = vmatpush.msra.mxu0 0.0
  %365 = vmatpush.msra.mxu0 0.0
  %366 = vmatpush.msra.mxu0 0.0
  %367 = vmatpush.msra.mxu0 0.0
  %368 = vmatpush.msra.mxu0 0.0
  %369 = vmatpush.msra.mxu0 0.0
  %370 = vmatpush.msra.mxu0 0.0
  %371 = vmatpush.msra.mxu0 0.0
  %372 = vmatpush.msra.mxu0 %v352
  %373 = vmatmul.f32.gmra.mxu0 %v355
  %v374 = vpop.f32.mrf.mxu0
  %v375 = vadd.f32 0.0, %v374
  %376 = vdwg.mxu0
  %v377 = vmul.f32 %v375, 0.015625
  %v378 = vmul.f32 %v377, %v377
  %380 = vrot.lane.b32.xlu0 %v378, 1
  %v381 = vpop.permute.xlu0 %380
  %v383 = vsub.f32 %v377, %v381
  %v384 = vmax.f32 %v383, 0.0
  %386 = vset.pattern.permute.xlu0 0
  %387 = vperm.xlu0 %386, %v377
  %v388 = vpop.permute.xlu0 %387
  %v390 = vsub.f32 %v298, %v388
  %v391 = vsub.f32 %v311, %v388
  %v392 = vsub.f32 %v324, %v388
  %v393 = vadd.f32 %v384, 1e-05
  %v394 = vrsqrt.pop %v393
  %v395 = vmul.f32 %v394, %v393
  %v396 = vmul.f32 %v395, %v394
  %v397 = vmul.f32 0.5, %v396
  %v398 = vsub.f32 1.5, %v397
  %v399 = vmul.f32 %v394, %v398
  %vm400 = vweird.f32 %v393
  %vm401 = vweird.f32 %v394
  %vm402 = vmor %vm400, %vm401
  %v403 = vsel %vm402, %v394, %v399
  %405 = vset.pattern.permute.xlu0 1
  %406 = vperm.xlu0 %405, %v403
  %v407 = vpop.permute.xlu0 %406
  %v409 = vmul.f32 %v390, %v407
  %v410 = vmul.f32 %v391, %v407
  %v411 = vmul.f32 %v392, %v407
  %413 = vset.pattern.permute.xlu0 0
  %414 = vperm.xlu0 %413, %v29
  %v415 = vpop.permute.xlu0 %414
  %v417 = vmul.f32 %v409, %v415
  %v418 = vmul.f32 %v410, %v415
  %v419 = vmul.f32 %v411, %v415
  %421 = vset.pattern.permute.xlu0 0
  %422 = vperm.xlu0 %421, %v30
  %v423 = vpop.permute.xlu0 %422
  %v425 = vadd.f32 %v417, %v423
  %v426 = vadd.f32 %v418, %v423
  %v427 = vadd.f32 %v419, %v423
  %v428 = vmul.f32 %v425, 0.5
  %v429 = vmul.f32 %v426, 0.5
  %v430 = vmul.f32 %v427, 0.5
  %v431 = vmul.f32 %v425, 0.70710677
  %v432 = vmul.f32 %v426, 0.70710677
  %v433 = vmul.f32 %v427, 0.70710677
  %v434 = vmul.f32 %v431, %v431
  %v435 = vmin.f32 16.0, %v434
  %v436 = vmul.f32 %v435, 2.1237322e-06
  %v437 = vadd.f32 %v436, 0.00028619796
  %v438 = vmul.f32 %v435, %v437
  %v439 = vadd.f32 %v438, 0.0036580483
  %v440 = vmul.f32 %v435, %v439
  %v441 = vadd.f32 %v440, 0.05243302
  %v442 = vmul.f32 %v435, %v441
  %v443 = vadd.f32 %v442, 0.18741608
  %v444 = vmul.f32 %v435, %v443
  %v445 = vadd.f32 %v444, 1.1283791
  %v446 = vmul.f32 %v431, %v445
  %v447 = vmul.f32 %v435, 3.8918573e-05
  %v448 = vadd.f32 %v447, 0.001143296
  %v449 = vmul.f32 %v435, %v448
  %v450 = vadd.f32 %v449, 0.014752088
  %v451 = vmul.f32 %v435, %v450
  %v452 = vadd.f32 %v451, 0.112945676
  %v453 = vmul.f32 %v435, %v452
  %v454 = vadd.f32 %v453, 0.4994258
  %v455 = vmul.f32 %v435, %v454
  %v456 = vadd.f32 %v455, 1.0
  %v457 = vrcp.pop %v456
  %v458 = vmul.f32 %v456, %v457
  %v459 = vsub.f32 1.0, %v458
  %v460 = vmul.f32 %v457, %v459
  %v461 = vadd.f32 %v457, %v460
  %vm462 = vweird.f32 %v456
  %vm463 = vweird.f32 %v457
  %vm464 = vmor %vm462, %vm463
  %v465 = vsel %vm464, %v457, %v461
  %v466 = vand.u32 2147483647, %v456
  %vm467 = vcmp.eq.f32.partialorder %v466, 8.507059e+37
  %v468 = vand.u32 %v456, 2147483648
  %v469 = vor.u32 1.1754944e-38, %v468
  %v470 = vsel %vm467, %v469, %v465
  %v471 = vmul.f32 %v446, %v470
  %v472 = vmin.f32 %v471, 1.0
  %v473 = vmax.f32 %v472, -1.0
  %v474 = vmul.f32 %v432, %v432
  %v475 = vmin.f32 16.0, %v474
  %v476 = vmul.f32 %v475, 2.1237322e-06
  %v477 = vadd.f32 %v476, 0.00028619796
  %v478 = vmul.f32 %v475, %v477
  %v479 = vadd.f32 %v478, 0.0036580483
  %v480 = vmul.f32 %v475, %v479
  %v481 = vadd.f32 %v480, 0.05243302
  %v482 = vmul.f32 %v475, %v481
  %v483 = vadd.f32 %v482, 0.18741608
  %v484 = vmul.f32 %v475, %v483
  %v485 = vadd.f32 %v484, 1.1283791
  %v486 = vmul.f32 %v432, %v485
  %v487 = vmul.f32 %v475, 3.8918573e-05
  %v488 = vadd.f32 %v487, 0.001143296
  %v489 = vmul.f32 %v475, %v488
  %v490 = vadd.f32 %v489, 0.014752088
  %v491 = vmul.f32 %v475, %v490
  %v492 = vadd.f32 %v491, 0.112945676
  %v493 = vmul.f32 %v475, %v492
  %v494 = vadd.f32 %v493, 0.4994258
  %v495 = vmul.f32 %v475, %v494
  %v496 = vadd.f32 %v495, 1.0
  %v497 = vrcp.pop %v496
  %v498 = vmul.f32 %v496, %v497
  %v499 = vsub.f32 1.0, %v498
  %v500 = vmul.f32 %v497, %v499
  %v501 = vadd.f32 %v497, %v500
  %vm502 = vweird.f32 %v496
  %vm503 = vweird.f32 %v497
  %vm504 = vmor %vm502, %vm503
  %v505 = vsel %vm504, %v497, %v501
  %v506 = vand.u32 2147483647, %v496
  %vm507 = vcmp.eq.f32.partialorder %v506, 8.507059e+37
  %v508 = vand.u32 %v496, 2147483648
  %v509 = vor.u32 1.1754944e-38, %v508
  %v510 = vsel %vm507, %v509, %v505
  %v511 = vmul.f32 %v486, %v510
  %v512 = vmin.f32 %v511, 1.0
  %v513 = vmax.f32 %v512, -1.0
  %v514 = vmul.f32 %v433, %v433
  %v515 = vmin.f32 16.0, %v514
  %v516 = vmul.f32 %v515, 2.1237322e-06
  %v517 = vadd.f32 %v516, 0.00028619796
  %v518 = vmul.f32 %v515, %v517
  %v519 = vadd.f32 %v518, 0.0036580483
  %v520 = vmul.f32 %v515, %v519
  %v521 = vadd.f32 %v520, 0.05243302
  %v522 = vmul.f32 %v515, %v521
  %v523 = vadd.f32 %v522, 0.18741608
  %v524 = vmul.f32 %v515, %v523
  %v525 = vadd.f32 %v524, 1.1283791
  %v526 = vmul.f32 %v433, %v525
  %v527 = vmul.f32 %v515, 3.8918573e-05
  %v528 = vadd.f32 %v527, 0.001143296
  %v529 = vmul.f32 %v515, %v528
  %v530 = vadd.f32 %v529, 0.014752088
  %v531 = vmul.f32 %v515, %v530
  %v532 = vadd.f32 %v531, 0.112945676
  %v533 = vmul.f32 %v515, %v532
  %v534 = vadd.f32 %v533, 0.4994258
  %v535 = vmul.f32 %v515, %v534
  %v536 = vadd.f32 %v535, 1.0
  %v537 = vrcp.pop %v536
  %v538 = vmul.f32 %v536, %v537
  %v539 = vsub.f32 1.0, %v538
  %v540 = vmul.f32 %v537, %v539
  %v541 = vadd.f32 %v537, %v540
  %vm542 = vweird.f32 %v536
  %vm543 = vweird.f32 %v537
  %vm544 = vmor %vm542, %vm543
  %v545 = vsel %vm544, %v537, %v541
  %v546 = vand.u32 2147483647, %v536
  %vm547 = vcmp.eq.f32.partialorder %v546, 8.507059e+37
  %v548 = vand.u32 %v536, 2147483648
  %v549 = vor.u32 1.1754944e-38, %v548
  %v550 = vsel %vm547, %v549, %v545
  %v551 = vmul.f32 %v526, %v550
  %v552 = vmin.f32 %v551, 1.0
  %v553 = vmax.f32 %v552, -1.0
  %v554 = vadd.f32 %v473, 1.0
  %v555 = vadd.f32 %v513, 1.0
  %v556 = vadd.f32 %v553, 1.0
  %v557 = vmul.f32 %v428, %v554
  %v558 = vmul.f32 %v429, %v555
  %v559 = vmul.f32 %v430, %v556
  %v560 = vmul.f32 %v557, %v328
  %v561 = vmul.f32 %v558, %v329
  %v562 = vmul.f32 %v559, %v330
  %v563 = vpack.c.bf16 %v561, %v560
  %v564 = vpack.c.bf16 %v562, %v562
  %565 = vst [vmem:[%s7] sm:$0xff] %v563
  %566 = vst.msk [vmem:[%s7 + $0x8] sm:$0xf] %vm51, %v564
  %s567 = scalar_lea.vmem %s0, 20
  %v568 = vld [vmem:[%s567] sm:$0xff]
  %v569 = vld [vmem:[%s567 + $0x8] sm:$0xff]
  %572 = vrot.lane.b32.xlu0 %v568, 21
  %v573 = vpop.permute.xlu0 %572
  %574 = vrot.lane.b32.xlu0 %v569, 21
  %v575 = vpop.permute.xlu0 %574
  %v576 = vrot.slane %v573, 4
  %v577 = vrot.slane %v575, 4
  %v578 = vsel %vm43, %v576, %v577
  %v579 = vsel %vm45, %v573, %v578
  %v580 = vsel %vm45, %v575, %v577
  %583 = vst [vmem:[#allocation2] sm:$0xff] %v579
  %584 = vst.msk [vmem:[#allocation2 + $0x8] sm:$0xf] %vm51, %v580
  %v585 = vld [vmem:[%s567] sm:$0xff]
  %v586 = vld [vmem:[%s567 + $0x8] sm:$0xff]
  %589 = vrot.lane.b32.xlu0 %v585, 20
  %v590 = vpop.permute.xlu0 %589
  %591 = vrot.lane.b32.xlu0 %v586, 20
  %v592 = vpop.permute.xlu0 %591
  %v593 = vrot.slane %v590, 4
  %v594 = vrot.slane %v592, 4
  %v595 = vsel %vm43, %v593, %v594
  %v596 = vsel %vm64, %v590, %v595
  %v597 = vsel %vm64, %v592, %v594
  %600 = vst [vmem:[#allocation2 + $0xc] sm:$0xff] %v596
  %601 = vst.msk [vmem:[#allocation2 + $0x14] sm:$0xf] %vm51, %v597
  %v602 = vld [vmem:[%s567] sm:$0xff]
  %v603 = vld [vmem:[%s567 + $0x8] sm:$0xff]
  %606 = vrot.lane.b32.xlu0 %v602, 19
  %v607 = vpop.permute.xlu0 %606
  %608 = vrot.lane.b32.xlu0 %v603, 19
  %v609 = vpop.permute.xlu0 %608
  %v610 = vrot.slane %v607, 4
  %v611 = vrot.slane %v609, 4
  %v612 = vsel %vm43, %v610, %v611
  %v613 = vsel %vm82, %v607, %v612
  %v614 = vsel %vm82, %v609, %v611
  %617 = vst [vmem:[#allocation2 + $0x18] sm:$0xff] %v613
  %618 = vst.msk [vmem:[#allocation2 + $0x20] sm:$0xf] %vm51, %v614
  %v619 = vld [vmem:[%s567] sm:$0xff]
  %v620 = vld [vmem:[%s567 + $0x8] sm:$0xff]
  %623 = vrot.lane.b32.xlu0 %v619, 1
  %v624 = vpop.permute.xlu0 %623
  %625 = vrot.lane.b32.xlu0 %v620, 1
  %v626 = vpop.permute.xlu0 %625
  %v627 = vrot.slane %v624, 4
  %v628 = vrot.slane %v626, 4
  %v629 = vsel %vm43, %v627, %v628
  %v630 = vsel %vm100, %v624, %v629
  %v631 = vsel %vm100, %v626, %v628
  %634 = vst [vmem:[#allocation2 + $0x24] sm:$0xff] %v630
  %635 = vst.msk [vmem:[#allocation2 + $0x2c] sm:$0xf] %vm51, %v631
  %v636 = vld [vmem:[%s567 + $0x4] sm:$0xff]
  %v637 = vld [vmem:[%s567 + $0xc] sm:$0xf]
  %638 = vst [vmem:[#allocation2 + $0x30] sm:$0xff] %v636
  %639 = vst.msk [vmem:[#allocation2 + $0x38] sm:$0xf] %vm51, %v637
  %v640 = vld [vmem:[%s567 + $0x4] sm:$0xff]
  %v641 = vld [vmem:[%s567 + $0xc] sm:$0xf]
  %644 = vrot.lane.b32.xlu0 %v640, 127
  %v645 = vpop.permute.xlu0 %644
  %646 = vrot.lane.b32.xlu0 %v641, 127
  %v647 = vpop.permute.xlu0 %646
  %v648 = vrot.slane %v645, 4
  %v649 = vrot.slane %v647, 4
  %v650 = vsel %vm43, %v648, %v649
  %v651 = vsel %vm122, %v645, %v650
  %654 = vst [vmem:[#allocation2 + $0x3c] sm:$0xff] %v651
  %655 = vst.msk [vmem:[#allocation2 + $0x44] sm:$0xf] %vm51, %v647
  %v656 = vld [vmem:[%s567 + $0x4] sm:$0xff]
  %v657 = vld [vmem:[%s567 + $0xc] sm:$0xf]
  %660 = vrot.lane.b32.xlu0 %v656, 109
  %v661 = vpop.permute.xlu0 %660
  %662 = vrot.lane.b32.xlu0 %v657, 109
  %v663 = vpop.permute.xlu0 %662
  %v664 = vrot.slane %v661, 4
  %v665 = vrot.slane %v663, 4
  %v666 = vsel %vm43, %v664, %v665
  %v667 = vsel %vm139, %v661, %v666
  %670 = vst [vmem:[#allocation2 + $0x48] sm:$0xff] %v667
  %671 = vst.msk [vmem:[#allocation2 + $0x50] sm:$0xf] %vm51, %v663
  %v672 = vld [vmem:[%s567 + $0x4] sm:$0xff]
  %v673 = vld [vmem:[%s567 + $0xc] sm:$0xf]
  %676 = vrot.lane.b32.xlu0 %v672, 108
  %v677 = vpop.permute.xlu0 %676
  %678 = vrot.lane.b32.xlu0 %v673, 108
  %v679 = vpop.permute.xlu0 %678
  %v680 = vrot.slane %v677, 4
  %v681 = vrot.slane %v679, 4
  %v682 = vsel %vm43, %v680, %v681
  %v683 = vsel %vm156, %v677, %v682
  %686 = vst [vmem:[#allocation2 + $0x54] sm:$0xff] %v683
  %687 = vst.msk [vmem:[#allocation2 + $0x5c] sm:$0xf] %vm51, %v679
  %v688 = vld [vmem:[%s567 + $0x4] sm:$0xff]
  %v689 = vld [vmem:[%s567 + $0xc] sm:$0xf]
  %692 = vrot.lane.b32.xlu0 %v688, 107
  %v693 = vpop.permute.xlu0 %692
  %694 = vrot.lane.b32.xlu0 %v689, 107
  %v695 = vpop.permute.xlu0 %694
  %v696 = vrot.slane %v693, 4
  %v697 = vrot.slane %v695, 4
  %v698 = vsel %vm43, %v696, %v697
  %v699 = vsel %vm173, %v693, %v698
  %702 = vst [vmem:[#allocation2 + $0x60] sm:$0xff] %v699
  %703 = vst.msk [vmem:[#allocation2 + $0x68] sm:$0xf] %vm51, %v695
  %v704 = vld [vmem:[#allocation2] sm:$0xff]
  %v705 = vld [vmem:[#allocation2 + $0x8] sm:$0xf]
  %v706 = vld [vmem:[#allocation2 + $0xc] sm:$0xff]
  %v707 = vld [vmem:[#allocation2 + $0x14] sm:$0xf]
  %v708 = vld [vmem:[#allocation2 + $0x18] sm:$0xff]
  %v709 = vld [vmem:[#allocation2 + $0x20] sm:$0xf]
  %v710 = vld [vmem:[#allocation2 + $0x24] sm:$0xff]
  %v711 = vld [vmem:[#allocation2 + $0x2c] sm:$0xf]
  %v712 = vld [vmem:[#allocation2 + $0x30] sm:$0xff]
  %v713 = vld [vmem:[#allocation2 + $0x38] sm:$0xf]
  %v714 = vld [vmem:[#allocation2 + $0x3c] sm:$0xff]
  %v715 = vld [vmem:[#allocation2 + $0x44] sm:$0xf]
  %v716 = vld [vmem:[#allocation2 + $0x48] sm:$0xff]
  %v717 = vld [vmem:[#allocation2 + $0x50] sm:$0xf]
  %v718 = vld [vmem:[#allocation2 + $0x54] sm:$0xff]
  %v719 = vld [vmem:[#allocation2 + $0x5c] sm:$0xf]
  %v720 = vld [vmem:[#allocation2 + $0x60] sm:$0xff]
  %v721 = vld [vmem:[#allocation2 + $0x68] sm:$0xf]
  %v740 = vunpack.c.l.b16 %v704
  %v741 = vunpack.c.h.b16 %v704
  %v742 = vunpack.c.l.b16 %v705
  %v743 = vunpack.c.l.b16 %v706
  %v744 = vunpack.c.h.b16 %v706
  %v745 = vunpack.c.l.b16 %v707
  %v746 = vunpack.c.l.b16 %v708
  %v747 = vunpack.c.h.b16 %v708
  %v748 = vunpack.c.l.b16 %v709
  %v749 = vunpack.c.l.b16 %v710
  %v750 = vunpack.c.h.b16 %v710
  %v751 = vunpack.c.l.b16 %v711
  %v752 = vunpack.c.l.b16 %v712
  %v753 = vunpack.c.h.b16 %v712
  %v754 = vunpack.c.l.b16 %v713
  %v755 = vunpack.c.l.b16 %v714
  %v756 = vunpack.c.h.b16 %v714
  %v757 = vunpack.c.l.b16 %v715
  %v758 = vunpack.c.l.b16 %v716
  %v759 = vunpack.c.h.b16 %v716
  %v760 = vunpack.c.l.b16 %v717
  %v761 = vunpack.c.l.b16 %v718
  %v762 = vunpack.c.h.b16 %v718
  %v763 = vunpack.c.l.b16 %v719
  %v764 = vunpack.c.l.b16 %v720
  %v765 = vunpack.c.h.b16 %v720
  %v766 = vunpack.c.l.b16 %v721
  %v767 = vpack.c.b16 %v743, %v740
  %v768 = vpack.c.b16 %v744, %v741
  %v769 = vpack.c.b16 %v745, %v742
  %v770 = vpack.c.b16 %v749, %v746
  %v771 = vpack.c.b16 %v750, %v747
  %v772 = vpack.c.b16 %v751, %v748
  %v773 = vpack.c.b16 %v755, %v752
  %v774 = vpack.c.b16 %v756, %v753
  %v775 = vpack.c.b16 %v757, %v754
  %v776 = vpack.c.b16 %v761, %v758
  %v777 = vpack.c.b16 %v762, %v759
  %v778 = vpack.c.b16 %v763, %v760
  %v779 = vpack.c.b16 %v764, %v764
  %v780 = vpack.c.b16 %v765, %v765
  %v781 = vpack.c.b16 %v766, %v766
  %v795 = vsel %vm278, %v779, 0
  %v798 = vsel %vm278, %v780, 0
  %v801 = vsel %vm278, %v781, 0
  %803 = vmatpush.bf16.msra.mxu0 0
  %804 = vmatpush.bf16.msra.mxu0 0
  %805 = vmatpush.bf16.msra.mxu0 0
  %806 = vmatpush.bf16.msra.mxu0 %v795
  %807 = vmatpush.bf16.msra.mxu0 %v776
  %808 = vmatpush.bf16.msra.mxu0 %v773
  %809 = vmatpush.bf16.msra.mxu0 %v770
  %810 = vmatpush.bf16.msra.mxu0 %v767
  %811 = vmatmul.bf16.gmra.mxu0 %v276
  %v812 = vpop.f32.mrf.mxu0
  %v813 = vadd.f32 %v200, %v812
  %v814 = vpop.f32.mrf.mxu0
  %815 = vdwg.mxu0
  %816 = vmatpush.bf16.msra.mxu0 0
  %817 = vmatpush.bf16.msra.mxu0 0
  %818 = vmatpush.bf16.msra.mxu0 0
  %819 = vmatpush.bf16.msra.mxu0 %v798
  %820 = vmatpush.bf16.msra.mxu0 %v777
  %821 = vmatpush.bf16.msra.mxu0 %v774
  %822 = vmatpush.bf16.msra.mxu0 %v771
  %823 = vmatpush.bf16.msra.mxu0 %v768
  %824 = vmatmul.bf16.gmra.mxu0 %v276
  %v825 = vpop.f32.mrf.mxu0
  %v826 = vadd.f32 %v200, %v825
  %v827 = vpop.f32.mrf.mxu0
  %828 = vdwg.mxu0
  %829 = vmatpush.bf16.msra.mxu0 0
  %830 = vmatpush.bf16.msra.mxu0 0
  %831 = vmatpush.bf16.msra.mxu0 0
  %832 = vmatpush.bf16.msra.mxu0 %v801
  %833 = vmatpush.bf16.msra.mxu0 %v778
  %834 = vmatpush.bf16.msra.mxu0 %v775
  %835 = vmatpush.bf16.msra.mxu0 %v772
  %836 = vmatpush.bf16.msra.mxu0 %v769
  %837 = vmatmul.bf16.gmra.mxu0 %v276
  %v838 = vpop.f32.mrf.mxu0
  %v839 = vadd.f32 %v200, %v838
  %v840 = vpop.f32.mrf.mxu0
  %841 = vdwg.mxu0
  %v842 = vmul.f32 %v813, %v328
  %v843 = vmul.f32 %v826, %v329
  %v844 = vmul.f32 %v839, %v330
  %v845 = vadd.f32 %v842, %v843
  %v846 = vsel %vm338, %v844, 0.0
  %v847 = vadd.f32 %v845, %v846
  %848 = vadd.xlane.f32.xlu0 %v847
  %v849 = vpop.xlane.xlu0 %848
  %v850 = vmul.f32 %v842, %v842
  %v851 = vmul.f32 %v843, %v843
  %v852 = vmul.f32 %v844, %v844
  %v853 = vadd.f32 %v850, %v851
  %v854 = vsel %vm338, %v852, 0.0
  %v855 = vadd.f32 %v853, %v854
  %856 = vadd.xlane.f32.xlu0 %v855
  %v857 = vpop.xlane.xlu0 %856
  %v858 = vsel %vm351, %v849, %v857
  %859 = vmatpush.msra.mxu0 0.0
  %860 = vmatpush.msra.mxu0 0.0
  %861 = vmatpush.msra.mxu0 0.0
  %862 = vmatpush.msra.mxu0 0.0
  %863 = vmatpush.msra.mxu0 0.0
  %864 = vmatpush.msra.mxu0 0.0
  %865 = vmatpush.msra.mxu0 0.0
  %866 = vmatpush.msra.mxu0 0.0
  %867 = vmatpush.msra.mxu0 0.0
  %868 = vmatpush.msra.mxu0 0.0
  %869 = vmatpush.msra.mxu0 0.0
  %870 = vmatpush.msra.mxu0 0.0
  %871 = vmatpush.msra.mxu0 0.0
  %872 = vmatpush.msra.mxu0 0.0
  %873 = vmatpush.msra.mxu0 0.0
  %874 = vmatpush.msra.mxu0 %v858
  %875 = vmatmul.f32.gmra.mxu0 %v355
  %v876 = vpop.f32.mrf.mxu0
  %v877 = vadd.f32 0.0, %v876
  %878 = vdwg.mxu0
  %v879 = vmul.f32 %v877, 0.015625
  %v880 = vmul.f32 %v879, %v879
  %882 = vrot.lane.b32.xlu0 %v880, 1
  %v883 = vpop.permute.xlu0 %882
  %v885 = vsub.f32 %v879, %v883
  %v886 = vmax.f32 %v885, 0.0
  %888 = vset.pattern.permute.xlu0 0
  %889 = vperm.xlu0 %888, %v879
  %v890 = vpop.permute.xlu0 %889
  %v892 = vsub.f32 %v813, %v890
  %v893 = vsub.f32 %v826, %v890
  %v894 = vsub.f32 %v839, %v890
  %v895 = vadd.f32 %v886, 1e-05
  %v896 = vrsqrt.pop %v895
  %v897 = vmul.f32 %v896, %v895
  %v898 = vmul.f32 %v897, %v896
  %v899 = vmul.f32 0.5, %v898
  %v900 = vsub.f32 1.5, %v899
  %v901 = vmul.f32 %v896, %v900
  %vm902 = vweird.f32 %v895
  %vm903 = vweird.f32 %v896
  %vm904 = vmor %vm902, %vm903
  %v905 = vsel %vm904, %v896, %v901
  %907 = vset.pattern.permute.xlu0 1
  %908 = vperm.xlu0 %907, %v905
  %v909 = vpop.permute.xlu0 %908
  %v911 = vmul.f32 %v892, %v909
  %v912 = vmul.f32 %v893, %v909
  %v913 = vmul.f32 %v894, %v909
  %v914 = vmul.f32 %v911, %v415
  %v915 = vmul.f32 %v912, %v415
  %v916 = vmul.f32 %v913, %v415
  %v917 = vadd.f32 %v914, %v423
  %v918 = vadd.f32 %v915, %v423
  %v919 = vadd.f32 %v916, %v423
  %v920 = vmul.f32 %v917, 0.5
  %v921 = vmul.f32 %v918, 0.5
  %v922 = vmul.f32 %v919, 0.5
  %v923 = vmul.f32 %v917, 0.70710677
  %v924 = vmul.f32 %v918, 0.70710677
  %v925 = vmul.f32 %v919, 0.70710677
  %v926 = vmul.f32 %v923, %v923
  %v927 = vmin.f32 16.0, %v926
  %v928 = vmul.f32 %v927, 2.1237322e-06
  %v929 = vadd.f32 %v928, 0.00028619796
  %v930 = vmul.f32 %v927, %v929
  %v931 = vadd.f32 %v930, 0.0036580483
  %v932 = vmul.f32 %v927, %v931
  %v933 = vadd.f32 %v932, 0.05243302
  %v934 = vmul.f32 %v927, %v933
  %v935 = vadd.f32 %v934, 0.18741608
  %v936 = vmul.f32 %v927, %v935
  %v937 = vadd.f32 %v936, 1.1283791
  %v938 = vmul.f32 %v923, %v937
  %v939 = vmul.f32 %v927, 3.8918573e-05
  %v940 = vadd.f32 %v939, 0.001143296
  %v941 = vmul.f32 %v927, %v940
  %v942 = vadd.f32 %v941, 0.014752088
  %v943 = vmul.f32 %v927, %v942
  %v944 = vadd.f32 %v943, 0.112945676
  %v945 = vmul.f32 %v927, %v944
  %v946 = vadd.f32 %v945, 0.4994258
  %v947 = vmul.f32 %v927, %v946
  %v948 = vadd.f32 %v947, 1.0
  %v949 = vrcp.pop %v948
  %v950 = vmul.f32 %v948, %v949
  %v951 = vsub.f32 1.0, %v950
  %v952 = vmul.f32 %v949, %v951
  %v953 = vadd.f32 %v949, %v952
  %vm954 = vweird.f32 %v948
  %vm955 = vweird.f32 %v949
  %vm956 = vmor %vm954, %vm955
  %v957 = vsel %vm956, %v949, %v953
  %v958 = vand.u32 2147483647, %v948
  %vm959 = vcmp.eq.f32.partialorder %v958, 8.507059e+37
  %v960 = vand.u32 %v948, 2147483648
  %v961 = vor.u32 1.1754944e-38, %v960
  %v962 = vsel %vm959, %v961, %v957
  %v963 = vmul.f32 %v938, %v962
  %v964 = vmin.f32 %v963, 1.0
  %v965 = vmax.f32 %v964, -1.0
  %v966 = vmul.f32 %v924, %v924
  %v967 = vmin.f32 16.0, %v966
  %v968 = vmul.f32 %v967, 2.1237322e-06
  %v969 = vadd.f32 %v968, 0.00028619796
  %v970 = vmul.f32 %v967, %v969
  %v971 = vadd.f32 %v970, 0.0036580483
  %v972 = vmul.f32 %v967, %v971
  %v973 = vadd.f32 %v972, 0.05243302
  %v974 = vmul.f32 %v967, %v973
  %v975 = vadd.f32 %v974, 0.18741608
  %v976 = vmul.f32 %v967, %v975
  %v977 = vadd.f32 %v976, 1.1283791
  %v978 = vmul.f32 %v924, %v977
  %v979 = vmul.f32 %v967, 3.8918573e-05
  %v980 = vadd.f32 %v979, 0.001143296
  %v981 = vmul.f32 %v967, %v980
  %v982 = vadd.f32 %v981, 0.014752088
  %v983 = vmul.f32 %v967, %v982
  %v984 = vadd.f32 %v983, 0.112945676
  %v985 = vmul.f32 %v967, %v984
  %v986 = vadd.f32 %v985, 0.4994258
  %v987 = vmul.f32 %v967, %v986
  %v988 = vadd.f32 %v987, 1.0
  %v989 = vrcp.pop %v988
  %v990 = vmul.f32 %v988, %v989
  %v991 = vsub.f32 1.0, %v990
  %v992 = vmul.f32 %v989, %v991
  %v993 = vadd.f32 %v989, %v992
  %vm994 = vweird.f32 %v988
  %vm995 = vweird.f32 %v989
  %vm996 = vmor %vm994, %vm995
  %v997 = vsel %vm996, %v989, %v993
  %v998 = vand.u32 2147483647, %v988
  %vm999 = vcmp.eq.f32.partialorder %v998, 8.507059e+37
  %v1000 = vand.u32 %v988, 2147483648
  %v1001 = vor.u32 1.1754944e-38, %v1000
  %v1002 = vsel %vm999, %v1001, %v997
  %v1003 = vmul.f32 %v978, %v1002
  %v1004 = vmin.f32 %v1003, 1.0
  %v1005 = vmax.f32 %v1004, -1.0
  %v1006 = vmul.f32 %v925, %v925
  %v1007 = vmin.f32 16.0, %v1006
  %v1008 = vmul.f32 %v1007, 2.1237322e-06
  %v1009 = vadd.f32 %v1008, 0.00028619796
  %v1010 = vmul.f32 %v1007, %v1009
  %v1011 = vadd.f32 %v1010, 0.0036580483
  %v1012 = vmul.f32 %v1007, %v1011
  %v1013 = vadd.f32 %v1012, 0.05243302
  %v1014 = vmul.f32 %v1007, %v1013
  %v1015 = vadd.f32 %v1014, 0.18741608
  %v1016 = vmul.f32 %v1007, %v1015
  %v1017 = vadd.f32 %v1016, 1.1283791
  %v1018 = vmul.f32 %v925, %v1017
  %v1019 = vmul.f32 %v1007, 3.8918573e-05
  %v1020 = vadd.f32 %v1019, 0.001143296
  %v1021 = vmul.f32 %v1007, %v1020
  %v1022 = vadd.f32 %v1021, 0.014752088
  %v1023 = vmul.f32 %v1007, %v1022
  %v1024 = vadd.f32 %v1023, 0.112945676
  %v1025 = vmul.f32 %v1007, %v1024
  %v1026 = vadd.f32 %v1025, 0.4994258
  %v1027 = vmul.f32 %v1007, %v1026
  %v1028 = vadd.f32 %v1027, 1.0
  %v1029 = vrcp.pop %v1028
  %v1030 = vmul.f32 %v1028, %v1029
  %v1031 = vsub.f32 1.0, %v1030
  %v1032 = vmul.f32 %v1029, %v1031
  %v1033 = vadd.f32 %v1029, %v1032
  %vm1034 = vweird.f32 %v1028
  %vm1035 = vweird.f32 %v1029
  %vm1036 = vmor %vm1034, %vm1035
  %v1037 = vsel %vm1036, %v1029, %v1033
  %v1038 = vand.u32 2147483647, %v1028
  %vm1039 = vcmp.eq.f32.partialorder %v1038, 8.507059e+37
  %v1040 = vand.u32 %v1028, 2147483648
  %v1041 = vor.u32 1.1754944e-38, %v1040
  %v1042 = vsel %vm1039, %v1041, %v1037
  %v1043 = vmul.f32 %v1018, %v1042
  %v1044 = vmin.f32 %v1043, 1.0
  %v1045 = vmax.f32 %v1044, -1.0
  %v1046 = vadd.f32 %v965, 1.0
  %v1047 = vadd.f32 %v1005, 1.0
  %v1048 = vadd.f32 %v1045, 1.0
  %v1049 = vmul.f32 %v920, %v1046
  %v1050 = vmul.f32 %v921, %v1047
  %v1051 = vmul.f32 %v922, %v1048
  %v1052 = vmul.f32 %v1049, %v328
  %v1053 = vmul.f32 %v1050, %v329
  %v1054 = vmul.f32 %v1051, %v330
  %v1055 = vpack.c.bf16 %v1053, %v1052
  %v1056 = vpack.c.bf16 %v1054, %v1054
  %s1057 = scalar_lea.vmem %s7, 12
  %1058 = vst [vmem:[%s1057] sm:$0xff] %v1055
  %1059 = vst.msk [vmem:[%s1057 + $0x8] sm:$0xf] %vm51, %v1056
  // Predicated region
  $region30: #{_lambda_.6} parent=0 // pred_check
    _
  $region31: #{_lambda_.6} parent=0 // pred_check_branch
    %1061 = sbr.rel (0) target = $region33
  $region32: #{_lambda_.6} parent=0 // pred_region
    _
  $region33: #{_lambda_.6} parent=0 // pred_fallthru
    _
  // Predicated region
  $region34: #{_lambda_.6} parent=0 // pred_check
    _
  $region35: #{_lambda_.6} parent=0 // pred_check_branch
    %1063 = sbr.rel (0) target = $region37
  $region36: #{_lambda_.6} parent=0 // pred_region
    _
  $region37: #{_lambda_.6} parent=0 // pred_fallthru
    _

// kernel: _lambda_.5
$region0: #{_lambda_.5}
  #allocation0 [shape = 'u32[]', space=smem, size = 0x4, offset = 0x4, fixed_abs, tag = 'smem constant byte address 0x4 - core index']
  #allocation1 [shape = 'u32[72,128]{1,0:T(1,128)}', space=vmem, size = 0x9000, scoped, tag = 'internal scratch']
  #allocation2 [shape = 'bf16[8,640]{1,0:T(8,128)(2,1)}', space=vmem, size = 0x2800, scoped, tag = 'scratch operand']
  #allocation3 [shape = 'bf16[72,320]{1,0:T(8,128)(2,1)}', space=vmem, size = 0xd800, scoped, tag = 'scratch operand']
  %s0 = inlined_call_operand.vmem [shape: bf16[2,8,640], index: 0, kind: input, shape index: {}]
  %s1 = inlined_call_operand.vmem [shape: bf16[8,72], index: 1, kind: input, shape index: {}]
  %s2 = inlined_call_operand.vmem [shape: f32[8,1], index: 2, kind: input, shape index: {}]
  %s3 = inlined_call_operand.vmem [shape: f32[8,1], index: 3, kind: input, shape index: {}, may-alias: {3,7}]
  %s4 = inlined_call_operand.vmem [shape: f32[8,1], index: 4, kind: input, shape index: {}, may-alias: {4,8}]
  %s5 = inlined_call_operand.vmem [shape: bf16[8,72], index: 5, kind: input, shape index: {}]
  %s6 = inlined_call_operand.vmem [shape: f32[8,1], index: 6, kind: input, shape index: {}]
  %s7 = inlined_call_operand.vmem [shape: f32[8,1], index: 7, kind: input, shape index: {}, may-alias: {3,7}]
  %s8 = inlined_call_operand.vmem [shape: f32[8,1], index: 8, kind: input, shape index: {}, may-alias: {4,8}]
  %s9 = inlined_call_operand.vmem [shape: f32[8,8], index: 9, kind: input, shape index: {}]
  %s10 = inlined_call_operand.vmem [shape: f32[1,320], index: 10, kind: input, shape index: {}]
  %s11 = inlined_call_operand.vmem [shape: bf16[2,8,640], index: 11, kind: output, shape index: {}]
  %s12 = sld [smem:[#allocation0]]
  $region54: #{_lambda_.5} parent=0
    _
  %s14 = ssub.s32 1, %s12
  %s15 = scalar_select 0, %s14, %s12
  // Predicated region
  $region2: #{_lambda_.5} parent=0 // pred_check
    _
  $region3: #{_lambda_.5} parent=0 // pred_check_branch
    %17 = sbr.rel (0) target = $region5
  $region4: #{_lambda_.5} parent=0 // pred_region
    _
  $region5: #{_lambda_.5} parent=0 // pred_fallthru
    _
  // Predicated region
  $region6: #{_lambda_.5} parent=0 // pred_check
    _
  $region7: #{_lambda_.5} parent=0 // pred_check_branch
    %19 = sbr.rel (0) target = $region9
  $region8: #{_lambda_.5} parent=0 // pred_region
    _
  $region9: #{_lambda_.5} parent=0 // pred_fallthru
    _
  // Predicated region
  $region10: #{_lambda_.5} parent=0 // pred_check
    _
  $region11: #{_lambda_.5} parent=0 // pred_check_branch
    %21 = sbr.rel (0) target = $region13
  $region12: #{_lambda_.5} parent=0 // pred_region
    _
  $region13: #{_lambda_.5} parent=0 // pred_fallthru
    _
  // Predicated region
  $region14: #{_lambda_.5} parent=0 // pred_check
    _
  $region15: #{_lambda_.5} parent=0 // pred_check_branch
    %23 = sbr.rel (0) target = $region17
  $region16: #{_lambda_.5} parent=0 // pred_region
    _
  $region17: #{_lambda_.5} parent=0 // pred_fallthru
    _
  // Predicated region
  $region18: #{_lambda_.5} parent=0 // pred_check
    _
  $region19: #{_lambda_.5} parent=0 // pred_check_branch
    %25 = sbr.rel (0) target = $region21
  $region20: #{_lambda_.5} parent=0 // pred_region
    _
  $region21: #{_lambda_.5} parent=0 // pred_fallthru
    _
  // Predicated region
  $region22: #{_lambda_.5} parent=0 // pred_check
    _
  $region23: #{_lambda_.5} parent=0 // pred_check_branch
    %27 = sbr.rel (0) target = $region25
  $region24: #{_lambda_.5} parent=0 // pred_region
    _
  $region25: #{_lambda_.5} parent=0 // pred_fallthru
    _
  // Predicated region
  $region26: #{_lambda_.5} parent=0 // pred_check
    _
  $region27: #{_lambda_.5} parent=0 // pred_check_branch
    %29 = sbr.rel (0) target = $region29
  $region28: #{_lambda_.5} parent=0 // pred_region
    _
  $region29: #{_lambda_.5} parent=0 // pred_fallthru
    _
  // Predicated region
  $region30: #{_lambda_.5} parent=0 // pred_check
    _
  $region31: #{_lambda_.5} parent=0 // pred_check_branch
    %31 = sbr.rel (0) target = $region33
  $region32: #{_lambda_.5} parent=0 // pred_region
    _
  $region33: #{_lambda_.5} parent=0 // pred_fallthru
    _
  // Predicated region
  $region34: #{_lambda_.5} parent=0 // pred_check
    _
  $region35: #{_lambda_.5} parent=0 // pred_check_branch
    %33 = sbr.rel (0) target = $region37
  $region36: #{_lambda_.5} parent=0 // pred_region
    _
  $region37: #{_lambda_.5} parent=0 // pred_fallthru
    _
  // Predicated region
  $region38: #{_lambda_.5} parent=0 // pred_check
    _
  $region39: #{_lambda_.5} parent=0 // pred_check_branch
    %35 = sbr.rel (0) target = $region41
  $region40: #{_lambda_.5} parent=0 // pred_region
    _
  $region41: #{_lambda_.5} parent=0 // pred_fallthru
    _
  // Predicated region
  $region42: #{_lambda_.5} parent=0 // pred_check
    _
  $region43: #{_lambda_.5} parent=0 // pred_check_branch
    %37 = sbr.rel (0) target = $region45
  $region44: #{_lambda_.5} parent=0 // pred_region
    _
  $region45: #{_lambda_.5} parent=0 // pred_fallthru
    _
  %v39 = vld [vmem:[%s1] sm:$0xf]
  %v40 = vld [vmem:[%s2] sm:$0xff]
  %v41 = vld [vmem:[%s3] sm:$0xff]
  %v42 = vld [vmem:[%s4] sm:$0xff]
  %v43 = vld [vmem:[%s5] sm:$0xf]
  %v44 = vld [vmem:[%s6] sm:$0xff]
  %v45 = vld [vmem:[%s7] sm:$0xff]
  %v46 = vld [vmem:[%s8] sm:$0xff]
  %v47 = vld [vmem:[%s9] sm:$0xff]
  %v48 = vld [vmem:[%s10] sm:$0x7]
  %49 = vst [vmem:[#allocation2] sm:$0xf] 0
  %vm50 = vcmask 1043968
  %vm51 = vcmask 1047556
  %vm52 = vmor %vm51, %vm50
  %53 = vst.msk [vmem:[#allocation2 + $0xc] sm:$0xff] %vm52, 0
  %v54 = vld [vmem:[%s0] sm:$0xff]
  %v55 = vld [vmem:[%s0 + $0x8] sm:$0xff]
  %58 = vrot.lane.b32.xlu0 %v54, 21
  %v59 = vpop.permute.xlu0 %58
  %60 = vrot.lane.b32.xlu0 %v55, 21
  %v61 = vpop.permute.xlu0 %60
  %v62 = vrot.slane %v59, 4
  %v63 = vrot.slane %v61, 4
  %vm64 = vcmask 1043456
  %v65 = vsel %vm64, %v62, %v63
  %vm66 = vcmask 171008
  %v67 = vsel %vm66, %v59, %v65
  %v68 = vsel %vm66, %v61, %v63
  %71 = vst [vmem:[#allocation3] sm:$0xff] %v67
  %vm72 = vcmask 519168
  %73 = vst.msk [vmem:[#allocation3 + $0x8] sm:$0xf] %vm72, %v68
  %v74 = vld [vmem:[%s0] sm:$0xff]
  %v75 = vld [vmem:[%s0 + $0x8] sm:$0xff]
  %78 = vrot.lane.b32.xlu0 %v74, 20
  %v79 = vpop.permute.xlu0 %78
  %80 = vrot.lane.b32.xlu0 %v75, 20
  %v81 = vpop.permute.xlu0 %80
  %v82 = vrot.slane %v79, 4
  %v83 = vrot.slane %v81, 4
  %v84 = vsel %vm64, %v82, %v83
  %vm85 = vcmask 162816
  %v86 = vsel %vm85, %v79, %v84
  %v87 = vsel %vm85, %v81, %v83
  %90 = vst [vmem:[#allocation3 + $0xc] sm:$0xff] %v86
  %91 = vst.msk [vmem:[#allocation3 + $0x14] sm:$0xf] %vm72, %v87
  %v92 = vld [vmem:[%s0] sm:$0xff]
  %v93 = vld [vmem:[%s0 + $0x8] sm:$0xff]
  %96 = vrot.lane.b32.xlu0 %v92, 19
  %v97 = vpop.permute.xlu0 %96
  %98 = vrot.lane.b32.xlu0 %v93, 19
  %v99 = vpop.permute.xlu0 %98
  %v100 = vrot.slane %v97, 4
  %v101 = vrot.slane %v99, 4
  %v102 = vsel %vm64, %v100, %v101
  %vm103 = vcmask 154624
  %v104 = vsel %vm103, %v97, %v102
  %v105 = vsel %vm103, %v99, %v101
  %108 = vst [vmem:[#allocation3 + $0x18] sm:$0xff] %v104
  %109 = vst.msk [vmem:[#allocation3 + $0x20] sm:$0xf] %vm72, %v105
  %v110 = vld [vmem:[%s0] sm:$0xff]
  %v111 = vld [vmem:[%s0 + $0x8] sm:$0xff]
  %114 = vrot.lane.b32.xlu0 %v110, 1
  %v115 = vpop.permute.xlu0 %114
  %116 = vrot.lane.b32.xlu0 %v111, 1
  %v117 = vpop.permute.xlu0 %116
  %v118 = vrot.slane %v115, 4
  %v119 = vrot.slane %v117, 4
  %v120 = vsel %vm64, %v118, %v119
  %vm121 = vcmask 7168
  %v122 = vsel %vm121, %v115, %v120
  %v123 = vsel %vm121, %v117, %v119
  %126 = vst [vmem:[#allocation3 + $0x24] sm:$0xff] %v122
  %127 = vst.msk [vmem:[#allocation3 + $0x2c] sm:$0xf] %vm72, %v123
  %v128 = vld [vmem:[%s0 + $0x4] sm:$0xff]
  %v129 = vld [vmem:[%s0 + $0xc] sm:$0xf]
  %130 = vst [vmem:[#allocation3 + $0x30] sm:$0xff] %v128
  %131 = vst.msk [vmem:[#allocation3 + $0x38] sm:$0xf] %vm72, %v129
  %v132 = vld [vmem:[%s0 + $0x4] sm:$0xff]
  %v133 = vld [vmem:[%s0 + $0xc] sm:$0xf]
  %136 = vrot.lane.b32.xlu0 %v132, 127
  %v137 = vpop.permute.xlu0 %136
  %138 = vrot.lane.b32.xlu0 %v133, 127
  %v139 = vpop.permute.xlu0 %138
  %v140 = vrot.slane %v137, 4
  %v141 = vrot.slane %v139, 4
  %v142 = vsel %vm64, %v140, %v141
  %vm143 = vcmask 1039360
  %v144 = vsel %vm143, %v137, %v142
  %147 = vst [vmem:[#allocation3 + $0x3c] sm:$0xff] %v144
  %148 = vst.msk [vmem:[#allocation3 + $0x44] sm:$0xf] %vm72, %v139
  %v149 = vld [vmem:[%s0 + $0x4] sm:$0xff]
  %v150 = vld [vmem:[%s0 + $0xc] sm:$0xf]
  %153 = vrot.lane.b32.xlu0 %v149, 109
  %v154 = vpop.permute.xlu0 %153
  %155 = vrot.lane.b32.xlu0 %v150, 109
  %v156 = vpop.permute.xlu0 %155
  %v157 = vrot.slane %v154, 4
  %v158 = vrot.slane %v156, 4
  %v159 = vsel %vm64, %v157, %v158
  %vm160 = vcmask 891904
  %v161 = vsel %vm160, %v154, %v159
  %164 = vst [vmem:[#allocation3 + $0x48] sm:$0xff] %v161
  %165 = vst.msk [vmem:[#allocation3 + $0x50] sm:$0xf] %vm72, %v156
  %v166 = vld [vmem:[%s0 + $0x4] sm:$0xff]
  %v167 = vld [vmem:[%s0 + $0xc] sm:$0xf]
  %170 = vrot.lane.b32.xlu0 %v166, 108
  %v171 = vpop.permute.xlu0 %170
  %172 = vrot.lane.b32.xlu0 %v167, 108
  %v173 = vpop.permute.xlu0 %172
  %v174 = vrot.slane %v171, 4
  %v175 = vrot.slane %v173, 4
  %v176 = vsel %vm64, %v174, %v175
  %vm177 = vcmask 883712
  %v178 = vsel %vm177, %v171, %v176
  %181 = vst [vmem:[#allocation3 + $0x54] sm:$0xff] %v178
  %182 = vst.msk [vmem:[#allocation3 + $0x5c] sm:$0xf] %vm72, %v173
  %v183 = vld [vmem:[%s0 + $0x4] sm:$0xff]
  %v184 = vld [vmem:[%s0 + $0xc] sm:$0xf]
  %187 = vrot.lane.b32.xlu0 %v183, 107
  %v188 = vpop.permute.xlu0 %187
  %189 = vrot.lane.b32.xlu0 %v184, 107
  %v190 = vpop.permute.xlu0 %189
  %v191 = vrot.slane %v188, 4
  %v192 = vrot.slane %v190, 4
  %v193 = vsel %vm64, %v191, %v192
  %vm194 = vcmask 875520
  %v195 = vsel %vm194, %v188, %v193
  %198 = vst [vmem:[#allocation3 + $0x60] sm:$0xff] %v195
  %199 = vst.msk [vmem:[#allocation3 + $0x68] sm:$0xf] %vm72, %v190
  %v200 = vld [vmem:[#allocation3] sm:$0xff]
  %v201 = vld [vmem:[#allocation3 + $0x8] sm:$0xf]
  %v202 = vld [vmem:[#allocation3 + $0xc] sm:$0xff]
  %v203 = vld [vmem:[#allocation3 + $0x14] sm:$0xf]
  %v204 = vld [vmem:[#allocation3 + $0x18] sm:$0xff]
  %v205 = vld [vmem:[#allocation3 + $0x20] sm:$0xf]
  %v206 = vld [vmem:[#allocation3 + $0x24] sm:$0xff]
  %v207 = vld [vmem:[#allocation3 + $0x2c] sm:$0xf]
  %v208 = vld [vmem:[#allocation3 + $0x30] sm:$0xff]
  %v209 = vld [vmem:[#allocation3 + $0x38] sm:$0xf]
  %v210 = vld [vmem:[#allocation3 + $0x3c] sm:$0xff]
  %v211 = vld [vmem:[#allocation3 + $0x44] sm:$0xf]
  %v212 = vld [vmem:[#allocation3 + $0x48] sm:$0xff]
  %v213 = vld [vmem:[#allocation3 + $0x50] sm:$0xf]
  %v214 = vld [vmem:[#allocation3 + $0x54] sm:$0xff]
  %v215 = vld [vmem:[#allocation3 + $0x5c] sm:$0xf]
  %v216 = vld [vmem:[#allocation3 + $0x60] sm:$0xff]
  %v217 = vld [vmem:[#allocation3 + $0x68] sm:$0xf]
  %219 = vset.pattern.permute.xlu0 0
  %220 = vperm.xlu0 %219, %v40
  %v221 = vpop.permute.xlu0 %220
  %v241 = vunpack.c.l.b16 %v200
  %v242 = vunpack.c.h.b16 %v200
  %v243 = vunpack.c.l.b16 %v201
  %v244 = vunpack.c.l.b16 %v202
  %v245 = vunpack.c.h.b16 %v202
  %v246 = vunpack.c.l.b16 %v203
  %v247 = vunpack.c.l.b16 %v204
  %v248 = vunpack.c.h.b16 %v204
  %v249 = vunpack.c.l.b16 %v205
  %v250 = vunpack.c.l.b16 %v206
  %v251 = vunpack.c.h.b16 %v206
  %v252 = vunpack.c.l.b16 %v207
  %v253 = vunpack.c.l.b16 %v208
  %v254 = vunpack.c.h.b16 %v208
  %v255 = vunpack.c.l.b16 %v209
  %v256 = vunpack.c.l.b16 %v210
  %v257 = vunpack.c.h.b16 %v210
  %v258 = vunpack.c.l.b16 %v211
  %v259 = vunpack.c.l.b16 %v212
  %v260 = vunpack.c.h.b16 %v212
  %v261 = vunpack.c.l.b16 %v213
  %v262 = vunpack.c.l.b16 %v214
  %v263 = vunpack.c.h.b16 %v214
  %v264 = vunpack.c.l.b16 %v215
  %v265 = vunpack.c.l.b16 %v216
  %v266 = vunpack.c.h.b16 %v216
  %v267 = vunpack.c.l.b16 %v217
  %v268 = vpack.c.b16 %v244, %v241
  %v269 = vpack.c.b16 %v245, %v242
  %v270 = vpack.c.b16 %v246, %v243
  %v271 = vpack.c.b16 %v250, %v247
  %v272 = vpack.c.b16 %v251, %v248
  %v273 = vpack.c.b16 %v252, %v249
  %v274 = vpack.c.b16 %v256, %v253
  %v275 = vpack.c.b16 %v257, %v254
  %v276 = vpack.c.b16 %v258, %v255
  %v277 = vpack.c.b16 %v262, %v259
  %v278 = vpack.c.b16 %v263, %v260
  %v279 = vpack.c.b16 %v264, %v261
  %v280 = vpack.c.b16 %v265, %v265
  %v281 = vpack.c.b16 %v266, %v266
  %v282 = vpack.c.b16 %v267, %v267
  %vm295 = vcmask 588800
  %v297 = vsel %vm295, %v39, 0
  %vm299 = vcmask 1043456
  %v301 = vsel %vm299, %v280, 0
  %v304 = vsel %vm299, %v281, 0
  %v307 = vsel %vm299, %v282, 0
  %309 = vmatpush.bf16.msra.mxu0 0
  %310 = vmatpush.bf16.msra.mxu0 0
  %311 = vmatpush.bf16.msra.mxu0 0
  %312 = vmatpush.bf16.msra.mxu0 %v301
  %313 = vmatpush.bf16.msra.mxu0 %v277
  %314 = vmatpush.bf16.msra.mxu0 %v274
  %315 = vmatpush.bf16.msra.mxu0 %v271
  %316 = vmatpush.bf16.msra.mxu0 %v268
  %317 = vmatmul.bf16.gmra.mxu0 %v297
  %v318 = vpop.f32.mrf.mxu0
  %v319 = vadd.f32 %v221, %v318
  %v320 = vpop.f32.mrf.mxu0
  %321 = vdwg.mxu0
  %322 = vmatpush.bf16.msra.mxu0 0
  %323 = vmatpush.bf16.msra.mxu0 0
  %324 = vmatpush.bf16.msra.mxu0 0
  %325 = vmatpush.bf16.msra.mxu0 %v304
  %326 = vmatpush.bf16.msra.mxu0 %v278
  %327 = vmatpush.bf16.msra.mxu0 %v275
  %328 = vmatpush.bf16.msra.mxu0 %v272
  %329 = vmatpush.bf16.msra.mxu0 %v269
  %330 = vmatmul.bf16.gmra.mxu0 %v297
  %v331 = vpop.f32.mrf.mxu0
  %v332 = vadd.f32 %v221, %v331
  %v333 = vpop.f32.mrf.mxu0
  %334 = vdwg.mxu0
  %335 = vmatpush.bf16.msra.mxu0 0
  %336 = vmatpush.bf16.msra.mxu0 0
  %337 = vmatpush.bf16.msra.mxu0 0
  %338 = vmatpush.bf16.msra.mxu0 %v307
  %339 = vmatpush.bf16.msra.mxu0 %v279
  %340 = vmatpush.bf16.msra.mxu0 %v276
  %341 = vmatpush.bf16.msra.mxu0 %v273
  %342 = vmatpush.bf16.msra.mxu0 %v270
  %343 = vmatmul.bf16.gmra.mxu0 %v297
  %v344 = vpop.f32.mrf.mxu0
  %v345 = vadd.f32 %v221, %v344
  %v346 = vpop.f32.mrf.mxu0
  %347 = vdwg.mxu0
  %v349 = vperm.slane %v48, 0
  %v350 = vperm.slane %v48, 1
  %v351 = vperm.slane %v48, 2
  %v355 = vmul.f32 %v319, %v349
  %v356 = vmul.f32 %v332, %v350
  %v357 = vmul.f32 %v345, %v351
  %v358 = vadd.f32 %v355, %v356
  %vm359 = vcmask 523264
  %v360 = vsel %vm359, %v357, 0.0
  %v361 = vadd.f32 %v358, %v360
  %362 = vadd.xlane.f32.xlu0 %v361
  %v363 = vpop.xlane.xlu0 %362
  %v364 = vmul.f32 %v355, %v355
  %v365 = vmul.f32 %v356, %v356
  %v366 = vmul.f32 %v357, %v357
  %v367 = vadd.f32 %v364, %v365
  %v368 = vsel %vm359, %v366, 0.0
  %v369 = vadd.f32 %v367, %v368
  %370 = vadd.xlane.f32.xlu0 %v369
  %v371 = vpop.xlane.xlu0 %370
  %vm372 = vcmask 7168
  %v373 = vsel %vm372, %v363, %v371
  %vm374 = vcmask 64512
  %v376 = vsel %vm374, %v47, 0
  %378 = vmatpush.msra.mxu0 0.0
  %379 = vmatpush.msra.mxu0 0.0
  %380 = vmatpush.msra.mxu0 0.0
  %381 = vmatpush.msra.mxu0 0.0
  %382 = vmatpush.msra.mxu0 0.0
  %383 = vmatpush.msra.mxu0 0.0
  %384 = vmatpush.msra.mxu0 0.0
  %385 = vmatpush.msra.mxu0 0.0
  %386 = vmatpush.msra.mxu0 0.0
  %387 = vmatpush.msra.mxu0 0.0
  %388 = vmatpush.msra.mxu0 0.0
  %389 = vmatpush.msra.mxu0 0.0
  %390 = vmatpush.msra.mxu0 0.0
  %391 = vmatpush.msra.mxu0 0.0
  %392 = vmatpush.msra.mxu0 0.0
  %393 = vmatpush.msra.mxu0 %v373
  %394 = vmatmul.f32.gmra.mxu0 %v376
  %v395 = vpop.f32.mrf.mxu0
  %v396 = vadd.f32 0.0, %v395
  %397 = vdwg.mxu0
  %v398 = vmul.f32 %v396, 0.00390625
  %v399 = vmul.f32 %v398, %v398
  %401 = vrot.lane.b32.xlu0 %v399, 1
  %v402 = vpop.permute.xlu0 %401
  %v404 = vsub.f32 %v398, %v402
  %v405 = vmax.f32 %v404, 0.0
  %407 = vset.pattern.permute.xlu0 0
  %408 = vperm.xlu0 %407, %v398
  %v409 = vpop.permute.xlu0 %408
  %v411 = vsub.f32 %v319, %v409
  %v412 = vsub.f32 %v332, %v409
  %v413 = vsub.f32 %v345, %v409
  %v414 = vadd.f32 %v405, 1e-05
  %v415 = vrsqrt.pop %v414
  %v416 = vmul.f32 %v415, %v414
  %v417 = vmul.f32 %v416, %v415
  %v418 = vmul.f32 0.5, %v417
  %v419 = vsub.f32 1.5, %v418
  %v420 = vmul.f32 %v415, %v419
  %vm421 = vweird.f32 %v414
  %vm422 = vweird.f32 %v415
  %vm423 = vmor %vm421, %vm422
  %v424 = vsel %vm423, %v415, %v420
  %426 = vset.pattern.permute.xlu0 1
  %427 = vperm.xlu0 %426, %v424
  %v428 = vpop.permute.xlu0 %427
  %v430 = vmul.f32 %v411, %v428
  %v431 = vmul.f32 %v412, %v428
  %v432 = vmul.f32 %v413, %v428
  %434 = vset.pattern.permute.xlu0 0
  %435 = vperm.xlu0 %434, %v41
  %v436 = vpop.permute.xlu0 %435
  %v438 = vmul.f32 %v430, %v436
  %v439 = vmul.f32 %v431, %v436
  %v440 = vmul.f32 %v432, %v436
  %442 = vset.pattern.permute.xlu0 0
  %443 = vperm.xlu0 %442, %v42
  %v444 = vpop.permute.xlu0 %443
  %v446 = vadd.f32 %v438, %v444
  %v447 = vadd.f32 %v439, %v444
  %v448 = vadd.f32 %v440, %v444
  %v449 = vmul.f32 %v446, 0.5
  %v450 = vmul.f32 %v447, 0.5
  %v451 = vmul.f32 %v448, 0.5
  %v452 = vmul.f32 %v446, 0.70710677
  %v453 = vmul.f32 %v447, 0.70710677
  %v454 = vmul.f32 %v448, 0.70710677
  %v455 = vmul.f32 %v452, %v452
  %v456 = vmin.f32 16.0, %v455
  %v457 = vmul.f32 %v456, 2.1237322e-06
  %v458 = vadd.f32 %v457, 0.00028619796
  %v459 = vmul.f32 %v456, %v458
  %v460 = vadd.f32 %v459, 0.0036580483
  %v461 = vmul.f32 %v456, %v460
  %v462 = vadd.f32 %v461, 0.05243302
  %v463 = vmul.f32 %v456, %v462
  %v464 = vadd.f32 %v463, 0.18741608
  %v465 = vmul.f32 %v456, %v464
  %v466 = vadd.f32 %v465, 1.1283791
  %v467 = vmul.f32 %v452, %v466
  %v468 = vmul.f32 %v456, 3.8918573e-05
  %v469 = vadd.f32 %v468, 0.001143296
  %v470 = vmul.f32 %v456, %v469
  %v471 = vadd.f32 %v470, 0.014752088
  %v472 = vmul.f32 %v456, %v471
  %v473 = vadd.f32 %v472, 0.112945676
  %v474 = vmul.f32 %v456, %v473
  %v475 = vadd.f32 %v474, 0.4994258
  %v476 = vmul.f32 %v456, %v475
  %v477 = vadd.f32 %v476, 1.0
  %v478 = vrcp.pop %v477
  %v479 = vmul.f32 %v477, %v478
  %v480 = vsub.f32 1.0, %v479
  %v481 = vmul.f32 %v478, %v480
  %v482 = vadd.f32 %v478, %v481
  %vm483 = vweird.f32 %v477
  %vm484 = vweird.f32 %v478
  %vm485 = vmor %vm483, %vm484
  %v486 = vsel %vm485, %v478, %v482
  %v487 = vand.u32 2147483647, %v477
  %vm488 = vcmp.eq.f32.partialorder %v487, 8.507059e+37
  %v489 = vand.u32 %v477, 2147483648
  %v490 = vor.u32 1.1754944e-38, %v489
  %v491 = vsel %vm488, %v490, %v486
  %v492 = vmul.f32 %v467, %v491
  %v493 = vmin.f32 %v492, 1.0
  %v494 = vmax.f32 %v493, -1.0
  %v495 = vmul.f32 %v453, %v453
  %v496 = vmin.f32 16.0, %v495
  %v497 = vmul.f32 %v496, 2.1237322e-06
  %v498 = vadd.f32 %v497, 0.00028619796
  %v499 = vmul.f32 %v496, %v498
  %v500 = vadd.f32 %v499, 0.0036580483
  %v501 = vmul.f32 %v496, %v500
  %v502 = vadd.f32 %v501, 0.05243302
  %v503 = vmul.f32 %v496, %v502
  %v504 = vadd.f32 %v503, 0.18741608
  %v505 = vmul.f32 %v496, %v504
  %v506 = vadd.f32 %v505, 1.1283791
  %v507 = vmul.f32 %v453, %v506
  %v508 = vmul.f32 %v496, 3.8918573e-05
  %v509 = vadd.f32 %v508, 0.001143296
  %v510 = vmul.f32 %v496, %v509
  %v511 = vadd.f32 %v510, 0.014752088
  %v512 = vmul.f32 %v496, %v511
  %v513 = vadd.f32 %v512, 0.112945676
  %v514 = vmul.f32 %v496, %v513
  %v515 = vadd.f32 %v514, 0.4994258
  %v516 = vmul.f32 %v496, %v515
  %v517 = vadd.f32 %v516, 1.0
  %v518 = vrcp.pop %v517
  %v519 = vmul.f32 %v517, %v518
  %v520 = vsub.f32 1.0, %v519
  %v521 = vmul.f32 %v518, %v520
  %v522 = vadd.f32 %v518, %v521
  %vm523 = vweird.f32 %v517
  %vm524 = vweird.f32 %v518
  %vm525 = vmor %vm523, %vm524
  %v526 = vsel %vm525, %v518, %v522
  %v527 = vand.u32 2147483647, %v517
  %vm528 = vcmp.eq.f32.partialorder %v527, 8.507059e+37
  %v529 = vand.u32 %v517, 2147483648
  %v530 = vor.u32 1.1754944e-38, %v529
  %v531 = vsel %vm528, %v530, %v526
  %v532 = vmul.f32 %v507, %v531
  %v533 = vmin.f32 %v532, 1.0
  %v534 = vmax.f32 %v533, -1.0
  %v535 = vmul.f32 %v454, %v454
  %v536 = vmin.f32 16.0, %v535
  %v537 = vmul.f32 %v536, 2.1237322e-06
  %v538 = vadd.f32 %v537, 0.00028619796
  %v539 = vmul.f32 %v536, %v538
  %v540 = vadd.f32 %v539, 0.0036580483
  %v541 = vmul.f32 %v536, %v540
  %v542 = vadd.f32 %v541, 0.05243302
  %v543 = vmul.f32 %v536, %v542
  %v544 = vadd.f32 %v543, 0.18741608
  %v545 = vmul.f32 %v536, %v544
  %v546 = vadd.f32 %v545, 1.1283791
  %v547 = vmul.f32 %v454, %v546
  %v548 = vmul.f32 %v536, 3.8918573e-05
  %v549 = vadd.f32 %v548, 0.001143296
  %v550 = vmul.f32 %v536, %v549
  %v551 = vadd.f32 %v550, 0.014752088
  %v552 = vmul.f32 %v536, %v551
  %v553 = vadd.f32 %v552, 0.112945676
  %v554 = vmul.f32 %v536, %v553
  %v555 = vadd.f32 %v554, 0.4994258
  %v556 = vmul.f32 %v536, %v555
  %v557 = vadd.f32 %v556, 1.0
  %v558 = vrcp.pop %v557
  %v559 = vmul.f32 %v557, %v558
  %v560 = vsub.f32 1.0, %v559
  %v561 = vmul.f32 %v558, %v560
  %v562 = vadd.f32 %v558, %v561
  %vm563 = vweird.f32 %v557
  %vm564 = vweird.f32 %v558
  %vm565 = vmor %vm563, %vm564
  %v566 = vsel %vm565, %v558, %v562
  %v567 = vand.u32 2147483647, %v557
  %vm568 = vcmp.eq.f32.partialorder %v567, 8.507059e+37
  %v569 = vand.u32 %v557, 2147483648
  %v570 = vor.u32 1.1754944e-38, %v569
  %v571 = vsel %vm568, %v570, %v566
  %v572 = vmul.f32 %v547, %v571
  %v573 = vmin.f32 %v572, 1.0
  %v574 = vmax.f32 %v573, -1.0
  %v575 = vadd.f32 %v494, 1.0
  %v576 = vadd.f32 %v534, 1.0
  %v577 = vadd.f32 %v574, 1.0
  %v578 = vmul.f32 %v449, %v575
  %v579 = vmul.f32 %v450, %v576
  %v580 = vmul.f32 %v451, %v577
  %v581 = vmul.f32 %v578, %v349
  %v582 = vmul.f32 %v579, %v350
  %v583 = vmul.f32 %v580, %v351
  %v584 = vpack.c.bf16 %v582, %v581
  %v585 = vpack.c.bf16 %v583, %v583
  %586 = vst [vmem:[#allocation2 + $0x4] sm:$0xff] %v584
  %587 = vst.msk [vmem:[#allocation2 + $0xc] sm:$0xf] %vm72, %v585
  %v588 = vld [vmem:[#allocation2] sm:$0xff]
  %v589 = vld [vmem:[#allocation2 + $0x8] sm:$0xff]
  %592 = vrot.lane.b32.xlu0 %v588, 21
  %v593 = vpop.permute.xlu0 %592
  %594 = vrot.lane.b32.xlu0 %v589, 21
  %v595 = vpop.permute.xlu0 %594
  %v596 = vrot.slane %v593, 4
  %v597 = vrot.slane %v595, 4
  %v598 = vsel %vm64, %v596, %v597
  %v599 = vsel %vm66, %v593, %v598
  %v600 = vsel %vm66, %v595, %v597
  %603 = vst [vmem:[#allocation3] sm:$0xff] %v599
  %604 = vst.msk [vmem:[#allocation3 + $0x8] sm:$0xf] %vm72, %v600
  %v605 = vld [vmem:[#allocation2] sm:$0xff]
  %v606 = vld [vmem:[#allocation2 + $0x8] sm:$0xff]
  %609 = vrot.lane.b32.xlu0 %v605, 20
  %v610 = vpop.permute.xlu0 %609
  %611 = vrot.lane.b32.xlu0 %v606, 20
  %v612 = vpop.permute.xlu0 %611
  %v613 = vrot.slane %v610, 4
  %v614 = vrot.slane %v612, 4
  %v615 = vsel %vm64, %v613, %v614
  %v616 = vsel %vm85, %v610, %v615
  %v617 = vsel %vm85, %v612, %v614
  %620 = vst [vmem:[#allocation3 + $0xc] sm:$0xff] %v616
  %621 = vst.msk [vmem:[#allocation3 + $0x14] sm:$0xf] %vm72, %v617
  %v622 = vld [vmem:[#allocation2] sm:$0xff]
  %v623 = vld [vmem:[#allocation2 + $0x8] sm:$0xff]
  %626 = vrot.lane.b32.xlu0 %v622, 19
  %v627 = vpop.permute.xlu0 %626
  %628 = vrot.lane.b32.xlu0 %v623, 19
  %v629 = vpop.permute.xlu0 %628
  %v630 = vrot.slane %v627, 4
  %v631 = vrot.slane %v629, 4
  %v632 = vsel %vm64, %v630, %v631
  %v633 = vsel %vm103, %v627, %v632
  %v634 = vsel %vm103, %v629, %v631
  %637 = vst [vmem:[#allocation3 + $0x18] sm:$0xff] %v633
  %638 = vst.msk [vmem:[#allocation3 + $0x20] sm:$0xf] %vm72, %v634
  %v639 = vld [vmem:[#allocation2] sm:$0xff]
  %v640 = vld [vmem:[#allocation2 + $0x8] sm:$0xff]
  %643 = vrot.lane.b32.xlu0 %v639, 1
  %v644 = vpop.permute.xlu0 %643
  %645 = vrot.lane.b32.xlu0 %v640, 1
  %v646 = vpop.permute.xlu0 %645
  %v647 = vrot.slane %v644, 4
  %v648 = vrot.slane %v646, 4
  %v649 = vsel %vm64, %v647, %v648
  %v650 = vsel %vm121, %v644, %v649
  %v651 = vsel %vm121, %v646, %v648
  %654 = vst [vmem:[#allocation3 + $0x24] sm:$0xff] %v650
  %655 = vst.msk [vmem:[#allocation3 + $0x2c] sm:$0xf] %vm72, %v651
  %v656 = vld [vmem:[#allocation2 + $0x4] sm:$0xff]
  %v657 = vld [vmem:[#allocation2 + $0xc] sm:$0xf]
  %658 = vst [vmem:[#allocation3 + $0x30] sm:$0xff] %v656
  %659 = vst.msk [vmem:[#allocation3 + $0x38] sm:$0xf] %vm72, %v657
  %v660 = vld [vmem:[#allocation2 + $0x4] sm:$0xff]
  %v661 = vld [vmem:[#allocation2 + $0xc] sm:$0xf]
  %664 = vrot.lane.b32.xlu0 %v660, 127
  %v665 = vpop.permute.xlu0 %664
  %666 = vrot.lane.b32.xlu0 %v661, 127
  %v667 = vpop.permute.xlu0 %666
  %v668 = vrot.slane %v665, 4
  %v669 = vrot.slane %v667, 4
  %v670 = vsel %vm64, %v668, %v669
  %v671 = vsel %vm143, %v665, %v670
  %674 = vst [vmem:[#allocation3 + $0x3c] sm:$0xff] %v671
  %675 = vst.msk [vmem:[#allocation3 + $0x44] sm:$0xf] %vm72, %v667
  %v676 = vld [vmem:[#allocation2 + $0x4] sm:$0xff]
  %v677 = vld [vmem:[#allocation2 + $0xc] sm:$0xf]
  %680 = vrot.lane.b32.xlu0 %v676, 109
  %v681 = vpop.permute.xlu0 %680
  %682 = vrot.lane.b32.xlu0 %v677, 109
  %v683 = vpop.permute.xlu0 %682
  %v684 = vrot.slane %v681, 4
  %v685 = vrot.slane %v683, 4
  %v686 = vsel %vm64, %v684, %v685
  %v687 = vsel %vm160, %v681, %v686
  %690 = vst [vmem:[#allocation3 + $0x48] sm:$0xff] %v687
  %691 = vst.msk [vmem:[#allocation3 + $0x50] sm:$0xf] %vm72, %v683
  %v692 = vld [vmem:[#allocation2 + $0x4] sm:$0xff]
  %v693 = vld [vmem:[#allocation2 + $0xc] sm:$0xf]
  %696 = vrot.lane.b32.xlu0 %v692, 108
  %v697 = vpop.permute.xlu0 %696
  %698 = vrot.lane.b32.xlu0 %v693, 108
  %v699 = vpop.permute.xlu0 %698
  %v700 = vrot.slane %v697, 4
  %v701 = vrot.slane %v699, 4
  %v702 = vsel %vm64, %v700, %v701
  %v703 = vsel %vm177, %v697, %v702
  %706 = vst [vmem:[#allocation3 + $0x54] sm:$0xff] %v703
  %707 = vst.msk [vmem:[#allocation3 + $0x5c] sm:$0xf] %vm72, %v699
  %v708 = vld [vmem:[#allocation2 + $0x4] sm:$0xff]
  %v709 = vld [vmem:[#allocation2 + $0xc] sm:$0xf]
  %712 = vrot.lane.b32.xlu0 %v708, 107
  %v713 = vpop.permute.xlu0 %712
  %714 = vrot.lane.b32.xlu0 %v709, 107
  %v715 = vpop.permute.xlu0 %714
  %v716 = vrot.slane %v713, 4
  %v717 = vrot.slane %v715, 4
  %v718 = vsel %vm64, %v716, %v717
  %v719 = vsel %vm194, %v713, %v718
  %722 = vst [vmem:[#allocation3 + $0x60] sm:$0xff] %v719
  %723 = vst.msk [vmem:[#allocation3 + $0x68] sm:$0xf] %vm72, %v715
  %v724 = vld [vmem:[#allocation3] sm:$0xff]
  %v725 = vld [vmem:[#allocation3 + $0x8] sm:$0xf]
  %v726 = vld [vmem:[#allocation3 + $0xc] sm:$0xff]
  %v727 = vld [vmem:[#allocation3 + $0x14] sm:$0xf]
  %v728 = vld [vmem:[#allocation3 + $0x18] sm:$0xff]
  %v729 = vld [vmem:[#allocation3 + $0x20] sm:$0xf]
  %v730 = vld [vmem:[#allocation3 + $0x24] sm:$0xff]
  %v731 = vld [vmem:[#allocation3 + $0x2c] sm:$0xf]
  %v732 = vld [vmem:[#allocation3 + $0x30] sm:$0xff]
  %v733 = vld [vmem:[#allocation3 + $0x38] sm:$0xf]
  %v734 = vld [vmem:[#allocation3 + $0x3c] sm:$0xff]
  %v735 = vld [vmem:[#allocation3 + $0x44] sm:$0xf]
  %v736 = vld [vmem:[#allocation3 + $0x48] sm:$0xff]
  %v737 = vld [vmem:[#allocation3 + $0x50] sm:$0xf]
  %v738 = vld [vmem:[#allocation3 + $0x54] sm:$0xff]
  %v739 = vld [vmem:[#allocation3 + $0x5c] sm:$0xf]
  %v740 = vld [vmem:[#allocation3 + $0x60] sm:$0xff]
  %v741 = vld [vmem:[#allocation3 + $0x68] sm:$0xf]
  %743 = vset.pattern.permute.xlu0 0
  %744 = vperm.xlu0 %743, %v44
  %v745 = vpop.permute.xlu0 %744
  %v765 = vunpack.c.l.b16 %v724
  %v766 = vunpack.c.h.b16 %v724
  %v767 = vunpack.c.l.b16 %v725
  %v768 = vunpack.c.l.b16 %v726
  %v769 = vunpack.c.h.b16 %v726
  %v770 = vunpack.c.l.b16 %v727
  %v771 = vunpack.c.l.b16 %v728
  %v772 = vunpack.c.h.b16 %v728
  %v773 = vunpack.c.l.b16 %v729
  %v774 = vunpack.c.l.b16 %v730
  %v775 = vunpack.c.h.b16 %v730
  %v776 = vunpack.c.l.b16 %v731
  %v777 = vunpack.c.l.b16 %v732
  %v778 = vunpack.c.h.b16 %v732
  %v779 = vunpack.c.l.b16 %v733
  %v780 = vunpack.c.l.b16 %v734
  %v781 = vunpack.c.h.b16 %v734
  %v782 = vunpack.c.l.b16 %v735
  %v783 = vunpack.c.l.b16 %v736
  %v784 = vunpack.c.h.b16 %v736
  %v785 = vunpack.c.l.b16 %v737
  %v786 = vunpack.c.l.b16 %v738
  %v787 = vunpack.c.h.b16 %v738
  %v788 = vunpack.c.l.b16 %v739
  %v789 = vunpack.c.l.b16 %v740
  %v790 = vunpack.c.h.b16 %v740
  %v791 = vunpack.c.l.b16 %v741
  %v792 = vpack.c.b16 %v768, %v765
  %v793 = vpack.c.b16 %v769, %v766
  %v794 = vpack.c.b16 %v770, %v767
  %v795 = vpack.c.b16 %v774, %v771
  %v796 = vpack.c.b16 %v775, %v772
  %v797 = vpack.c.b16 %v776, %v773
  %v798 = vpack.c.b16 %v780, %v777
  %v799 = vpack.c.b16 %v781, %v778
  %v800 = vpack.c.b16 %v782, %v779
  %v801 = vpack.c.b16 %v786, %v783
  %v802 = vpack.c.b16 %v787, %v784
  %v803 = vpack.c.b16 %v788, %v785
  %v804 = vpack.c.b16 %v789, %v789
  %v805 = vpack.c.b16 %v790, %v790
  %v806 = vpack.c.b16 %v791, %v791
  %v820 = vsel %vm295, %v43, 0
  %v823 = vsel %vm299, %v804, 0
  %v826 = vsel %vm299, %v805, 0
  %v829 = vsel %vm299, %v806, 0
  %831 = vmatpush.bf16.msra.mxu0 0
  %832 = vmatpush.bf16.msra.mxu0 0
  %833 = vmatpush.bf16.msra.mxu0 0
  %834 = vmatpush.bf16.msra.mxu0 %v823
  %835 = vmatpush.bf16.msra.mxu0 %v801
  %836 = vmatpush.bf16.msra.mxu0 %v798
  %837 = vmatpush.bf16.msra.mxu0 %v795
  %838 = vmatpush.bf16.msra.mxu0 %v792
  %839 = vmatmul.bf16.gmra.mxu0 %v820
  %v840 = vpop.f32.mrf.mxu0
  %v841 = vadd.f32 %v745, %v840
  %v842 = vpop.f32.mrf.mxu0
  %843 = vdwg.mxu0
  %844 = vmatpush.bf16.msra.mxu0 0
  %845 = vmatpush.bf16.msra.mxu0 0
  %846 = vmatpush.bf16.msra.mxu0 0
  %847 = vmatpush.bf16.msra.mxu0 %v826
  %848 = vmatpush.bf16.msra.mxu0 %v802
  %849 = vmatpush.bf16.msra.mxu0 %v799
  %850 = vmatpush.bf16.msra.mxu0 %v796
  %851 = vmatpush.bf16.msra.mxu0 %v793
  %852 = vmatmul.bf16.gmra.mxu0 %v820
  %v853 = vpop.f32.mrf.mxu0
  %v854 = vadd.f32 %v745, %v853
  %v855 = vpop.f32.mrf.mxu0
  %856 = vdwg.mxu0
  %857 = vmatpush.bf16.msra.mxu0 0
  %858 = vmatpush.bf16.msra.mxu0 0
  %859 = vmatpush.bf16.msra.mxu0 0
  %860 = vmatpush.bf16.msra.mxu0 %v829
  %861 = vmatpush.bf16.msra.mxu0 %v803
  %862 = vmatpush.bf16.msra.mxu0 %v800
  %863 = vmatpush.bf16.msra.mxu0 %v797
  %864 = vmatpush.bf16.msra.mxu0 %v794
  %865 = vmatmul.bf16.gmra.mxu0 %v820
  %v866 = vpop.f32.mrf.mxu0
  %v867 = vadd.f32 %v745, %v866
  %v868 = vpop.f32.mrf.mxu0
  %869 = vdwg.mxu0
  %v870 = vmul.f32 %v841, %v349
  %v871 = vmul.f32 %v854, %v350
  %v872 = vmul.f32 %v867, %v351
  %v873 = vadd.f32 %v870, %v871
  %v874 = vsel %vm359, %v872, 0.0
  %v875 = vadd.f32 %v873, %v874
  %876 = vadd.xlane.f32.xlu0 %v875
  %v877 = vpop.xlane.xlu0 %876
  %v878 = vmul.f32 %v870, %v870
  %v879 = vmul.f32 %v871, %v871
  %v880 = vmul.f32 %v872, %v872
  %v881 = vadd.f32 %v878, %v879
  %v882 = vsel %vm359, %v880, 0.0
  %v883 = vadd.f32 %v881, %v882
  %884 = vadd.xlane.f32.xlu0 %v883
  %v885 = vpop.xlane.xlu0 %884
  %v886 = vsel %vm372, %v877, %v885
  %887 = vmatpush.msra.mxu0 0.0
  %888 = vmatpush.msra.mxu0 0.0
  %889 = vmatpush.msra.mxu0 0.0
  %890 = vmatpush.msra.mxu0 0.0
  %891 = vmatpush.msra.mxu0 0.0
  %892 = vmatpush.msra.mxu0 0.0
  %893 = vmatpush.msra.mxu0 0.0
  %894 = vmatpush.msra.mxu0 0.0
  %895 = vmatpush.msra.mxu0 0.0
  %896 = vmatpush.msra.mxu0 0.0
  %897 = vmatpush.msra.mxu0 0.0
  %898 = vmatpush.msra.mxu0 0.0
  %899 = vmatpush.msra.mxu0 0.0
  %900 = vmatpush.msra.mxu0 0.0
  %901 = vmatpush.msra.mxu0 0.0
  %902 = vmatpush.msra.mxu0 %v886
  %903 = vmatmul.f32.gmra.mxu0 %v376
  %v904 = vpop.f32.mrf.mxu0
  %v905 = vadd.f32 0.0, %v904
  %906 = vdwg.mxu0
  %v907 = vmul.f32 %v905, 0.00390625
  %v908 = vmul.f32 %v907, %v907
  %910 = vrot.lane.b32.xlu0 %v908, 1
  %v911 = vpop.permute.xlu0 %910
  %v913 = vsub.f32 %v907, %v911
  %v914 = vmax.f32 %v913, 0.0
  %916 = vset.pattern.permute.xlu0 0
  %917 = vperm.xlu0 %916, %v907
  %v918 = vpop.permute.xlu0 %917
  %v920 = vsub.f32 %v841, %v918
  %v921 = vsub.f32 %v854, %v918
  %v922 = vsub.f32 %v867, %v918
  %v923 = vadd.f32 %v914, 1e-05
  %v924 = vrsqrt.pop %v923
  %v925 = vmul.f32 %v924, %v923
  %v926 = vmul.f32 %v925, %v924
  %v927 = vmul.f32 0.5, %v926
  %v928 = vsub.f32 1.5, %v927
  %v929 = vmul.f32 %v924, %v928
  %vm930 = vweird.f32 %v923
  %vm931 = vweird.f32 %v924
  %vm932 = vmor %vm930, %vm931
  %v933 = vsel %vm932, %v924, %v929
  %935 = vset.pattern.permute.xlu0 1
  %936 = vperm.xlu0 %935, %v933
  %v937 = vpop.permute.xlu0 %936
  %v939 = vmul.f32 %v920, %v937
  %v940 = vmul.f32 %v921, %v937
  %v941 = vmul.f32 %v922, %v937
  %943 = vset.pattern.permute.xlu0 0
  %944 = vperm.xlu0 %943, %v45
  %v945 = vpop.permute.xlu0 %944
  %v947 = vmul.f32 %v939, %v945
  %v948 = vmul.f32 %v940, %v945
  %v949 = vmul.f32 %v941, %v945
  %951 = vset.pattern.permute.xlu0 0
  %952 = vperm.xlu0 %951, %v46
  %v953 = vpop.permute.xlu0 %952
  %v955 = vadd.f32 %v947, %v953
  %v956 = vadd.f32 %v948, %v953
  %v957 = vadd.f32 %v949, %v953
  %v958 = vmul.f32 %v955, 0.5
  %v959 = vmul.f32 %v956, 0.5
  %v960 = vmul.f32 %v957, 0.5
  %v961 = vmul.f32 %v955, 0.70710677
  %v962 = vmul.f32 %v956, 0.70710677
  %v963 = vmul.f32 %v957, 0.70710677
  %v964 = vmul.f32 %v961, %v961
  %v965 = vmin.f32 16.0, %v964
  %v966 = vmul.f32 %v965, 2.1237322e-06
  %v967 = vadd.f32 %v966, 0.00028619796
  %v968 = vmul.f32 %v965, %v967
  %v969 = vadd.f32 %v968, 0.0036580483
  %v970 = vmul.f32 %v965, %v969
  %v971 = vadd.f32 %v970, 0.05243302
  %v972 = vmul.f32 %v965, %v971
  %v973 = vadd.f32 %v972, 0.18741608
  %v974 = vmul.f32 %v965, %v973
  %v975 = vadd.f32 %v974, 1.1283791
  %v976 = vmul.f32 %v961, %v975
  %v977 = vmul.f32 %v965, 3.8918573e-05
  %v978 = vadd.f32 %v977, 0.001143296
  %v979 = vmul.f32 %v965, %v978
  %v980 = vadd.f32 %v979, 0.014752088
  %v981 = vmul.f32 %v965, %v980
  %v982 = vadd.f32 %v981, 0.112945676
  %v983 = vmul.f32 %v965, %v982
  %v984 = vadd.f32 %v983, 0.4994258
  %v985 = vmul.f32 %v965, %v984
  %v986 = vadd.f32 %v985, 1.0
  %v987 = vrcp.pop %v986
  %v988 = vmul.f32 %v986, %v987
  %v989 = vsub.f32 1.0, %v988
  %v990 = vmul.f32 %v987, %v989
  %v991 = vadd.f32 %v987, %v990
  %vm992 = vweird.f32 %v986
  %vm993 = vweird.f32 %v987
  %vm994 = vmor %vm992, %vm993
  %v995 = vsel %vm994, %v987, %v991
  %v996 = vand.u32 2147483647, %v986
  %vm997 = vcmp.eq.f32.partialorder %v996, 8.507059e+37
  %v998 = vand.u32 %v986, 2147483648
  %v999 = vor.u32 1.1754944e-38, %v998
  %v1000 = vsel %vm997, %v999, %v995
  %v1001 = vmul.f32 %v976, %v1000
  %v1002 = vmin.f32 %v1001, 1.0
  %v1003 = vmax.f32 %v1002, -1.0
  %v1004 = vmul.f32 %v962, %v962
  %v1005 = vmin.f32 16.0, %v1004
  %v1006 = vmul.f32 %v1005, 2.1237322e-06
  %v1007 = vadd.f32 %v1006, 0.00028619796
  %v1008 = vmul.f32 %v1005, %v1007
  %v1009 = vadd.f32 %v1008, 0.0036580483
  %v1010 = vmul.f32 %v1005, %v1009
  %v1011 = vadd.f32 %v1010, 0.05243302
  %v1012 = vmul.f32 %v1005, %v1011
  %v1013 = vadd.f32 %v1012, 0.18741608
  %v1014 = vmul.f32 %v1005, %v1013
  %v1015 = vadd.f32 %v1014, 1.1283791
  %v1016 = vmul.f32 %v962, %v1015
  %v1017 = vmul.f32 %v1005, 3.8918573e-05
  %v1018 = vadd.f32 %v1017, 0.001143296
  %v1019 = vmul.f32 %v1005, %v1018
  %v1020 = vadd.f32 %v1019, 0.014752088
  %v1021 = vmul.f32 %v1005, %v1020
  %v1022 = vadd.f32 %v1021, 0.112945676
  %v1023 = vmul.f32 %v1005, %v1022
  %v1024 = vadd.f32 %v1023, 0.4994258
  %v1025 = vmul.f32 %v1005, %v1024
  %v1026 = vadd.f32 %v1025, 1.0
  %v1027 = vrcp.pop %v1026
  %v1028 = vmul.f32 %v1026, %v1027
  %v1029 = vsub.f32 1.0, %v1028
  %v1030 = vmul.f32 %v1027, %v1029
  %v1031 = vadd.f32 %v1027, %v1030
  %vm1032 = vweird.f32 %v1026
  %vm1033 = vweird.f32 %v1027
  %vm1034 = vmor %vm1032, %vm1033
  %v1035 = vsel %vm1034, %v1027, %v1031
  %v1036 = vand.u32 2147483647, %v1026
  %vm1037 = vcmp.eq.f32.partialorder %v1036, 8.507059e+37
  %v1038 = vand.u32 %v1026, 2147483648
  %v1039 = vor.u32 1.1754944e-38, %v1038
  %v1040 = vsel %vm1037, %v1039, %v1035
  %v1041 = vmul.f32 %v1016, %v1040
  %v1042 = vmin.f32 %v1041, 1.0
  %v1043 = vmax.f32 %v1042, -1.0
  %v1044 = vmul.f32 %v963, %v963
  %v1045 = vmin.f32 16.0, %v1044
  %v1046 = vmul.f32 %v1045, 2.1237322e-06
  %v1047 = vadd.f32 %v1046, 0.00028619796
  %v1048 = vmul.f32 %v1045, %v1047
  %v1049 = vadd.f32 %v1048, 0.0036580483
  %v1050 = vmul.f32 %v1045, %v1049
  %v1051 = vadd.f32 %v1050, 0.05243302
  %v1052 = vmul.f32 %v1045, %v1051
  %v1053 = vadd.f32 %v1052, 0.18741608
  %v1054 = vmul.f32 %v1045, %v1053
  %v1055 = vadd.f32 %v1054, 1.1283791
  %v1056 = vmul.f32 %v963, %v1055
  %v1057 = vmul.f32 %v1045, 3.8918573e-05
  %v1058 = vadd.f32 %v1057, 0.001143296
  %v1059 = vmul.f32 %v1045, %v1058
  %v1060 = vadd.f32 %v1059, 0.014752088
  %v1061 = vmul.f32 %v1045, %v1060
  %v1062 = vadd.f32 %v1061, 0.112945676
  %v1063 = vmul.f32 %v1045, %v1062
  %v1064 = vadd.f32 %v1063, 0.4994258
  %v1065 = vmul.f32 %v1045, %v1064
  %v1066 = vadd.f32 %v1065, 1.0
  %v1067 = vrcp.pop %v1066
  %v1068 = vmul.f32 %v1066, %v1067
  %v1069 = vsub.f32 1.0, %v1068
  %v1070 = vmul.f32 %v1067, %v1069
  %v1071 = vadd.f32 %v1067, %v1070
  %vm1072 = vweird.f32 %v1066
  %vm1073 = vweird.f32 %v1067
  %vm1074 = vmor %vm1072, %vm1073
  %v1075 = vsel %vm1074, %v1067, %v1071
  %v1076 = vand.u32 2147483647, %v1066
  %vm1077 = vcmp.eq.f32.partialorder %v1076, 8.507059e+37
  %v1078 = vand.u32 %v1066, 2147483648
  %v1079 = vor.u32 1.1754944e-38, %v1078
  %v1080 = vsel %vm1077, %v1079, %v1075
  %v1081 = vmul.f32 %v1056, %v1080
  %v1082 = vmin.f32 %v1081, 1.0
  %v1083 = vmax.f32 %v1082, -1.0
  %v1084 = vadd.f32 %v1003, 1.0
  %v1085 = vadd.f32 %v1043, 1.0
  %v1086 = vadd.f32 %v1083, 1.0
  %v1087 = vmul.f32 %v958, %v1084
  %v1088 = vmul.f32 %v959, %v1085
  %v1089 = vmul.f32 %v960, %v1086
  %v1090 = vld [vmem:[%s0 + $0x4] sm:$0xff]
  %v1091 = vld [vmem:[%s0 + $0xc] sm:$0xf]
  %v1092 = vunpack.c.l.bf16 %v1090
  %v1093 = vunpack.c.h.bf16 %v1090
  %v1094 = vunpack.c.l.bf16 %v1091
  %v1095 = vadd.f32 %v1087, %v1092
  %v1096 = vadd.f32 %v1088, %v1093
  %v1097 = vadd.f32 %v1089, %v1094
  %v1098 = vmul.f32 %v1095, %v349
  %v1099 = vmul.f32 %v1096, %v350
  %v1100 = vmul.f32 %v1097, %v351
  %1101 = vst [vmem:[%s11] sm:$0xf] 0
  %v1102 = vpack.c.bf16 %v1099, %v1098
  %v1103 = vpack.c.bf16 %v1100, %v1100
  %1104 = vst [vmem:[%s11 + $0x4] sm:$0xff] %v1102
  %1105 = vst.msk [vmem:[%s11 + $0xc] sm:$0xf] %vm72, %v1103
  %1106 = vst.msk [vmem:[%s11 + $0xc] sm:$0xff] %vm52, 0
  %s1107 = scalar_lea.vmem %s0, 20
  %v1108 = vld [vmem:[%s1107] sm:$0xff]
  %v1109 = vld [vmem:[%s1107 + $0x8] sm:$0xff]
  %1112 = vrot.lane.b32.xlu0 %v1108, 21
  %v1113 = vpop.permute.xlu0 %1112
  %1114 = vrot.lane.b32.xlu0 %v1109, 21
  %v1115 = vpop.permute.xlu0 %1114
  %v1116 = vrot.slane %v1113, 4
  %v1117 = vrot.slane %v1115, 4
  %v1118 = vsel %vm64, %v1116, %v1117
  %v1119 = vsel %vm66, %v1113, %v1118
  %v1120 = vsel %vm66, %v1115, %v1117
  %1123 = vst [vmem:[#allocation3] sm:$0xff] %v1119
  %1124 = vst.msk [vmem:[#allocation3 + $0x8] sm:$0xf] %vm72, %v1120
  %v1125 = vld [vmem:[%s1107] sm:$0xff]
  %v1126 = vld [vmem:[%s1107 + $0x8] sm:$0xff]
  %1129 = vrot.lane.b32.xlu0 %v1125, 20
  %v1130 = vpop.permute.xlu0 %1129
  %1131 = vrot.lane.b32.xlu0 %v1126, 20
  %v1132 = vpop.permute.xlu0 %1131
  %v1133 = vrot.slane %v1130, 4
  %v1134 = vrot.slane %v1132, 4
  %v1135 = vsel %vm64, %v1133, %v1134
  %v1136 = vsel %vm85, %v1130, %v1135
  %v1137 = vsel %vm85, %v1132, %v1134
  %1140 = vst [vmem:[#allocation3 + $0xc] sm:$0xff] %v1136
  %1141 = vst.msk [vmem:[#allocation3 + $0x14] sm:$0xf] %vm72, %v1137
  %v1142 = vld [vmem:[%s1107] sm:$0xff]
  %v1143 = vld [vmem:[%s1107 + $0x8] sm:$0xff]
  %1146 = vrot.lane.b32.xlu0 %v1142, 19
  %v1147 = vpop.permute.xlu0 %1146
  %1148 = vrot.lane.b32.xlu0 %v1143, 19
  %v1149 = vpop.permute.xlu0 %1148
  %v1150 = vrot.slane %v1147, 4
  %v1151 = vrot.slane %v1149, 4
  %v1152 = vsel %vm64, %v1150, %v1151
  %v1153 = vsel %vm103, %v1147, %v1152
  %v1154 = vsel %vm103, %v1149, %v1151
  %1157 = vst [vmem:[#allocation3 + $0x18] sm:$0xff] %v1153
  %1158 = vst.msk [vmem:[#allocation3 + $0x20] sm:$0xf] %vm72, %v1154
  %v1159 = vld [vmem:[%s1107] sm:$0xff]
  %v1160 = vld [vmem:[%s1107 + $0x8] sm:$0xff]
  %1163 = vrot.lane.b32.xlu0 %v1159, 1
  %v1164 = vpop.permute.xlu0 %1163
  %1165 = vrot.lane.b32.xlu0 %v1160, 1
  %v1166 = vpop.permute.xlu0 %1165
  %v1167 = vrot.slane %v1164, 4
  %v1168 = vrot.slane %v1166, 4
  %v1169 = vsel %vm64, %v1167, %v1168
  %v1170 = vsel %vm121, %v1164, %v1169
  %v1171 = vsel %vm121, %v1166, %v1168
  %1174 = vst [vmem:[#allocation3 + $0x24] sm:$0xff] %v1170
  %1175 = vst.msk [vmem:[#allocation3 + $0x2c] sm:$0xf] %vm72, %v1171
  %v1176 = vld [vmem:[%s1107 + $0x4] sm:$0xff]
  %v1177 = vld [vmem:[%s1107 + $0xc] sm:$0xf]
  %1178 = vst [vmem:[#allocation3 + $0x30] sm:$0xff] %v1176
  %1179 = vst.msk [vmem:[#allocation3 + $0x38] sm:$0xf] %vm72, %v1177
  %v1180 = vld [vmem:[%s1107 + $0x4] sm:$0xff]
  %v1181 = vld [vmem:[%s1107 + $0xc] sm:$0xf]
  %1184 = vrot.lane.b32.xlu0 %v1180, 127
  %v1185 = vpop.permute.xlu0 %1184
  %1186 = vrot.lane.b32.xlu0 %v1181, 127
  %v1187 = vpop.permute.xlu0 %1186
  %v1188 = vrot.slane %v1185, 4
  %v1189 = vrot.slane %v1187, 4
  %v1190 = vsel %vm64, %v1188, %v1189
  %v1191 = vsel %vm143, %v1185, %v1190
  %1194 = vst [vmem:[#allocation3 + $0x3c] sm:$0xff] %v1191
  %1195 = vst.msk [vmem:[#allocation3 + $0x44] sm:$0xf] %vm72, %v1187
  %v1196 = vld [vmem:[%s1107 + $0x4] sm:$0xff]
  %v1197 = vld [vmem:[%s1107 + $0xc] sm:$0xf]
  %1200 = vrot.lane.b32.xlu0 %v1196, 109
  %v1201 = vpop.permute.xlu0 %1200
  %1202 = vrot.lane.b32.xlu0 %v1197, 109
  %v1203 = vpop.permute.xlu0 %1202
  %v1204 = vrot.slane %v1201, 4
  %v1205 = vrot.slane %v1203, 4
  %v1206 = vsel %vm64, %v1204, %v1205
  %v1207 = vsel %vm160, %v1201, %v1206
  %1210 = vst [vmem:[#allocation3 + $0x48] sm:$0xff] %v1207
  %1211 = vst.msk [vmem:[#allocation3 + $0x50] sm:$0xf] %vm72, %v1203
  %v1212 = vld [vmem:[%s1107 + $0x4] sm:$0xff]
  %v1213 = vld [vmem:[%s1107 + $0xc] sm:$0xf]
  %1216 = vrot.lane.b32.xlu0 %v1212, 108
  %v1217 = vpop.permute.xlu0 %1216
  %1218 = vrot.lane.b32.xlu0 %v1213, 108
  %v1219 = vpop.permute.xlu0 %1218
  %v1220 = vrot.slane %v1217, 4
  %v1221 = vrot.slane %v1219, 4
  %v1222 = vsel %vm64, %v1220, %v1221
  %v1223 = vsel %vm177, %v1217, %v1222
  %1226 = vst [vmem:[#allocation3 + $0x54] sm:$0xff] %v1223
  %1227 = vst.msk [vmem:[#allocation3 + $0x5c] sm:$0xf] %vm72, %v1219
  %v1228 = vld [vmem:[%s1107 + $0x4] sm:$0xff]
  %v1229 = vld [vmem:[%s1107 + $0xc] sm:$0xf]
  %1232 = vrot.lane.b32.xlu0 %v1228, 107
  %v1233 = vpop.permute.xlu0 %1232
  %1234 = vrot.lane.b32.xlu0 %v1229, 107
  %v1235 = vpop.permute.xlu0 %1234
  %v1236 = vrot.slane %v1233, 4
  %v1237 = vrot.slane %v1235, 4
  %v1238 = vsel %vm64, %v1236, %v1237
  %v1239 = vsel %vm194, %v1233, %v1238
  %1242 = vst [vmem:[#allocation3 + $0x60] sm:$0xff] %v1239
  %1243 = vst.msk [vmem:[#allocation3 + $0x68] sm:$0xf] %vm72, %v1235
  %v1244 = vld [vmem:[#allocation3] sm:$0xff]
  %v1245 = vld [vmem:[#allocation3 + $0x8] sm:$0xf]
  %v1246 = vld [vmem:[#allocation3 + $0xc] sm:$0xff]
  %v1247 = vld [vmem:[#allocation3 + $0x14] sm:$0xf]
  %v1248 = vld [vmem:[#allocation3 + $0x18] sm:$0xff]
  %v1249 = vld [vmem:[#allocation3 + $0x20] sm:$0xf]
  %v1250 = vld [vmem:[#allocation3 + $0x24] sm:$0xff]
  %v1251 = vld [vmem:[#allocation3 + $0x2c] sm:$0xf]
  %v1252 = vld [vmem:[#allocation3 + $0x30] sm:$0xff]
  %v1253 = vld [vmem:[#allocation3 + $0x38] sm:$0xf]
  %v1254 = vld [vmem:[#allocation3 + $0x3c] sm:$0xff]
  %v1255 = vld [vmem:[#allocation3 + $0x44] sm:$0xf]
  %v1256 = vld [vmem:[#allocation3 + $0x48] sm:$0xff]
  %v1257 = vld [vmem:[#allocation3 + $0x50] sm:$0xf]
  %v1258 = vld [vmem:[#allocation3 + $0x54] sm:$0xff]
  %v1259 = vld [vmem:[#allocation3 + $0x5c] sm:$0xf]
  %v1260 = vld [vmem:[#allocation3 + $0x60] sm:$0xff]
  %v1261 = vld [vmem:[#allocation3 + $0x68] sm:$0xf]
  %v1280 = vunpack.c.l.b16 %v1244
  %v1281 = vunpack.c.h.b16 %v1244
  %v1282 = vunpack.c.l.b16 %v1245
  %v1283 = vunpack.c.l.b16 %v1246
  %v1284 = vunpack.c.h.b16 %v1246
  %v1285 = vunpack.c.l.b16 %v1247
  %v1286 = vunpack.c.l.b16 %v1248
  %v1287 = vunpack.c.h.b16 %v1248
  %v1288 = vunpack.c.l.b16 %v1249
  %v1289 = vunpack.c.l.b16 %v1250
  %v1290 = vunpack.c.h.b16 %v1250
  %v1291 = vunpack.c.l.b16 %v1251
  %v1292 = vunpack.c.l.b16 %v1252
  %v1293 = vunpack.c.h.b16 %v1252
  %v1294 = vunpack.c.l.b16 %v1253
  %v1295 = vunpack.c.l.b16 %v1254
  %v1296 = vunpack.c.h.b16 %v1254
  %v1297 = vunpack.c.l.b16 %v1255
  %v1298 = vunpack.c.l.b16 %v1256
  %v1299 = vunpack.c.h.b16 %v1256
  %v1300 = vunpack.c.l.b16 %v1257
  %v1301 = vunpack.c.l.b16 %v1258
  %v1302 = vunpack.c.h.b16 %v1258
  %v1303 = vunpack.c.l.b16 %v1259
  %v1304 = vunpack.c.l.b16 %v1260
  %v1305 = vunpack.c.h.b16 %v1260
  %v1306 = vunpack.c.l.b16 %v1261
  %v1307 = vpack.c.b16 %v1283, %v1280
  %v1308 = vpack.c.b16 %v1284, %v1281
  %v1309 = vpack.c.b16 %v1285, %v1282
  %v1310 = vpack.c.b16 %v1289, %v1286
  %v1311 = vpack.c.b16 %v1290, %v1287
  %v1312 = vpack.c.b16 %v1291, %v1288
  %v1313 = vpack.c.b16 %v1295, %v1292
  %v1314 = vpack.c.b16 %v1296, %v1293
  %v1315 = vpack.c.b16 %v1297, %v1294
  %v1316 = vpack.c.b16 %v1301, %v1298
  %v1317 = vpack.c.b16 %v1302, %v1299
  %v1318 = vpack.c.b16 %v1303, %v1300
  %v1319 = vpack.c.b16 %v1304, %v1304
  %v1320 = vpack.c.b16 %v1305, %v1305
  %v1321 = vpack.c.b16 %v1306, %v1306
  %v1335 = vsel %vm299, %v1319, 0
  %v1338 = vsel %vm299, %v1320, 0
  %v1341 = vsel %vm299, %v1321, 0
  %1343 = vmatpush.bf16.msra.mxu0 0
  %1344 = vmatpush.bf16.msra.mxu0 0
  %1345 = vmatpush.bf16.msra.mxu0 0
  %1346 = vmatpush.bf16.msra.mxu0 %v1335
  %1347 = vmatpush.bf16.msra.mxu0 %v1316
  %1348 = vmatpush.bf16.msra.mxu0 %v1313
  %1349 = vmatpush.bf16.msra.mxu0 %v1310
  %1350 = vmatpush.bf16.msra.mxu0 %v1307
  %1351 = vmatmul.bf16.gmra.mxu0 %v297
  %v1352 = vpop.f32.mrf.mxu0
  %v1353 = vadd.f32 %v221, %v1352
  %v1354 = vpop.f32.mrf.mxu0
  %1355 = vdwg.mxu0
  %1356 = vmatpush.bf16.msra.mxu0 0
  %1357 = vmatpush.bf16.msra.mxu0 0
  %1358 = vmatpush.bf16.msra.mxu0 0
  %1359 = vmatpush.bf16.msra.mxu0 %v1338
  %1360 = vmatpush.bf16.msra.mxu0 %v1317
  %1361 = vmatpush.bf16.msra.mxu0 %v1314
  %1362 = vmatpush.bf16.msra.mxu0 %v1311
  %1363 = vmatpush.bf16.msra.mxu0 %v1308
  %1364 = vmatmul.bf16.gmra.mxu0 %v297
  %v1365 = vpop.f32.mrf.mxu0
  %v1366 = vadd.f32 %v221, %v1365
  %v1367 = vpop.f32.mrf.mxu0
  %1368 = vdwg.mxu0
  %1369 = vmatpush.bf16.msra.mxu0 0
  %1370 = vmatpush.bf16.msra.mxu0 0
  %1371 = vmatpush.bf16.msra.mxu0 0
  %1372 = vmatpush.bf16.msra.mxu0 %v1341
  %1373 = vmatpush.bf16.msra.mxu0 %v1318
  %1374 = vmatpush.bf16.msra.mxu0 %v1315
  %1375 = vmatpush.bf16.msra.mxu0 %v1312
  %1376 = vmatpush.bf16.msra.mxu0 %v1309
  %1377 = vmatmul.bf16.gmra.mxu0 %v297
  %v1378 = vpop.f32.mrf.mxu0
  %v1379 = vadd.f32 %v221, %v1378
  %v1380 = vpop.f32.mrf.mxu0
  %1381 = vdwg.mxu0
  %v1382 = vmul.f32 %v1353, %v349
  %v1383 = vmul.f32 %v1366, %v350
  %v1384 = vmul.f32 %v1379, %v351
  %v1385 = vadd.f32 %v1382, %v1383
  %v1386 = vsel %vm359, %v1384, 0.0
  %v1387 = vadd.f32 %v1385, %v1386
  %1388 = vadd.xlane.f32.xlu0 %v1387
  %v1389 = vpop.xlane.xlu0 %1388
  %v1390 = vmul.f32 %v1382, %v1382
  %v1391 = vmul.f32 %v1383, %v1383
  %v1392 = vmul.f32 %v1384, %v1384
  %v1393 = vadd.f32 %v1390, %v1391
  %v1394 = vsel %vm359, %v1392, 0.0
  %v1395 = vadd.f32 %v1393, %v1394
  %1396 = vadd.xlane.f32.xlu0 %v1395
  %v1397 = vpop.xlane.xlu0 %1396
  %v1398 = vsel %vm372, %v1389, %v1397
  %1399 = vmatpush.msra.mxu0 0.0
  %1400 = vmatpush.msra.mxu0 0.0
  %1401 = vmatpush.msra.mxu0 0.0
  %1402 = vmatpush.msra.mxu0 0.0
  %1403 = vmatpush.msra.mxu0 0.0
  %1404 = vmatpush.msra.mxu0 0.0
  %1405 = vmatpush.msra.mxu0 0.0
  %1406 = vmatpush.msra.mxu0 0.0
  %1407 = vmatpush.msra.mxu0 0.0
  %1408 = vmatpush.msra.mxu0 0.0
  %1409 = vmatpush.msra.mxu0 0.0
  %1410 = vmatpush.msra.mxu0 0.0
  %1411 = vmatpush.msra.mxu0 0.0
  %1412 = vmatpush.msra.mxu0 0.0
  %1413 = vmatpush.msra.mxu0 0.0
  %1414 = vmatpush.msra.mxu0 %v1398
  %1415 = vmatmul.f32.gmra.mxu0 %v376
  %v1416 = vpop.f32.mrf.mxu0
  %v1417 = vadd.f32 0.0, %v1416
  %1418 = vdwg.mxu0
  %v1419 = vmul.f32 %v1417, 0.00390625
  %v1420 = vmul.f32 %v1419, %v1419
  %1422 = vrot.lane.b32.xlu0 %v1420, 1
  %v1423 = vpop.permute.xlu0 %1422
  %v1425 = vsub.f32 %v1419, %v1423
  %v1426 = vmax.f32 %v1425, 0.0
  %1428 = vset.pattern.permute.xlu0 0
  %1429 = vperm.xlu0 %1428, %v1419
  %v1430 = vpop.permute.xlu0 %1429
  %v1432 = vsub.f32 %v1353, %v1430
  %v1433 = vsub.f32 %v1366, %v1430
  %v1434 = vsub.f32 %v1379, %v1430
  %v1435 = vadd.f32 %v1426, 1e-05
  %v1436 = vrsqrt.pop %v1435
  %v1437 = vmul.f32 %v1436, %v1435
  %v1438 = vmul.f32 %v1437, %v1436
  %v1439 = vmul.f32 0.5, %v1438
  %v1440 = vsub.f32 1.5, %v1439
  %v1441 = vmul.f32 %v1436, %v1440
  %vm1442 = vweird.f32 %v1435
  %vm1443 = vweird.f32 %v1436
  %vm1444 = vmor %vm1442, %vm1443
  %v1445 = vsel %vm1444, %v1436, %v1441
  %1447 = vset.pattern.permute.xlu0 1
  %1448 = vperm.xlu0 %1447, %v1445
  %v1449 = vpop.permute.xlu0 %1448
  %v1451 = vmul.f32 %v1432, %v1449
  %v1452 = vmul.f32 %v1433, %v1449
  %v1453 = vmul.f32 %v1434, %v1449
  %v1454 = vmul.f32 %v1451, %v436
  %v1455 = vmul.f32 %v1452, %v436
  %v1456 = vmul.f32 %v1453, %v436
  %v1457 = vadd.f32 %v1454, %v444
  %v1458 = vadd.f32 %v1455, %v444
  %v1459 = vadd.f32 %v1456, %v444
  %v1460 = vmul.f32 %v1457, 0.5
  %v1461 = vmul.f32 %v1458, 0.5
  %v1462 = vmul.f32 %v1459, 0.5
  %v1463 = vmul.f32 %v1457, 0.70710677
  %v1464 = vmul.f32 %v1458, 0.70710677
  %v1465 = vmul.f32 %v1459, 0.70710677
  %v1466 = vmul.f32 %v1463, %v1463
  %v1467 = vmin.f32 16.0, %v1466
  %v1468 = vmul.f32 %v1467, 2.1237322e-06
  %v1469 = vadd.f32 %v1468, 0.00028619796
  %v1470 = vmul.f32 %v1467, %v1469
  %v1471 = vadd.f32 %v1470, 0.0036580483
  %v1472 = vmul.f32 %v1467, %v1471
  %v1473 = vadd.f32 %v1472, 0.05243302
  %v1474 = vmul.f32 %v1467, %v1473
  %v1475 = vadd.f32 %v1474, 0.18741608
  %v1476 = vmul.f32 %v1467, %v1475
  %v1477 = vadd.f32 %v1476, 1.1283791
  %v1478 = vmul.f32 %v1463, %v1477
  %v1479 = vmul.f32 %v1467, 3.8918573e-05
  %v1480 = vadd.f32 %v1479, 0.001143296
  %v1481 = vmul.f32 %v1467, %v1480
  %v1482 = vadd.f32 %v1481, 0.014752088
  %v1483 = vmul.f32 %v1467, %v1482
  %v1484 = vadd.f32 %v1483, 0.112945676
  %v1485 = vmul.f32 %v1467, %v1484
  %v1486 = vadd.f32 %v1485, 0.4994258
  %v1487 = vmul.f32 %v1467, %v1486
  %v1488 = vadd.f32 %v1487, 1.0
  %v1489 = vrcp.pop %v1488
  %v1490 = vmul.f32 %v1488, %v1489
  %v1491 = vsub.f32 1.0, %v1490
  %v1492 = vmul.f32 %v1489, %v1491
  %v1493 = vadd.f32 %v1489, %v1492
  %vm1494 = vweird.f32 %v1488
  %vm1495 = vweird.f32 %v1489
  %vm1496 = vmor %vm1494, %vm1495
  %v1497 = vsel %vm1496, %v1489, %v1493
  %v1498 = vand.u32 2147483647, %v1488
  %vm1499 = vcmp.eq.f32.partialorder %v1498, 8.507059e+37
  %v1500 = vand.u32 %v1488, 2147483648
  %v1501 = vor.u32 1.1754944e-38, %v1500
  %v1502 = vsel %vm1499, %v1501, %v1497
  %v1503 = vmul.f32 %v1478, %v1502
  %v1504 = vmin.f32 %v1503, 1.0
  %v1505 = vmax.f32 %v1504, -1.0
  %v1506 = vmul.f32 %v1464, %v1464
  %v1507 = vmin.f32 16.0, %v1506
  %v1508 = vmul.f32 %v1507, 2.1237322e-06
  %v1509 = vadd.f32 %v1508, 0.00028619796
  %v1510 = vmul.f32 %v1507, %v1509
  %v1511 = vadd.f32 %v1510, 0.0036580483
  %v1512 = vmul.f32 %v1507, %v1511
  %v1513 = vadd.f32 %v1512, 0.05243302
  %v1514 = vmul.f32 %v1507, %v1513
  %v1515 = vadd.f32 %v1514, 0.18741608
  %v1516 = vmul.f32 %v1507, %v1515
  %v1517 = vadd.f32 %v1516, 1.1283791
  %v1518 = vmul.f32 %v1464, %v1517
  %v1519 = vmul.f32 %v1507, 3.8918573e-05
  %v1520 = vadd.f32 %v1519, 0.001143296
  %v1521 = vmul.f32 %v1507, %v1520
  %v1522 = vadd.f32 %v1521, 0.014752088
  %v1523 = vmul.f32 %v1507, %v1522
  %v1524 = vadd.f32 %v1523, 0.112945676
  %v1525 = vmul.f32 %v1507, %v1524
  %v1526 = vadd.f32 %v1525, 0.4994258
  %v1527 = vmul.f32 %v1507, %v1526
  %v1528 = vadd.f32 %v1527, 1.0
  %v1529 = vrcp.pop %v1528
  %v1530 = vmul.f32 %v1528, %v1529
  %v1531 = vsub.f32 1.0, %v1530
  %v1532 = vmul.f32 %v1529, %v1531
  %v1533 = vadd.f32 %v1529, %v1532
  %vm1534 = vweird.f32 %v1528
  %vm1535 = vweird.f32 %v1529
  %vm1536 = vmor %vm1534, %vm1535
  %v1537 = vsel %vm1536, %v1529, %v1533
  %v1538 = vand.u32 2147483647, %v1528
  %vm1539 = vcmp.eq.f32.partialorder %v1538, 8.507059e+37
  %v1540 = vand.u32 %v1528, 2147483648
  %v1541 = vor.u32 1.1754944e-38, %v1540
  %v1542 = vsel %vm1539, %v1541, %v1537
  %v1543 = vmul.f32 %v1518, %v1542
  %v1544 = vmin.f32 %v1543, 1.0
  %v1545 = vmax.f32 %v1544, -1.0
  %v1546 = vmul.f32 %v1465, %v1465
  %v1547 = vmin.f32 16.0, %v1546
  %v1548 = vmul.f32 %v1547, 2.1237322e-06
  %v1549 = vadd.f32 %v1548, 0.00028619796
  %v1550 = vmul.f32 %v1547, %v1549
  %v1551 = vadd.f32 %v1550, 0.0036580483
  %v1552 = vmul.f32 %v1547, %v1551
  %v1553 = vadd.f32 %v1552, 0.05243302
  %v1554 = vmul.f32 %v1547, %v1553
  %v1555 = vadd.f32 %v1554, 0.18741608
  %v1556 = vmul.f32 %v1547, %v1555
  %v1557 = vadd.f32 %v1556, 1.1283791
  %v1558 = vmul.f32 %v1465, %v1557
  %v1559 = vmul.f32 %v1547, 3.8918573e-05
  %v1560 = vadd.f32 %v1559, 0.001143296
  %v1561 = vmul.f32 %v1547, %v1560
  %v1562 = vadd.f32 %v1561, 0.014752088
  %v1563 = vmul.f32 %v1547, %v1562
  %v1564 = vadd.f32 %v1563, 0.112945676
  %v1565 = vmul.f32 %v1547, %v1564
  %v1566 = vadd.f32 %v1565, 0.4994258
  %v1567 = vmul.f32 %v1547, %v1566
  %v1568 = vadd.f32 %v1567, 1.0
  %v1569 = vrcp.pop %v1568
  %v1570 = vmul.f32 %v1568, %v1569
  %v1571 = vsub.f32 1.0, %v1570
  %v1572 = vmul.f32 %v1569, %v1571
  %v1573 = vadd.f32 %v1569, %v1572
  %vm1574 = vweird.f32 %v1568
  %vm1575 = vweird.f32 %v1569
  %vm1576 = vmor %vm1574, %vm1575
  %v1577 = vsel %vm1576, %v1569, %v1573
  %v1578 = vand.u32 2147483647, %v1568
  %vm1579 = vcmp.eq.f32.partialorder %v1578, 8.507059e+37
  %v1580 = vand.u32 %v1568, 2147483648
  %v1581 = vor.u32 1.1754944e-38, %v1580
  %v1582 = vsel %vm1579, %v1581, %v1577
  %v1583 = vmul.f32 %v1558, %v1582
  %v1584 = vmin.f32 %v1583, 1.0
  %v1585 = vmax.f32 %v1584, -1.0
  %v1586 = vadd.f32 %v1505, 1.0
  %v1587 = vadd.f32 %v1545, 1.0
  %v1588 = vadd.f32 %v1585, 1.0
  %v1589 = vmul.f32 %v1460, %v1586
  %v1590 = vmul.f32 %v1461, %v1587
  %v1591 = vmul.f32 %v1462, %v1588
  %v1592 = vmul.f32 %v1589, %v349
  %v1593 = vmul.f32 %v1590, %v350
  %v1594 = vmul.f32 %v1591, %v351
  %v1595 = vpack.c.bf16 %v1593, %v1592
  %v1596 = vpack.c.bf16 %v1594, %v1594
  %1597 = vst [vmem:[#allocation2 + $0x4] sm:$0xff] %v1595
  %1598 = vst.msk [vmem:[#allocation2 + $0xc] sm:$0xf] %vm72, %v1596
  %v1599 = vld [vmem:[#allocation2] sm:$0xff]
  %v1600 = vld [vmem:[#allocation2 + $0x8] sm:$0xff]
  %1603 = vrot.lane.b32.xlu0 %v1599, 21
  %v1604 = vpop.permute.xlu0 %1603
  %1605 = vrot.lane.b32.xlu0 %v1600, 21
  %v1606 = vpop.permute.xlu0 %1605
  %v1607 = vrot.slane %v1604, 4
  %v1608 = vrot.slane %v1606, 4
  %v1609 = vsel %vm64, %v1607, %v1608
  %v1610 = vsel %vm66, %v1604, %v1609
  %v1611 = vsel %vm66, %v1606, %v1608
  %1614 = vst [vmem:[#allocation3] sm:$0xff] %v1610
  %1615 = vst.msk [vmem:[#allocation3 + $0x8] sm:$0xf] %vm72, %v1611
  %v1616 = vld [vmem:[#allocation2] sm:$0xff]
  %v1617 = vld [vmem:[#allocation2 + $0x8] sm:$0xff]
  %1620 = vrot.lane.b32.xlu0 %v1616, 20
  %v1621 = vpop.permute.xlu0 %1620
  %1622 = vrot.lane.b32.xlu0 %v1617, 20
  %v1623 = vpop.permute.xlu0 %1622
  %v1624 = vrot.slane %v1621, 4
  %v1625 = vrot.slane %v1623, 4
  %v1626 = vsel %vm64, %v1624, %v1625
  %v1627 = vsel %vm85, %v1621, %v1626
  %v1628 = vsel %vm85, %v1623, %v1625
  %1631 = vst [vmem:[#allocation3 + $0xc] sm:$0xff] %v1627
  %1632 = vst.msk [vmem:[#allocation3 + $0x14] sm:$0xf] %vm72, %v1628
  %v1633 = vld [vmem:[#allocation2] sm:$0xff]
  %v1634 = vld [vmem:[#allocation2 + $0x8] sm:$0xff]
  %1637 = vrot.lane.b32.xlu0 %v1633, 19
  %v1638 = vpop.permute.xlu0 %1637
  %1639 = vrot.lane.b32.xlu0 %v1634, 19
  %v1640 = vpop.permute.xlu0 %1639
  %v1641 = vrot.slane %v1638, 4
  %v1642 = vrot.slane %v1640, 4
  %v1643 = vsel %vm64, %v1641, %v1642
  %v1644 = vsel %vm103, %v1638, %v1643
  %v1645 = vsel %vm103, %v1640, %v1642
  %1648 = vst [vmem:[#allocation3 + $0x18] sm:$0xff] %v1644
  %1649 = vst.msk [vmem:[#allocation3 + $0x20] sm:$0xf] %vm72, %v1645
  %v1650 = vld [vmem:[#allocation2] sm:$0xff]
  %v1651 = vld [vmem:[#allocation2 + $0x8] sm:$0xff]
  %1654 = vrot.lane.b32.xlu0 %v1650, 1
  %v1655 = vpop.permute.xlu0 %1654
  %1656 = vrot.lane.b32.xlu0 %v1651, 1
  %v1657 = vpop.permute.xlu0 %1656
  %v1658 = vrot.slane %v1655, 4
  %v1659 = vrot.slane %v1657, 4
  %v1660 = vsel %vm64, %v1658, %v1659
  %v1661 = vsel %vm121, %v1655, %v1660
  %v1662 = vsel %vm121, %v1657, %v1659
  %1665 = vst [vmem:[#allocation3 + $0x24] sm:$0xff] %v1661
  %1666 = vst.msk [vmem:[#allocation3 + $0x2c] sm:$0xf] %vm72, %v1662
  %v1667 = vld [vmem:[#allocation2 + $0x4] sm:$0xff]
  %v1668 = vld [vmem:[#allocation2 + $0xc] sm:$0xf]
  %1669 = vst [vmem:[#allocation3 + $0x30] sm:$0xff] %v1667
  %1670 = vst.msk [vmem:[#allocation3 + $0x38] sm:$0xf] %vm72, %v1668
  %v1671 = vld [vmem:[#allocation2 + $0x4] sm:$0xff]
  %v1672 = vld [vmem:[#allocation2 + $0xc] sm:$0xf]
  %1675 = vrot.lane.b32.xlu0 %v1671, 127
  %v1676 = vpop.permute.xlu0 %1675
  %1677 = vrot.lane.b32.xlu0 %v1672, 127
  %v1678 = vpop.permute.xlu0 %1677
  %v1679 = vrot.slane %v1676, 4
  %v1680 = vrot.slane %v1678, 4
  %v1681 = vsel %vm64, %v1679, %v1680
  %v1682 = vsel %vm143, %v1676, %v1681
  %1685 = vst [vmem:[#allocation3 + $0x3c] sm:$0xff] %v1682
  %1686 = vst.msk [vmem:[#allocation3 + $0x44] sm:$0xf] %vm72, %v1678
  %v1687 = vld [vmem:[#allocation2 + $0x4] sm:$0xff]
  %v1688 = vld [vmem:[#allocation2 + $0xc] sm:$0xf]
  %1691 = vrot.lane.b32.xlu0 %v1687, 109
  %v1692 = vpop.permute.xlu0 %1691
  %1693 = vrot.lane.b32.xlu0 %v1688, 109
  %v1694 = vpop.permute.xlu0 %1693
  %v1695 = vrot.slane %v1692, 4
  %v1696 = vrot.slane %v1694, 4
  %v1697 = vsel %vm64, %v1695, %v1696
  %v1698 = vsel %vm160, %v1692, %v1697
  %1701 = vst [vmem:[#allocation3 + $0x48] sm:$0xff] %v1698
  %1702 = vst.msk [vmem:[#allocation3 + $0x50] sm:$0xf] %vm72, %v1694
  %v1703 = vld [vmem:[#allocation2 + $0x4] sm:$0xff]
  %v1704 = vld [vmem:[#allocation2 + $0xc] sm:$0xf]
  %1707 = vrot.lane.b32.xlu0 %v1703, 108
  %v1708 = vpop.permute.xlu0 %1707
  %1709 = vrot.lane.b32.xlu0 %v1704, 108
  %v1710 = vpop.permute.xlu0 %1709
  %v1711 = vrot.slane %v1708, 4
  %v1712 = vrot.slane %v1710, 4
  %v1713 = vsel %vm64, %v1711, %v1712
  %v1714 = vsel %vm177, %v1708, %v1713
  %1717 = vst [vmem:[#allocation3 + $0x54] sm:$0xff] %v1714
  %1718 = vst.msk [vmem:[#allocation3 + $0x5c] sm:$0xf] %vm72, %v1710
  %v1719 = vld [vmem:[#allocation2 + $0x4] sm:$0xff]
  %v1720 = vld [vmem:[#allocation2 + $0xc] sm:$0xf]
  %1723 = vrot.lane.b32.xlu0 %v1719, 107
  %v1724 = vpop.permute.xlu0 %1723
  %1725 = vrot.lane.b32.xlu0 %v1720, 107
  %v1726 = vpop.permute.xlu0 %1725
  %v1727 = vrot.slane %v1724, 4
  %v1728 = vrot.slane %v1726, 4
  %v1729 = vsel %vm64, %v1727, %v1728
  %v1730 = vsel %vm194, %v1724, %v1729
  %1733 = vst [vmem:[#allocation3 + $0x60] sm:$0xff] %v1730
  %1734 = vst.msk [vmem:[#allocation3 + $0x68] sm:$0xf] %vm72, %v1726
  %v1735 = vld [vmem:[#allocation3] sm:$0xff]
  %v1736 = vld [vmem:[#allocation3 + $0x8] sm:$0xf]
  %v1737 = vld [vmem:[#allocation3 + $0xc] sm:$0xff]
  %v1738 = vld [vmem:[#allocation3 + $0x14] sm:$0xf]
  %v1739 = vld [vmem:[#allocation3 + $0x18] sm:$0xff]
  %v1740 = vld [vmem:[#allocation3 + $0x20] sm:$0xf]
  %v1741 = vld [vmem:[#allocation3 + $0x24] sm:$0xff]
  %v1742 = vld [vmem:[#allocation3 + $0x2c] sm:$0xf]
  %v1743 = vld [vmem:[#allocation3 + $0x30] sm:$0xff]
  %v1744 = vld [vmem:[#allocation3 + $0x38] sm:$0xf]
  %v1745 = vld [vmem:[#allocation3 + $0x3c] sm:$0xff]
  %v1746 = vld [vmem:[#allocation3 + $0x44] sm:$0xf]
  %v1747 = vld [vmem:[#allocation3 + $0x48] sm:$0xff]
  %v1748 = vld [vmem:[#allocation3 + $0x50] sm:$0xf]
  %v1749 = vld [vmem:[#allocation3 + $0x54] sm:$0xff]
  %v1750 = vld [vmem:[#allocation3 + $0x5c] sm:$0xf]
  %v1751 = vld [vmem:[#allocation3 + $0x60] sm:$0xff]
  %v1752 = vld [vmem:[#allocation3 + $0x68] sm:$0xf]
  %v1771 = vunpack.c.l.b16 %v1735
  %v1772 = vunpack.c.h.b16 %v1735
  %v1773 = vunpack.c.l.b16 %v1736
  %v1774 = vunpack.c.l.b16 %v1737
  %v1775 = vunpack.c.h.b16 %v1737
  %v1776 = vunpack.c.l.b16 %v1738
  %v1777 = vunpack.c.l.b16 %v1739
  %v1778 = vunpack.c.h.b16 %v1739
  %v1779 = vunpack.c.l.b16 %v1740
  %v1780 = vunpack.c.l.b16 %v1741
  %v1781 = vunpack.c.h.b16 %v1741
  %v1782 = vunpack.c.l.b16 %v1742
  %v1783 = vunpack.c.l.b16 %v1743
  %v1784 = vunpack.c.h.b16 %v1743
  %v1785 = vunpack.c.l.b16 %v1744
  %v1786 = vunpack.c.l.b16 %v1745
  %v1787 = vunpack.c.h.b16 %v1745
  %v1788 = vunpack.c.l.b16 %v1746
  %v1789 = vunpack.c.l.b16 %v1747
  %v1790 = vunpack.c.h.b16 %v1747
  %v1791 = vunpack.c.l.b16 %v1748
  %v1792 = vunpack.c.l.b16 %v1749
  %v1793 = vunpack.c.h.b16 %v1749
  %v1794 = vunpack.c.l.b16 %v1750
  %v1795 = vunpack.c.l.b16 %v1751
  %v1796 = vunpack.c.h.b16 %v1751
  %v1797 = vunpack.c.l.b16 %v1752
  %v1798 = vpack.c.b16 %v1774, %v1771
  %v1799 = vpack.c.b16 %v1775, %v1772
  %v1800 = vpack.c.b16 %v1776, %v1773
  %v1801 = vpack.c.b16 %v1780, %v1777
  %v1802 = vpack.c.b16 %v1781, %v1778
  %v1803 = vpack.c.b16 %v1782, %v1779
  %v1804 = vpack.c.b16 %v1786, %v1783
  %v1805 = vpack.c.b16 %v1787, %v1784
  %v1806 = vpack.c.b16 %v1788, %v1785
  %v1807 = vpack.c.b16 %v1792, %v1789
  %v1808 = vpack.c.b16 %v1793, %v1790
  %v1809 = vpack.c.b16 %v1794, %v1791
  %v1810 = vpack.c.b16 %v1795, %v1795
  %v1811 = vpack.c.b16 %v1796, %v1796
  %v1812 = vpack.c.b16 %v1797, %v1797
  %v1826 = vsel %vm299, %v1810, 0
  %v1829 = vsel %vm299, %v1811, 0
  %v1832 = vsel %vm299, %v1812, 0
  %1834 = vmatpush.bf16.msra.mxu0 0
  %1835 = vmatpush.bf16.msra.mxu0 0
  %1836 = vmatpush.bf16.msra.mxu0 0
  %1837 = vmatpush.bf16.msra.mxu0 %v1826
  %1838 = vmatpush.bf16.msra.mxu0 %v1807
  %1839 = vmatpush.bf16.msra.mxu0 %v1804
  %1840 = vmatpush.bf16.msra.mxu0 %v1801
  %1841 = vmatpush.bf16.msra.mxu0 %v1798
  %1842 = vmatmul.bf16.gmra.mxu0 %v820
  %v1843 = vpop.f32.mrf.mxu0
  %v1844 = vadd.f32 %v745, %v1843
  %v1845 = vpop.f32.mrf.mxu0
  %1846 = vdwg.mxu0
  %1847 = vmatpush.bf16.msra.mxu0 0
  %1848 = vmatpush.bf16.msra.mxu0 0
  %1849 = vmatpush.bf16.msra.mxu0 0
  %1850 = vmatpush.bf16.msra.mxu0 %v1829
  %1851 = vmatpush.bf16.msra.mxu0 %v1808
  %1852 = vmatpush.bf16.msra.mxu0 %v1805
  %1853 = vmatpush.bf16.msra.mxu0 %v1802
  %1854 = vmatpush.bf16.msra.mxu0 %v1799
  %1855 = vmatmul.bf16.gmra.mxu0 %v820
  %v1856 = vpop.f32.mrf.mxu0
  %v1857 = vadd.f32 %v745, %v1856
  %v1858 = vpop.f32.mrf.mxu0
  %1859 = vdwg.mxu0
  %1860 = vmatpush.bf16.msra.mxu0 0
  %1861 = vmatpush.bf16.msra.mxu0 0
  %1862 = vmatpush.bf16.msra.mxu0 0
  %1863 = vmatpush.bf16.msra.mxu0 %v1832
  %1864 = vmatpush.bf16.msra.mxu0 %v1809
  %1865 = vmatpush.bf16.msra.mxu0 %v1806
  %1866 = vmatpush.bf16.msra.mxu0 %v1803
  %1867 = vmatpush.bf16.msra.mxu0 %v1800
  %1868 = vmatmul.bf16.gmra.mxu0 %v820
  %v1869 = vpop.f32.mrf.mxu0
  %v1870 = vadd.f32 %v745, %v1869
  %v1871 = vpop.f32.mrf.mxu0
  %1872 = vdwg.mxu0
  %v1873 = vmul.f32 %v1844, %v349
  %v1874 = vmul.f32 %v1857, %v350
  %v1875 = vmul.f32 %v1870, %v351
  %v1876 = vadd.f32 %v1873, %v1874
  %v1877 = vsel %vm359, %v1875, 0.0
  %v1878 = vadd.f32 %v1876, %v1877
  %1879 = vadd.xlane.f32.xlu0 %v1878
  %v1880 = vpop.xlane.xlu0 %1879
  %v1881 = vmul.f32 %v1873, %v1873
  %v1882 = vmul.f32 %v1874, %v1874
  %v1883 = vmul.f32 %v1875, %v1875
  %v1884 = vadd.f32 %v1881, %v1882
  %v1885 = vsel %vm359, %v1883, 0.0
  %v1886 = vadd.f32 %v1884, %v1885
  %1887 = vadd.xlane.f32.xlu0 %v1886
  %v1888 = vpop.xlane.xlu0 %1887
  %v1889 = vsel %vm372, %v1880, %v1888
  %1890 = vmatpush.msra.mxu0 0.0
  %1891 = vmatpush.msra.mxu0 0.0
  %1892 = vmatpush.msra.mxu0 0.0
  %1893 = vmatpush.msra.mxu0 0.0
  %1894 = vmatpush.msra.mxu0 0.0
  %1895 = vmatpush.msra.mxu0 0.0
  %1896 = vmatpush.msra.mxu0 0.0
  %1897 = vmatpush.msra.mxu0 0.0
  %1898 = vmatpush.msra.mxu0 0.0
  %1899 = vmatpush.msra.mxu0 0.0
  %1900 = vmatpush.msra.mxu0 0.0
  %1901 = vmatpush.msra.mxu0 0.0
  %1902 = vmatpush.msra.mxu0 0.0
  %1903 = vmatpush.msra.mxu0 0.0
  %1904 = vmatpush.msra.mxu0 0.0
  %1905 = vmatpush.msra.mxu0 %v1889
  %1906 = vmatmul.f32.gmra.mxu0 %v376
  %v1907 = vpop.f32.mrf.mxu0
  %v1908 = vadd.f32 0.0, %v1907
  %1909 = vdwg.mxu0
  %v1910 = vmul.f32 %v1908, 0.00390625
  %v1911 = vmul.f32 %v1910, %v1910
  %1913 = vrot.lane.b32.xlu0 %v1911, 1
  %v1914 = vpop.permute.xlu0 %1913
  %v1916 = vsub.f32 %v1910, %v1914
  %v1917 = vmax.f32 %v1916, 0.0
  %1919 = vset.pattern.permute.xlu0 0
  %1920 = vperm.xlu0 %1919, %v1910
  %v1921 = vpop.permute.xlu0 %1920
  %v1923 = vsub.f32 %v1844, %v1921
  %v1924 = vsub.f32 %v1857, %v1921
  %v1925 = vsub.f32 %v1870, %v1921
  %v1926 = vadd.f32 %v1917, 1e-05
  %v1927 = vrsqrt.pop %v1926
  %v1928 = vmul.f32 %v1927, %v1926
  %v1929 = vmul.f32 %v1928, %v1927
  %v1930 = vmul.f32 0.5, %v1929
  %v1931 = vsub.f32 1.5, %v1930
  %v1932 = vmul.f32 %v1927, %v1931
  %vm1933 = vweird.f32 %v1926
  %vm1934 = vweird.f32 %v1927
  %vm1935 = vmor %vm1933, %vm1934
  %v1936 = vsel %vm1935, %v1927, %v1932
  %1938 = vset.pattern.permute.xlu0 1
  %1939 = vperm.xlu0 %1938, %v1936
  %v1940 = vpop.permute.xlu0 %1939
  %v1942 = vmul.f32 %v1923, %v1940
  %v1943 = vmul.f32 %v1924, %v1940
  %v1944 = vmul.f32 %v1925, %v1940
  %v1945 = vmul.f32 %v1942, %v945
  %v1946 = vmul.f32 %v1943, %v945
  %v1947 = vmul.f32 %v1944, %v945
  %v1948 = vadd.f32 %v1945, %v953
  %v1949 = vadd.f32 %v1946, %v953
  %v1950 = vadd.f32 %v1947, %v953
  %v1951 = vmul.f32 %v1948, 0.5
  %v1952 = vmul.f32 %v1949, 0.5
  %v1953 = vmul.f32 %v1950, 0.5
  %v1954 = vmul.f32 %v1948, 0.70710677
  %v1955 = vmul.f32 %v1949, 0.70710677
  %v1956 = vmul.f32 %v1950, 0.70710677
  %v1957 = vmul.f32 %v1954, %v1954
  %v1958 = vmin.f32 16.0, %v1957
  %v1959 = vmul.f32 %v1958, 2.1237322e-06
  %v1960 = vadd.f32 %v1959, 0.00028619796
  %v1961 = vmul.f32 %v1958, %v1960
  %v1962 = vadd.f32 %v1961, 0.0036580483
  %v1963 = vmul.f32 %v1958, %v1962
  %v1964 = vadd.f32 %v1963, 0.05243302
  %v1965 = vmul.f32 %v1958, %v1964
  %v1966 = vadd.f32 %v1965, 0.18741608
  %v1967 = vmul.f32 %v1958, %v1966
  %v1968 = vadd.f32 %v1967, 1.1283791
  %v1969 = vmul.f32 %v1954, %v1968
  %v1970 = vmul.f32 %v1958, 3.8918573e-05
  %v1971 = vadd.f32 %v1970, 0.001143296
  %v1972 = vmul.f32 %v1958, %v1971
  %v1973 = vadd.f32 %v1972, 0.014752088
  %v1974 = vmul.f32 %v1958, %v1973
  %v1975 = vadd.f32 %v1974, 0.112945676
  %v1976 = vmul.f32 %v1958, %v1975
  %v1977 = vadd.f32 %v1976, 0.4994258
  %v1978 = vmul.f32 %v1958, %v1977
  %v1979 = vadd.f32 %v1978, 1.0
  %v1980 = vrcp.pop %v1979
  %v1981 = vmul.f32 %v1979, %v1980
  %v1982 = vsub.f32 1.0, %v1981
  %v1983 = vmul.f32 %v1980, %v1982
  %v1984 = vadd.f32 %v1980, %v1983
  %vm1985 = vweird.f32 %v1979
  %vm1986 = vweird.f32 %v1980
  %vm1987 = vmor %vm1985, %vm1986
  %v1988 = vsel %vm1987, %v1980, %v1984
  %v1989 = vand.u32 2147483647, %v1979
  %vm1990 = vcmp.eq.f32.partialorder %v1989, 8.507059e+37
  %v1991 = vand.u32 %v1979, 2147483648
  %v1992 = vor.u32 1.1754944e-38, %v1991
  %v1993 = vsel %vm1990, %v1992, %v1988
  %v1994 = vmul.f32 %v1969, %v1993
  %v1995 = vmin.f32 %v1994, 1.0
  %v1996 = vmax.f32 %v1995, -1.0
  %v1997 = vmul.f32 %v1955, %v1955
  %v1998 = vmin.f32 16.0, %v1997
  %v1999 = vmul.f32 %v1998, 2.1237322e-06
  %v2000 = vadd.f32 %v1999, 0.00028619796
  %v2001 = vmul.f32 %v1998, %v2000
  %v2002 = vadd.f32 %v2001, 0.0036580483
  %v2003 = vmul.f32 %v1998, %v2002
  %v2004 = vadd.f32 %v2003, 0.05243302
  %v2005 = vmul.f32 %v1998, %v2004
  %v2006 = vadd.f32 %v2005, 0.18741608
  %v2007 = vmul.f32 %v1998, %v2006
  %v2008 = vadd.f32 %v2007, 1.1283791
  %v2009 = vmul.f32 %v1955, %v2008
  %v2010 = vmul.f32 %v1998, 3.8918573e-05
  %v2011 = vadd.f32 %v2010, 0.001143296
  %v2012 = vmul.f32 %v1998, %v2011
  %v2013 = vadd.f32 %v2012, 0.014752088
  %v2014 = vmul.f32 %v1998, %v2013
  %v2015 = vadd.f32 %v2014, 0.112945676
  %v2016 = vmul.f32 %v1998, %v2015
  %v2017 = vadd.f32 %v2016, 0.4994258
  %v2018 = vmul.f32 %v1998, %v2017
  %v2019 = vadd.f32 %v2018, 1.0
  %v2020 = vrcp.pop %v2019
  %v2021 = vmul.f32 %v2019, %v2020
  %v2022 = vsub.f32 1.0, %v2021
  %v2023 = vmul.f32 %v2020, %v2022
  %v2024 = vadd.f32 %v2020, %v2023
  %vm2025 = vweird.f32 %v2019
  %vm2026 = vweird.f32 %v2020
  %vm2027 = vmor %vm2025, %vm2026
  %v2028 = vsel %vm2027, %v2020, %v2024
  %v2029 = vand.u32 2147483647, %v2019
  %vm2030 = vcmp.eq.f32.partialorder %v2029, 8.507059e+37
  %v2031 = vand.u32 %v2019, 2147483648
  %v2032 = vor.u32 1.1754944e-38, %v2031
  %v2033 = vsel %vm2030, %v2032, %v2028
  %v2034 = vmul.f32 %v2009, %v2033
  %v2035 = vmin.f32 %v2034, 1.0
  %v2036 = vmax.f32 %v2035, -1.0
  %v2037 = vmul.f32 %v1956, %v1956
  %v2038 = vmin.f32 16.0, %v2037
  %v2039 = vmul.f32 %v2038, 2.1237322e-06
  %v2040 = vadd.f32 %v2039, 0.00028619796
  %v2041 = vmul.f32 %v2038, %v2040
  %v2042 = vadd.f32 %v2041, 0.0036580483
  %v2043 = vmul.f32 %v2038, %v2042
  %v2044 = vadd.f32 %v2043, 0.05243302
  %v2045 = vmul.f32 %v2038, %v2044
  %v2046 = vadd.f32 %v2045, 0.18741608
  %v2047 = vmul.f32 %v2038, %v2046
  %v2048 = vadd.f32 %v2047, 1.1283791
  %v2049 = vmul.f32 %v1956, %v2048
  %v2050 = vmul.f32 %v2038, 3.8918573e-05
  %v2051 = vadd.f32 %v2050, 0.001143296
  %v2052 = vmul.f32 %v2038, %v2051
  %v2053 = vadd.f32 %v2052, 0.014752088
  %v2054 = vmul.f32 %v2038, %v2053
  %v2055 = vadd.f32 %v2054, 0.112945676
  %v2056 = vmul.f32 %v2038, %v2055
  %v2057 = vadd.f32 %v2056, 0.4994258
  %v2058 = vmul.f32 %v2038, %v2057
  %v2059 = vadd.f32 %v2058, 1.0
  %v2060 = vrcp.pop %v2059
  %v2061 = vmul.f32 %v2059, %v2060
  %v2062 = vsub.f32 1.0, %v2061
  %v2063 = vmul.f32 %v2060, %v2062
  %v2064 = vadd.f32 %v2060, %v2063
  %vm2065 = vweird.f32 %v2059
  %vm2066 = vweird.f32 %v2060
  %vm2067 = vmor %vm2065, %vm2066
  %v2068 = vsel %vm2067, %v2060, %v2064
  %v2069 = vand.u32 2147483647, %v2059
  %vm2070 = vcmp.eq.f32.partialorder %v2069, 8.507059e+37
  %v2071 = vand.u32 %v2059, 2147483648
  %v2072 = vor.u32 1.1754944e-38, %v2071
  %v2073 = vsel %vm2070, %v2072, %v2068
  %v2074 = vmul.f32 %v2049, %v2073
  %v2075 = vmin.f32 %v2074, 1.0
  %v2076 = vmax.f32 %v2075, -1.0
  %v2077 = vadd.f32 %v1996, 1.0
  %v2078 = vadd.f32 %v2036, 1.0
  %v2079 = vadd.f32 %v2076, 1.0
  %v2080 = vmul.f32 %v1951, %v2077
  %v2081 = vmul.f32 %v1952, %v2078
  %v2082 = vmul.f32 %v1953, %v2079
  %v2083 = vld [vmem:[%s1107 + $0x4] sm:$0xff]
  %v2084 = vld [vmem:[%s1107 + $0xc] sm:$0xf]
  %v2085 = vunpack.c.l.bf16 %v2083
  %v2086 = vunpack.c.h.bf16 %v2083
  %v2087 = vunpack.c.l.bf16 %v2084
  %v2088 = vadd.f32 %v2080, %v2085
  %v2089 = vadd.f32 %v2081, %v2086
  %v2090 = vadd.f32 %v2082, %v2087
  %v2091 = vmul.f32 %v2088, %v349
  %v2092 = vmul.f32 %v2089, %v350
  %v2093 = vmul.f32 %v2090, %v351
  %s2094 = scalar_lea.vmem %s11, 20
  %2095 = vst [vmem:[%s2094] sm:$0xf] 0
  %v2096 = vpack.c.bf16 %v2092, %v2091
  %v2097 = vpack.c.bf16 %v2093, %v2093
  %2098 = vst [vmem:[%s2094 + $0x4] sm:$0xff] %v2096
  %2099 = vst.msk [vmem:[%s2094 + $0xc] sm:$0xf] %vm72, %v2097
  %2100 = vst.msk [vmem:[%s2094 + $0xc] sm:$0xff] %vm52, 0
  // Predicated region
  $region46: #{_lambda_.5} parent=0 // pred_check
    _
  $region47: #{_lambda_.5} parent=0 // pred_check_branch
    %2102 = sbr.rel (0) target = $region49
  $region48: #{_lambda_.5} parent=0 // pred_region
    _
  $region49: #{_lambda_.5} parent=0 // pred_fallthru
    _
  // Predicated region
  $region50: #{_lambda_.5} parent=0 // pred_check
    _
  $region51: #{_lambda_.5} parent=0 // pred_check_branch
    %2104 = sbr.rel (0) target = $region53
  $region52: #{_lambda_.5} parent=0 // pred_region
    _
  $region53: #{_lambda_.5} parent=0 // pred_fallthru
    _

// kernel: _lambda_.7
$region0: #{_lambda_.7}
  #allocation0 [shape = 'u32[]', space=smem, size = 0x4, offset = 0x4, fixed_abs, tag = 'smem constant byte address 0x4 - core index']
  #allocation1 [shape = 'u32[72,128]{1,0:T(1,128)}', space=vmem, size = 0x9000, scoped, tag = 'internal scratch']
  #allocation2 [shape = 'bf16[8,384]{1,0:T(8,128)(2,1)}', space=vmem, size = 0x1800, scoped, tag = 'scratch operand']
  #allocation3 [shape = 'bf16[72,96]{1,0:T(8,128)(2,1)}', space=vmem, size = 0x4800, scoped, tag = 'scratch operand']
  %s0 = inlined_call_operand.vmem [shape: bf16[2,8,384], index: 0, kind: input, shape index: {}]
  %s1 = inlined_call_operand.vmem [shape: bf16[8,72], index: 1, kind: input, shape index: {}]
  %s2 = inlined_call_operand.vmem [shape: f32[8,1], index: 2, kind: input, shape index: {}]
  %s3 = inlined_call_operand.vmem [shape: f32[8,1], index: 3, kind: input, shape index: {}, may-alias: {3,7}]
  %s4 = inlined_call_operand.vmem [shape: f32[8,1], index: 4, kind: input, shape index: {}, may-alias: {4,8}]
  %s5 = inlined_call_operand.vmem [shape: bf16[8,72], index: 5, kind: input, shape index: {}]
  %s6 = inlined_call_operand.vmem [shape: f32[8,1], index: 6, kind: input, shape index: {}]
  %s7 = inlined_call_operand.vmem [shape: f32[8,1], index: 7, kind: input, shape index: {}, may-alias: {3,7}]
  %s8 = inlined_call_operand.vmem [shape: f32[8,1], index: 8, kind: input, shape index: {}, may-alias: {4,8}]
  %s9 = inlined_call_operand.vmem [shape: f32[8,8], index: 9, kind: input, shape index: {}]
  %s10 = inlined_call_operand.vmem [shape: f32[1,96], index: 10, kind: input, shape index: {}]
  %s11 = inlined_call_operand.vmem [shape: bf16[8,8], index: 11, kind: input, shape index: {}]
  %s12 = inlined_call_operand.vmem [shape: f32[8,1], index: 12, kind: input, shape index: {}]
  %s13 = inlined_call_operand.vmem [shape: f32[2,8,96], index: 13, kind: output, shape index: {}]
  %s14 = sld [smem:[#allocation0]]
  $region62: #{_lambda_.7} parent=0
    _
  %s16 = ssub.s32 1, %s14
  %s17 = scalar_select 0, %s16, %s14
  // Predicated region
  $region2: #{_lambda_.7} parent=0 // pred_check
    _
  $region3: #{_lambda_.7} parent=0 // pred_check_branch
    %19 = sbr.rel (0) target = $region5
  $region4: #{_lambda_.7} parent=0 // pred_region
    _
  $region5: #{_lambda_.7} parent=0 // pred_fallthru
    _
  // Predicated region
  $region6: #{_lambda_.7} parent=0 // pred_check
    _
  $region7: #{_lambda_.7} parent=0 // pred_check_branch
    %21 = sbr.rel (0) target = $region9
  $region8: #{_lambda_.7} parent=0 // pred_region
    _
  $region9: #{_lambda_.7} parent=0 // pred_fallthru
    _
  // Predicated region
  $region10: #{_lambda_.7} parent=0 // pred_check
    _
  $region11: #{_lambda_.7} parent=0 // pred_check_branch
    %23 = sbr.rel (0) target = $region13
  $region12: #{_lambda_.7} parent=0 // pred_region
    _
  $region13: #{_lambda_.7} parent=0 // pred_fallthru
    _
  // Predicated region
  $region14: #{_lambda_.7} parent=0 // pred_check
    _
  $region15: #{_lambda_.7} parent=0 // pred_check_branch
    %25 = sbr.rel (0) target = $region17
  $region16: #{_lambda_.7} parent=0 // pred_region
    _
  $region17: #{_lambda_.7} parent=0 // pred_fallthru
    _
  // Predicated region
  $region18: #{_lambda_.7} parent=0 // pred_check
    _
  $region19: #{_lambda_.7} parent=0 // pred_check_branch
    %27 = sbr.rel (0) target = $region21
  $region20: #{_lambda_.7} parent=0 // pred_region
    _
  $region21: #{_lambda_.7} parent=0 // pred_fallthru
    _
  // Predicated region
  $region22: #{_lambda_.7} parent=0 // pred_check
    _
  $region23: #{_lambda_.7} parent=0 // pred_check_branch
    %29 = sbr.rel (0) target = $region25
  $region24: #{_lambda_.7} parent=0 // pred_region
    _
  $region25: #{_lambda_.7} parent=0 // pred_fallthru
    _
  // Predicated region
  $region26: #{_lambda_.7} parent=0 // pred_check
    _
  $region27: #{_lambda_.7} parent=0 // pred_check_branch
    %31 = sbr.rel (0) target = $region29
  $region28: #{_lambda_.7} parent=0 // pred_region
    _
  $region29: #{_lambda_.7} parent=0 // pred_fallthru
    _
  // Predicated region
  $region30: #{_lambda_.7} parent=0 // pred_check
    _
  $region31: #{_lambda_.7} parent=0 // pred_check_branch
    %33 = sbr.rel (0) target = $region33
  $region32: #{_lambda_.7} parent=0 // pred_region
    _
  $region33: #{_lambda_.7} parent=0 // pred_fallthru
    _
  // Predicated region
  $region34: #{_lambda_.7} parent=0 // pred_check
    _
  $region35: #{_lambda_.7} parent=0 // pred_check_branch
    %35 = sbr.rel (0) target = $region37
  $region36: #{_lambda_.7} parent=0 // pred_region
    _
  $region37: #{_lambda_.7} parent=0 // pred_fallthru
    _
  // Predicated region
  $region38: #{_lambda_.7} parent=0 // pred_check
    _
  $region39: #{_lambda_.7} parent=0 // pred_check_branch
    %37 = sbr.rel (0) target = $region41
  $region40: #{_lambda_.7} parent=0 // pred_region
    _
  $region41: #{_lambda_.7} parent=0 // pred_fallthru
    _
  // Predicated region
  $region42: #{_lambda_.7} parent=0 // pred_check
    _
  $region43: #{_lambda_.7} parent=0 // pred_check_branch
    %39 = sbr.rel (0) target = $region45
  $region44: #{_lambda_.7} parent=0 // pred_region
    _
  $region45: #{_lambda_.7} parent=0 // pred_fallthru
    _
  // Predicated region
  $region46: #{_lambda_.7} parent=0 // pred_check
    _
  $region47: #{_lambda_.7} parent=0 // pred_check_branch
    %41 = sbr.rel (0) target = $region49
  $region48: #{_lambda_.7} parent=0 // pred_region
    _
  $region49: #{_lambda_.7} parent=0 // pred_fallthru
    _
  // Predicated region
  $region50: #{_lambda_.7} parent=0 // pred_check
    _
  $region51: #{_lambda_.7} parent=0 // pred_check_branch
    %43 = sbr.rel (0) target = $region53
  $region52: #{_lambda_.7} parent=0 // pred_region
    _
  $region53: #{_lambda_.7} parent=0 // pred_fallthru
    _
  %v45 = vld [vmem:[%s1] sm:$0xf]
  %v46 = vld [vmem:[%s2] sm:$0xff]
  %v47 = vld [vmem:[%s3] sm:$0xff]
  %v48 = vld [vmem:[%s4] sm:$0xff]
  %v49 = vld [vmem:[%s5] sm:$0xf]
  %v50 = vld [vmem:[%s6] sm:$0xff]
  %v51 = vld [vmem:[%s7] sm:$0xff]
  %v52 = vld [vmem:[%s8] sm:$0xff]
  %v53 = vld [vmem:[%s9] sm:$0xff]
  %v54 = vld [vmem:[%s10] sm:$0x1]
  %v55 = vld [vmem:[%s11] sm:$0xf]
  %v56 = vld [vmem:[%s12] sm:$0xff]
  %57 = vst [vmem:[#allocation2] sm:$0xf] 0
  %vm58 = vcmask 1044224
  %vm59 = vcmask 1047556
  %vm60 = vmor %vm59, %vm58
  %61 = vst.msk [vmem:[#allocation2 + $0x4] sm:$0xff] %vm60, 0
  %v62 = vld [vmem:[%s0] sm:$0xff]
  %64 = vrot.lane.b32.xlu0 %v62, 13
  %v65 = vpop.permute.xlu0 %64
  %v66 = vrot.slane %v65, 4
  %vm67 = vcmask 105472
  %v68 = vsel %vm67, %v65, %v66
  %vm70 = vcmask 781312
  %71 = vst.msk [vmem:[#allocation3] sm:$0xf] %vm70, %v68
  %v72 = vld [vmem:[%s0] sm:$0xff]
  %74 = vrot.lane.b32.xlu0 %v72, 12
  %v75 = vpop.permute.xlu0 %74
  %v76 = vrot.slane %v75, 4
  %vm77 = vcmask 97280
  %v78 = vsel %vm77, %v75, %v76
  %80 = vst.msk [vmem:[#allocation3 + $0x4] sm:$0xf] %vm70, %v78
  %v81 = vld [vmem:[%s0] sm:$0xff]
  %83 = vrot.lane.b32.xlu0 %v81, 11
  %v84 = vpop.permute.xlu0 %83
  %v85 = vrot.slane %v84, 4
  %vm86 = vcmask 89088
  %v87 = vsel %vm86, %v84, %v85
  %89 = vst.msk [vmem:[#allocation3 + $0x8] sm:$0xf] %vm70, %v87
  %v90 = vld [vmem:[%s0] sm:$0xff]
  %92 = vrot.lane.b32.xlu0 %v90, 1
  %v93 = vpop.permute.xlu0 %92
  %v94 = vrot.slane %v93, 4
  %vm95 = vcmask 7168
  %v96 = vsel %vm95, %v93, %v94
  %98 = vst.msk [vmem:[#allocation3 + $0xc] sm:$0xf] %vm70, %v96
  %v99 = vld [vmem:[%s0 + $0x4] sm:$0xf]
  %100 = vst.msk [vmem:[#allocation3 + $0x10] sm:$0xf] %vm70, %v99
  %v101 = vld [vmem:[%s0 + $0x4] sm:$0xf]
  %103 = vrot.lane.b32.xlu0 %v101, 127
  %v104 = vpop.permute.xlu0 %103
  %106 = vst.msk [vmem:[#allocation3 + $0x14] sm:$0xf] %vm70, %v104
  %v107 = vld [vmem:[%s0 + $0x4] sm:$0xf]
  %109 = vrot.lane.b32.xlu0 %v107, 117
  %v110 = vpop.permute.xlu0 %109
  %112 = vst.msk [vmem:[#allocation3 + $0x18] sm:$0xf] %vm70, %v110
  %v113 = vld [vmem:[%s0 + $0x4] sm:$0xf]
  %115 = vrot.lane.b32.xlu0 %v113, 116
  %v116 = vpop.permute.xlu0 %115
  %118 = vst.msk [vmem:[#allocation3 + $0x1c] sm:$0xf] %vm70, %v116
  %v119 = vld [vmem:[%s0 + $0x4] sm:$0xf]
  %121 = vrot.lane.b32.xlu0 %v119, 115
  %v122 = vpop.permute.xlu0 %121
  %124 = vst.msk [vmem:[#allocation3 + $0x20] sm:$0xf] %vm70, %v122
  %v125 = vld [vmem:[#allocation3] sm:$0xf]
  %v126 = vld [vmem:[#allocation3 + $0x4] sm:$0xf]
  %v127 = vld [vmem:[#allocation3 + $0x8] sm:$0xf]
  %v128 = vld [vmem:[#allocation3 + $0xc] sm:$0xf]
  %v129 = vld [vmem:[#allocation3 + $0x10] sm:$0xf]
  %v130 = vld [vmem:[#allocation3 + $0x14] sm:$0xf]
  %v131 = vld [vmem:[#allocation3 + $0x18] sm:$0xf]
  %v132 = vld [vmem:[#allocation3 + $0x1c] sm:$0xf]
  %v133 = vld [vmem:[#allocation3 + $0x20] sm:$0xf]
  %135 = vset.pattern.permute.xlu0 0
  %136 = vperm.xlu0 %135, %v46
  %v137 = vpop.permute.xlu0 %136
  %v148 = vunpack.c.l.b16 %v125
  %v149 = vunpack.c.l.b16 %v126
  %v150 = vunpack.c.l.b16 %v127
  %v151 = vunpack.c.l.b16 %v128
  %v152 = vunpack.c.l.b16 %v129
  %v153 = vunpack.c.l.b16 %v130
  %v154 = vunpack.c.l.b16 %v131
  %v155 = vunpack.c.l.b16 %v132
  %v156 = vunpack.c.l.b16 %v133
  %v157 = vpack.c.b16 %v149, %v148
  %v158 = vpack.c.b16 %v151, %v150
  %v159 = vpack.c.b16 %v153, %v152
  %v160 = vpack.c.b16 %v155, %v154
  %v161 = vpack.c.b16 %v156, %v156
  %vm166 = vcmask 588800
  %v168 = vsel %vm166, %v45, 0
  %vm170 = vcmask 1043456
  %v172 = vsel %vm170, %v161, 0
  %174 = vmatpush.bf16.msra.mxu0 0
  %175 = vmatpush.bf16.msra.mxu0 0
  %176 = vmatpush.bf16.msra.mxu0 0
  %177 = vmatpush.bf16.msra.mxu0 %v172
  %178 = vmatpush.bf16.msra.mxu0 %v160
  %179 = vmatpush.bf16.msra.mxu0 %v159
  %180 = vmatpush.bf16.msra.mxu0 %v158
  %181 = vmatpush.bf16.msra.mxu0 %v157
  %182 = vmatmul.bf16.gmra.mxu0 %v168
  %v183 = vpop.f32.mrf.mxu0
  %v184 = vadd.f32 %v137, %v183
  %v185 = vpop.f32.mrf.mxu0
  %186 = vdwg.mxu0
  %v188 = vperm.slane %v54, 0
  %v190 = vmul.f32 %v184, %v188
  %vm191 = vcmask 785408
  %v192 = vsel %vm191, %v190, 0.0
  %193 = vadd.xlane.f32.xlu0 %v192
  %v194 = vpop.xlane.xlu0 %193
  %v195 = vmul.f32 %v190, %v190
  %v196 = vsel %vm191, %v195, 0.0
  %197 = vadd.xlane.f32.xlu0 %v196
  %v198 = vpop.xlane.xlu0 %197
  %vm199 = vcmask 7168
  %v200 = vsel %vm199, %v194, %v198
  %vm201 = vcmask 64512
  %v203 = vsel %vm201, %v53, 0
  %205 = vmatpush.msra.mxu0 0.0
  %206 = vmatpush.msra.mxu0 0.0
  %207 = vmatpush.msra.mxu0 0.0
  %208 = vmatpush.msra.mxu0 0.0
  %209 = vmatpush.msra.mxu0 0.0
  %210 = vmatpush.msra.mxu0 0.0
  %211 = vmatpush.msra.mxu0 0.0
  %212 = vmatpush.msra.mxu0 0.0
  %213 = vmatpush.msra.mxu0 0.0
  %214 = vmatpush.msra.mxu0 0.0
  %215 = vmatpush.msra.mxu0 0.0
  %216 = vmatpush.msra.mxu0 0.0
  %217 = vmatpush.msra.mxu0 0.0
  %218 = vmatpush.msra.mxu0 0.0
  %219 = vmatpush.msra.mxu0 0.0
  %220 = vmatpush.msra.mxu0 %v200
  %221 = vmatmul.f32.gmra.mxu0 %v203
  %v222 = vpop.f32.mrf.mxu0
  %v223 = vadd.f32 0.0, %v222
  %224 = vdwg.mxu0
  %v225 = vmul.f32 %v223, 0.015625
  %v226 = vmul.f32 %v225, %v225
  %228 = vrot.lane.b32.xlu0 %v226, 1
  %v229 = vpop.permute.xlu0 %228
  %v231 = vsub.f32 %v225, %v229
  %v232 = vmax.f32 %v231, 0.0
  %234 = vset.pattern.permute.xlu0 0
  %235 = vperm.xlu0 %234, %v225
  %v236 = vpop.permute.xlu0 %235
  %v238 = vsub.f32 %v184, %v236
  %v239 = vadd.f32 %v232, 1e-05
  %v240 = vrsqrt.pop %v239
  %v241 = vmul.f32 %v240, %v239
  %v242 = vmul.f32 %v241, %v240
  %v243 = vmul.f32 0.5, %v242
  %v244 = vsub.f32 1.5, %v243
  %v245 = vmul.f32 %v240, %v244
  %vm246 = vweird.f32 %v239
  %vm247 = vweird.f32 %v240
  %vm248 = vmor %vm246, %vm247
  %v249 = vsel %vm248, %v240, %v245
  %251 = vset.pattern.permute.xlu0 1
  %252 = vperm.xlu0 %251, %v249
  %v253 = vpop.permute.xlu0 %252
  %v255 = vmul.f32 %v238, %v253
  %257 = vset.pattern.permute.xlu0 0
  %258 = vperm.xlu0 %257, %v47
  %v259 = vpop.permute.xlu0 %258
  %v261 = vmul.f32 %v255, %v259
  %263 = vset.pattern.permute.xlu0 0
  %264 = vperm.xlu0 %263, %v48
  %v265 = vpop.permute.xlu0 %264
  %v267 = vadd.f32 %v261, %v265
  %v268 = vmul.f32 %v267, 0.5
  %v269 = vmul.f32 %v267, 0.70710677
  %v270 = vmul.f32 %v269, %v269
  %v271 = vmin.f32 16.0, %v270
  %v272 = vmul.f32 %v271, 2.1237322e-06
  %v273 = vadd.f32 %v272, 0.00028619796
  %v274 = vmul.f32 %v271, %v273
  %v275 = vadd.f32 %v274, 0.0036580483
  %v276 = vmul.f32 %v271, %v275
  %v277 = vadd.f32 %v276, 0.05243302
  %v278 = vmul.f32 %v271, %v277
  %v279 = vadd.f32 %v278, 0.18741608
  %v280 = vmul.f32 %v271, %v279
  %v281 = vadd.f32 %v280, 1.1283791
  %v282 = vmul.f32 %v269, %v281
  %v283 = vmul.f32 %v271, 3.8918573e-05
  %v284 = vadd.f32 %v283, 0.001143296
  %v285 = vmul.f32 %v271, %v284
  %v286 = vadd.f32 %v285, 0.014752088
  %v287 = vmul.f32 %v271, %v286
  %v288 = vadd.f32 %v287, 0.112945676
  %v289 = vmul.f32 %v271, %v288
  %v290 = vadd.f32 %v289, 0.4994258
  %v291 = vmul.f32 %v271, %v290
  %v292 = vadd.f32 %v291, 1.0
  %v293 = vrcp.pop %v292
  %v294 = vmul.f32 %v292, %v293
  %v295 = vsub.f32 1.0, %v294
  %v296 = vmul.f32 %v293, %v295
  %v297 = vadd.f32 %v293, %v296
  %vm298 = vweird.f32 %v292
  %vm299 = vweird.f32 %v293
  %vm300 = vmor %vm298, %vm299
  %v301 = vsel %vm300, %v293, %v297
  %v302 = vand.u32 2147483647, %v292
  %vm303 = vcmp.eq.f32.partialorder %v302, 8.507059e+37
  %v304 = vand.u32 %v292, 2147483648
  %v305 = vor.u32 1.1754944e-38, %v304
  %v306 = vsel %vm303, %v305, %v301
  %v307 = vmul.f32 %v282, %v306
  %v308 = vmin.f32 %v307, 1.0
  %v309 = vmax.f32 %v308, -1.0
  %v310 = vadd.f32 %v309, 1.0
  %v311 = vmul.f32 %v268, %v310
  %v312 = vmul.f32 %v311, %v188
  %v313 = vpack.c.bf16 %v312, %v312
  %314 = vst.msk [vmem:[#allocation2 + $0x4] sm:$0xf] %vm70, %v313
  %v315 = vld [vmem:[#allocation2] sm:$0xff]
  %317 = vrot.lane.b32.xlu0 %v315, 13
  %v318 = vpop.permute.xlu0 %317
  %v319 = vrot.slane %v318, 4
  %v320 = vsel %vm67, %v318, %v319
  %322 = vst.msk [vmem:[#allocation3] sm:$0xf] %vm70, %v320
  %v323 = vld [vmem:[#allocation2] sm:$0xff]
  %325 = vrot.lane.b32.xlu0 %v323, 12
  %v326 = vpop.permute.xlu0 %325
  %v327 = vrot.slane %v326, 4
  %v328 = vsel %vm77, %v326, %v327
  %330 = vst.msk [vmem:[#allocation3 + $0x4] sm:$0xf] %vm70, %v328
  %v331 = vld [vmem:[#allocation2] sm:$0xff]
  %333 = vrot.lane.b32.xlu0 %v331, 11
  %v334 = vpop.permute.xlu0 %333
  %v335 = vrot.slane %v334, 4
  %v336 = vsel %vm86, %v334, %v335
  %338 = vst.msk [vmem:[#allocation3 + $0x8] sm:$0xf] %vm70, %v336
  %v339 = vld [vmem:[#allocation2] sm:$0xff]
  %341 = vrot.lane.b32.xlu0 %v339, 1
  %v342 = vpop.permute.xlu0 %341
  %v343 = vrot.slane %v342, 4
  %v344 = vsel %vm95, %v342, %v343
  %346 = vst.msk [vmem:[#allocation3 + $0xc] sm:$0xf] %vm70, %v344
  %v347 = vld [vmem:[#allocation2 + $0x4] sm:$0xf]
  %348 = vst.msk [vmem:[#allocation3 + $0x10] sm:$0xf] %vm70, %v347
  %v349 = vld [vmem:[#allocation2 + $0x4] sm:$0xf]
  %351 = vrot.lane.b32.xlu0 %v349, 127
  %v352 = vpop.permute.xlu0 %351
  %354 = vst.msk [vmem:[#allocation3 + $0x14] sm:$0xf] %vm70, %v352
  %v355 = vld [vmem:[#allocation2 + $0x4] sm:$0xf]
  %357 = vrot.lane.b32.xlu0 %v355, 117
  %v358 = vpop.permute.xlu0 %357
  %360 = vst.msk [vmem:[#allocation3 + $0x18] sm:$0xf] %vm70, %v358
  %v361 = vld [vmem:[#allocation2 + $0x4] sm:$0xf]
  %363 = vrot.lane.b32.xlu0 %v361, 116
  %v364 = vpop.permute.xlu0 %363
  %366 = vst.msk [vmem:[#allocation3 + $0x1c] sm:$0xf] %vm70, %v364
  %v367 = vld [vmem:[#allocation2 + $0x4] sm:$0xf]
  %369 = vrot.lane.b32.xlu0 %v367, 115
  %v370 = vpop.permute.xlu0 %369
  %372 = vst.msk [vmem:[#allocation3 + $0x20] sm:$0xf] %vm70, %v370
  %v373 = vld [vmem:[#allocation3] sm:$0xf]
  %v374 = vld [vmem:[#allocation3 + $0x4] sm:$0xf]
  %v375 = vld [vmem:[#allocation3 + $0x8] sm:$0xf]
  %v376 = vld [vmem:[#allocation3 + $0xc] sm:$0xf]
  %v377 = vld [vmem:[#allocation3 + $0x10] sm:$0xf]
  %v378 = vld [vmem:[#allocation3 + $0x14] sm:$0xf]
  %v379 = vld [vmem:[#allocation3 + $0x18] sm:$0xf]
  %v380 = vld [vmem:[#allocation3 + $0x1c] sm:$0xf]
  %v381 = vld [vmem:[#allocation3 + $0x20] sm:$0xf]
  %383 = vset.pattern.permute.xlu0 0
  %384 = vperm.xlu0 %383, %v50
  %v385 = vpop.permute.xlu0 %384
  %v396 = vunpack.c.l.b16 %v373
  %v397 = vunpack.c.l.b16 %v374
  %v398 = vunpack.c.l.b16 %v375
  %v399 = vunpack.c.l.b16 %v376
  %v400 = vunpack.c.l.b16 %v377
  %v401 = vunpack.c.l.b16 %v378
  %v402 = vunpack.c.l.b16 %v379
  %v403 = vunpack.c.l.b16 %v380
  %v404 = vunpack.c.l.b16 %v381
  %v405 = vpack.c.b16 %v397, %v396
  %v406 = vpack.c.b16 %v399, %v398
  %v407 = vpack.c.b16 %v401, %v400
  %v408 = vpack.c.b16 %v403, %v402
  %v409 = vpack.c.b16 %v404, %v404
  %v415 = vsel %vm166, %v49, 0
  %v418 = vsel %vm170, %v409, 0
  %420 = vmatpush.bf16.msra.mxu0 0
  %421 = vmatpush.bf16.msra.mxu0 0
  %422 = vmatpush.bf16.msra.mxu0 0
  %423 = vmatpush.bf16.msra.mxu0 %v418
  %424 = vmatpush.bf16.msra.mxu0 %v408
  %425 = vmatpush.bf16.msra.mxu0 %v407
  %426 = vmatpush.bf16.msra.mxu0 %v406
  %427 = vmatpush.bf16.msra.mxu0 %v405
  %428 = vmatmul.bf16.gmra.mxu0 %v415
  %v429 = vpop.f32.mrf.mxu0
  %v430 = vadd.f32 %v385, %v429
  %v431 = vpop.f32.mrf.mxu0
  %432 = vdwg.mxu0
  %v433 = vmul.f32 %v430, %v188
  %v434 = vsel %vm191, %v433, 0.0
  %435 = vadd.xlane.f32.xlu0 %v434
  %v436 = vpop.xlane.xlu0 %435
  %v437 = vmul.f32 %v433, %v433
  %v438 = vsel %vm191, %v437, 0.0
  %439 = vadd.xlane.f32.xlu0 %v438
  %v440 = vpop.xlane.xlu0 %439
  %v441 = vsel %vm199, %v436, %v440
  %442 = vmatpush.msra.mxu0 0.0
  %443 = vmatpush.msra.mxu0 0.0
  %444 = vmatpush.msra.mxu0 0.0
  %445 = vmatpush.msra.mxu0 0.0
  %446 = vmatpush.msra.mxu0 0.0
  %447 = vmatpush.msra.mxu0 0.0
  %448 = vmatpush.msra.mxu0 0.0
  %449 = vmatpush.msra.mxu0 0.0
  %450 = vmatpush.msra.mxu0 0.0
  %451 = vmatpush.msra.mxu0 0.0
  %452 = vmatpush.msra.mxu0 0.0
  %453 = vmatpush.msra.mxu0 0.0
  %454 = vmatpush.msra.mxu0 0.0
  %455 = vmatpush.msra.mxu0 0.0
  %456 = vmatpush.msra.mxu0 0.0
  %457 = vmatpush.msra.mxu0 %v441
  %458 = vmatmul.f32.gmra.mxu0 %v203
  %v459 = vpop.f32.mrf.mxu0
  %v460 = vadd.f32 0.0, %v459
  %461 = vdwg.mxu0
  %v462 = vmul.f32 %v460, 0.015625
  %v463 = vmul.f32 %v462, %v462
  %465 = vrot.lane.b32.xlu0 %v463, 1
  %v466 = vpop.permute.xlu0 %465
  %v468 = vsub.f32 %v462, %v466
  %v469 = vmax.f32 %v468, 0.0
  %471 = vset.pattern.permute.xlu0 0
  %472 = vperm.xlu0 %471, %v462
  %v473 = vpop.permute.xlu0 %472
  %v475 = vsub.f32 %v430, %v473
  %v476 = vadd.f32 %v469, 1e-05
  %v477 = vrsqrt.pop %v476
  %v478 = vmul.f32 %v477, %v476
  %v479 = vmul.f32 %v478, %v477
  %v480 = vmul.f32 0.5, %v479
  %v481 = vsub.f32 1.5, %v480
  %v482 = vmul.f32 %v477, %v481
  %vm483 = vweird.f32 %v476
  %vm484 = vweird.f32 %v477
  %vm485 = vmor %vm483, %vm484
  %v486 = vsel %vm485, %v477, %v482
  %488 = vset.pattern.permute.xlu0 1
  %489 = vperm.xlu0 %488, %v486
  %v490 = vpop.permute.xlu0 %489
  %v492 = vmul.f32 %v475, %v490
  %494 = vset.pattern.permute.xlu0 0
  %495 = vperm.xlu0 %494, %v51
  %v496 = vpop.permute.xlu0 %495
  %v498 = vmul.f32 %v492, %v496
  %500 = vset.pattern.permute.xlu0 0
  %501 = vperm.xlu0 %500, %v52
  %v502 = vpop.permute.xlu0 %501
  %v504 = vadd.f32 %v498, %v502
  %v505 = vmul.f32 %v504, 0.5
  %v506 = vmul.f32 %v504, 0.70710677
  %v507 = vmul.f32 %v506, %v506
  %v508 = vmin.f32 16.0, %v507
  %v509 = vmul.f32 %v508, 2.1237322e-06
  %v510 = vadd.f32 %v509, 0.00028619796
  %v511 = vmul.f32 %v508, %v510
  %v512 = vadd.f32 %v511, 0.0036580483
  %v513 = vmul.f32 %v508, %v512
  %v514 = vadd.f32 %v513, 0.05243302
  %v515 = vmul.f32 %v508, %v514
  %v516 = vadd.f32 %v515, 0.18741608
  %v517 = vmul.f32 %v508, %v516
  %v518 = vadd.f32 %v517, 1.1283791
  %v519 = vmul.f32 %v506, %v518
  %v520 = vmul.f32 %v508, 3.8918573e-05
  %v521 = vadd.f32 %v520, 0.001143296
  %v522 = vmul.f32 %v508, %v521
  %v523 = vadd.f32 %v522, 0.014752088
  %v524 = vmul.f32 %v508, %v523
  %v525 = vadd.f32 %v524, 0.112945676
  %v526 = vmul.f32 %v508, %v525
  %v527 = vadd.f32 %v526, 0.4994258
  %v528 = vmul.f32 %v508, %v527
  %v529 = vadd.f32 %v528, 1.0
  %v530 = vrcp.pop %v529
  %v531 = vmul.f32 %v529, %v530
  %v532 = vsub.f32 1.0, %v531
  %v533 = vmul.f32 %v530, %v532
  %v534 = vadd.f32 %v530, %v533
  %vm535 = vweird.f32 %v529
  %vm536 = vweird.f32 %v530
  %vm537 = vmor %vm535, %vm536
  %v538 = vsel %vm537, %v530, %v534
  %v539 = vand.u32 2147483647, %v529
  %vm540 = vcmp.eq.f32.partialorder %v539, 8.507059e+37
  %v541 = vand.u32 %v529, 2147483648
  %v542 = vor.u32 1.1754944e-38, %v541
  %v543 = vsel %vm540, %v542, %v538
  %v544 = vmul.f32 %v519, %v543
  %v545 = vmin.f32 %v544, 1.0
  %v546 = vmax.f32 %v545, -1.0
  %v547 = vadd.f32 %v546, 1.0
  %v548 = vmul.f32 %v505, %v547
  %v549 = vld [vmem:[%s0 + $0x4] sm:$0xf]
  %v550 = vunpack.c.l.bf16 %v549
  %v551 = vadd.f32 %v548, %v550
  %v552 = vmul.f32 %v551, %v188
  %v553 = vpack.c.bf16 %v552, %v552
  %555 = vset.pattern.permute.xlu0 0
  %556 = vperm.xlu0 %555, %v56
  %v557 = vpop.permute.xlu0 %556
  %v560 = vsel %vm201, %v55, 0
  %v563 = vsel %vm170, %v553, 0
  %565 = vmatpush.bf16.msra.mxu0 0
  %566 = vmatpush.bf16.msra.mxu0 0
  %567 = vmatpush.bf16.msra.mxu0 0
  %568 = vmatpush.bf16.msra.mxu0 0
  %569 = vmatpush.bf16.msra.mxu0 0
  %570 = vmatpush.bf16.msra.mxu0 0
  %571 = vmatpush.bf16.msra.mxu0 0
  %572 = vmatpush.bf16.msra.mxu0 %v563
  %573 = vmatmul.bf16.gmra.mxu0 %v560
  %v574 = vpop.f32.mrf.mxu0
  %v575 = vadd.f32 %v557, %v574
  %v576 = vpop.f32.mrf.mxu0
  %577 = vdwg.mxu0
  %578 = vst.msk [vmem:[%s13] sm:$0xff] %vm191, %v575
  %s579 = scalar_lea.vmem %s0, 12
  %v580 = vld [vmem:[%s579] sm:$0xff]
  %582 = vrot.lane.b32.xlu0 %v580, 13
  %v583 = vpop.permute.xlu0 %582
  %v584 = vrot.slane %v583, 4
  %v585 = vsel %vm67, %v583, %v584
  %587 = vst.msk [vmem:[#allocation3] sm:$0xf] %vm70, %v585
  %v588 = vld [vmem:[%s579] sm:$0xff]
  %590 = vrot.lane.b32.xlu0 %v588, 12
  %v591 = vpop.permute.xlu0 %590
  %v592 = vrot.slane %v591, 4
  %v593 = vsel %vm77, %v591, %v592
  %595 = vst.msk [vmem:[#allocation3 + $0x4] sm:$0xf] %vm70, %v593
  %v596 = vld [vmem:[%s579] sm:$0xff]
  %598 = vrot.lane.b32.xlu0 %v596, 11
  %v599 = vpop.permute.xlu0 %598
  %v600 = vrot.slane %v599, 4
  %v601 = vsel %vm86, %v599, %v600
  %603 = vst.msk [vmem:[#allocation3 + $0x8] sm:$0xf] %vm70, %v601
  %v604 = vld [vmem:[%s579] sm:$0xff]
  %606 = vrot.lane.b32.xlu0 %v604, 1
  %v607 = vpop.permute.xlu0 %606
  %v608 = vrot.slane %v607, 4
  %v609 = vsel %vm95, %v607, %v608
  %611 = vst.msk [vmem:[#allocation3 + $0xc] sm:$0xf] %vm70, %v609
  %v612 = vld [vmem:[%s579 + $0x4] sm:$0xf]
  %613 = vst.msk [vmem:[#allocation3 + $0x10] sm:$0xf] %vm70, %v612
  %v614 = vld [vmem:[%s579 + $0x4] sm:$0xf]
  %616 = vrot.lane.b32.xlu0 %v614, 127
  %v617 = vpop.permute.xlu0 %616
  %619 = vst.msk [vmem:[#allocation3 + $0x14] sm:$0xf] %vm70, %v617
  %v620 = vld [vmem:[%s579 + $0x4] sm:$0xf]
  %622 = vrot.lane.b32.xlu0 %v620, 117
  %v623 = vpop.permute.xlu0 %622
  %625 = vst.msk [vmem:[#allocation3 + $0x18] sm:$0xf] %vm70, %v623
  %v626 = vld [vmem:[%s579 + $0x4] sm:$0xf]
  %628 = vrot.lane.b32.xlu0 %v626, 116
  %v629 = vpop.permute.xlu0 %628
  %631 = vst.msk [vmem:[#allocation3 + $0x1c] sm:$0xf] %vm70, %v629
  %v632 = vld [vmem:[%s579 + $0x4] sm:$0xf]
  %634 = vrot.lane.b32.xlu0 %v632, 115
  %v635 = vpop.permute.xlu0 %634
  %637 = vst.msk [vmem:[#allocation3 + $0x20] sm:$0xf] %vm70, %v635
  %v638 = vld [vmem:[#allocation3] sm:$0xf]
  %v639 = vld [vmem:[#allocation3 + $0x4] sm:$0xf]
  %v640 = vld [vmem:[#allocation3 + $0x8] sm:$0xf]
  %v641 = vld [vmem:[#allocation3 + $0xc] sm:$0xf]
  %v642 = vld [vmem:[#allocation3 + $0x10] sm:$0xf]
  %v643 = vld [vmem:[#allocation3 + $0x14] sm:$0xf]
  %v644 = vld [vmem:[#allocation3 + $0x18] sm:$0xf]
  %v645 = vld [vmem:[#allocation3 + $0x1c] sm:$0xf]
  %v646 = vld [vmem:[#allocation3 + $0x20] sm:$0xf]
  %v656 = vunpack.c.l.b16 %v638
  %v657 = vunpack.c.l.b16 %v639
  %v658 = vunpack.c.l.b16 %v640
  %v659 = vunpack.c.l.b16 %v641
  %v660 = vunpack.c.l.b16 %v642
  %v661 = vunpack.c.l.b16 %v643
  %v662 = vunpack.c.l.b16 %v644
  %v663 = vunpack.c.l.b16 %v645
  %v664 = vunpack.c.l.b16 %v646
  %v665 = vpack.c.b16 %v657, %v656
  %v666 = vpack.c.b16 %v659, %v658
  %v667 = vpack.c.b16 %v661, %v660
  %v668 = vpack.c.b16 %v663, %v662
  %v669 = vpack.c.b16 %v664, %v664
  %v675 = vsel %vm170, %v669, 0
  %677 = vmatpush.bf16.msra.mxu0 0
  %678 = vmatpush.bf16.msra.mxu0 0
  %679 = vmatpush.bf16.msra.mxu0 0
  %680 = vmatpush.bf16.msra.mxu0 %v675
  %681 = vmatpush.bf16.msra.mxu0 %v668
  %682 = vmatpush.bf16.msra.mxu0 %v667
  %683 = vmatpush.bf16.msra.mxu0 %v666
  %684 = vmatpush.bf16.msra.mxu0 %v665
  %685 = vmatmul.bf16.gmra.mxu0 %v168
  %v686 = vpop.f32.mrf.mxu0
  %v687 = vadd.f32 %v137, %v686
  %v688 = vpop.f32.mrf.mxu0
  %689 = vdwg.mxu0
  %v690 = vmul.f32 %v687, %v188
  %v691 = vsel %vm191, %v690, 0.0
  %692 = vadd.xlane.f32.xlu0 %v691
  %v693 = vpop.xlane.xlu0 %692
  %v694 = vmul.f32 %v690, %v690
  %v695 = vsel %vm191, %v694, 0.0
  %696 = vadd.xlane.f32.xlu0 %v695
  %v697 = vpop.xlane.xlu0 %696
  %v698 = vsel %vm199, %v693, %v697
  %699 = vmatpush.msra.mxu0 0.0
  %700 = vmatpush.msra.mxu0 0.0
  %701 = vmatpush.msra.mxu0 0.0
  %702 = vmatpush.msra.mxu0 0.0
  %703 = vmatpush.msra.mxu0 0.0
  %704 = vmatpush.msra.mxu0 0.0
  %705 = vmatpush.msra.mxu0 0.0
  %706 = vmatpush.msra.mxu0 0.0
  %707 = vmatpush.msra.mxu0 0.0
  %708 = vmatpush.msra.mxu0 0.0
  %709 = vmatpush.msra.mxu0 0.0
  %710 = vmatpush.msra.mxu0 0.0
  %711 = vmatpush.msra.mxu0 0.0
  %712 = vmatpush.msra.mxu0 0.0
  %713 = vmatpush.msra.mxu0 0.0
  %714 = vmatpush.msra.mxu0 %v698
  %715 = vmatmul.f32.gmra.mxu0 %v203
  %v716 = vpop.f32.mrf.mxu0
  %v717 = vadd.f32 0.0, %v716
  %718 = vdwg.mxu0
  %v719 = vmul.f32 %v717, 0.015625
  %v720 = vmul.f32 %v719, %v719
  %722 = vrot.lane.b32.xlu0 %v720, 1
  %v723 = vpop.permute.xlu0 %722
  %v725 = vsub.f32 %v719, %v723
  %v726 = vmax.f32 %v725, 0.0
  %728 = vset.pattern.permute.xlu0 0
  %729 = vperm.xlu0 %728, %v719
  %v730 = vpop.permute.xlu0 %729
  %v732 = vsub.f32 %v687, %v730
  %v733 = vadd.f32 %v726, 1e-05
  %v734 = vrsqrt.pop %v733
  %v735 = vmul.f32 %v734, %v733
  %v736 = vmul.f32 %v735, %v734
  %v737 = vmul.f32 0.5, %v736
  %v738 = vsub.f32 1.5, %v737
  %v739 = vmul.f32 %v734, %v738
  %vm740 = vweird.f32 %v733
  %vm741 = vweird.f32 %v734
  %vm742 = vmor %vm740, %vm741
  %v743 = vsel %vm742, %v734, %v739
  %745 = vset.pattern.permute.xlu0 1
  %746 = vperm.xlu0 %745, %v743
  %v747 = vpop.permute.xlu0 %746
  %v749 = vmul.f32 %v732, %v747
  %v750 = vmul.f32 %v749, %v259
  %v751 = vadd.f32 %v750, %v265
  %v752 = vmul.f32 %v751, 0.5
  %v753 = vmul.f32 %v751, 0.70710677
  %v754 = vmul.f32 %v753, %v753
  %v755 = vmin.f32 16.0, %v754
  %v756 = vmul.f32 %v755, 2.1237322e-06
  %v757 = vadd.f32 %v756, 0.00028619796
  %v758 = vmul.f32 %v755, %v757
  %v759 = vadd.f32 %v758, 0.0036580483
  %v760 = vmul.f32 %v755, %v759
  %v761 = vadd.f32 %v760, 0.05243302
  %v762 = vmul.f32 %v755, %v761
  %v763 = vadd.f32 %v762, 0.18741608
  %v764 = vmul.f32 %v755, %v763
  %v765 = vadd.f32 %v764, 1.1283791
  %v766 = vmul.f32 %v753, %v765
  %v767 = vmul.f32 %v755, 3.8918573e-05
  %v768 = vadd.f32 %v767, 0.001143296
  %v769 = vmul.f32 %v755, %v768
  %v770 = vadd.f32 %v769, 0.014752088
  %v771 = vmul.f32 %v755, %v770
  %v772 = vadd.f32 %v771, 0.112945676
  %v773 = vmul.f32 %v755, %v772
  %v774 = vadd.f32 %v773, 0.4994258
  %v775 = vmul.f32 %v755, %v774
  %v776 = vadd.f32 %v775, 1.0
  %v777 = vrcp.pop %v776
  %v778 = vmul.f32 %v776, %v777
  %v779 = vsub.f32 1.0, %v778
  %v780 = vmul.f32 %v777, %v779
  %v781 = vadd.f32 %v777, %v780
  %vm782 = vweird.f32 %v776
  %vm783 = vweird.f32 %v777
  %vm784 = vmor %vm782, %vm783
  %v785 = vsel %vm784, %v777, %v781
  %v786 = vand.u32 2147483647, %v776
  %vm787 = vcmp.eq.f32.partialorder %v786, 8.507059e+37
  %v788 = vand.u32 %v776, 2147483648
  %v789 = vor.u32 1.1754944e-38, %v788
  %v790 = vsel %vm787, %v789, %v785
  %v791 = vmul.f32 %v766, %v790
  %v792 = vmin.f32 %v791, 1.0
  %v793 = vmax.f32 %v792, -1.0
  %v794 = vadd.f32 %v793, 1.0
  %v795 = vmul.f32 %v752, %v794
  %v796 = vmul.f32 %v795, %v188
  %v797 = vpack.c.bf16 %v796, %v796
  %798 = vst.msk [vmem:[#allocation2 + $0x4] sm:$0xf] %vm70, %v797
  %v799 = vld [vmem:[#allocation2] sm:$0xff]
  %801 = vrot.lane.b32.xlu0 %v799, 13
  %v802 = vpop.permute.xlu0 %801
  %v803 = vrot.slane %v802, 4
  %v804 = vsel %vm67, %v802, %v803
  %806 = vst.msk [vmem:[#allocation3] sm:$0xf] %vm70, %v804
  %v807 = vld [vmem:[#allocation2] sm:$0xff]
  %809 = vrot.lane.b32.xlu0 %v807, 12
  %v810 = vpop.permute.xlu0 %809
  %v811 = vrot.slane %v810, 4
  %v812 = vsel %vm77, %v810, %v811
  %814 = vst.msk [vmem:[#allocation3 + $0x4] sm:$0xf] %vm70, %v812
  %v815 = vld [vmem:[#allocation2] sm:$0xff]
  %817 = vrot.lane.b32.xlu0 %v815, 11
  %v818 = vpop.permute.xlu0 %817
  %v819 = vrot.slane %v818, 4
  %v820 = vsel %vm86, %v818, %v819
  %822 = vst.msk [vmem:[#allocation3 + $0x8] sm:$0xf] %vm70, %v820
  %v823 = vld [vmem:[#allocation2] sm:$0xff]
  %825 = vrot.lane.b32.xlu0 %v823, 1
  %v826 = vpop.permute.xlu0 %825
  %v827 = vrot.slane %v826, 4
  %v828 = vsel %vm95, %v826, %v827
  %830 = vst.msk [vmem:[#allocation3 + $0xc] sm:$0xf] %vm70, %v828
  %v831 = vld [vmem:[#allocation2 + $0x4] sm:$0xf]
  %832 = vst.msk [vmem:[#allocation3 + $0x10] sm:$0xf] %vm70, %v831
  %v833 = vld [vmem:[#allocation2 + $0x4] sm:$0xf]
  %835 = vrot.lane.b32.xlu0 %v833, 127
  %v836 = vpop.permute.xlu0 %835
  %838 = vst.msk [vmem:[#allocation3 + $0x14] sm:$0xf] %vm70, %v836
  %v839 = vld [vmem:[#allocation2 + $0x4] sm:$0xf]
  %841 = vrot.lane.b32.xlu0 %v839, 117
  %v842 = vpop.permute.xlu0 %841
  %844 = vst.msk [vmem:[#allocation3 + $0x18] sm:$0xf] %vm70, %v842
  %v845 = vld [vmem:[#allocation2 + $0x4] sm:$0xf]
  %847 = vrot.lane.b32.xlu0 %v845, 116
  %v848 = vpop.permute.xlu0 %847
  %850 = vst.msk [vmem:[#allocation3 + $0x1c] sm:$0xf] %vm70, %v848
  %v851 = vld [vmem:[#allocation2 + $0x4] sm:$0xf]
  %853 = vrot.lane.b32.xlu0 %v851, 115
  %v854 = vpop.permute.xlu0 %853
  %856 = vst.msk [vmem:[#allocation3 + $0x20] sm:$0xf] %vm70, %v854
  %v857 = vld [vmem:[#allocation3] sm:$0xf]
  %v858 = vld [vmem:[#allocation3 + $0x4] sm:$0xf]
  %v859 = vld [vmem:[#allocation3 + $0x8] sm:$0xf]
  %v860 = vld [vmem:[#allocation3 + $0xc] sm:$0xf]
  %v861 = vld [vmem:[#allocation3 + $0x10] sm:$0xf]
  %v862 = vld [vmem:[#allocation3 + $0x14] sm:$0xf]
  %v863 = vld [vmem:[#allocation3 + $0x18] sm:$0xf]
  %v864 = vld [vmem:[#allocation3 + $0x1c] sm:$0xf]
  %v865 = vld [vmem:[#allocation3 + $0x20] sm:$0xf]
  %v875 = vunpack.c.l.b16 %v857
  %v876 = vunpack.c.l.b16 %v858
  %v877 = vunpack.c.l.b16 %v859
  %v878 = vunpack.c.l.b16 %v860
  %v879 = vunpack.c.l.b16 %v861
  %v880 = vunpack.c.l.b16 %v862
  %v881 = vunpack.c.l.b16 %v863
  %v882 = vunpack.c.l.b16 %v864
  %v883 = vunpack.c.l.b16 %v865
  %v884 = vpack.c.b16 %v876, %v875
  %v885 = vpack.c.b16 %v878, %v877
  %v886 = vpack.c.b16 %v880, %v879
  %v887 = vpack.c.b16 %v882, %v881
  %v888 = vpack.c.b16 %v883, %v883
  %v894 = vsel %vm170, %v888, 0
  %896 = vmatpush.bf16.msra.mxu0 0
  %897 = vmatpush.bf16.msra.mxu0 0
  %898 = vmatpush.bf16.msra.mxu0 0
  %899 = vmatpush.bf16.msra.mxu0 %v894
  %900 = vmatpush.bf16.msra.mxu0 %v887
  %901 = vmatpush.bf16.msra.mxu0 %v886
  %902 = vmatpush.bf16.msra.mxu0 %v885
  %903 = vmatpush.bf16.msra.mxu0 %v884
  %904 = vmatmul.bf16.gmra.mxu0 %v415
  %v905 = vpop.f32.mrf.mxu0
  %v906 = vadd.f32 %v385, %v905
  %v907 = vpop.f32.mrf.mxu0
  %908 = vdwg.mxu0
  %v909 = vmul.f32 %v906, %v188
  %v910 = vsel %vm191, %v909, 0.0
  %911 = vadd.xlane.f32.xlu0 %v910
  %v912 = vpop.xlane.xlu0 %911
  %v913 = vmul.f32 %v909, %v909
  %v914 = vsel %vm191, %v913, 0.0
  %915 = vadd.xlane.f32.xlu0 %v914
  %v916 = vpop.xlane.xlu0 %915
  %v917 = vsel %vm199, %v912, %v916
  %918 = vmatpush.msra.mxu0 0.0
  %919 = vmatpush.msra.mxu0 0.0
  %920 = vmatpush.msra.mxu0 0.0
  %921 = vmatpush.msra.mxu0 0.0
  %922 = vmatpush.msra.mxu0 0.0
  %923 = vmatpush.msra.mxu0 0.0
  %924 = vmatpush.msra.mxu0 0.0
  %925 = vmatpush.msra.mxu0 0.0
  %926 = vmatpush.msra.mxu0 0.0
  %927 = vmatpush.msra.mxu0 0.0
  %928 = vmatpush.msra.mxu0 0.0
  %929 = vmatpush.msra.mxu0 0.0
  %930 = vmatpush.msra.mxu0 0.0
  %931 = vmatpush.msra.mxu0 0.0
  %932 = vmatpush.msra.mxu0 0.0
  %933 = vmatpush.msra.mxu0 %v917
  %934 = vmatmul.f32.gmra.mxu0 %v203
  %v935 = vpop.f32.mrf.mxu0
  %v936 = vadd.f32 0.0, %v935
  %937 = vdwg.mxu0
  %v938 = vmul.f32 %v936, 0.015625
  %v939 = vmul.f32 %v938, %v938
  %941 = vrot.lane.b32.xlu0 %v939, 1
  %v942 = vpop.permute.xlu0 %941
  %v944 = vsub.f32 %v938, %v942
  %v945 = vmax.f32 %v944, 0.0
  %947 = vset.pattern.permute.xlu0 0
  %948 = vperm.xlu0 %947, %v938
  %v949 = vpop.permute.xlu0 %948
  %v951 = vsub.f32 %v906, %v949
  %v952 = vadd.f32 %v945, 1e-05
  %v953 = vrsqrt.pop %v952
  %v954 = vmul.f32 %v953, %v952
  %v955 = vmul.f32 %v954, %v953
  %v956 = vmul.f32 0.5, %v955
  %v957 = vsub.f32 1.5, %v956
  %v958 = vmul.f32 %v953, %v957
  %vm959 = vweird.f32 %v952
  %vm960 = vweird.f32 %v953
  %vm961 = vmor %vm959, %vm960
  %v962 = vsel %vm961, %v953, %v958
  %964 = vset.pattern.permute.xlu0 1
  %965 = vperm.xlu0 %964, %v962
  %v966 = vpop.permute.xlu0 %965
  %v968 = vmul.f32 %v951, %v966
  %v969 = vmul.f32 %v968, %v496
  %v970 = vadd.f32 %v969, %v502
  %v971 = vmul.f32 %v970, 0.5
  %v972 = vmul.f32 %v970, 0.70710677
  %v973 = vmul.f32 %v972, %v972
  %v974 = vmin.f32 16.0, %v973
  %v975 = vmul.f32 %v974, 2.1237322e-06
  %v976 = vadd.f32 %v975, 0.00028619796
  %v977 = vmul.f32 %v974, %v976
  %v978 = vadd.f32 %v977, 0.0036580483
  %v979 = vmul.f32 %v974, %v978
  %v980 = vadd.f32 %v979, 0.05243302
  %v981 = vmul.f32 %v974, %v980
  %v982 = vadd.f32 %v981, 0.18741608
  %v983 = vmul.f32 %v974, %v982
  %v984 = vadd.f32 %v983, 1.1283791
  %v985 = vmul.f32 %v972, %v984
  %v986 = vmul.f32 %v974, 3.8918573e-05
  %v987 = vadd.f32 %v986, 0.001143296
  %v988 = vmul.f32 %v974, %v987
  %v989 = vadd.f32 %v988, 0.014752088
  %v990 = vmul.f32 %v974, %v989
  %v991 = vadd.f32 %v990, 0.112945676
  %v992 = vmul.f32 %v974, %v991
  %v993 = vadd.f32 %v992, 0.4994258
  %v994 = vmul.f32 %v974, %v993
  %v995 = vadd.f32 %v994, 1.0
  %v996 = vrcp.pop %v995
  %v997 = vmul.f32 %v995, %v996
  %v998 = vsub.f32 1.0, %v997
  %v999 = vmul.f32 %v996, %v998
  %v1000 = vadd.f32 %v996, %v999
  %vm1001 = vweird.f32 %v995
  %vm1002 = vweird.f32 %v996
  %vm1003 = vmor %vm1001, %vm1002
  %v1004 = vsel %vm1003, %v996, %v1000
  %v1005 = vand.u32 2147483647, %v995
  %vm1006 = vcmp.eq.f32.partialorder %v1005, 8.507059e+37
  %v1007 = vand.u32 %v995, 2147483648
  %v1008 = vor.u32 1.1754944e-38, %v1007
  %v1009 = vsel %vm1006, %v1008, %v1004
  %v1010 = vmul.f32 %v985, %v1009
  %v1011 = vmin.f32 %v1010, 1.0
  %v1012 = vmax.f32 %v1011, -1.0
  %v1013 = vadd.f32 %v1012, 1.0
  %v1014 = vmul.f32 %v971, %v1013
  %v1015 = vld [vmem:[%s579 + $0x4] sm:$0xf]
  %v1016 = vunpack.c.l.bf16 %v1015
  %v1017 = vadd.f32 %v1014, %v1016
  %v1018 = vmul.f32 %v1017, %v188
  %v1019 = vpack.c.bf16 %v1018, %v1018
  %v1021 = vsel %vm170, %v1019, 0
  %1023 = vmatpush.bf16.msra.mxu0 0
  %1024 = vmatpush.bf16.msra.mxu0 0
  %1025 = vmatpush.bf16.msra.mxu0 0
  %1026 = vmatpush.bf16.msra.mxu0 0
  %1027 = vmatpush.bf16.msra.mxu0 0
  %1028 = vmatpush.bf16.msra.mxu0 0
  %1029 = vmatpush.bf16.msra.mxu0 0
  %1030 = vmatpush.bf16.msra.mxu0 %v1021
  %1031 = vmatmul.bf16.gmra.mxu0 %v560
  %v1032 = vpop.f32.mrf.mxu0
  %v1033 = vadd.f32 %v557, %v1032
  %v1034 = vpop.f32.mrf.mxu0
  %1035 = vdwg.mxu0
  %s1036 = scalar_lea.vmem %s13, 8
  %1037 = vst.msk [vmem:[%s1036] sm:$0xff] %vm191, %v1033
  // Predicated region
  $region54: #{_lambda_.7} parent=0 // pred_check
    _
  $region55: #{_lambda_.7} parent=0 // pred_check_branch
    %1039 = sbr.rel (0) target = $region57
  $region56: #{_lambda_.7} parent=0 // pred_region
    _
  $region57: #{_lambda_.7} parent=0 // pred_fallthru
    _
  // Predicated region
  $region58: #{_lambda_.7} parent=0 // pred_check
    _
  $region59: #{_lambda_.7} parent=0 // pred_check_branch
    %1041 = sbr.rel (0) target = $region61
  $region60: #{_lambda_.7} parent=0 // pred_region
    _
  $region61: #{_lambda_.7} parent=0 // pred_fallthru
    _

</llo_original>
